<compile_context>
chip_gen: v5e
topology: v5e:2x2
jax: 0.10.0
libtpu: 0.0.40
codegen_flags: <defaults>
</compile_context>

<pallas_src>
import jax
import jax.numpy as jnp
from jax import lax
from jax.experimental import pallas as pl
from jax.experimental.pallas import tpu as pltpu

N_HEAD, D_MODEL, D_K, D_V = 4, 20, 8, 8
SEQ = 16  # 4*4 spatial positions after the conv stack


def pick_tb(batch):
    for t in (32, 16, 8):
        if batch % t == 0:
            return t
    return batch  # small / odd batches: single grid step with full-array blocks


# --------------------------- kernel 1: conv stage ---------------------------

def conv_stage_kernel(a1_ref, w1_ref, b1_ref, w2_ref, b2_ref, z_ref, s_w1, s_w2):
    TB = z_ref.shape[0]
    # conv1: (TB*576, 25) bf16 @ (25, 10) bf16 -> f32, bias, relu
    y1 = jnp.dot(a1_ref[...], w1_ref[...], preferred_element_type=jnp.float32)
    y1 = jnp.maximum(y1 + b1_ref[...], 0.0)          # relu(maxpool) == maxpool(relu)
    # rows are (b, oh, ow): expose oh-parity as a leading dim (layout-preserving reshape)
    y1 = y1.reshape(TB, 12, 2, 24, 10)
    hmax = jnp.maximum(y1[:, :, 0], y1[:, :, 1])      # pool over height -> (TB,12,24,10)
    s_w1[...] = hmax
    z1 = jnp.maximum(s_w1[:, :, pl.ds(0, 12, 2), :],  # pool over width: stride-2 reads
                     s_w1[:, :, pl.ds(1, 12, 2), :])  # (TB,12,12,10)

    # conv2 straight from VMEM: 25 per-tap accumulating matmuls (no im2col, no HBM hop)
    acc = jnp.zeros((TB * 64, 20), jnp.float32)
    for i in range(5):
        for j in range(5):
            lhs = z1[:, i:i + 8, j:j + 8, :].reshape(TB * 64, 10).astype(jnp.bfloat16)
            acc = acc + jnp.dot(lhs, w2_ref[i * 5 + j],
                                preferred_element_type=jnp.float32)
    y2 = jnp.maximum(acc + b2_ref[...], 0.0)          # (TB*64, 20)
    y2 = y2.reshape(TB, 4, 2, 8, 20)
    hmax2 = jnp.maximum(y2[:, :, 0], y2[:, :, 1])     # (TB,4,8,20)
    s_w2[...] = hmax2
    z_ref[...] = jnp.maximum(s_w2[:, :, pl.ds(0, 4, 2), :],
                             s_w2[:, :, pl.ds(1, 4, 2), :])   # (TB,4,4,20) NHWC


def conv_stage(a1, w1, b1, w2t, b2, batch, tb):
    return pl.pallas_call(
        conv_stage_kernel,
        out_shape=jax.ShapeDtypeStruct((batch, 4, 4, 20), jnp.float32),
        grid=(batch // tb,),
        in_specs=[pl.BlockSpec((tb * 576, 25), lambda i: (i, 0)),
                  pl.BlockSpec((25, 10), lambda i: (0, 0)),
                  pl.BlockSpec((1, 10), lambda i: (0, 0)),
                  pl.BlockSpec((25, 10, 20), lambda i: (0, 0, 0)),
                  pl.BlockSpec((1, 20), lambda i: (0, 0))],
        out_specs=pl.BlockSpec((tb, 4, 4, 20), lambda i: (i, 0, 0, 0)),
        scratch_shapes=[pltpu.VMEM((tb, 12, 24, 10), jnp.float32),
                        pltpu.VMEM((tb, 4, 8, 20), jnp.float32)],
        compiler_params=pltpu.CompilerParams(dimension_semantics=("parallel",)),
    )(a1, w1, b1, w2t, b2)


# ------------------- kernel 2: attention + classifier head ------------------

def attn_head_kernel(q_ref, wqkv_ref, wo_ref, ln_ref, w1_ref, w2_ref, b12_ref,
                     qo_ref, lp_ref):
    TB = q_ref.shape[0]
    x2d = q_ref[...].reshape(TB * SEQ, D_MODEL)
    # fused QKV projection: (TB*16, 20) @ (20, 96)
    qkv = jnp.dot(x2d, wqkv_ref[...], preferred_element_type=jnp.float32)
    scale = 1.0 / (D_K ** 0.5)

    heads = []
    for h in range(N_HEAD):                                    # static unroll
        qh = (qkv[:, h * D_K:(h + 1) * D_K] * scale).reshape(TB, SEQ, D_K)
        kh = qkv[:, 32 + h * D_K:32 + (h + 1) * D_K].reshape(TB, SEQ, D_K)
        vh = qkv[:, 64 + h * D_V:64 + (h + 1) * D_V].reshape(TB, SEQ, D_V)
        logits = lax.dot_general(qh, kh, (((2,), (2,)), ((0,), (0,))),
                                 preferred_element_type=jnp.float32)   # (TB,SEQ,SEQ)
        logits = logits - jnp.max(logits, axis=-1, keepdims=True)
        p = jnp.exp(logits)
        p = p / jnp.sum(p, axis=-1, keepdims=True)
        oh = lax.dot_general(p, vh, (((2,), (1,)), ((0,), (0,))),
                             preferred_element_type=jnp.float32)       # (TB,SEQ,D_V)
        heads.append(oh)

    attn = jnp.concatenate(heads, axis=-1).reshape(TB * SEQ, N_HEAD * D_V)
    y = jnp.dot(attn, wo_ref[...], preferred_element_type=jnp.float32) + x2d
    mu = jnp.mean(y, axis=-1, keepdims=True)
    var = jnp.mean((y - mu) ** 2, axis=-1, keepdims=True)
    y = (y - mu) * lax.rsqrt(var + 1e-6)
    y = y * ln_ref[0:1, :] + ln_ref[1:2, :]
    qo_ref[...] = y.reshape(TB, SEQ, D_MODEL)

    # classifier head on the flattened q (flat idx = s*20 + d), fc1 as 16 matmuls
    h1 = jnp.zeros((TB, 50), jnp.float32) + b12_ref[0:1, 0:50]
    for s in range(SEQ):
        h1 = h1 + jnp.dot(qo_ref[:, s, :], w1_ref[s],
                          preferred_element_type=jnp.float32)
    z = jnp.dot(h1, w2_ref[...], preferred_element_type=jnp.float32) + b12_ref[0:1, 50:60]
    z = z - jnp.max(z, axis=-1, keepdims=True)
    lp_ref[...] = z - jnp.log(jnp.sum(jnp.exp(z), axis=-1, keepdims=True))


def attn_head_stage(q_in, wqkv, wo, ln, w1r, w2, b12, tb):
    batch = q_in.shape[0]
    return pl.pallas_call(
        attn_head_kernel,
        out_shape=(jax.ShapeDtypeStruct((batch, SEQ, D_MODEL), jnp.float32),
                   jax.ShapeDtypeStruct((batch, 10), jnp.float32)),
        grid=(batch // tb,),
        in_specs=[pl.BlockSpec((tb, SEQ, D_MODEL), lambda i: (i, 0, 0)),
                  pl.BlockSpec((D_MODEL, 96), lambda i: (0, 0)),
                  pl.BlockSpec((32, D_MODEL), lambda i: (0, 0)),
                  pl.BlockSpec((2, D_MODEL), lambda i: (0, 0)),
                  pl.BlockSpec((SEQ, D_MODEL, 50), lambda i: (0, 0, 0)),
                  pl.BlockSpec((50, 10), lambda i: (0, 0)),
                  pl.BlockSpec((1, 60), lambda i: (0, 0))],
        out_specs=(pl.BlockSpec((tb, SEQ, D_MODEL), lambda i: (i, 0, 0)),
                   pl.BlockSpec((tb, 10), lambda i: (i, 0))),
        compiler_params=pltpu.CompilerParams(dimension_semantics=("parallel",)),
    )(q_in, wqkv, wo, ln, w1r, w2, b12)


# ------------------------------- glue (JAX) --------------------------------

def im2col_1ch(x, k):
    # x: (B, H, W) -> (B*OH*OW, k*k), tap order (i, j) matching torch conv weight layout
    B, H, W = x.shape
    oh, ow = H - k + 1, W - k + 1
    cols = [x[:, i:i + oh, j:j + ow] for i in range(k) for j in range(k)]
    return jnp.stack(cols, axis=-1).reshape(B * oh * ow, k * k)


def init_params(key):
    ks = jax.random.split(key, 10)
    nrm = lambda k, shape, s: s * jax.random.normal(k, shape, jnp.float32)
    return {
        'conv1_w': nrm(ks[0], (10, 1, 5, 5), 0.2),
        'conv1_b': nrm(ks[1], (10,), 0.1),
        'conv2_w': nrm(ks[2], (20, 10, 5, 5), 0.06),
        'conv2_b': nrm(ks[3], (20,), 0.1),
        'wq': nrm(ks[4], (D_MODEL, N_HEAD * D_K), 0.2),
        'wk': nrm(ks[5], (D_MODEL, N_HEAD * D_K), 0.2),
        'wv': nrm(ks[6], (D_MODEL, N_HEAD * D_V), 0.2),
        'wo': nrm(ks[7], (N_HEAD * D_V, D_MODEL), 0.2),
        'ln_g': jnp.ones((D_MODEL,), jnp.float32),
        'ln_b': jnp.zeros((D_MODEL,), jnp.float32),
        'fc1_w': nrm(ks[8], (320, 50), 0.05),
        'fc1_b': jnp.zeros((50,), jnp.float32),
        'fc2_w': nrm(ks[9], (50, 10), 0.1),
        'fc2_b': jnp.zeros((10,), jnp.float32),
    }


def forward(x, p):
    x = x.reshape(-1, 1, 28, 28).astype(jnp.float32)            # x.view(-1,1,28,28)
    B = x.shape[0]
    tb = pick_tb(B)

    # ---- fused conv stage (conv1 GEMM + pool + relu + conv2 + pool + relu) ----
    a1 = im2col_1ch(x[:, 0], 5).astype(jnp.bfloat16)             # (B*576, 25)
    w1 = p['conv1_w'].reshape(10, 25).T.astype(jnp.bfloat16)     # (25, 10)
    b1 = p['conv1_b'].reshape(1, 10)
    w2t = jnp.transpose(p['conv2_w'], (2, 3, 1, 0)).reshape(25, 10, 20).astype(jnp.bfloat16)
    b2 = p['conv2_b'].reshape(1, 20)
    z_nhwc = conv_stage(a1, w1, b1, w2t, b2, B, tb)              # (B,4,4,20)

    # torch.reshape(z_nchw, (B, -1, 20)) on a contiguous NCHW tensor:
    q_in = jnp.transpose(z_nhwc, (0, 3, 1, 2)).reshape(B, SEQ, D_MODEL)

    # ---- fused attention + residual + LayerNorm + fc1/fc2/log_softmax ----
    wqkv = jnp.concatenate([p['wq'], p['wk'], p['wv']], axis=1)  # (20, 96)
    ln = jnp.stack([p['ln_g'], p['ln_b']])                       # (2, 20)
    w1r = p['fc1_w'].reshape(SEQ, D_MODEL, 50)
    b12 = jnp.concatenate([p['fc1_b'], p['fc2_b']]).reshape(1, 60)
    q_out, logp = attn_head_stage(q_in, wqkv, p['wo'], ln, w1r, p['fc2_w'], b12, tb)

    q4 = q_out.reshape(B, 20, 4, 4)                              # returned q
    # (z = q.mean(3).mean(2) in the PyTorch code is dead / overwritten — omitted)
    return logp, q4


if __name__ == "__main__":
    key = jax.random.PRNGKey(0)
    pkey, xkey = jax.random.split(key)
    params = init_params(pkey)
    x = jax.random.normal(xkey, (2, 1, 28, 28), jnp.float32)
    logp, q = jax.jit(forward)(x, params)
    jax.block_until_ready((logp, q))
    assert logp.shape == (2, 10) and q.shape == (2, 20, 4, 4)
    assert bool(jnp.all(jnp.isfinite(logp))) and bool(jnp.all(jnp.isfinite(q)))
    print("KERNEL_OK")
</pallas_src>

<mosaic_0001>
module attributes {stable_mosaic.version = 11 : i64} {
  func.func @conv_stage_kernel(%arg0: i32, %arg1: memref<1152x25xbf16, #tpu.memory_space<vmem>>, %arg2: memref<25x10xbf16, #tpu.memory_space<vmem>>, %arg3: memref<1x10xf32, #tpu.memory_space<vmem>>, %arg4: memref<25x10x20xbf16, #tpu.memory_space<vmem>>, %arg5: memref<1x20xf32, #tpu.memory_space<vmem>>, %arg6: memref<2x4x4x20xf32, #tpu.memory_space<vmem>>, %arg7: memref<2x12x24x10xf32, #tpu.memory_space<vmem>>, %arg8: memref<2x4x8x20xf32, #tpu.memory_space<vmem>>) attributes {dimension_semantics = [#tpu.dimension_semantics<parallel>], iteration_bounds = array<i64: 1>, scalar_prefetch = 0 : i64, scratch_operands = 2 : i64, tpu.core_type = #tpu.core_type<tc>, window_params = [{transform_indices = @transform_0, window_bounds = array<i64: 1152, 25>}, {pipeline_mode = #tpu.pipeline_mode<synchronous>, transform_indices = @transform_1, window_bounds = array<i64: 25, 10>}, {pipeline_mode = #tpu.pipeline_mode<synchronous>, transform_indices = @transform_2, window_bounds = array<i64: 1, 10>}, {pipeline_mode = #tpu.pipeline_mode<synchronous>, transform_indices = @transform_3, window_bounds = array<i64: 25, 10, 20>}, {pipeline_mode = #tpu.pipeline_mode<synchronous>, transform_indices = @transform_4, window_bounds = array<i64: 1, 20>}, {transform_indices = @transform_5, window_bounds = array<i64: 2, 4, 4, 20>}]} {
    %c0 = arith.constant 0 : index
    %c0_0 = arith.constant 0 : index
    %0 = vector.load %arg1[%c0, %c0_0] : memref<1152x25xbf16, #tpu.memory_space<vmem>>, vector<1152x25xbf16>
    %c0_1 = arith.constant 0 : index
    %c0_2 = arith.constant 0 : index
    %1 = vector.load %arg2[%c0_1, %c0_2] : memref<25x10xbf16, #tpu.memory_space<vmem>>, vector<25x10xbf16>
    %cst = arith.constant dense<0.000000e+00> : vector<1152x10xf32>
    %2 = tpu.matmul %0, %1, %cst {dimension_numbers = #tpu.dot_dimension_numbers<[1], [0], [0], [1], [0, 0, 1, 1], [], []>} : vector<1152x25xbf16>, vector<25x10xbf16>, vector<1152x10xf32> -> vector<1152x10xf32>
    %c0_3 = arith.constant 0 : index
    %c0_4 = arith.constant 0 : index
    %3 = vector.load %arg3[%c0_3, %c0_4] : memref<1x10xf32, #tpu.memory_space<vmem>>, vector<1x10xf32>
    %4 = vector.broadcast %3 : vector<1x10xf32> to vector<1152x10xf32>
    %5 = arith.addf %2, %4 : vector<1152x10xf32>
    %cst_5 = arith.constant 0.000000e+00 : f32
    %6 = vector.broadcast %cst_5 : f32 to vector<1152x10xf32>
    %7 = arith.maximumf %5, %6 : vector<1152x10xf32>
    %8 = vector.shape_cast %7 : vector<1152x10xf32> to vector<2x12x2x24x10xf32>
    %9 = vector.extract_strided_slice %8 {offsets = [0, 0, 0, 0, 0], sizes = [2, 12, 1, 24, 10], strides = [1, 1, 1, 1, 1]} : vector<2x12x2x24x10xf32> to vector<2x12x1x24x10xf32>
    %10 = vector.shape_cast %9 : vector<2x12x1x24x10xf32> to vector<2x12x24x10xf32>
    %11 = vector.extract_strided_slice %8 {offsets = [0, 0, 1, 0, 0], sizes = [2, 12, 1, 24, 10], strides = [1, 1, 1, 1, 1]} : vector<2x12x2x24x10xf32> to vector<2x12x1x24x10xf32>
    %12 = vector.shape_cast %11 : vector<2x12x1x24x10xf32> to vector<2x12x24x10xf32>
    %13 = arith.maximumf %10, %12 : vector<2x12x24x10xf32>
    %c0_6 = arith.constant 0 : index
    %c0_7 = arith.constant 0 : index
    %c0_8 = arith.constant 0 : index
    %c0_9 = arith.constant 0 : index
    %14 = vector.load %arg7[%c0_6, %c0_7, %c0_8, %c0_9] : memref<2x12x24x10xf32, #tpu.memory_space<vmem>>, vector<2x12x24x10xf32>
    tpu.vector_store %arg7[%c0_6, %c0_7, %c0_8, %c0_9], %13 {strides = array<i32>} : memref<2x12x24x10xf32, #tpu.memory_space<vmem>>, vector<2x12x24x10xf32>,
    %c0_10 = arith.constant 0 : index
    %c0_11 = arith.constant 0 : index
    %c0_12 = arith.constant 0 : index
    %c0_13 = arith.constant 0 : index
    %15 = tpu.strided_load %arg7[%c0_10, %c0_11, %c0_12, %c0_13] {strides = array<i32: 1, 1, 2, 1>} : memref<2x12x24x10xf32, #tpu.memory_space<vmem>>, vector<2x12x12x10xf32>
    %c0_14 = arith.constant 0 : index
    %c0_15 = arith.constant 0 : index
    %c1 = arith.constant 1 : index
    %c0_16 = arith.constant 0 : index
    %16 = tpu.strided_load %arg7[%c0_14, %c0_15, %c1, %c0_16] {strides = array<i32: 1, 1, 2, 1>} : memref<2x12x24x10xf32, #tpu.memory_space<vmem>>, vector<2x12x12x10xf32>
    %17 = arith.maximumf %15, %16 : vector<2x12x12x10xf32>
    %cst_17 = arith.constant 0.000000e+00 : f32
    %18 = vector.broadcast %cst_17 : f32 to vector<128x20xf32>
    %19 = vector.extract_strided_slice %17 {offsets = [0, 0, 0, 0], sizes = [2, 8, 8, 10], strides = [1, 1, 1, 1]} : vector<2x12x12x10xf32> to vector<2x8x8x10xf32>
    %20 = vector.shape_cast %19 : vector<2x8x8x10xf32> to vector<128x10xf32>
    %21 = arith.truncf %20 : vector<128x10xf32> to vector<128x10xbf16>
    %c0_18 = arith.constant 0 : index
    %c0_19 = arith.constant 0 : index
    %c0_20 = arith.constant 0 : index
    %22 = vector.load %arg4[%c0_18, %c0_19, %c0_20] : memref<25x10x20xbf16, #tpu.memory_space<vmem>>, vector<1x10x20xbf16>
    %23 = vector.shape_cast %22 : vector<1x10x20xbf16> to vector<10x20xbf16>
    %cst_21 = arith.constant dense<0.000000e+00> : vector<128x20xf32>
    %24 = tpu.matmul %21, %23, %cst_21 {dimension_numbers = #tpu.dot_dimension_numbers<[1], [0], [0], [1], [0, 0, 1, 1], [], []>} : vector<128x10xbf16>, vector<10x20xbf16>, vector<128x20xf32> -> vector<128x20xf32>
    %25 = arith.addf %18, %24 : vector<128x20xf32>
    %26 = vector.extract_strided_slice %17 {offsets = [0, 0, 1, 0], sizes = [2, 8, 8, 10], strides = [1, 1, 1, 1]} : vector<2x12x12x10xf32> to vector<2x8x8x10xf32>
    %27 = vector.shape_cast %26 : vector<2x8x8x10xf32> to vector<128x10xf32>
    %28 = arith.truncf %27 : vector<128x10xf32> to vector<128x10xbf16>
    %c1_22 = arith.constant 1 : index
    %c0_23 = arith.constant 0 : index
    %c0_24 = arith.constant 0 : index
    %29 = vector.load %arg4[%c1_22, %c0_23, %c0_24] : memref<25x10x20xbf16, #tpu.memory_space<vmem>>, vector<1x10x20xbf16>
    %30 = vector.shape_cast %29 : vector<1x10x20xbf16> to vector<10x20xbf16>
    %cst_25 = arith.constant dense<0.000000e+00> : vector<128x20xf32>
    %31 = tpu.matmul %28, %30, %cst_25 {dimension_numbers = #tpu.dot_dimension_numbers<[1], [0], [0], [1], [0, 0, 1, 1], [], []>} : vector<128x10xbf16>, vector<10x20xbf16>, vector<128x20xf32> -> vector<128x20xf32>
    %32 = arith.addf %25, %31 : vector<128x20xf32>
    %33 = vector.extract_strided_slice %17 {offsets = [0, 0, 2, 0], sizes = [2, 8, 8, 10], strides = [1, 1, 1, 1]} : vector<2x12x12x10xf32> to vector<2x8x8x10xf32>
    %34 = vector.shape_cast %33 : vector<2x8x8x10xf32> to vector<128x10xf32>
    %35 = arith.truncf %34 : vector<128x10xf32> to vector<128x10xbf16>
    %c2 = arith.constant 2 : index
    %c0_26 = arith.constant 0 : index
    %c0_27 = arith.constant 0 : index
    %36 = vector.load %arg4[%c2, %c0_26, %c0_27] : memref<25x10x20xbf16, #tpu.memory_space<vmem>>, vector<1x10x20xbf16>
    %37 = vector.shape_cast %36 : vector<1x10x20xbf16> to vector<10x20xbf16>
    %cst_28 = arith.constant dense<0.000000e+00> : vector<128x20xf32>
    %38 = tpu.matmul %35, %37, %cst_28 {dimension_numbers = #tpu.dot_dimension_numbers<[1], [0], [0], [1], [0, 0, 1, 1], [], []>} : vector<128x10xbf16>, vector<10x20xbf16>, vector<128x20xf32> -> vector<128x20xf32>
    %39 = arith.addf %32, %38 : vector<128x20xf32>
    %40 = vector.extract_strided_slice %17 {offsets = [0, 0, 3, 0], sizes = [2, 8, 8, 10], strides = [1, 1, 1, 1]} : vector<2x12x12x10xf32> to vector<2x8x8x10xf32>
    %41 = vector.shape_cast %40 : vector<2x8x8x10xf32> to vector<128x10xf32>
    %42 = arith.truncf %41 : vector<128x10xf32> to vector<128x10xbf16>
    %c3 = arith.constant 3 : index
    %c0_29 = arith.constant 0 : index
    %c0_30 = arith.constant 0 : index
    %43 = vector.load %arg4[%c3, %c0_29, %c0_30] : memref<25x10x20xbf16, #tpu.memory_space<vmem>>, vector<1x10x20xbf16>
    %44 = vector.shape_cast %43 : vector<1x10x20xbf16> to vector<10x20xbf16>
    %cst_31 = arith.constant dense<0.000000e+00> : vector<128x20xf32>
    %45 = tpu.matmul %42, %44, %cst_31 {dimension_numbers = #tpu.dot_dimension_numbers<[1], [0], [0], [1], [0, 0, 1, 1], [], []>} : vector<128x10xbf16>, vector<10x20xbf16>, vector<128x20xf32> -> vector<128x20xf32>
    %46 = arith.addf %39, %45 : vector<128x20xf32>
    %47 = vector.extract_strided_slice %17 {offsets = [0, 0, 4, 0], sizes = [2, 8, 8, 10], strides = [1, 1, 1, 1]} : vector<2x12x12x10xf32> to vector<2x8x8x10xf32>
    %48 = vector.shape_cast %47 : vector<2x8x8x10xf32> to vector<128x10xf32>
    %49 = arith.truncf %48 : vector<128x10xf32> to vector<128x10xbf16>
    %c4 = arith.constant 4 : index
    %c0_32 = arith.constant 0 : index
    %c0_33 = arith.constant 0 : index
    %50 = vector.load %arg4[%c4, %c0_32, %c0_33] : memref<25x10x20xbf16, #tpu.memory_space<vmem>>, vector<1x10x20xbf16>
    %51 = vector.shape_cast %50 : vector<1x10x20xbf16> to vector<10x20xbf16>
    %cst_34 = arith.constant dense<0.000000e+00> : vector<128x20xf32>
    %52 = tpu.matmul %49, %51, %cst_34 {dimension_numbers = #tpu.dot_dimension_numbers<[1], [0], [0], [1], [0, 0, 1, 1], [], []>} : vector<128x10xbf16>, vector<10x20xbf16>, vector<128x20xf32> -> vector<128x20xf32>
    %53 = arith.addf %46, %52 : vector<128x20xf32>
    %54 = vector.extract_strided_slice %17 {offsets = [0, 1, 0, 0], sizes = [2, 8, 8, 10], strides = [1, 1, 1, 1]} : vector<2x12x12x10xf32> to vector<2x8x8x10xf32>
    %55 = vector.shape_cast %54 : vector<2x8x8x10xf32> to vector<128x10xf32>
    %56 = arith.truncf %55 : vector<128x10xf32> to vector<128x10xbf16>
    %c5 = arith.constant 5 : index
    %c0_35 = arith.constant 0 : index
    %c0_36 = arith.constant 0 : index
    %57 = vector.load %arg4[%c5, %c0_35, %c0_36] : memref<25x10x20xbf16, #tpu.memory_space<vmem>>, vector<1x10x20xbf16>
    %58 = vector.shape_cast %57 : vector<1x10x20xbf16> to vector<10x20xbf16>
    %cst_37 = arith.constant dense<0.000000e+00> : vector<128x20xf32>
    %59 = tpu.matmul %56, %58, %cst_37 {dimension_numbers = #tpu.dot_dimension_numbers<[1], [0], [0], [1], [0, 0, 1, 1], [], []>} : vector<128x10xbf16>, vector<10x20xbf16>, vector<128x20xf32> -> vector<128x20xf32>
    %60 = arith.addf %53, %59 : vector<128x20xf32>
    %61 = vector.extract_strided_slice %17 {offsets = [0, 1, 1, 0], sizes = [2, 8, 8, 10], strides = [1, 1, 1, 1]} : vector<2x12x12x10xf32> to vector<2x8x8x10xf32>
    %62 = vector.shape_cast %61 : vector<2x8x8x10xf32> to vector<128x10xf32>
    %63 = arith.truncf %62 : vector<128x10xf32> to vector<128x10xbf16>
    %c6 = arith.constant 6 : index
    %c0_38 = arith.constant 0 : index
    %c0_39 = arith.constant 0 : index
    %64 = vector.load %arg4[%c6, %c0_38, %c0_39] : memref<25x10x20xbf16, #tpu.memory_space<vmem>>, vector<1x10x20xbf16>
    %65 = vector.shape_cast %64 : vector<1x10x20xbf16> to vector<10x20xbf16>
    %cst_40 = arith.constant dense<0.000000e+00> : vector<128x20xf32>
    %66 = tpu.matmul %63, %65, %cst_40 {dimension_numbers = #tpu.dot_dimension_numbers<[1], [0], [0], [1], [0, 0, 1, 1], [], []>} : vector<128x10xbf16>, vector<10x20xbf16>, vector<128x20xf32> -> vector<128x20xf32>
    %67 = arith.addf %60, %66 : vector<128x20xf32>
    %68 = vector.extract_strided_slice %17 {offsets = [0, 1, 2, 0], sizes = [2, 8, 8, 10], strides = [1, 1, 1, 1]} : vector<2x12x12x10xf32> to vector<2x8x8x10xf32>
    %69 = vector.shape_cast %68 : vector<2x8x8x10xf32> to vector<128x10xf32>
    %70 = arith.truncf %69 : vector<128x10xf32> to vector<128x10xbf16>
    %c7 = arith.constant 7 : index
    %c0_41 = arith.constant 0 : index
    %c0_42 = arith.constant 0 : index
    %71 = vector.load %arg4[%c7, %c0_41, %c0_42] : memref<25x10x20xbf16, #tpu.memory_space<vmem>>, vector<1x10x20xbf16>
    %72 = vector.shape_cast %71 : vector<1x10x20xbf16> to vector<10x20xbf16>
    %cst_43 = arith.constant dense<0.000000e+00> : vector<128x20xf32>
    %73 = tpu.matmul %70, %72, %cst_43 {dimension_numbers = #tpu.dot_dimension_numbers<[1], [0], [0], [1], [0, 0, 1, 1], [], []>} : vector<128x10xbf16>, vector<10x20xbf16>, vector<128x20xf32> -> vector<128x20xf32>
    %74 = arith.addf %67, %73 : vector<128x20xf32>
    %75 = vector.extract_strided_slice %17 {offsets = [0, 1, 3, 0], sizes = [2, 8, 8, 10], strides = [1, 1, 1, 1]} : vector<2x12x12x10xf32> to vector<2x8x8x10xf32>
    %76 = vector.shape_cast %75 : vector<2x8x8x10xf32> to vector<128x10xf32>
    %77 = arith.truncf %76 : vector<128x10xf32> to vector<128x10xbf16>
    %c8 = arith.constant 8 : index
    %c0_44 = arith.constant 0 : index
    %c0_45 = arith.constant 0 : index
    %78 = vector.load %arg4[%c8, %c0_44, %c0_45] : memref<25x10x20xbf16, #tpu.memory_space<vmem>>, vector<1x10x20xbf16>
    %79 = vector.shape_cast %78 : vector<1x10x20xbf16> to vector<10x20xbf16>
    %cst_46 = arith.constant dense<0.000000e+00> : vector<128x20xf32>
    %80 = tpu.matmul %77, %79, %cst_46 {dimension_numbers = #tpu.dot_dimension_numbers<[1], [0], [0], [1], [0, 0, 1, 1], [], []>} : vector<128x10xbf16>, vector<10x20xbf16>, vector<128x20xf32> -> vector<128x20xf32>
    %81 = arith.addf %74, %80 : vector<128x20xf32>
    %82 = vector.extract_strided_slice %17 {offsets = [0, 1, 4, 0], sizes = [2, 8, 8, 10], strides = [1, 1, 1, 1]} : vector<2x12x12x10xf32> to vector<2x8x8x10xf32>
    %83 = vector.shape_cast %82 : vector<2x8x8x10xf32> to vector<128x10xf32>
    %84 = arith.truncf %83 : vector<128x10xf32> to vector<128x10xbf16>
    %c9 = arith.constant 9 : index
    %c0_47 = arith.constant 0 : index
    %c0_48 = arith.constant 0 : index
    %85 = vector.load %arg4[%c9, %c0_47, %c0_48] : memref<25x10x20xbf16, #tpu.memory_space<vmem>>, vector<1x10x20xbf16>
    %86 = vector.shape_cast %85 : vector<1x10x20xbf16> to vector<10x20xbf16>
    %cst_49 = arith.constant dense<0.000000e+00> : vector<128x20xf32>
    %87 = tpu.matmul %84, %86, %cst_49 {dimension_numbers = #tpu.dot_dimension_numbers<[1], [0], [0], [1], [0, 0, 1, 1], [], []>} : vector<128x10xbf16>, vector<10x20xbf16>, vector<128x20xf32> -> vector<128x20xf32>
    %88 = arith.addf %81, %87 : vector<128x20xf32>
    %89 = vector.extract_strided_slice %17 {offsets = [0, 2, 0, 0], sizes = [2, 8, 8, 10], strides = [1, 1, 1, 1]} : vector<2x12x12x10xf32> to vector<2x8x8x10xf32>
    %90 = vector.shape_cast %89 : vector<2x8x8x10xf32> to vector<128x10xf32>
    %91 = arith.truncf %90 : vector<128x10xf32> to vector<128x10xbf16>
    %c10 = arith.constant 10 : index
    %c0_50 = arith.constant 0 : index
    %c0_51 = arith.constant 0 : index
    %92 = vector.load %arg4[%c10, %c0_50, %c0_51] : memref<25x10x20xbf16, #tpu.memory_space<vmem>>, vector<1x10x20xbf16>
    %93 = vector.shape_cast %92 : vector<1x10x20xbf16> to vector<10x20xbf16>
    %cst_52 = arith.constant dense<0.000000e+00> : vector<128x20xf32>
    %94 = tpu.matmul %91, %93, %cst_52 {dimension_numbers = #tpu.dot_dimension_numbers<[1], [0], [0], [1], [0, 0, 1, 1], [], []>} : vector<128x10xbf16>, vector<10x20xbf16>, vector<128x20xf32> -> vector<128x20xf32>
    %95 = arith.addf %88, %94 : vector<128x20xf32>
    %96 = vector.extract_strided_slice %17 {offsets = [0, 2, 1, 0], sizes = [2, 8, 8, 10], strides = [1, 1, 1, 1]} : vector<2x12x12x10xf32> to vector<2x8x8x10xf32>
    %97 = vector.shape_cast %96 : vector<2x8x8x10xf32> to vector<128x10xf32>
    %98 = arith.truncf %97 : vector<128x10xf32> to vector<128x10xbf16>
    %c11 = arith.constant 11 : index
    %c0_53 = arith.constant 0 : index
    %c0_54 = arith.constant 0 : index
    %99 = vector.load %arg4[%c11, %c0_53, %c0_54] : memref<25x10x20xbf16, #tpu.memory_space<vmem>>, vector<1x10x20xbf16>
    %100 = vector.shape_cast %99 : vector<1x10x20xbf16> to vector<10x20xbf16>
    %cst_55 = arith.constant dense<0.000000e+00> : vector<128x20xf32>
    %101 = tpu.matmul %98, %100, %cst_55 {dimension_numbers = #tpu.dot_dimension_numbers<[1], [0], [0], [1], [0, 0, 1, 1], [], []>} : vector<128x10xbf16>, vector<10x20xbf16>, vector<128x20xf32> -> vector<128x20xf32>
    %102 = arith.addf %95, %101 : vector<128x20xf32>
    %103 = vector.extract_strided_slice %17 {offsets = [0, 2, 2, 0], sizes = [2, 8, 8, 10], strides = [1, 1, 1, 1]} : vector<2x12x12x10xf32> to vector<2x8x8x10xf32>
    %104 = vector.shape_cast %103 : vector<2x8x8x10xf32> to vector<128x10xf32>
    %105 = arith.truncf %104 : vector<128x10xf32> to vector<128x10xbf16>
    %c12 = arith.constant 12 : index
    %c0_56 = arith.constant 0 : index
    %c0_57 = arith.constant 0 : index
    %106 = vector.load %arg4[%c12, %c0_56, %c0_57] : memref<25x10x20xbf16, #tpu.memory_space<vmem>>, vector<1x10x20xbf16>
    %107 = vector.shape_cast %106 : vector<1x10x20xbf16> to vector<10x20xbf16>
    %cst_58 = arith.constant dense<0.000000e+00> : vector<128x20xf32>
    %108 = tpu.matmul %105, %107, %cst_58 {dimension_numbers = #tpu.dot_dimension_numbers<[1], [0], [0], [1], [0, 0, 1, 1], [], []>} : vector<128x10xbf16>, vector<10x20xbf16>, vector<128x20xf32> -> vector<128x20xf32>
    %109 = arith.addf %102, %108 : vector<128x20xf32>
    %110 = vector.extract_strided_slice %17 {offsets = [0, 2, 3, 0], sizes = [2, 8, 8, 10], strides = [1, 1, 1, 1]} : vector<2x12x12x10xf32> to vector<2x8x8x10xf32>
    %111 = vector.shape_cast %110 : vector<2x8x8x10xf32> to vector<128x10xf32>
    %112 = arith.truncf %111 : vector<128x10xf32> to vector<128x10xbf16>
    %c13 = arith.constant 13 : index
    %c0_59 = arith.constant 0 : index
    %c0_60 = arith.constant 0 : index
    %113 = vector.load %arg4[%c13, %c0_59, %c0_60] : memref<25x10x20xbf16, #tpu.memory_space<vmem>>, vector<1x10x20xbf16>
    %114 = vector.shape_cast %113 : vector<1x10x20xbf16> to vector<10x20xbf16>
    %cst_61 = arith.constant dense<0.000000e+00> : vector<128x20xf32>
    %115 = tpu.matmul %112, %114, %cst_61 {dimension_numbers = #tpu.dot_dimension_numbers<[1], [0], [0], [1], [0, 0, 1, 1], [], []>} : vector<128x10xbf16>, vector<10x20xbf16>, vector<128x20xf32> -> vector<128x20xf32>
    %116 = arith.addf %109, %115 : vector<128x20xf32>
    %117 = vector.extract_strided_slice %17 {offsets = [0, 2, 4, 0], sizes = [2, 8, 8, 10], strides = [1, 1, 1, 1]} : vector<2x12x12x10xf32> to vector<2x8x8x10xf32>
    %118 = vector.shape_cast %117 : vector<2x8x8x10xf32> to vector<128x10xf32>
    %119 = arith.truncf %118 : vector<128x10xf32> to vector<128x10xbf16>
    %c14 = arith.constant 14 : index
    %c0_62 = arith.constant 0 : index
    %c0_63 = arith.constant 0 : index
    %120 = vector.load %arg4[%c14, %c0_62, %c0_63] : memref<25x10x20xbf16, #tpu.memory_space<vmem>>, vector<1x10x20xbf16>
    %121 = vector.shape_cast %120 : vector<1x10x20xbf16> to vector<10x20xbf16>
    %cst_64 = arith.constant dense<0.000000e+00> : vector<128x20xf32>
    %122 = tpu.matmul %119, %121, %cst_64 {dimension_numbers = #tpu.dot_dimension_numbers<[1], [0], [0], [1], [0, 0, 1, 1], [], []>} : vector<128x10xbf16>, vector<10x20xbf16>, vector<128x20xf32> -> vector<128x20xf32>
    %123 = arith.addf %116, %122 : vector<128x20xf32>
    %124 = vector.extract_strided_slice %17 {offsets = [0, 3, 0, 0], sizes = [2, 8, 8, 10], strides = [1, 1, 1, 1]} : vector<2x12x12x10xf32> to vector<2x8x8x10xf32>
    %125 = vector.shape_cast %124 : vector<2x8x8x10xf32> to vector<128x10xf32>
    %126 = arith.truncf %125 : vector<128x10xf32> to vector<128x10xbf16>
    %c15 = arith.constant 15 : index
    %c0_65 = arith.constant 0 : index
    %c0_66 = arith.constant 0 : index
    %127 = vector.load %arg4[%c15, %c0_65, %c0_66] : memref<25x10x20xbf16, #tpu.memory_space<vmem>>, vector<1x10x20xbf16>
    %128 = vector.shape_cast %127 : vector<1x10x20xbf16> to vector<10x20xbf16>
    %cst_67 = arith.constant dense<0.000000e+00> : vector<128x20xf32>
    %129 = tpu.matmul %126, %128, %cst_67 {dimension_numbers = #tpu.dot_dimension_numbers<[1], [0], [0], [1], [0, 0, 1, 1], [], []>} : vector<128x10xbf16>, vector<10x20xbf16>, vector<128x20xf32> -> vector<128x20xf32>
    %130 = arith.addf %123, %129 : vector<128x20xf32>
    %131 = vector.extract_strided_slice %17 {offsets = [0, 3, 1, 0], sizes = [2, 8, 8, 10], strides = [1, 1, 1, 1]} : vector<2x12x12x10xf32> to vector<2x8x8x10xf32>
    %132 = vector.shape_cast %131 : vector<2x8x8x10xf32> to vector<128x10xf32>
    %133 = arith.truncf %132 : vector<128x10xf32> to vector<128x10xbf16>
    %c16 = arith.constant 16 : index
    %c0_68 = arith.constant 0 : index
    %c0_69 = arith.constant 0 : index
    %134 = vector.load %arg4[%c16, %c0_68, %c0_69] : memref<25x10x20xbf16, #tpu.memory_space<vmem>>, vector<1x10x20xbf16>
    %135 = vector.shape_cast %134 : vector<1x10x20xbf16> to vector<10x20xbf16>
    %cst_70 = arith.constant dense<0.000000e+00> : vector<128x20xf32>
    %136 = tpu.matmul %133, %135, %cst_70 {dimension_numbers = #tpu.dot_dimension_numbers<[1], [0], [0], [1], [0, 0, 1, 1], [], []>} : vector<128x10xbf16>, vector<10x20xbf16>, vector<128x20xf32> -> vector<128x20xf32>
    %137 = arith.addf %130, %136 : vector<128x20xf32>
    %138 = vector.extract_strided_slice %17 {offsets = [0, 3, 2, 0], sizes = [2, 8, 8, 10], strides = [1, 1, 1, 1]} : vector<2x12x12x10xf32> to vector<2x8x8x10xf32>
    %139 = vector.shape_cast %138 : vector<2x8x8x10xf32> to vector<128x10xf32>
    %140 = arith.truncf %139 : vector<128x10xf32> to vector<128x10xbf16>
    %c17 = arith.constant 17 : index
    %c0_71 = arith.constant 0 : index
    %c0_72 = arith.constant 0 : index
    %141 = vector.load %arg4[%c17, %c0_71, %c0_72] : memref<25x10x20xbf16, #tpu.memory_space<vmem>>, vector<1x10x20xbf16>
    %142 = vector.shape_cast %141 : vector<1x10x20xbf16> to vector<10x20xbf16>
    %cst_73 = arith.constant dense<0.000000e+00> : vector<128x20xf32>
    %143 = tpu.matmul %140, %142, %cst_73 {dimension_numbers = #tpu.dot_dimension_numbers<[1], [0], [0], [1], [0, 0, 1, 1], [], []>} : vector<128x10xbf16>, vector<10x20xbf16>, vector<128x20xf32> -> vector<128x20xf32>
    %144 = arith.addf %137, %143 : vector<128x20xf32>
    %145 = vector.extract_strided_slice %17 {offsets = [0, 3, 3, 0], sizes = [2, 8, 8, 10], strides = [1, 1, 1, 1]} : vector<2x12x12x10xf32> to vector<2x8x8x10xf32>
    %146 = vector.shape_cast %145 : vector<2x8x8x10xf32> to vector<128x10xf32>
    %147 = arith.truncf %146 : vector<128x10xf32> to vector<128x10xbf16>
    %c18 = arith.constant 18 : index
    %c0_74 = arith.constant 0 : index
    %c0_75 = arith.constant 0 : index
    %148 = vector.load %arg4[%c18, %c0_74, %c0_75] : memref<25x10x20xbf16, #tpu.memory_space<vmem>>, vector<1x10x20xbf16>
    %149 = vector.shape_cast %148 : vector<1x10x20xbf16> to vector<10x20xbf16>
    %cst_76 = arith.constant dense<0.000000e+00> : vector<128x20xf32>
    %150 = tpu.matmul %147, %149, %cst_76 {dimension_numbers = #tpu.dot_dimension_numbers<[1], [0], [0], [1], [0, 0, 1, 1], [], []>} : vector<128x10xbf16>, vector<10x20xbf16>, vector<128x20xf32> -> vector<128x20xf32>
    %151 = arith.addf %144, %150 : vector<128x20xf32>
    %152 = vector.extract_strided_slice %17 {offsets = [0, 3, 4, 0], sizes = [2, 8, 8, 10], strides = [1, 1, 1, 1]} : vector<2x12x12x10xf32> to vector<2x8x8x10xf32>
    %153 = vector.shape_cast %152 : vector<2x8x8x10xf32> to vector<128x10xf32>
    %154 = arith.truncf %153 : vector<128x10xf32> to vector<128x10xbf16>
    %c19 = arith.constant 19 : index
    %c0_77 = arith.constant 0 : index
    %c0_78 = arith.constant 0 : index
    %155 = vector.load %arg4[%c19, %c0_77, %c0_78] : memref<25x10x20xbf16, #tpu.memory_space<vmem>>, vector<1x10x20xbf16>
    %156 = vector.shape_cast %155 : vector<1x10x20xbf16> to vector<10x20xbf16>
    %cst_79 = arith.constant dense<0.000000e+00> : vector<128x20xf32>
    %157 = tpu.matmul %154, %156, %cst_79 {dimension_numbers = #tpu.dot_dimension_numbers<[1], [0], [0], [1], [0, 0, 1, 1], [], []>} : vector<128x10xbf16>, vector<10x20xbf16>, vector<128x20xf32> -> vector<128x20xf32>
    %158 = arith.addf %151, %157 : vector<128x20xf32>
    %159 = vector.extract_strided_slice %17 {offsets = [0, 4, 0, 0], sizes = [2, 8, 8, 10], strides = [1, 1, 1, 1]} : vector<2x12x12x10xf32> to vector<2x8x8x10xf32>
    %160 = vector.shape_cast %159 : vector<2x8x8x10xf32> to vector<128x10xf32>
    %161 = arith.truncf %160 : vector<128x10xf32> to vector<128x10xbf16>
    %c20 = arith.constant 20 : index
    %c0_80 = arith.constant 0 : index
    %c0_81 = arith.constant 0 : index
    %162 = vector.load %arg4[%c20, %c0_80, %c0_81] : memref<25x10x20xbf16, #tpu.memory_space<vmem>>, vector<1x10x20xbf16>
    %163 = vector.shape_cast %162 : vector<1x10x20xbf16> to vector<10x20xbf16>
    %cst_82 = arith.constant dense<0.000000e+00> : vector<128x20xf32>
    %164 = tpu.matmul %161, %163, %cst_82 {dimension_numbers = #tpu.dot_dimension_numbers<[1], [0], [0], [1], [0, 0, 1, 1], [], []>} : vector<128x10xbf16>, vector<10x20xbf16>, vector<128x20xf32> -> vector<128x20xf32>
    %165 = arith.addf %158, %164 : vector<128x20xf32>
    %166 = vector.extract_strided_slice %17 {offsets = [0, 4, 1, 0], sizes = [2, 8, 8, 10], strides = [1, 1, 1, 1]} : vector<2x12x12x10xf32> to vector<2x8x8x10xf32>
    %167 = vector.shape_cast %166 : vector<2x8x8x10xf32> to vector<128x10xf32>
    %168 = arith.truncf %167 : vector<128x10xf32> to vector<128x10xbf16>
    %c21 = arith.constant 21 : index
    %c0_83 = arith.constant 0 : index
    %c0_84 = arith.constant 0 : index
    %169 = vector.load %arg4[%c21, %c0_83, %c0_84] : memref<25x10x20xbf16, #tpu.memory_space<vmem>>, vector<1x10x20xbf16>
    %170 = vector.shape_cast %169 : vector<1x10x20xbf16> to vector<10x20xbf16>
    %cst_85 = arith.constant dense<0.000000e+00> : vector<128x20xf32>
    %171 = tpu.matmul %168, %170, %cst_85 {dimension_numbers = #tpu.dot_dimension_numbers<[1], [0], [0], [1], [0, 0, 1, 1], [], []>} : vector<128x10xbf16>, vector<10x20xbf16>, vector<128x20xf32> -> vector<128x20xf32>
    %172 = arith.addf %165, %171 : vector<128x20xf32>
    %173 = vector.extract_strided_slice %17 {offsets = [0, 4, 2, 0], sizes = [2, 8, 8, 10], strides = [1, 1, 1, 1]} : vector<2x12x12x10xf32> to vector<2x8x8x10xf32>
    %174 = vector.shape_cast %173 : vector<2x8x8x10xf32> to vector<128x10xf32>
    %175 = arith.truncf %174 : vector<128x10xf32> to vector<128x10xbf16>
    %c22 = arith.constant 22 : index
    %c0_86 = arith.constant 0 : index
    %c0_87 = arith.constant 0 : index
    %176 = vector.load %arg4[%c22, %c0_86, %c0_87] : memref<25x10x20xbf16, #tpu.memory_space<vmem>>, vector<1x10x20xbf16>
    %177 = vector.shape_cast %176 : vector<1x10x20xbf16> to vector<10x20xbf16>
    %cst_88 = arith.constant dense<0.000000e+00> : vector<128x20xf32>
    %178 = tpu.matmul %175, %177, %cst_88 {dimension_numbers = #tpu.dot_dimension_numbers<[1], [0], [0], [1], [0, 0, 1, 1], [], []>} : vector<128x10xbf16>, vector<10x20xbf16>, vector<128x20xf32> -> vector<128x20xf32>
    %179 = arith.addf %172, %178 : vector<128x20xf32>
    %180 = vector.extract_strided_slice %17 {offsets = [0, 4, 3, 0], sizes = [2, 8, 8, 10], strides = [1, 1, 1, 1]} : vector<2x12x12x10xf32> to vector<2x8x8x10xf32>
    %181 = vector.shape_cast %180 : vector<2x8x8x10xf32> to vector<128x10xf32>
    %182 = arith.truncf %181 : vector<128x10xf32> to vector<128x10xbf16>
    %c23 = arith.constant 23 : index
    %c0_89 = arith.constant 0 : index
    %c0_90 = arith.constant 0 : index
    %183 = vector.load %arg4[%c23, %c0_89, %c0_90] : memref<25x10x20xbf16, #tpu.memory_space<vmem>>, vector<1x10x20xbf16>
    %184 = vector.shape_cast %183 : vector<1x10x20xbf16> to vector<10x20xbf16>
    %cst_91 = arith.constant dense<0.000000e+00> : vector<128x20xf32>
    %185 = tpu.matmul %182, %184, %cst_91 {dimension_numbers = #tpu.dot_dimension_numbers<[1], [0], [0], [1], [0, 0, 1, 1], [], []>} : vector<128x10xbf16>, vector<10x20xbf16>, vector<128x20xf32> -> vector<128x20xf32>
    %186 = arith.addf %179, %185 : vector<128x20xf32>
    %187 = vector.extract_strided_slice %17 {offsets = [0, 4, 4, 0], sizes = [2, 8, 8, 10], strides = [1, 1, 1, 1]} : vector<2x12x12x10xf32> to vector<2x8x8x10xf32>
    %188 = vector.shape_cast %187 : vector<2x8x8x10xf32> to vector<128x10xf32>
    %189 = arith.truncf %188 : vector<128x10xf32> to vector<128x10xbf16>
    %c24 = arith.constant 24 : index
    %c0_92 = arith.constant 0 : index
    %c0_93 = arith.constant 0 : index
    %190 = vector.load %arg4[%c24, %c0_92, %c0_93] : memref<25x10x20xbf16, #tpu.memory_space<vmem>>, vector<1x10x20xbf16>
    %191 = vector.shape_cast %190 : vector<1x10x20xbf16> to vector<10x20xbf16>
    %cst_94 = arith.constant dense<0.000000e+00> : vector<128x20xf32>
    %192 = tpu.matmul %189, %191, %cst_94 {dimension_numbers = #tpu.dot_dimension_numbers<[1], [0], [0], [1], [0, 0, 1, 1], [], []>} : vector<128x10xbf16>, vector<10x20xbf16>, vector<128x20xf32> -> vector<128x20xf32>
    %193 = arith.addf %186, %192 : vector<128x20xf32>
    %c0_95 = arith.constant 0 : index
    %c0_96 = arith.constant 0 : index
    %194 = vector.load %arg5[%c0_95, %c0_96] : memref<1x20xf32, #tpu.memory_space<vmem>>, vector<1x20xf32>
    %195 = vector.broadcast %194 : vector<1x20xf32> to vector<128x20xf32>
    %196 = arith.addf %193, %195 : vector<128x20xf32>
    %cst_97 = arith.constant 0.000000e+00 : f32
    %197 = vector.broadcast %cst_97 : f32 to vector<128x20xf32>
    %198 = arith.maximumf %196, %197 : vector<128x20xf32>
    %199 = vector.shape_cast %198 : vector<128x20xf32> to vector<2x4x2x8x20xf32>
    %200 = vector.extract_strided_slice %199 {offsets = [0, 0, 0, 0, 0], sizes = [2, 4, 1, 8, 20], strides = [1, 1, 1, 1, 1]} : vector<2x4x2x8x20xf32> to vector<2x4x1x8x20xf32>
    %201 = vector.shape_cast %200 : vector<2x4x1x8x20xf32> to vector<2x4x8x20xf32>
    %202 = vector.extract_strided_slice %199 {offsets = [0, 0, 1, 0, 0], sizes = [2, 4, 1, 8, 20], strides = [1, 1, 1, 1, 1]} : vector<2x4x2x8x20xf32> to vector<2x4x1x8x20xf32>
    %203 = vector.shape_cast %202 : vector<2x4x1x8x20xf32> to vector<2x4x8x20xf32>
    %204 = arith.maximumf %201, %203 : vector<2x4x8x20xf32>
    %c0_98 = arith.constant 0 : index
    %c0_99 = arith.constant 0 : index
    %c0_100 = arith.constant 0 : index
    %c0_101 = arith.constant 0 : index
    %205 = vector.load %arg8[%c0_98, %c0_99, %c0_100, %c0_101] : memref<2x4x8x20xf32, #tpu.memory_space<vmem>>, vector<2x4x8x20xf32>
    tpu.vector_store %arg8[%c0_98, %c0_99, %c0_100, %c0_101], %204 {strides = array<i32>} : memref<2x4x8x20xf32, #tpu.memory_space<vmem>>, vector<2x4x8x20xf32>,
    %c0_102 = arith.constant 0 : index
    %c0_103 = arith.constant 0 : index
    %c0_104 = arith.constant 0 : index
    %c0_105 = arith.constant 0 : index
    %206 = tpu.strided_load %arg8[%c0_102, %c0_103, %c0_104, %c0_105] {strides = array<i32: 1, 1, 2, 1>} : memref<2x4x8x20xf32, #tpu.memory_space<vmem>>, vector<2x4x4x20xf32>
    %c0_106 = arith.constant 0 : index
    %c0_107 = arith.constant 0 : index
    %c1_108 = arith.constant 1 : index
    %c0_109 = arith.constant 0 : index
    %207 = tpu.strided_load %arg8[%c0_106, %c0_107, %c1_108, %c0_109] {strides = array<i32: 1, 1, 2, 1>} : memref<2x4x8x20xf32, #tpu.memory_space<vmem>>, vector<2x4x4x20xf32>
    %208 = arith.maximumf %206, %207 : vector<2x4x4x20xf32>
    %c0_110 = arith.constant 0 : index
    %c0_111 = arith.constant 0 : index
    %c0_112 = arith.constant 0 : index
    %c0_113 = arith.constant 0 : index
    %209 = vector.load %arg6[%c0_110, %c0_111, %c0_112, %c0_113] : memref<2x4x4x20xf32, #tpu.memory_space<vmem>>, vector<2x4x4x20xf32>
    tpu.vector_store %arg6[%c0_110, %c0_111, %c0_112, %c0_113], %208 {strides = array<i32>} : memref<2x4x4x20xf32, #tpu.memory_space<vmem>>, vector<2x4x4x20xf32>,
    return
  }
  func.func @transform_0(%arg0: i32) -> (i32, i32) {
    %c0_i32 = arith.constant 0 : i32
    %c0_i32_0 = arith.constant 0 : i32
    return %arg0, %c0_i32 : i32, i32
  }
  func.func @transform_1(%arg0: i32) -> (i32, i32) {
    %c0_i32 = arith.constant 0 : i32
    %c0_i32_0 = arith.constant 0 : i32
    %c0_i32_1 = arith.constant 0 : i32
    return %c0_i32, %c0_i32_0 : i32, i32
  }
  func.func @transform_2(%arg0: i32) -> (i32, i32) {
    %c0_i32 = arith.constant 0 : i32
    %c0_i32_0 = arith.constant 0 : i32
    %c0_i32_1 = arith.constant 0 : i32
    return %c0_i32, %c0_i32_0 : i32, i32
  }
  func.func @transform_3(%arg0: i32) -> (i32, i32, i32) {
    %c0_i32 = arith.constant 0 : i32
    %c0_i32_0 = arith.constant 0 : i32
    %c0_i32_1 = arith.constant 0 : i32
    %c0_i32_2 = arith.constant 0 : i32
    return %c0_i32, %c0_i32_0, %c0_i32_1 : i32, i32, i32
  }
  func.func @transform_4(%arg0: i32) -> (i32, i32) {
    %c0_i32 = arith.constant 0 : i32
    %c0_i32_0 = arith.constant 0 : i32
    %c0_i32_1 = arith.constant 0 : i32
    return %c0_i32, %c0_i32_0 : i32, i32
  }
  func.func @transform_5(%arg0: i32) -> (i32, i32, i32, i32) {
    %c0_i32 = arith.constant 0 : i32
    %c0_i32_0 = arith.constant 0 : i32
    %c0_i32_1 = arith.constant 0 : i32
    %c0_i32_2 = arith.constant 0 : i32
    return %arg0, %c0_i32, %c0_i32_0, %c0_i32_1 : i32, i32, i32, i32
  }
}

module attributes {stable_mosaic.version = 11 : i64} {
  func.func @attn_head_kernel(%arg0: i32, %arg1: memref<2x16x20xf32, #tpu.memory_space<vmem>>, %arg2: memref<20x96xf32, #tpu.memory_space<vmem>>, %arg3: memref<32x20xf32, #tpu.memory_space<vmem>>, %arg4: memref<2x20xf32, #tpu.memory_space<vmem>>, %arg5: memref<16x20x50xf32, #tpu.memory_space<vmem>>, %arg6: memref<50x10xf32, #tpu.memory_space<vmem>>, %arg7: memref<1x60xf32, #tpu.memory_space<vmem>>, %arg8: memref<2x16x20xf32, #tpu.memory_space<vmem>>, %arg9: memref<2x10xf32, #tpu.memory_space<vmem>>) attributes {dimension_semantics = [#tpu.dimension_semantics<parallel>], iteration_bounds = array<i64: 1>, scalar_prefetch = 0 : i64, scratch_operands = 0 : i64, tpu.core_type = #tpu.core_type<tc>, window_params = [{transform_indices = @transform_0, window_bounds = array<i64: 2, 16, 20>}, {pipeline_mode = #tpu.pipeline_mode<synchronous>, transform_indices = @transform_1, window_bounds = array<i64: 20, 96>}, {pipeline_mode = #tpu.pipeline_mode<synchronous>, transform_indices = @transform_2, window_bounds = array<i64: 32, 20>}, {pipeline_mode = #tpu.pipeline_mode<synchronous>, transform_indices = @transform_3, window_bounds = array<i64: 2, 20>}, {pipeline_mode = #tpu.pipeline_mode<synchronous>, transform_indices = @transform_4, window_bounds = array<i64: 16, 20, 50>}, {pipeline_mode = #tpu.pipeline_mode<synchronous>, transform_indices = @transform_5, window_bounds = array<i64: 50, 10>}, {pipeline_mode = #tpu.pipeline_mode<synchronous>, transform_indices = @transform_6, window_bounds = array<i64: 1, 60>}, {transform_indices = @transform_7, window_bounds = array<i64: 2, 16, 20>}, {transform_indices = @transform_8, window_bounds = array<i64: 2, 10>}]} {
    %c0 = arith.constant 0 : index
    %c0_0 = arith.constant 0 : index
    %c0_1 = arith.constant 0 : index
    %0 = vector.load %arg1[%c0, %c0_0, %c0_1] : memref<2x16x20xf32, #tpu.memory_space<vmem>>, vector<2x16x20xf32>
    %1 = vector.shape_cast %0 : vector<2x16x20xf32> to vector<32x20xf32>
    %c0_2 = arith.constant 0 : index
    %c0_3 = arith.constant 0 : index
    %2 = vector.load %arg2[%c0_2, %c0_3] : memref<20x96xf32, #tpu.memory_space<vmem>>, vector<20x96xf32>
    %cst = arith.constant dense<0.000000e+00> : vector<32x96xf32>
    %3 = tpu.matmul %1, %2, %cst {dimension_numbers = #tpu.dot_dimension_numbers<[1], [0], [0], [1], [0, 0, 1, 1], [], []>} : vector<32x20xf32>, vector<20x96xf32>, vector<32x96xf32> -> vector<32x96xf32>
    %4 = vector.extract_strided_slice %3 {offsets = [0, 0], sizes = [32, 8], strides = [1, 1]} : vector<32x96xf32> to vector<32x8xf32>
    %cst_4 = arith.constant 0.353553385 : f32
    %5 = vector.broadcast %cst_4 : f32 to vector<32x8xf32>
    %6 = arith.mulf %4, %5 : vector<32x8xf32>
    %7 = vector.shape_cast %6 : vector<32x8xf32> to vector<2x16x8xf32>
    %8 = vector.extract_strided_slice %3 {offsets = [0, 32], sizes = [32, 8], strides = [1, 1]} : vector<32x96xf32> to vector<32x8xf32>
    %9 = vector.shape_cast %8 : vector<32x8xf32> to vector<2x16x8xf32>
    %10 = vector.extract_strided_slice %3 {offsets = [0, 64], sizes = [32, 8], strides = [1, 1]} : vector<32x96xf32> to vector<32x8xf32>
    %11 = vector.shape_cast %10 : vector<32x8xf32> to vector<2x16x8xf32>
    %cst_5 = arith.constant dense<0.000000e+00> : vector<2x16x16xf32>
    %12 = tpu.matmul %7, %9, %cst_5 {dimension_numbers = #tpu.dot_dimension_numbers<[2], [2], [1], [1], [0, 0, 0, 1, 1, 1], [0], [0]>} : vector<2x16x8xf32>, vector<2x16x8xf32>, vector<2x16x16xf32> -> vector<2x16x16xf32>
    %cst_6 = arith.constant dense<0xFF800000> : vector<2x16xf32>
    %13 = vector.multi_reduction <maximumf>, %12, %cst_6 [2] : vector<2x16x16xf32> to vector<2x16xf32>
    %14 = vector.shape_cast %13 : vector<2x16xf32> to vector<2x16x1xf32>
    %15 = vector.broadcast %14 : vector<2x16x1xf32> to vector<2x16x16xf32>
    %16 = arith.subf %12, %15 : vector<2x16x16xf32>
    %17 = math.exp %16 : vector<2x16x16xf32>
    %cst_7 = arith.constant dense<0.000000e+00> : vector<2x16xf32>
    %18 = vector.multi_reduction <add>, %17, %cst_7 [2] : vector<2x16x16xf32> to vector<2x16xf32>
    %19 = vector.shape_cast %18 : vector<2x16xf32> to vector<2x16x1xf32>
    %20 = vector.broadcast %19 : vector<2x16x1xf32> to vector<2x16x16xf32>
    %21 = arith.divf %17, %20 : vector<2x16x16xf32>
    %cst_8 = arith.constant dense<0.000000e+00> : vector<2x16x8xf32>
    %22 = tpu.matmul %21, %11, %cst_8 {dimension_numbers = #tpu.dot_dimension_numbers<[2], [1], [1], [2], [0, 0, 0, 1, 1, 2], [0], [0]>} : vector<2x16x16xf32>, vector<2x16x8xf32>, vector<2x16x8xf32> -> vector<2x16x8xf32>
    %23 = vector.extract_strided_slice %3 {offsets = [0, 8], sizes = [32, 8], strides = [1, 1]} : vector<32x96xf32> to vector<32x8xf32>
    %cst_9 = arith.constant 0.353553385 : f32
    %24 = vector.broadcast %cst_9 : f32 to vector<32x8xf32>
    %25 = arith.mulf %23, %24 : vector<32x8xf32>
    %26 = vector.shape_cast %25 : vector<32x8xf32> to vector<2x16x8xf32>
    %27 = vector.extract_strided_slice %3 {offsets = [0, 40], sizes = [32, 8], strides = [1, 1]} : vector<32x96xf32> to vector<32x8xf32>
    %28 = vector.shape_cast %27 : vector<32x8xf32> to vector<2x16x8xf32>
    %29 = vector.extract_strided_slice %3 {offsets = [0, 72], sizes = [32, 8], strides = [1, 1]} : vector<32x96xf32> to vector<32x8xf32>
    %30 = vector.shape_cast %29 : vector<32x8xf32> to vector<2x16x8xf32>
    %cst_10 = arith.constant dense<0.000000e+00> : vector<2x16x16xf32>
    %31 = tpu.matmul %26, %28, %cst_10 {dimension_numbers = #tpu.dot_dimension_numbers<[2], [2], [1], [1], [0, 0, 0, 1, 1, 1], [0], [0]>} : vector<2x16x8xf32>, vector<2x16x8xf32>, vector<2x16x16xf32> -> vector<2x16x16xf32>
    %cst_11 = arith.constant dense<0xFF800000> : vector<2x16xf32>
    %32 = vector.multi_reduction <maximumf>, %31, %cst_11 [2] : vector<2x16x16xf32> to vector<2x16xf32>
    %33 = vector.shape_cast %32 : vector<2x16xf32> to vector<2x16x1xf32>
    %34 = vector.broadcast %33 : vector<2x16x1xf32> to vector<2x16x16xf32>
    %35 = arith.subf %31, %34 : vector<2x16x16xf32>
    %36 = math.exp %35 : vector<2x16x16xf32>
    %cst_12 = arith.constant dense<0.000000e+00> : vector<2x16xf32>
    %37 = vector.multi_reduction <add>, %36, %cst_12 [2] : vector<2x16x16xf32> to vector<2x16xf32>
    %38 = vector.shape_cast %37 : vector<2x16xf32> to vector<2x16x1xf32>
    %39 = vector.broadcast %38 : vector<2x16x1xf32> to vector<2x16x16xf32>
    %40 = arith.divf %36, %39 : vector<2x16x16xf32>
    %cst_13 = arith.constant dense<0.000000e+00> : vector<2x16x8xf32>
    %41 = tpu.matmul %40, %30, %cst_13 {dimension_numbers = #tpu.dot_dimension_numbers<[2], [1], [1], [2], [0, 0, 0, 1, 1, 2], [0], [0]>} : vector<2x16x16xf32>, vector<2x16x8xf32>, vector<2x16x8xf32> -> vector<2x16x8xf32>
    %42 = vector.extract_strided_slice %3 {offsets = [0, 16], sizes = [32, 8], strides = [1, 1]} : vector<32x96xf32> to vector<32x8xf32>
    %cst_14 = arith.constant 0.353553385 : f32
    %43 = vector.broadcast %cst_14 : f32 to vector<32x8xf32>
    %44 = arith.mulf %42, %43 : vector<32x8xf32>
    %45 = vector.shape_cast %44 : vector<32x8xf32> to vector<2x16x8xf32>
    %46 = vector.extract_strided_slice %3 {offsets = [0, 48], sizes = [32, 8], strides = [1, 1]} : vector<32x96xf32> to vector<32x8xf32>
    %47 = vector.shape_cast %46 : vector<32x8xf32> to vector<2x16x8xf32>
    %48 = vector.extract_strided_slice %3 {offsets = [0, 80], sizes = [32, 8], strides = [1, 1]} : vector<32x96xf32> to vector<32x8xf32>
    %49 = vector.shape_cast %48 : vector<32x8xf32> to vector<2x16x8xf32>
    %cst_15 = arith.constant dense<0.000000e+00> : vector<2x16x16xf32>
    %50 = tpu.matmul %45, %47, %cst_15 {dimension_numbers = #tpu.dot_dimension_numbers<[2], [2], [1], [1], [0, 0, 0, 1, 1, 1], [0], [0]>} : vector<2x16x8xf32>, vector<2x16x8xf32>, vector<2x16x16xf32> -> vector<2x16x16xf32>
    %cst_16 = arith.constant dense<0xFF800000> : vector<2x16xf32>
    %51 = vector.multi_reduction <maximumf>, %50, %cst_16 [2] : vector<2x16x16xf32> to vector<2x16xf32>
    %52 = vector.shape_cast %51 : vector<2x16xf32> to vector<2x16x1xf32>
    %53 = vector.broadcast %52 : vector<2x16x1xf32> to vector<2x16x16xf32>
    %54 = arith.subf %50, %53 : vector<2x16x16xf32>
    %55 = math.exp %54 : vector<2x16x16xf32>
    %cst_17 = arith.constant dense<0.000000e+00> : vector<2x16xf32>
    %56 = vector.multi_reduction <add>, %55, %cst_17 [2] : vector<2x16x16xf32> to vector<2x16xf32>
    %57 = vector.shape_cast %56 : vector<2x16xf32> to vector<2x16x1xf32>
    %58 = vector.broadcast %57 : vector<2x16x1xf32> to vector<2x16x16xf32>
    %59 = arith.divf %55, %58 : vector<2x16x16xf32>
    %cst_18 = arith.constant dense<0.000000e+00> : vector<2x16x8xf32>
    %60 = tpu.matmul %59, %49, %cst_18 {dimension_numbers = #tpu.dot_dimension_numbers<[2], [1], [1], [2], [0, 0, 0, 1, 1, 2], [0], [0]>} : vector<2x16x16xf32>, vector<2x16x8xf32>, vector<2x16x8xf32> -> vector<2x16x8xf32>
    %61 = vector.extract_strided_slice %3 {offsets = [0, 24], sizes = [32, 8], strides = [1, 1]} : vector<32x96xf32> to vector<32x8xf32>
    %cst_19 = arith.constant 0.353553385 : f32
    %62 = vector.broadcast %cst_19 : f32 to vector<32x8xf32>
    %63 = arith.mulf %61, %62 : vector<32x8xf32>
    %64 = vector.shape_cast %63 : vector<32x8xf32> to vector<2x16x8xf32>
    %65 = vector.extract_strided_slice %3 {offsets = [0, 56], sizes = [32, 8], strides = [1, 1]} : vector<32x96xf32> to vector<32x8xf32>
    %66 = vector.shape_cast %65 : vector<32x8xf32> to vector<2x16x8xf32>
    %67 = vector.extract_strided_slice %3 {offsets = [0, 88], sizes = [32, 8], strides = [1, 1]} : vector<32x96xf32> to vector<32x8xf32>
    %68 = vector.shape_cast %67 : vector<32x8xf32> to vector<2x16x8xf32>
    %cst_20 = arith.constant dense<0.000000e+00> : vector<2x16x16xf32>
    %69 = tpu.matmul %64, %66, %cst_20 {dimension_numbers = #tpu.dot_dimension_numbers<[2], [2], [1], [1], [0, 0, 0, 1, 1, 1], [0], [0]>} : vector<2x16x8xf32>, vector<2x16x8xf32>, vector<2x16x16xf32> -> vector<2x16x16xf32>
    %cst_21 = arith.constant dense<0xFF800000> : vector<2x16xf32>
    %70 = vector.multi_reduction <maximumf>, %69, %cst_21 [2] : vector<2x16x16xf32> to vector<2x16xf32>
    %71 = vector.shape_cast %70 : vector<2x16xf32> to vector<2x16x1xf32>
    %72 = vector.broadcast %71 : vector<2x16x1xf32> to vector<2x16x16xf32>
    %73 = arith.subf %69, %72 : vector<2x16x16xf32>
    %74 = math.exp %73 : vector<2x16x16xf32>
    %cst_22 = arith.constant dense<0.000000e+00> : vector<2x16xf32>
    %75 = vector.multi_reduction <add>, %74, %cst_22 [2] : vector<2x16x16xf32> to vector<2x16xf32>
    %76 = vector.shape_cast %75 : vector<2x16xf32> to vector<2x16x1xf32>
    %77 = vector.broadcast %76 : vector<2x16x1xf32> to vector<2x16x16xf32>
    %78 = arith.divf %74, %77 : vector<2x16x16xf32>
    %cst_23 = arith.constant dense<0.000000e+00> : vector<2x16x8xf32>
    %79 = tpu.matmul %78, %68, %cst_23 {dimension_numbers = #tpu.dot_dimension_numbers<[2], [1], [1], [2], [0, 0, 0, 1, 1, 2], [0], [0]>} : vector<2x16x16xf32>, vector<2x16x8xf32>, vector<2x16x8xf32> -> vector<2x16x8xf32>
    %80 = tpu.concatenate %22, %41, %60, %79 in 2 : vector<2x16x8xf32>, vector<2x16x8xf32>, vector<2x16x8xf32>, vector<2x16x8xf32> -> vector<2x16x32xf32>
    %81 = vector.shape_cast %80 : vector<2x16x32xf32> to vector<32x32xf32>
    %c0_24 = arith.constant 0 : index
    %c0_25 = arith.constant 0 : index
    %82 = vector.load %arg3[%c0_24, %c0_25] : memref<32x20xf32, #tpu.memory_space<vmem>>, vector<32x20xf32>
    %cst_26 = arith.constant dense<0.000000e+00> : vector<32x20xf32>
    %83 = tpu.matmul %81, %82, %cst_26 {dimension_numbers = #tpu.dot_dimension_numbers<[1], [0], [0], [1], [0, 0, 1, 1], [], []>} : vector<32x32xf32>, vector<32x20xf32>, vector<32x20xf32> -> vector<32x20xf32>
    %84 = arith.addf %83, %1 : vector<32x20xf32>
    %cst_27 = arith.constant dense<0.000000e+00> : vector<32xf32>
    %85 = vector.multi_reduction <add>, %84, %cst_27 [1] : vector<32x20xf32> to vector<32xf32>
    %86 = vector.shape_cast %85 : vector<32xf32> to vector<32x1xf32>
    %cst_28 = arith.constant 2.000000e+01 : f32
    %87 = vector.broadcast %cst_28 : f32 to vector<32x1xf32>
    %88 = arith.divf %86, %87 : vector<32x1xf32>
    %89 = vector.broadcast %88 : vector<32x1xf32> to vector<32x20xf32>
    %90 = arith.subf %84, %89 : vector<32x20xf32>
    %91 = arith.mulf %90, %90 : vector<32x20xf32>
    %cst_29 = arith.constant dense<0.000000e+00> : vector<32xf32>
    %92 = vector.multi_reduction <add>, %91, %cst_29 [1] : vector<32x20xf32> to vector<32xf32>
    %93 = vector.shape_cast %92 : vector<32xf32> to vector<32x1xf32>
    %cst_30 = arith.constant 2.000000e+01 : f32
    %94 = vector.broadcast %cst_30 : f32 to vector<32x1xf32>
    %95 = arith.divf %93, %94 : vector<32x1xf32>
    %96 = vector.broadcast %88 : vector<32x1xf32> to vector<32x20xf32>
    %97 = arith.subf %84, %96 : vector<32x20xf32>
    %cst_31 = arith.constant 9.99999997E-7 : f32
    %98 = vector.broadcast %cst_31 : f32 to vector<32x1xf32>
    %99 = arith.addf %95, %98 : vector<32x1xf32>
    %100 = math.rsqrt %99 : vector<32x1xf32>
    %101 = vector.broadcast %100 : vector<32x1xf32> to vector<32x20xf32>
    %102 = arith.mulf %97, %101 : vector<32x20xf32>
    %c0_32 = arith.constant 0 : index
    %c0_33 = arith.constant 0 : index
    %103 = vector.load %arg4[%c0_32, %c0_33] : memref<2x20xf32, #tpu.memory_space<vmem>>, vector<1x20xf32>
    %104 = vector.broadcast %103 : vector<1x20xf32> to vector<32x20xf32>
    %105 = arith.mulf %102, %104 : vector<32x20xf32>
    %c1 = arith.constant 1 : index
    %c0_34 = arith.constant 0 : index
    %106 = vector.load %arg4[%c1, %c0_34] : memref<2x20xf32, #tpu.memory_space<vmem>>, vector<1x20xf32>
    %107 = vector.broadcast %106 : vector<1x20xf32> to vector<32x20xf32>
    %108 = arith.addf %105, %107 : vector<32x20xf32>
    %109 = vector.shape_cast %108 : vector<32x20xf32> to vector<2x16x20xf32>
    %c0_35 = arith.constant 0 : index
    %c0_36 = arith.constant 0 : index
    %c0_37 = arith.constant 0 : index
    %110 = vector.load %arg8[%c0_35, %c0_36, %c0_37] : memref<2x16x20xf32, #tpu.memory_space<vmem>>, vector<2x16x20xf32>
    tpu.vector_store %arg8[%c0_35, %c0_36, %c0_37], %109 {strides = array<i32>} : memref<2x16x20xf32, #tpu.memory_space<vmem>>, vector<2x16x20xf32>,
    %cst_38 = arith.constant 0.000000e+00 : f32
    %111 = vector.broadcast %cst_38 : f32 to vector<2x50xf32>
    %c0_39 = arith.constant 0 : index
    %c0_40 = arith.constant 0 : index
    %112 = vector.load %arg7[%c0_39, %c0_40] : memref<1x60xf32, #tpu.memory_space<vmem>>, vector<1x50xf32>
    %113 = vector.broadcast %112 : vector<1x50xf32> to vector<2x50xf32>
    %114 = arith.addf %111, %113 : vector<2x50xf32>
    %c0_41 = arith.constant 0 : index
    %c0_42 = arith.constant 0 : index
    %c0_43 = arith.constant 0 : index
    %115 = vector.load %arg8[%c0_41, %c0_42, %c0_43] : memref<2x16x20xf32, #tpu.memory_space<vmem>>, vector<2x1x20xf32>
    %116 = vector.shape_cast %115 : vector<2x1x20xf32> to vector<2x20xf32>
    %c0_44 = arith.constant 0 : index
    %c0_45 = arith.constant 0 : index
    %c0_46 = arith.constant 0 : index
    %117 = vector.load %arg5[%c0_44, %c0_45, %c0_46] : memref<16x20x50xf32, #tpu.memory_space<vmem>>, vector<1x20x50xf32>
    %118 = vector.shape_cast %117 : vector<1x20x50xf32> to vector<20x50xf32>
    %cst_47 = arith.constant dense<0.000000e+00> : vector<2x50xf32>
    %119 = tpu.matmul %116, %118, %cst_47 {dimension_numbers = #tpu.dot_dimension_numbers<[1], [0], [0], [1], [0, 0, 1, 1], [], []>} : vector<2x20xf32>, vector<20x50xf32>, vector<2x50xf32> -> vector<2x50xf32>
    %120 = arith.addf %114, %119 : vector<2x50xf32>
    %c0_48 = arith.constant 0 : index
    %c1_49 = arith.constant 1 : index
    %c0_50 = arith.constant 0 : index
    %121 = vector.load %arg8[%c0_48, %c1_49, %c0_50] : memref<2x16x20xf32, #tpu.memory_space<vmem>>, vector<2x1x20xf32>
    %122 = vector.shape_cast %121 : vector<2x1x20xf32> to vector<2x20xf32>
    %c1_51 = arith.constant 1 : index
    %c0_52 = arith.constant 0 : index
    %c0_53 = arith.constant 0 : index
    %123 = vector.load %arg5[%c1_51, %c0_52, %c0_53] : memref<16x20x50xf32, #tpu.memory_space<vmem>>, vector<1x20x50xf32>
    %124 = vector.shape_cast %123 : vector<1x20x50xf32> to vector<20x50xf32>
    %cst_54 = arith.constant dense<0.000000e+00> : vector<2x50xf32>
    %125 = tpu.matmul %122, %124, %cst_54 {dimension_numbers = #tpu.dot_dimension_numbers<[1], [0], [0], [1], [0, 0, 1, 1], [], []>} : vector<2x20xf32>, vector<20x50xf32>, vector<2x50xf32> -> vector<2x50xf32>
    %126 = arith.addf %120, %125 : vector<2x50xf32>
    %c0_55 = arith.constant 0 : index
    %c2 = arith.constant 2 : index
    %c0_56 = arith.constant 0 : index
    %127 = vector.load %arg8[%c0_55, %c2, %c0_56] : memref<2x16x20xf32, #tpu.memory_space<vmem>>, vector<2x1x20xf32>
    %128 = vector.shape_cast %127 : vector<2x1x20xf32> to vector<2x20xf32>
    %c2_57 = arith.constant 2 : index
    %c0_58 = arith.constant 0 : index
    %c0_59 = arith.constant 0 : index
    %129 = vector.load %arg5[%c2_57, %c0_58, %c0_59] : memref<16x20x50xf32, #tpu.memory_space<vmem>>, vector<1x20x50xf32>
    %130 = vector.shape_cast %129 : vector<1x20x50xf32> to vector<20x50xf32>
    %cst_60 = arith.constant dense<0.000000e+00> : vector<2x50xf32>
    %131 = tpu.matmul %128, %130, %cst_60 {dimension_numbers = #tpu.dot_dimension_numbers<[1], [0], [0], [1], [0, 0, 1, 1], [], []>} : vector<2x20xf32>, vector<20x50xf32>, vector<2x50xf32> -> vector<2x50xf32>
    %132 = arith.addf %126, %131 : vector<2x50xf32>
    %c0_61 = arith.constant 0 : index
    %c3 = arith.constant 3 : index
    %c0_62 = arith.constant 0 : index
    %133 = vector.load %arg8[%c0_61, %c3, %c0_62] : memref<2x16x20xf32, #tpu.memory_space<vmem>>, vector<2x1x20xf32>
    %134 = vector.shape_cast %133 : vector<2x1x20xf32> to vector<2x20xf32>
    %c3_63 = arith.constant 3 : index
    %c0_64 = arith.constant 0 : index
    %c0_65 = arith.constant 0 : index
    %135 = vector.load %arg5[%c3_63, %c0_64, %c0_65] : memref<16x20x50xf32, #tpu.memory_space<vmem>>, vector<1x20x50xf32>
    %136 = vector.shape_cast %135 : vector<1x20x50xf32> to vector<20x50xf32>
    %cst_66 = arith.constant dense<0.000000e+00> : vector<2x50xf32>
    %137 = tpu.matmul %134, %136, %cst_66 {dimension_numbers = #tpu.dot_dimension_numbers<[1], [0], [0], [1], [0, 0, 1, 1], [], []>} : vector<2x20xf32>, vector<20x50xf32>, vector<2x50xf32> -> vector<2x50xf32>
    %138 = arith.addf %132, %137 : vector<2x50xf32>
    %c0_67 = arith.constant 0 : index
    %c4 = arith.constant 4 : index
    %c0_68 = arith.constant 0 : index
    %139 = vector.load %arg8[%c0_67, %c4, %c0_68] : memref<2x16x20xf32, #tpu.memory_space<vmem>>, vector<2x1x20xf32>
    %140 = vector.shape_cast %139 : vector<2x1x20xf32> to vector<2x20xf32>
    %c4_69 = arith.constant 4 : index
    %c0_70 = arith.constant 0 : index
    %c0_71 = arith.constant 0 : index
    %141 = vector.load %arg5[%c4_69, %c0_70, %c0_71] : memref<16x20x50xf32, #tpu.memory_space<vmem>>, vector<1x20x50xf32>
    %142 = vector.shape_cast %141 : vector<1x20x50xf32> to vector<20x50xf32>
    %cst_72 = arith.constant dense<0.000000e+00> : vector<2x50xf32>
    %143 = tpu.matmul %140, %142, %cst_72 {dimension_numbers = #tpu.dot_dimension_numbers<[1], [0], [0], [1], [0, 0, 1, 1], [], []>} : vector<2x20xf32>, vector<20x50xf32>, vector<2x50xf32> -> vector<2x50xf32>
    %144 = arith.addf %138, %143 : vector<2x50xf32>
    %c0_73 = arith.constant 0 : index
    %c5 = arith.constant 5 : index
    %c0_74 = arith.constant 0 : index
    %145 = vector.load %arg8[%c0_73, %c5, %c0_74] : memref<2x16x20xf32, #tpu.memory_space<vmem>>, vector<2x1x20xf32>
    %146 = vector.shape_cast %145 : vector<2x1x20xf32> to vector<2x20xf32>
    %c5_75 = arith.constant 5 : index
    %c0_76 = arith.constant 0 : index
    %c0_77 = arith.constant 0 : index
    %147 = vector.load %arg5[%c5_75, %c0_76, %c0_77] : memref<16x20x50xf32, #tpu.memory_space<vmem>>, vector<1x20x50xf32>
    %148 = vector.shape_cast %147 : vector<1x20x50xf32> to vector<20x50xf32>
    %cst_78 = arith.constant dense<0.000000e+00> : vector<2x50xf32>
    %149 = tpu.matmul %146, %148, %cst_78 {dimension_numbers = #tpu.dot_dimension_numbers<[1], [0], [0], [1], [0, 0, 1, 1], [], []>} : vector<2x20xf32>, vector<20x50xf32>, vector<2x50xf32> -> vector<2x50xf32>
    %150 = arith.addf %144, %149 : vector<2x50xf32>
    %c0_79 = arith.constant 0 : index
    %c6 = arith.constant 6 : index
    %c0_80 = arith.constant 0 : index
    %151 = vector.load %arg8[%c0_79, %c6, %c0_80] : memref<2x16x20xf32, #tpu.memory_space<vmem>>, vector<2x1x20xf32>
    %152 = vector.shape_cast %151 : vector<2x1x20xf32> to vector<2x20xf32>
    %c6_81 = arith.constant 6 : index
    %c0_82 = arith.constant 0 : index
    %c0_83 = arith.constant 0 : index
    %153 = vector.load %arg5[%c6_81, %c0_82, %c0_83] : memref<16x20x50xf32, #tpu.memory_space<vmem>>, vector<1x20x50xf32>
    %154 = vector.shape_cast %153 : vector<1x20x50xf32> to vector<20x50xf32>
    %cst_84 = arith.constant dense<0.000000e+00> : vector<2x50xf32>
    %155 = tpu.matmul %152, %154, %cst_84 {dimension_numbers = #tpu.dot_dimension_numbers<[1], [0], [0], [1], [0, 0, 1, 1], [], []>} : vector<2x20xf32>, vector<20x50xf32>, vector<2x50xf32> -> vector<2x50xf32>
    %156 = arith.addf %150, %155 : vector<2x50xf32>
    %c0_85 = arith.constant 0 : index
    %c7 = arith.constant 7 : index
    %c0_86 = arith.constant 0 : index
    %157 = vector.load %arg8[%c0_85, %c7, %c0_86] : memref<2x16x20xf32, #tpu.memory_space<vmem>>, vector<2x1x20xf32>
    %158 = vector.shape_cast %157 : vector<2x1x20xf32> to vector<2x20xf32>
    %c7_87 = arith.constant 7 : index
    %c0_88 = arith.constant 0 : index
    %c0_89 = arith.constant 0 : index
    %159 = vector.load %arg5[%c7_87, %c0_88, %c0_89] : memref<16x20x50xf32, #tpu.memory_space<vmem>>, vector<1x20x50xf32>
    %160 = vector.shape_cast %159 : vector<1x20x50xf32> to vector<20x50xf32>
    %cst_90 = arith.constant dense<0.000000e+00> : vector<2x50xf32>
    %161 = tpu.matmul %158, %160, %cst_90 {dimension_numbers = #tpu.dot_dimension_numbers<[1], [0], [0], [1], [0, 0, 1, 1], [], []>} : vector<2x20xf32>, vector<20x50xf32>, vector<2x50xf32> -> vector<2x50xf32>
    %162 = arith.addf %156, %161 : vector<2x50xf32>
    %c0_91 = arith.constant 0 : index
    %c8 = arith.constant 8 : index
    %c0_92 = arith.constant 0 : index
    %163 = vector.load %arg8[%c0_91, %c8, %c0_92] : memref<2x16x20xf32, #tpu.memory_space<vmem>>, vector<2x1x20xf32>
    %164 = vector.shape_cast %163 : vector<2x1x20xf32> to vector<2x20xf32>
    %c8_93 = arith.constant 8 : index
    %c0_94 = arith.constant 0 : index
    %c0_95 = arith.constant 0 : index
    %165 = vector.load %arg5[%c8_93, %c0_94, %c0_95] : memref<16x20x50xf32, #tpu.memory_space<vmem>>, vector<1x20x50xf32>
    %166 = vector.shape_cast %165 : vector<1x20x50xf32> to vector<20x50xf32>
    %cst_96 = arith.constant dense<0.000000e+00> : vector<2x50xf32>
    %167 = tpu.matmul %164, %166, %cst_96 {dimension_numbers = #tpu.dot_dimension_numbers<[1], [0], [0], [1], [0, 0, 1, 1], [], []>} : vector<2x20xf32>, vector<20x50xf32>, vector<2x50xf32> -> vector<2x50xf32>
    %168 = arith.addf %162, %167 : vector<2x50xf32>
    %c0_97 = arith.constant 0 : index
    %c9 = arith.constant 9 : index
    %c0_98 = arith.constant 0 : index
    %169 = vector.load %arg8[%c0_97, %c9, %c0_98] : memref<2x16x20xf32, #tpu.memory_space<vmem>>, vector<2x1x20xf32>
    %170 = vector.shape_cast %169 : vector<2x1x20xf32> to vector<2x20xf32>
    %c9_99 = arith.constant 9 : index
    %c0_100 = arith.constant 0 : index
    %c0_101 = arith.constant 0 : index
    %171 = vector.load %arg5[%c9_99, %c0_100, %c0_101] : memref<16x20x50xf32, #tpu.memory_space<vmem>>, vector<1x20x50xf32>
    %172 = vector.shape_cast %171 : vector<1x20x50xf32> to vector<20x50xf32>
    %cst_102 = arith.constant dense<0.000000e+00> : vector<2x50xf32>
    %173 = tpu.matmul %170, %172, %cst_102 {dimension_numbers = #tpu.dot_dimension_numbers<[1], [0], [0], [1], [0, 0, 1, 1], [], []>} : vector<2x20xf32>, vector<20x50xf32>, vector<2x50xf32> -> vector<2x50xf32>
    %174 = arith.addf %168, %173 : vector<2x50xf32>
    %c0_103 = arith.constant 0 : index
    %c10 = arith.constant 10 : index
    %c0_104 = arith.constant 0 : index
    %175 = vector.load %arg8[%c0_103, %c10, %c0_104] : memref<2x16x20xf32, #tpu.memory_space<vmem>>, vector<2x1x20xf32>
    %176 = vector.shape_cast %175 : vector<2x1x20xf32> to vector<2x20xf32>
    %c10_105 = arith.constant 10 : index
    %c0_106 = arith.constant 0 : index
    %c0_107 = arith.constant 0 : index
    %177 = vector.load %arg5[%c10_105, %c0_106, %c0_107] : memref<16x20x50xf32, #tpu.memory_space<vmem>>, vector<1x20x50xf32>
    %178 = vector.shape_cast %177 : vector<1x20x50xf32> to vector<20x50xf32>
    %cst_108 = arith.constant dense<0.000000e+00> : vector<2x50xf32>
    %179 = tpu.matmul %176, %178, %cst_108 {dimension_numbers = #tpu.dot_dimension_numbers<[1], [0], [0], [1], [0, 0, 1, 1], [], []>} : vector<2x20xf32>, vector<20x50xf32>, vector<2x50xf32> -> vector<2x50xf32>
    %180 = arith.addf %174, %179 : vector<2x50xf32>
    %c0_109 = arith.constant 0 : index
    %c11 = arith.constant 11 : index
    %c0_110 = arith.constant 0 : index
    %181 = vector.load %arg8[%c0_109, %c11, %c0_110] : memref<2x16x20xf32, #tpu.memory_space<vmem>>, vector<2x1x20xf32>
    %182 = vector.shape_cast %181 : vector<2x1x20xf32> to vector<2x20xf32>
    %c11_111 = arith.constant 11 : index
    %c0_112 = arith.constant 0 : index
    %c0_113 = arith.constant 0 : index
    %183 = vector.load %arg5[%c11_111, %c0_112, %c0_113] : memref<16x20x50xf32, #tpu.memory_space<vmem>>, vector<1x20x50xf32>
    %184 = vector.shape_cast %183 : vector<1x20x50xf32> to vector<20x50xf32>
    %cst_114 = arith.constant dense<0.000000e+00> : vector<2x50xf32>
    %185 = tpu.matmul %182, %184, %cst_114 {dimension_numbers = #tpu.dot_dimension_numbers<[1], [0], [0], [1], [0, 0, 1, 1], [], []>} : vector<2x20xf32>, vector<20x50xf32>, vector<2x50xf32> -> vector<2x50xf32>
    %186 = arith.addf %180, %185 : vector<2x50xf32>
    %c0_115 = arith.constant 0 : index
    %c12 = arith.constant 12 : index
    %c0_116 = arith.constant 0 : index
    %187 = vector.load %arg8[%c0_115, %c12, %c0_116] : memref<2x16x20xf32, #tpu.memory_space<vmem>>, vector<2x1x20xf32>
    %188 = vector.shape_cast %187 : vector<2x1x20xf32> to vector<2x20xf32>
    %c12_117 = arith.constant 12 : index
    %c0_118 = arith.constant 0 : index
    %c0_119 = arith.constant 0 : index
    %189 = vector.load %arg5[%c12_117, %c0_118, %c0_119] : memref<16x20x50xf32, #tpu.memory_space<vmem>>, vector<1x20x50xf32>
    %190 = vector.shape_cast %189 : vector<1x20x50xf32> to vector<20x50xf32>
    %cst_120 = arith.constant dense<0.000000e+00> : vector<2x50xf32>
    %191 = tpu.matmul %188, %190, %cst_120 {dimension_numbers = #tpu.dot_dimension_numbers<[1], [0], [0], [1], [0, 0, 1, 1], [], []>} : vector<2x20xf32>, vector<20x50xf32>, vector<2x50xf32> -> vector<2x50xf32>
    %192 = arith.addf %186, %191 : vector<2x50xf32>
    %c0_121 = arith.constant 0 : index
    %c13 = arith.constant 13 : index
    %c0_122 = arith.constant 0 : index
    %193 = vector.load %arg8[%c0_121, %c13, %c0_122] : memref<2x16x20xf32, #tpu.memory_space<vmem>>, vector<2x1x20xf32>
    %194 = vector.shape_cast %193 : vector<2x1x20xf32> to vector<2x20xf32>
    %c13_123 = arith.constant 13 : index
    %c0_124 = arith.constant 0 : index
    %c0_125 = arith.constant 0 : index
    %195 = vector.load %arg5[%c13_123, %c0_124, %c0_125] : memref<16x20x50xf32, #tpu.memory_space<vmem>>, vector<1x20x50xf32>
    %196 = vector.shape_cast %195 : vector<1x20x50xf32> to vector<20x50xf32>
    %cst_126 = arith.constant dense<0.000000e+00> : vector<2x50xf32>
    %197 = tpu.matmul %194, %196, %cst_126 {dimension_numbers = #tpu.dot_dimension_numbers<[1], [0], [0], [1], [0, 0, 1, 1], [], []>} : vector<2x20xf32>, vector<20x50xf32>, vector<2x50xf32> -> vector<2x50xf32>
    %198 = arith.addf %192, %197 : vector<2x50xf32>
    %c0_127 = arith.constant 0 : index
    %c14 = arith.constant 14 : index
    %c0_128 = arith.constant 0 : index
    %199 = vector.load %arg8[%c0_127, %c14, %c0_128] : memref<2x16x20xf32, #tpu.memory_space<vmem>>, vector<2x1x20xf32>
    %200 = vector.shape_cast %199 : vector<2x1x20xf32> to vector<2x20xf32>
    %c14_129 = arith.constant 14 : index
    %c0_130 = arith.constant 0 : index
    %c0_131 = arith.constant 0 : index
    %201 = vector.load %arg5[%c14_129, %c0_130, %c0_131] : memref<16x20x50xf32, #tpu.memory_space<vmem>>, vector<1x20x50xf32>
    %202 = vector.shape_cast %201 : vector<1x20x50xf32> to vector<20x50xf32>
    %cst_132 = arith.constant dense<0.000000e+00> : vector<2x50xf32>
    %203 = tpu.matmul %200, %202, %cst_132 {dimension_numbers = #tpu.dot_dimension_numbers<[1], [0], [0], [1], [0, 0, 1, 1], [], []>} : vector<2x20xf32>, vector<20x50xf32>, vector<2x50xf32> -> vector<2x50xf32>
    %204 = arith.addf %198, %203 : vector<2x50xf32>
    %c0_133 = arith.constant 0 : index
    %c15 = arith.constant 15 : index
    %c0_134 = arith.constant 0 : index
    %205 = vector.load %arg8[%c0_133, %c15, %c0_134] : memref<2x16x20xf32, #tpu.memory_space<vmem>>, vector<2x1x20xf32>
    %206 = vector.shape_cast %205 : vector<2x1x20xf32> to vector<2x20xf32>
    %c15_135 = arith.constant 15 : index
    %c0_136 = arith.constant 0 : index
    %c0_137 = arith.constant 0 : index
    %207 = vector.load %arg5[%c15_135, %c0_136, %c0_137] : memref<16x20x50xf32, #tpu.memory_space<vmem>>, vector<1x20x50xf32>
    %208 = vector.shape_cast %207 : vector<1x20x50xf32> to vector<20x50xf32>
    %cst_138 = arith.constant dense<0.000000e+00> : vector<2x50xf32>
    %209 = tpu.matmul %206, %208, %cst_138 {dimension_numbers = #tpu.dot_dimension_numbers<[1], [0], [0], [1], [0, 0, 1, 1], [], []>} : vector<2x20xf32>, vector<20x50xf32>, vector<2x50xf32> -> vector<2x50xf32>
    %210 = arith.addf %204, %209 : vector<2x50xf32>
    %c0_139 = arith.constant 0 : index
    %c0_140 = arith.constant 0 : index
    %211 = vector.load %arg6[%c0_139, %c0_140] : memref<50x10xf32, #tpu.memory_space<vmem>>, vector<50x10xf32>
    %cst_141 = arith.constant dense<0.000000e+00> : vector<2x10xf32>
    %212 = tpu.matmul %210, %211, %cst_141 {dimension_numbers = #tpu.dot_dimension_numbers<[1], [0], [0], [1], [0, 0, 1, 1], [], []>} : vector<2x50xf32>, vector<50x10xf32>, vector<2x10xf32> -> vector<2x10xf32>
    %c0_142 = arith.constant 0 : index
    %c50 = arith.constant 50 : index
    %213 = vector.load %arg7[%c0_142, %c50] : memref<1x60xf32, #tpu.memory_space<vmem>>, vector<1x10xf32>
    %214 = vector.broadcast %213 : vector<1x10xf32> to vector<2x10xf32>
    %215 = arith.addf %212, %214 : vector<2x10xf32>
    %cst_143 = arith.constant dense<0xFF800000> : vector<2xf32>
    %216 = vector.multi_reduction <maximumf>, %215, %cst_143 [1] : vector<2x10xf32> to vector<2xf32>
    %217 = vector.shape_cast %216 : vector<2xf32> to vector<2x1xf32>
    %218 = vector.broadcast %217 : vector<2x1xf32> to vector<2x10xf32>
    %219 = arith.subf %215, %218 : vector<2x10xf32>
    %220 = math.exp %219 : vector<2x10xf32>
    %cst_144 = arith.constant dense<0.000000e+00> : vector<2xf32>
    %221 = vector.multi_reduction <add>, %220, %cst_144 [1] : vector<2x10xf32> to vector<2xf32>
    %222 = vector.shape_cast %221 : vector<2xf32> to vector<2x1xf32>
    %223 = math.log %222 : vector<2x1xf32>
    %224 = vector.broadcast %223 : vector<2x1xf32> to vector<2x10xf32>
    %225 = arith.subf %219, %224 : vector<2x10xf32>
    %c0_145 = arith.constant 0 : index
    %c0_146 = arith.constant 0 : index
    %226 = vector.load %arg9[%c0_145, %c0_146] : memref<2x10xf32, #tpu.memory_space<vmem>>, vector<2x10xf32>
    tpu.vector_store %arg9[%c0_145, %c0_146], %225 {strides = array<i32>} : memref<2x10xf32, #tpu.memory_space<vmem>>, vector<2x10xf32>,
    return
  }
  func.func @transform_0(%arg0: i32) -> (i32, i32, i32) {
    %c0_i32 = arith.constant 0 : i32
    %c0_i32_0 = arith.constant 0 : i32
    %c0_i32_1 = arith.constant 0 : i32
    return %arg0, %c0_i32, %c0_i32_0 : i32, i32, i32
  }
  func.func @transform_1(%arg0: i32) -> (i32, i32) {
    %c0_i32 = arith.constant 0 : i32
    %c0_i32_0 = arith.constant 0 : i32
    %c0_i32_1 = arith.constant 0 : i32
    return %c0_i32, %c0_i32_0 : i32, i32
  }
  func.func @transform_2(%arg0: i32) -> (i32, i32) {
    %c0_i32 = arith.constant 0 : i32
    %c0_i32_0 = arith.constant 0 : i32
    %c0_i32_1 = arith.constant 0 : i32
    return %c0_i32, %c0_i32_0 : i32, i32
  }
  func.func @transform_3(%arg0: i32) -> (i32, i32) {
    %c0_i32 = arith.constant 0 : i32
    %c0_i32_0 = arith.constant 0 : i32
    %c0_i32_1 = arith.constant 0 : i32
    return %c0_i32, %c0_i32_0 : i32, i32
  }
  func.func @transform_4(%arg0: i32) -> (i32, i32, i32) {
    %c0_i32 = arith.constant 0 : i32
    %c0_i32_0 = arith.constant 0 : i32
    %c0_i32_1 = arith.constant 0 : i32
    %c0_i32_2 = arith.constant 0 : i32
    return %c0_i32, %c0_i32_0, %c0_i32_1 : i32, i32, i32
  }
  func.func @transform_5(%arg0: i32) -> (i32, i32) {
    %c0_i32 = arith.constant 0 : i32
    %c0_i32_0 = arith.constant 0 : i32
    %c0_i32_1 = arith.constant 0 : i32
    return %c0_i32, %c0_i32_0 : i32, i32
  }
  func.func @transform_6(%arg0: i32) -> (i32, i32) {
    %c0_i32 = arith.constant 0 : i32
    %c0_i32_0 = arith.constant 0 : i32
    %c0_i32_1 = arith.constant 0 : i32
    return %c0_i32, %c0_i32_0 : i32, i32
  }
  func.func @transform_7(%arg0: i32) -> (i32, i32, i32) {
    %c0_i32 = arith.constant 0 : i32
    %c0_i32_0 = arith.constant 0 : i32
    %c0_i32_1 = arith.constant 0 : i32
    return %arg0, %c0_i32, %c0_i32_0 : i32, i32, i32
  }
  func.func @transform_8(%arg0: i32) -> (i32, i32) {
    %c0_i32 = arith.constant 0 : i32
    %c0_i32_0 = arith.constant 0 : i32
    return %arg0, %c0_i32 : i32, i32
  }
}

</mosaic_0001>

<llo_original>
// kernel: forward.3
$region0: #{forward.3}
  #allocation0 [shape = 'u32[]', space=smem, size = 0x4, offset = 0x4, fixed_abs, tag = 'smem constant byte address 0x4 - core index']
  #allocation1 [shape = 'u32[72,128]{1,0:T(1,128)}', space=vmem, size = 0x9000, scoped, tag = 'internal scratch']
  %s0 = inlined_call_operand.vmem [shape: f32[2,16,20], index: 0, kind: input, shape index: {}]
  %s1 = inlined_call_operand.vmem [shape: f32[20,96], index: 1, kind: input, shape index: {}]
  %s2 = inlined_call_operand.vmem [shape: f32[32,20], index: 2, kind: input, shape index: {}]
  %s3 = inlined_call_operand.vmem [shape: f32[2,20], index: 3, kind: input, shape index: {}]
  %s4 = inlined_call_operand.vmem [shape: f32[16,20,50], index: 4, kind: input, shape index: {}]
  %s5 = inlined_call_operand.vmem [shape: f32[50,10], index: 5, kind: input, shape index: {}]
  %s6 = inlined_call_operand.vmem [shape: f32[1,60], index: 6, kind: input, shape index: {}]
  %s7 = inlined_call_operand.vmem [shape: f32[2,16,20], index: 7, kind: output, shape index: {0}]
  %s8 = inlined_call_operand.hbm [shape: f32[2,10], index: 8, kind: output, shape index: {1}]
  %9 = xla_tuple %s7, %s8
  %s10 = sld [smem:[#allocation0]]
  $region46: #{forward.3} parent=0
    _
  %s12 = ssub.s32 1, %s10
  %s13 = scalar_select 0, %s12, %s10
  $region1: #{forward.3} parent=0
    #allocation2 [shape = 'u8[1024]{0}', space=vmem, size = 0x400, scoped, tag = 'output window, operand 1, single buffered']
    #allocation3 [shape = 's32[1]{0}', space=sflag, size = 0x4, scoped, tag = 'scoped memory for forward.3']
    %14 = vsyncpa [#allocation3], 0
    // Predicated region
    $region2: #{forward.3} parent=1 // pred_check
      _
    $region3: #{forward.3} parent=1 // pred_check_branch
      %16 = sbr.rel (0) target = $region5
    $region4: #{forward.3} parent=1 // pred_region
      _
    $region5: #{forward.3} parent=1 // pred_fallthru
      _
    // Predicated region
    $region6: #{forward.3} parent=1 // pred_check
      _
    $region7: #{forward.3} parent=1 // pred_check_branch
      %18 = sbr.rel (0) target = $region9
    $region8: #{forward.3} parent=1 // pred_region
      _
    $region9: #{forward.3} parent=1 // pred_fallthru
      _
    // Predicated region
    $region10: #{forward.3} parent=1 // pred_check
      _
    $region11: #{forward.3} parent=1 // pred_check_branch
      %20 = sbr.rel (0) target = $region13
    $region12: #{forward.3} parent=1 // pred_region
      _
    $region13: #{forward.3} parent=1 // pred_fallthru
      _
    // Predicated region
    $region14: #{forward.3} parent=1 // pred_check
      _
    $region15: #{forward.3} parent=1 // pred_check_branch
      %22 = sbr.rel (0) target = $region17
    $region16: #{forward.3} parent=1 // pred_region
      _
    $region17: #{forward.3} parent=1 // pred_fallthru
      _
    // Predicated region
    $region18: #{forward.3} parent=1 // pred_check
      _
    $region19: #{forward.3} parent=1 // pred_check_branch
      %24 = sbr.rel (0) target = $region21
    $region20: #{forward.3} parent=1 // pred_region
      _
    $region21: #{forward.3} parent=1 // pred_fallthru
      _
    // Predicated region
    $region22: #{forward.3} parent=1 // pred_check
      _
    $region23: #{forward.3} parent=1 // pred_check_branch
      %26 = sbr.rel (0) target = $region25
    $region24: #{forward.3} parent=1 // pred_region
      _
    $region25: #{forward.3} parent=1 // pred_fallthru
      _
    // Predicated region
    $region26: #{forward.3} parent=1 // pred_check
      _
    $region27: #{forward.3} parent=1 // pred_check_branch
      %28 = sbr.rel (0) target = $region29
    $region28: #{forward.3} parent=1 // pred_region
      _
    $region29: #{forward.3} parent=1 // pred_fallthru
      _
    %v29 = vld [vmem:[%s0] sm:$0xff]
    %v30 = vld [vmem:[%s0 + $0x8] sm:$0xff]
    %v31 = vld [vmem:[%s0 + $0x10] sm:$0xff]
    %v32 = vld [vmem:[%s0 + $0x18] sm:$0xff]
    %v33 = vld [vmem:[%s1] sm:$0xff]
    %v34 = vld [vmem:[%s1 + $0x8] sm:$0xff]
    %v35 = vld [vmem:[%s1 + $0x10] sm:$0xf]
    %vm36 = vcmask 162816
    %v38 = vsel %vm36, %v29, 0
    %v41 = vsel %vm36, %v30, 0
    %v44 = vsel %vm36, %v31, 0
    %v47 = vsel %vm36, %v32, 0
    %vm49 = vcmask 1043456
    %v51 = vsel %vm49, %v35, 0
    %53 = vmatpush.msra.mxu0 0.0
    %54 = vmatpush.msra.mxu0 0.0
    %55 = vmatpush.msra.mxu0 0.0
    %56 = vmatpush.msra.mxu0 0.0
    %57 = vmatpush.msra.mxu0 0.0
    %58 = vmatpush.msra.mxu0 0.0
    %59 = vmatpush.msra.mxu0 0.0
    %60 = vmatpush.msra.mxu0 0.0
    %61 = vmatpush.msra.mxu0 0.0
    %62 = vmatpush.msra.mxu0 0.0
    %63 = vmatpush.msra.mxu0 0.0
    %64 = vmatpush.msra.mxu0 0.0
    %65 = vmatpush.msra.mxu0 0.0
    %66 = vmatpush.msra.mxu0 %v51
    %67 = vmatpush.msra.mxu0 %v34
    %68 = vmatpush.msra.mxu0 %v33
    %69 = vmatmul.f32.gmra.mxu0 %v38
    %v70 = vpop.f32.mrf.mxu0
    %v71 = vadd.f32 0.0, %v70
    %72 = vmatmul.f32.gmra.mxu0 %v41
    %v73 = vpop.f32.mrf.mxu0
    %v74 = vadd.f32 0.0, %v73
    %75 = vmatmul.f32.gmra.mxu0 %v44
    %v76 = vpop.f32.mrf.mxu0
    %v77 = vadd.f32 0.0, %v76
    %78 = vmatmul.f32.gmra.mxu0 %v47
    %v79 = vpop.f32.mrf.mxu0
    %v80 = vadd.f32 0.0, %v79
    %81 = vdwg.mxu0
    %v82 = vmul.f32 %v71, 0.35355338
    %v83 = vmul.f32 %v74, 0.35355338
    %v84 = vmul.f32 %v77, 0.35355338
    %v85 = vmul.f32 %v80, 0.35355338
    %88 = vrot.lane.b32.xlu0 %v71, 96
    %v89 = vpop.permute.xlu0 %88
    %90 = vrot.lane.b32.xlu0 %v74, 96
    %v91 = vpop.permute.xlu0 %90
    %vm92 = vcmask 64512
    %v94 = vsel %vm92, %v82, 0
    %v97 = vsel %vm92, %v83, 0
    %v99 = vsel %vm92, %v89, 0
    %v101 = vsel %vm92, %v91, 0
    %103 = vmatpush.xpose.msra.mxu0 0.0
    %104 = vmatpush.xpose.msra.mxu0 0.0
    %105 = vmatpush.xpose.msra.mxu0 0.0
    %106 = vmatpush.xpose.msra.mxu0 0.0
    %107 = vmatpush.xpose.msra.mxu0 0.0
    %108 = vmatpush.xpose.msra.mxu0 0.0
    %109 = vmatpush.xpose.msra.mxu0 0.0
    %110 = vmatpush.xpose.msra.mxu0 0.0
    %111 = vmatpush.xpose.msra.mxu0 0.0
    %112 = vmatpush.xpose.msra.mxu0 0.0
    %113 = vmatpush.xpose.msra.mxu0 0.0
    %114 = vmatpush.xpose.msra.mxu0 0.0
    %115 = vmatpush.xpose.msra.mxu0 0.0
    %116 = vmatpush.xpose.msra.mxu0 0.0
    %117 = vmatpush.xpose.msra.mxu0 %v101
    %118 = vmatpush.xpose.msra.mxu0 %v99
    %119 = vmatmul.f32.gmra.mxu0 %v94
    %v120 = vpop.f32.mrf.mxu0
    %v121 = vadd.f32 0.0, %v120
    %122 = vmatmul.f32.gmra.mxu0 %v97
    %v123 = vpop.f32.mrf.mxu0
    %v124 = vadd.f32 0.0, %v123
    %125 = vdwg.mxu0
    %128 = vrot.lane.b32.xlu0 %v77, 96
    %v129 = vpop.permute.xlu0 %128
    %130 = vrot.lane.b32.xlu0 %v80, 96
    %v131 = vpop.permute.xlu0 %130
    %v133 = vsel %vm92, %v84, 0
    %v136 = vsel %vm92, %v85, 0
    %v138 = vsel %vm92, %v129, 0
    %v140 = vsel %vm92, %v131, 0
    %142 = vmatpush.xpose.msra.mxu0 0.0
    %143 = vmatpush.xpose.msra.mxu0 0.0
    %144 = vmatpush.xpose.msra.mxu0 0.0
    %145 = vmatpush.xpose.msra.mxu0 0.0
    %146 = vmatpush.xpose.msra.mxu0 0.0
    %147 = vmatpush.xpose.msra.mxu0 0.0
    %148 = vmatpush.xpose.msra.mxu0 0.0
    %149 = vmatpush.xpose.msra.mxu0 0.0
    %150 = vmatpush.xpose.msra.mxu0 0.0
    %151 = vmatpush.xpose.msra.mxu0 0.0
    %152 = vmatpush.xpose.msra.mxu0 0.0
    %153 = vmatpush.xpose.msra.mxu0 0.0
    %154 = vmatpush.xpose.msra.mxu0 0.0
    %155 = vmatpush.xpose.msra.mxu0 0.0
    %156 = vmatpush.xpose.msra.mxu0 %v140
    %157 = vmatpush.xpose.msra.mxu0 %v138
    %158 = vmatmul.f32.gmra.mxu0 %v133
    %v159 = vpop.f32.mrf.mxu0
    %v160 = vadd.f32 0.0, %v159
    %161 = vmatmul.f32.gmra.mxu0 %v136
    %v162 = vpop.f32.mrf.mxu0
    %v163 = vadd.f32 0.0, %v162
    %164 = vdwg.mxu0
    %vm165 = vcmask 130048
    %v166 = vsel %vm165, %v121, -inf
    %167 = vmax.xlane.f32.xlu0 %v166
    %v168 = vpop.xlane.xlu0 %167
    %v169 = vsel %vm165, %v124, -inf
    %170 = vmax.xlane.f32.xlu0 %v169
    %v171 = vpop.xlane.xlu0 %170
    %v172 = vsel %vm165, %v160, -inf
    %173 = vmax.xlane.f32.xlu0 %v172
    %v174 = vpop.xlane.xlu0 %173
    %v175 = vsel %vm165, %v163, -inf
    %176 = vmax.xlane.f32.xlu0 %v175
    %v177 = vpop.xlane.xlu0 %176
    %v178 = vsub.f32 %v121, %v168
    %v179 = vsub.f32 %v124, %v171
    %v180 = vsub.f32 %v160, %v174
    %v181 = vsub.f32 %v163, %v177
    %v182 = vmul.f32 %v178, 1.442695
    %v183 = vpow.pop %v182
    %v184 = vmul.f32 %v179, 1.442695
    %v185 = vpow.pop %v184
    %v186 = vmul.f32 %v180, 1.442695
    %v187 = vpow.pop %v186
    %v188 = vmul.f32 %v181, 1.442695
    %v189 = vpow.pop %v188
    %v190 = vsel %vm165, %v183, 0.0
    %191 = vadd.xlane.f32.xlu0 %v190
    %v192 = vpop.xlane.xlu0 %191
    %v193 = vsel %vm165, %v185, 0.0
    %194 = vadd.xlane.f32.xlu0 %v193
    %v195 = vpop.xlane.xlu0 %194
    %v196 = vsel %vm165, %v187, 0.0
    %197 = vadd.xlane.f32.xlu0 %v196
    %v198 = vpop.xlane.xlu0 %197
    %v199 = vsel %vm165, %v189, 0.0
    %200 = vadd.xlane.f32.xlu0 %v199
    %v201 = vpop.xlane.xlu0 %200
    %v202 = vrcp.pop %v192
    %v203 = vmul.f32 %v192, %v202
    %v204 = vsub.f32 1.0, %v203
    %v205 = vmul.f32 %v202, %v204
    %v206 = vadd.f32 %v202, %v205
    %vm207 = vweird.f32 %v192
    %vm208 = vweird.f32 %v202
    %vm209 = vmor %vm207, %vm208
    %v210 = vsel %vm209, %v202, %v206
    %v211 = vand.u32 2147483647, %v192
    %vm212 = vcmp.eq.f32.partialorder %v211, 8.507059e+37
    %v213 = vand.u32 %v192, 2147483648
    %v214 = vor.u32 1.1754944e-38, %v213
    %v215 = vsel %vm212, %v214, %v210
    %v216 = vmul.f32 %v183, %v215
    %v217 = vrcp.pop %v195
    %v218 = vmul.f32 %v195, %v217
    %v219 = vsub.f32 1.0, %v218
    %v220 = vmul.f32 %v217, %v219
    %v221 = vadd.f32 %v217, %v220
    %vm222 = vweird.f32 %v195
    %vm223 = vweird.f32 %v217
    %vm224 = vmor %vm222, %vm223
    %v225 = vsel %vm224, %v217, %v221
    %v226 = vand.u32 2147483647, %v195
    %vm227 = vcmp.eq.f32.partialorder %v226, 8.507059e+37
    %v228 = vand.u32 %v195, 2147483648
    %v229 = vor.u32 1.1754944e-38, %v228
    %v230 = vsel %vm227, %v229, %v225
    %v231 = vmul.f32 %v185, %v230
    %v232 = vrcp.pop %v198
    %v233 = vmul.f32 %v198, %v232
    %v234 = vsub.f32 1.0, %v233
    %v235 = vmul.f32 %v232, %v234
    %v236 = vadd.f32 %v232, %v235
    %vm237 = vweird.f32 %v198
    %vm238 = vweird.f32 %v232
    %vm239 = vmor %vm237, %vm238
    %v240 = vsel %vm239, %v232, %v236
    %v241 = vand.u32 2147483647, %v198
    %vm242 = vcmp.eq.f32.partialorder %v241, 8.507059e+37
    %v243 = vand.u32 %v198, 2147483648
    %v244 = vor.u32 1.1754944e-38, %v243
    %v245 = vsel %vm242, %v244, %v240
    %v246 = vmul.f32 %v187, %v245
    %v247 = vrcp.pop %v201
    %v248 = vmul.f32 %v201, %v247
    %v249 = vsub.f32 1.0, %v248
    %v250 = vmul.f32 %v247, %v249
    %v251 = vadd.f32 %v247, %v250
    %vm252 = vweird.f32 %v201
    %vm253 = vweird.f32 %v247
    %vm254 = vmor %vm252, %vm253
    %v255 = vsel %vm254, %v247, %v251
    %v256 = vand.u32 2147483647, %v201
    %vm257 = vcmp.eq.f32.partialorder %v256, 8.507059e+37
    %v258 = vand.u32 %v201, 2147483648
    %v259 = vor.u32 1.1754944e-38, %v258
    %v260 = vsel %vm257, %v259, %v255
    %v261 = vmul.f32 %v189, %v260
    %262 = vrot.lane.b32.xlu0 %v71, 64
    %v263 = vpop.permute.xlu0 %262
    %264 = vrot.lane.b32.xlu0 %v74, 64
    %v265 = vpop.permute.xlu0 %264
    %v269 = vsel %vm165, %v216, 0
    %v272 = vsel %vm165, %v231, 0
    %274 = vmatpush.msra.mxu0 0.0
    %275 = vmatpush.msra.mxu0 0.0
    %276 = vmatpush.msra.mxu0 0.0
    %277 = vmatpush.msra.mxu0 0.0
    %278 = vmatpush.msra.mxu0 0.0
    %279 = vmatpush.msra.mxu0 0.0
    %280 = vmatpush.msra.mxu0 0.0
    %281 = vmatpush.msra.mxu0 0.0
    %282 = vmatpush.msra.mxu0 0.0
    %283 = vmatpush.msra.mxu0 0.0
    %284 = vmatpush.msra.mxu0 0.0
    %285 = vmatpush.msra.mxu0 0.0
    %286 = vmatpush.msra.mxu0 0.0
    %287 = vmatpush.msra.mxu0 0.0
    %288 = vmatpush.msra.mxu0 %v265
    %289 = vmatpush.msra.mxu0 %v263
    %290 = vmatmul.f32.gmra.mxu0 %v269
    %v291 = vpop.f32.mrf.mxu0
    %v292 = vadd.f32 0.0, %v291
    %293 = vmatmul.f32.gmra.mxu0 %v272
    %v294 = vpop.f32.mrf.mxu0
    %v295 = vadd.f32 0.0, %v294
    %296 = vdwg.mxu0
    %297 = vrot.lane.b32.xlu0 %v77, 64
    %v298 = vpop.permute.xlu0 %297
    %299 = vrot.lane.b32.xlu0 %v80, 64
    %v300 = vpop.permute.xlu0 %299
    %v304 = vsel %vm165, %v246, 0
    %v307 = vsel %vm165, %v261, 0
    %309 = vmatpush.msra.mxu0 0.0
    %310 = vmatpush.msra.mxu0 0.0
    %311 = vmatpush.msra.mxu0 0.0
    %312 = vmatpush.msra.mxu0 0.0
    %313 = vmatpush.msra.mxu0 0.0
    %314 = vmatpush.msra.mxu0 0.0
    %315 = vmatpush.msra.mxu0 0.0
    %316 = vmatpush.msra.mxu0 0.0
    %317 = vmatpush.msra.mxu0 0.0
    %318 = vmatpush.msra.mxu0 0.0
    %319 = vmatpush.msra.mxu0 0.0
    %320 = vmatpush.msra.mxu0 0.0
    %321 = vmatpush.msra.mxu0 0.0
    %322 = vmatpush.msra.mxu0 0.0
    %323 = vmatpush.msra.mxu0 %v300
    %324 = vmatpush.msra.mxu0 %v298
    %325 = vmatmul.f32.gmra.mxu0 %v304
    %v326 = vpop.f32.mrf.mxu0
    %v327 = vadd.f32 0.0, %v326
    %328 = vmatmul.f32.gmra.mxu0 %v307
    %v329 = vpop.f32.mrf.mxu0
    %v330 = vadd.f32 0.0, %v329
    %331 = vdwg.mxu0
    %332 = vrot.lane.b32.xlu0 %v82, 120
    %v333 = vpop.permute.xlu0 %332
    %334 = vrot.lane.b32.xlu0 %v83, 120
    %v335 = vpop.permute.xlu0 %334
    %336 = vrot.lane.b32.xlu0 %v71, 88
    %v337 = vpop.permute.xlu0 %336
    %338 = vrot.lane.b32.xlu0 %v74, 88
    %v339 = vpop.permute.xlu0 %338
    %v340 = vsel %vm92, %v333, 0
    %v342 = vsel %vm92, %v335, 0
    %v344 = vsel %vm92, %v337, 0
    %v346 = vsel %vm92, %v339, 0
    %348 = vmatpush.xpose.msra.mxu0 0.0
    %349 = vmatpush.xpose.msra.mxu0 0.0
    %350 = vmatpush.xpose.msra.mxu0 0.0
    %351 = vmatpush.xpose.msra.mxu0 0.0
    %352 = vmatpush.xpose.msra.mxu0 0.0
    %353 = vmatpush.xpose.msra.mxu0 0.0
    %354 = vmatpush.xpose.msra.mxu0 0.0
    %355 = vmatpush.xpose.msra.mxu0 0.0
    %356 = vmatpush.xpose.msra.mxu0 0.0
    %357 = vmatpush.xpose.msra.mxu0 0.0
    %358 = vmatpush.xpose.msra.mxu0 0.0
    %359 = vmatpush.xpose.msra.mxu0 0.0
    %360 = vmatpush.xpose.msra.mxu0 0.0
    %361 = vmatpush.xpose.msra.mxu0 0.0
    %362 = vmatpush.xpose.msra.mxu0 %v346
    %363 = vmatpush.xpose.msra.mxu0 %v344
    %364 = vmatmul.f32.gmra.mxu0 %v340
    %v365 = vpop.f32.mrf.mxu0
    %v366 = vadd.f32 0.0, %v365
    %367 = vmatmul.f32.gmra.mxu0 %v342
    %v368 = vpop.f32.mrf.mxu0
    %v369 = vadd.f32 0.0, %v368
    %370 = vdwg.mxu0
    %371 = vrot.lane.b32.xlu0 %v84, 120
    %v372 = vpop.permute.xlu0 %371
    %373 = vrot.lane.b32.xlu0 %v85, 120
    %v374 = vpop.permute.xlu0 %373
    %375 = vrot.lane.b32.xlu0 %v77, 88
    %v376 = vpop.permute.xlu0 %375
    %377 = vrot.lane.b32.xlu0 %v80, 88
    %v378 = vpop.permute.xlu0 %377
    %v379 = vsel %vm92, %v372, 0
    %v381 = vsel %vm92, %v374, 0
    %v383 = vsel %vm92, %v376, 0
    %v385 = vsel %vm92, %v378, 0
    %387 = vmatpush.xpose.msra.mxu0 0.0
    %388 = vmatpush.xpose.msra.mxu0 0.0
    %389 = vmatpush.xpose.msra.mxu0 0.0
    %390 = vmatpush.xpose.msra.mxu0 0.0
    %391 = vmatpush.xpose.msra.mxu0 0.0
    %392 = vmatpush.xpose.msra.mxu0 0.0
    %393 = vmatpush.xpose.msra.mxu0 0.0
    %394 = vmatpush.xpose.msra.mxu0 0.0
    %395 = vmatpush.xpose.msra.mxu0 0.0
    %396 = vmatpush.xpose.msra.mxu0 0.0
    %397 = vmatpush.xpose.msra.mxu0 0.0
    %398 = vmatpush.xpose.msra.mxu0 0.0
    %399 = vmatpush.xpose.msra.mxu0 0.0
    %400 = vmatpush.xpose.msra.mxu0 0.0
    %401 = vmatpush.xpose.msra.mxu0 %v385
    %402 = vmatpush.xpose.msra.mxu0 %v383
    %403 = vmatmul.f32.gmra.mxu0 %v379
    %v404 = vpop.f32.mrf.mxu0
    %v405 = vadd.f32 0.0, %v404
    %406 = vmatmul.f32.gmra.mxu0 %v381
    %v407 = vpop.f32.mrf.mxu0
    %v408 = vadd.f32 0.0, %v407
    %409 = vdwg.mxu0
    %v410 = vsel %vm165, %v366, -inf
    %411 = vmax.xlane.f32.xlu0 %v410
    %v412 = vpop.xlane.xlu0 %411
    %v413 = vsel %vm165, %v369, -inf
    %414 = vmax.xlane.f32.xlu0 %v413
    %v415 = vpop.xlane.xlu0 %414
    %v416 = vsel %vm165, %v405, -inf
    %417 = vmax.xlane.f32.xlu0 %v416
    %v418 = vpop.xlane.xlu0 %417
    %v419 = vsel %vm165, %v408, -inf
    %420 = vmax.xlane.f32.xlu0 %v419
    %v421 = vpop.xlane.xlu0 %420
    %v422 = vsub.f32 %v366, %v412
    %v423 = vsub.f32 %v369, %v415
    %v424 = vsub.f32 %v405, %v418
    %v425 = vsub.f32 %v408, %v421
    %v426 = vmul.f32 %v422, 1.442695
    %v427 = vpow.pop %v426
    %v428 = vmul.f32 %v423, 1.442695
    %v429 = vpow.pop %v428
    %v430 = vmul.f32 %v424, 1.442695
    %v431 = vpow.pop %v430
    %v432 = vmul.f32 %v425, 1.442695
    %v433 = vpow.pop %v432
    %v434 = vsel %vm165, %v427, 0.0
    %435 = vadd.xlane.f32.xlu0 %v434
    %v436 = vpop.xlane.xlu0 %435
    %v437 = vsel %vm165, %v429, 0.0
    %438 = vadd.xlane.f32.xlu0 %v437
    %v439 = vpop.xlane.xlu0 %438
    %v440 = vsel %vm165, %v431, 0.0
    %441 = vadd.xlane.f32.xlu0 %v440
    %v442 = vpop.xlane.xlu0 %441
    %v443 = vsel %vm165, %v433, 0.0
    %444 = vadd.xlane.f32.xlu0 %v443
    %v445 = vpop.xlane.xlu0 %444
    %v446 = vrcp.pop %v436
    %v447 = vmul.f32 %v436, %v446
    %v448 = vsub.f32 1.0, %v447
    %v449 = vmul.f32 %v446, %v448
    %v450 = vadd.f32 %v446, %v449
    %vm451 = vweird.f32 %v436
    %vm452 = vweird.f32 %v446
    %vm453 = vmor %vm451, %vm452
    %v454 = vsel %vm453, %v446, %v450
    %v455 = vand.u32 2147483647, %v436
    %vm456 = vcmp.eq.f32.partialorder %v455, 8.507059e+37
    %v457 = vand.u32 %v436, 2147483648
    %v458 = vor.u32 1.1754944e-38, %v457
    %v459 = vsel %vm456, %v458, %v454
    %v460 = vmul.f32 %v427, %v459
    %v461 = vrcp.pop %v439
    %v462 = vmul.f32 %v439, %v461
    %v463 = vsub.f32 1.0, %v462
    %v464 = vmul.f32 %v461, %v463
    %v465 = vadd.f32 %v461, %v464
    %vm466 = vweird.f32 %v439
    %vm467 = vweird.f32 %v461
    %vm468 = vmor %vm466, %vm467
    %v469 = vsel %vm468, %v461, %v465
    %v470 = vand.u32 2147483647, %v439
    %vm471 = vcmp.eq.f32.partialorder %v470, 8.507059e+37
    %v472 = vand.u32 %v439, 2147483648
    %v473 = vor.u32 1.1754944e-38, %v472
    %v474 = vsel %vm471, %v473, %v469
    %v475 = vmul.f32 %v429, %v474
    %v476 = vrcp.pop %v442
    %v477 = vmul.f32 %v442, %v476
    %v478 = vsub.f32 1.0, %v477
    %v479 = vmul.f32 %v476, %v478
    %v480 = vadd.f32 %v476, %v479
    %vm481 = vweird.f32 %v442
    %vm482 = vweird.f32 %v476
    %vm483 = vmor %vm481, %vm482
    %v484 = vsel %vm483, %v476, %v480
    %v485 = vand.u32 2147483647, %v442
    %vm486 = vcmp.eq.f32.partialorder %v485, 8.507059e+37
    %v487 = vand.u32 %v442, 2147483648
    %v488 = vor.u32 1.1754944e-38, %v487
    %v489 = vsel %vm486, %v488, %v484
    %v490 = vmul.f32 %v431, %v489
    %v491 = vrcp.pop %v445
    %v492 = vmul.f32 %v445, %v491
    %v493 = vsub.f32 1.0, %v492
    %v494 = vmul.f32 %v491, %v493
    %v495 = vadd.f32 %v491, %v494
    %vm496 = vweird.f32 %v445
    %vm497 = vweird.f32 %v491
    %vm498 = vmor %vm496, %vm497
    %v499 = vsel %vm498, %v491, %v495
    %v500 = vand.u32 2147483647, %v445
    %vm501 = vcmp.eq.f32.partialorder %v500, 8.507059e+37
    %v502 = vand.u32 %v445, 2147483648
    %v503 = vor.u32 1.1754944e-38, %v502
    %v504 = vsel %vm501, %v503, %v499
    %v505 = vmul.f32 %v433, %v504
    %506 = vrot.lane.b32.xlu0 %v71, 56
    %v507 = vpop.permute.xlu0 %506
    %508 = vrot.lane.b32.xlu0 %v74, 56
    %v509 = vpop.permute.xlu0 %508
    %v513 = vsel %vm165, %v460, 0
    %v516 = vsel %vm165, %v475, 0
    %518 = vmatpush.msra.mxu0 0.0
    %519 = vmatpush.msra.mxu0 0.0
    %520 = vmatpush.msra.mxu0 0.0
    %521 = vmatpush.msra.mxu0 0.0
    %522 = vmatpush.msra.mxu0 0.0
    %523 = vmatpush.msra.mxu0 0.0
    %524 = vmatpush.msra.mxu0 0.0
    %525 = vmatpush.msra.mxu0 0.0
    %526 = vmatpush.msra.mxu0 0.0
    %527 = vmatpush.msra.mxu0 0.0
    %528 = vmatpush.msra.mxu0 0.0
    %529 = vmatpush.msra.mxu0 0.0
    %530 = vmatpush.msra.mxu0 0.0
    %531 = vmatpush.msra.mxu0 0.0
    %532 = vmatpush.msra.mxu0 %v509
    %533 = vmatpush.msra.mxu0 %v507
    %534 = vmatmul.f32.gmra.mxu0 %v513
    %v535 = vpop.f32.mrf.mxu0
    %v536 = vadd.f32 0.0, %v535
    %537 = vmatmul.f32.gmra.mxu0 %v516
    %v538 = vpop.f32.mrf.mxu0
    %v539 = vadd.f32 0.0, %v538
    %540 = vdwg.mxu0
    %541 = vrot.lane.b32.xlu0 %v77, 56
    %v542 = vpop.permute.xlu0 %541
    %543 = vrot.lane.b32.xlu0 %v80, 56
    %v544 = vpop.permute.xlu0 %543
    %v548 = vsel %vm165, %v490, 0
    %v551 = vsel %vm165, %v505, 0
    %553 = vmatpush.msra.mxu0 0.0
    %554 = vmatpush.msra.mxu0 0.0
    %555 = vmatpush.msra.mxu0 0.0
    %556 = vmatpush.msra.mxu0 0.0
    %557 = vmatpush.msra.mxu0 0.0
    %558 = vmatpush.msra.mxu0 0.0
    %559 = vmatpush.msra.mxu0 0.0
    %560 = vmatpush.msra.mxu0 0.0
    %561 = vmatpush.msra.mxu0 0.0
    %562 = vmatpush.msra.mxu0 0.0
    %563 = vmatpush.msra.mxu0 0.0
    %564 = vmatpush.msra.mxu0 0.0
    %565 = vmatpush.msra.mxu0 0.0
    %566 = vmatpush.msra.mxu0 0.0
    %567 = vmatpush.msra.mxu0 %v544
    %568 = vmatpush.msra.mxu0 %v542
    %569 = vmatmul.f32.gmra.mxu0 %v548
    %v570 = vpop.f32.mrf.mxu0
    %v571 = vadd.f32 0.0, %v570
    %572 = vmatmul.f32.gmra.mxu0 %v551
    %v573 = vpop.f32.mrf.mxu0
    %v574 = vadd.f32 0.0, %v573
    %575 = vdwg.mxu0
    %576 = vrot.lane.b32.xlu0 %v82, 112
    %v577 = vpop.permute.xlu0 %576
    %578 = vrot.lane.b32.xlu0 %v83, 112
    %v579 = vpop.permute.xlu0 %578
    %580 = vrot.lane.b32.xlu0 %v71, 80
    %v581 = vpop.permute.xlu0 %580
    %582 = vrot.lane.b32.xlu0 %v74, 80
    %v583 = vpop.permute.xlu0 %582
    %v584 = vsel %vm92, %v577, 0
    %v586 = vsel %vm92, %v579, 0
    %v588 = vsel %vm92, %v581, 0
    %v590 = vsel %vm92, %v583, 0
    %592 = vmatpush.xpose.msra.mxu0 0.0
    %593 = vmatpush.xpose.msra.mxu0 0.0
    %594 = vmatpush.xpose.msra.mxu0 0.0
    %595 = vmatpush.xpose.msra.mxu0 0.0
    %596 = vmatpush.xpose.msra.mxu0 0.0
    %597 = vmatpush.xpose.msra.mxu0 0.0
    %598 = vmatpush.xpose.msra.mxu0 0.0
    %599 = vmatpush.xpose.msra.mxu0 0.0
    %600 = vmatpush.xpose.msra.mxu0 0.0
    %601 = vmatpush.xpose.msra.mxu0 0.0
    %602 = vmatpush.xpose.msra.mxu0 0.0
    %603 = vmatpush.xpose.msra.mxu0 0.0
    %604 = vmatpush.xpose.msra.mxu0 0.0
    %605 = vmatpush.xpose.msra.mxu0 0.0
    %606 = vmatpush.xpose.msra.mxu0 %v590
    %607 = vmatpush.xpose.msra.mxu0 %v588
    %608 = vmatmul.f32.gmra.mxu0 %v584
    %v609 = vpop.f32.mrf.mxu0
    %v610 = vadd.f32 0.0, %v609
    %611 = vmatmul.f32.gmra.mxu0 %v586
    %v612 = vpop.f32.mrf.mxu0
    %v613 = vadd.f32 0.0, %v612
    %614 = vdwg.mxu0
    %615 = vrot.lane.b32.xlu0 %v84, 112
    %v616 = vpop.permute.xlu0 %615
    %617 = vrot.lane.b32.xlu0 %v85, 112
    %v618 = vpop.permute.xlu0 %617
    %619 = vrot.lane.b32.xlu0 %v77, 80
    %v620 = vpop.permute.xlu0 %619
    %621 = vrot.lane.b32.xlu0 %v80, 80
    %v622 = vpop.permute.xlu0 %621
    %v623 = vsel %vm92, %v616, 0
    %v625 = vsel %vm92, %v618, 0
    %v627 = vsel %vm92, %v620, 0
    %v629 = vsel %vm92, %v622, 0
    %631 = vmatpush.xpose.msra.mxu0 0.0
    %632 = vmatpush.xpose.msra.mxu0 0.0
    %633 = vmatpush.xpose.msra.mxu0 0.0
    %634 = vmatpush.xpose.msra.mxu0 0.0
    %635 = vmatpush.xpose.msra.mxu0 0.0
    %636 = vmatpush.xpose.msra.mxu0 0.0
    %637 = vmatpush.xpose.msra.mxu0 0.0
    %638 = vmatpush.xpose.msra.mxu0 0.0
    %639 = vmatpush.xpose.msra.mxu0 0.0
    %640 = vmatpush.xpose.msra.mxu0 0.0
    %641 = vmatpush.xpose.msra.mxu0 0.0
    %642 = vmatpush.xpose.msra.mxu0 0.0
    %643 = vmatpush.xpose.msra.mxu0 0.0
    %644 = vmatpush.xpose.msra.mxu0 0.0
    %645 = vmatpush.xpose.msra.mxu0 %v629
    %646 = vmatpush.xpose.msra.mxu0 %v627
    %647 = vmatmul.f32.gmra.mxu0 %v623
    %v648 = vpop.f32.mrf.mxu0
    %v649 = vadd.f32 0.0, %v648
    %650 = vmatmul.f32.gmra.mxu0 %v625
    %v651 = vpop.f32.mrf.mxu0
    %v652 = vadd.f32 0.0, %v651
    %653 = vdwg.mxu0
    %v654 = vsel %vm165, %v610, -inf
    %655 = vmax.xlane.f32.xlu0 %v654
    %v656 = vpop.xlane.xlu0 %655
    %v657 = vsel %vm165, %v613, -inf
    %658 = vmax.xlane.f32.xlu0 %v657
    %v659 = vpop.xlane.xlu0 %658
    %v660 = vsel %vm165, %v649, -inf
    %661 = vmax.xlane.f32.xlu0 %v660
    %v662 = vpop.xlane.xlu0 %661
    %v663 = vsel %vm165, %v652, -inf
    %664 = vmax.xlane.f32.xlu0 %v663
    %v665 = vpop.xlane.xlu0 %664
    %v666 = vsub.f32 %v610, %v656
    %v667 = vsub.f32 %v613, %v659
    %v668 = vsub.f32 %v649, %v662
    %v669 = vsub.f32 %v652, %v665
    %v670 = vmul.f32 %v666, 1.442695
    %v671 = vpow.pop %v670
    %v672 = vmul.f32 %v667, 1.442695
    %v673 = vpow.pop %v672
    %v674 = vmul.f32 %v668, 1.442695
    %v675 = vpow.pop %v674
    %v676 = vmul.f32 %v669, 1.442695
    %v677 = vpow.pop %v676
    %v678 = vsel %vm165, %v671, 0.0
    %679 = vadd.xlane.f32.xlu0 %v678
    %v680 = vpop.xlane.xlu0 %679
    %v681 = vsel %vm165, %v673, 0.0
    %682 = vadd.xlane.f32.xlu0 %v681
    %v683 = vpop.xlane.xlu0 %682
    %v684 = vsel %vm165, %v675, 0.0
    %685 = vadd.xlane.f32.xlu0 %v684
    %v686 = vpop.xlane.xlu0 %685
    %v687 = vsel %vm165, %v677, 0.0
    %688 = vadd.xlane.f32.xlu0 %v687
    %v689 = vpop.xlane.xlu0 %688
    %v690 = vrcp.pop %v680
    %v691 = vmul.f32 %v680, %v690
    %v692 = vsub.f32 1.0, %v691
    %v693 = vmul.f32 %v690, %v692
    %v694 = vadd.f32 %v690, %v693
    %vm695 = vweird.f32 %v680
    %vm696 = vweird.f32 %v690
    %vm697 = vmor %vm695, %vm696
    %v698 = vsel %vm697, %v690, %v694
    %v699 = vand.u32 2147483647, %v680
    %vm700 = vcmp.eq.f32.partialorder %v699, 8.507059e+37
    %v701 = vand.u32 %v680, 2147483648
    %v702 = vor.u32 1.1754944e-38, %v701
    %v703 = vsel %vm700, %v702, %v698
    %v704 = vmul.f32 %v671, %v703
    %v705 = vrcp.pop %v683
    %v706 = vmul.f32 %v683, %v705
    %v707 = vsub.f32 1.0, %v706
    %v708 = vmul.f32 %v705, %v707
    %v709 = vadd.f32 %v705, %v708
    %vm710 = vweird.f32 %v683
    %vm711 = vweird.f32 %v705
    %vm712 = vmor %vm710, %vm711
    %v713 = vsel %vm712, %v705, %v709
    %v714 = vand.u32 2147483647, %v683
    %vm715 = vcmp.eq.f32.partialorder %v714, 8.507059e+37
    %v716 = vand.u32 %v683, 2147483648
    %v717 = vor.u32 1.1754944e-38, %v716
    %v718 = vsel %vm715, %v717, %v713
    %v719 = vmul.f32 %v673, %v718
    %v720 = vrcp.pop %v686
    %v721 = vmul.f32 %v686, %v720
    %v722 = vsub.f32 1.0, %v721
    %v723 = vmul.f32 %v720, %v722
    %v724 = vadd.f32 %v720, %v723
    %vm725 = vweird.f32 %v686
    %vm726 = vweird.f32 %v720
    %vm727 = vmor %vm725, %vm726
    %v728 = vsel %vm727, %v720, %v724
    %v729 = vand.u32 2147483647, %v686
    %vm730 = vcmp.eq.f32.partialorder %v729, 8.507059e+37
    %v731 = vand.u32 %v686, 2147483648
    %v732 = vor.u32 1.1754944e-38, %v731
    %v733 = vsel %vm730, %v732, %v728
    %v734 = vmul.f32 %v675, %v733
    %v735 = vrcp.pop %v689
    %v736 = vmul.f32 %v689, %v735
    %v737 = vsub.f32 1.0, %v736
    %v738 = vmul.f32 %v735, %v737
    %v739 = vadd.f32 %v735, %v738
    %vm740 = vweird.f32 %v689
    %vm741 = vweird.f32 %v735
    %vm742 = vmor %vm740, %vm741
    %v743 = vsel %vm742, %v735, %v739
    %v744 = vand.u32 2147483647, %v689
    %vm745 = vcmp.eq.f32.partialorder %v744, 8.507059e+37
    %v746 = vand.u32 %v689, 2147483648
    %v747 = vor.u32 1.1754944e-38, %v746
    %v748 = vsel %vm745, %v747, %v743
    %v749 = vmul.f32 %v677, %v748
    %750 = vrot.lane.b32.xlu0 %v71, 48
    %v751 = vpop.permute.xlu0 %750
    %752 = vrot.lane.b32.xlu0 %v74, 48
    %v753 = vpop.permute.xlu0 %752
    %v757 = vsel %vm165, %v704, 0
    %v760 = vsel %vm165, %v719, 0
    %762 = vmatpush.msra.mxu0 0.0
    %763 = vmatpush.msra.mxu0 0.0
    %764 = vmatpush.msra.mxu0 0.0
    %765 = vmatpush.msra.mxu0 0.0
    %766 = vmatpush.msra.mxu0 0.0
    %767 = vmatpush.msra.mxu0 0.0
    %768 = vmatpush.msra.mxu0 0.0
    %769 = vmatpush.msra.mxu0 0.0
    %770 = vmatpush.msra.mxu0 0.0
    %771 = vmatpush.msra.mxu0 0.0
    %772 = vmatpush.msra.mxu0 0.0
    %773 = vmatpush.msra.mxu0 0.0
    %774 = vmatpush.msra.mxu0 0.0
    %775 = vmatpush.msra.mxu0 0.0
    %776 = vmatpush.msra.mxu0 %v753
    %777 = vmatpush.msra.mxu0 %v751
    %778 = vmatmul.f32.gmra.mxu0 %v757
    %v779 = vpop.f32.mrf.mxu0
    %v780 = vadd.f32 0.0, %v779
    %781 = vmatmul.f32.gmra.mxu0 %v760
    %v782 = vpop.f32.mrf.mxu0
    %v783 = vadd.f32 0.0, %v782
    %784 = vdwg.mxu0
    %785 = vrot.lane.b32.xlu0 %v77, 48
    %v786 = vpop.permute.xlu0 %785
    %787 = vrot.lane.b32.xlu0 %v80, 48
    %v788 = vpop.permute.xlu0 %787
    %v792 = vsel %vm165, %v734, 0
    %v795 = vsel %vm165, %v749, 0
    %797 = vmatpush.msra.mxu0 0.0
    %798 = vmatpush.msra.mxu0 0.0
    %799 = vmatpush.msra.mxu0 0.0
    %800 = vmatpush.msra.mxu0 0.0
    %801 = vmatpush.msra.mxu0 0.0
    %802 = vmatpush.msra.mxu0 0.0
    %803 = vmatpush.msra.mxu0 0.0
    %804 = vmatpush.msra.mxu0 0.0
    %805 = vmatpush.msra.mxu0 0.0
    %806 = vmatpush.msra.mxu0 0.0
    %807 = vmatpush.msra.mxu0 0.0
    %808 = vmatpush.msra.mxu0 0.0
    %809 = vmatpush.msra.mxu0 0.0
    %810 = vmatpush.msra.mxu0 0.0
    %811 = vmatpush.msra.mxu0 %v788
    %812 = vmatpush.msra.mxu0 %v786
    %813 = vmatmul.f32.gmra.mxu0 %v792
    %v814 = vpop.f32.mrf.mxu0
    %v815 = vadd.f32 0.0, %v814
    %816 = vmatmul.f32.gmra.mxu0 %v795
    %v817 = vpop.f32.mrf.mxu0
    %v818 = vadd.f32 0.0, %v817
    %819 = vdwg.mxu0
    %820 = vrot.lane.b32.xlu0 %v82, 104
    %v821 = vpop.permute.xlu0 %820
    %822 = vrot.lane.b32.xlu0 %v83, 104
    %v823 = vpop.permute.xlu0 %822
    %824 = vrot.lane.b32.xlu0 %v71, 72
    %v825 = vpop.permute.xlu0 %824
    %826 = vrot.lane.b32.xlu0 %v74, 72
    %v827 = vpop.permute.xlu0 %826
    %v828 = vsel %vm92, %v821, 0
    %v830 = vsel %vm92, %v823, 0
    %v832 = vsel %vm92, %v825, 0
    %v834 = vsel %vm92, %v827, 0
    %836 = vmatpush.xpose.msra.mxu0 0.0
    %837 = vmatpush.xpose.msra.mxu0 0.0
    %838 = vmatpush.xpose.msra.mxu0 0.0
    %839 = vmatpush.xpose.msra.mxu0 0.0
    %840 = vmatpush.xpose.msra.mxu0 0.0
    %841 = vmatpush.xpose.msra.mxu0 0.0
    %842 = vmatpush.xpose.msra.mxu0 0.0
    %843 = vmatpush.xpose.msra.mxu0 0.0
    %844 = vmatpush.xpose.msra.mxu0 0.0
    %845 = vmatpush.xpose.msra.mxu0 0.0
    %846 = vmatpush.xpose.msra.mxu0 0.0
    %847 = vmatpush.xpose.msra.mxu0 0.0
    %848 = vmatpush.xpose.msra.mxu0 0.0
    %849 = vmatpush.xpose.msra.mxu0 0.0
    %850 = vmatpush.xpose.msra.mxu0 %v834
    %851 = vmatpush.xpose.msra.mxu0 %v832
    %852 = vmatmul.f32.gmra.mxu0 %v828
    %v853 = vpop.f32.mrf.mxu0
    %v854 = vadd.f32 0.0, %v853
    %855 = vmatmul.f32.gmra.mxu0 %v830
    %v856 = vpop.f32.mrf.mxu0
    %v857 = vadd.f32 0.0, %v856
    %858 = vdwg.mxu0
    %859 = vrot.lane.b32.xlu0 %v84, 104
    %v860 = vpop.permute.xlu0 %859
    %861 = vrot.lane.b32.xlu0 %v85, 104
    %v862 = vpop.permute.xlu0 %861
    %863 = vrot.lane.b32.xlu0 %v77, 72
    %v864 = vpop.permute.xlu0 %863
    %865 = vrot.lane.b32.xlu0 %v80, 72
    %v866 = vpop.permute.xlu0 %865
    %v867 = vsel %vm92, %v860, 0
    %v869 = vsel %vm92, %v862, 0
    %v871 = vsel %vm92, %v864, 0
    %v873 = vsel %vm92, %v866, 0
    %875 = vmatpush.xpose.msra.mxu0 0.0
    %876 = vmatpush.xpose.msra.mxu0 0.0
    %877 = vmatpush.xpose.msra.mxu0 0.0
    %878 = vmatpush.xpose.msra.mxu0 0.0
    %879 = vmatpush.xpose.msra.mxu0 0.0
    %880 = vmatpush.xpose.msra.mxu0 0.0
    %881 = vmatpush.xpose.msra.mxu0 0.0
    %882 = vmatpush.xpose.msra.mxu0 0.0
    %883 = vmatpush.xpose.msra.mxu0 0.0
    %884 = vmatpush.xpose.msra.mxu0 0.0
    %885 = vmatpush.xpose.msra.mxu0 0.0
    %886 = vmatpush.xpose.msra.mxu0 0.0
    %887 = vmatpush.xpose.msra.mxu0 0.0
    %888 = vmatpush.xpose.msra.mxu0 0.0
    %889 = vmatpush.xpose.msra.mxu0 %v873
    %890 = vmatpush.xpose.msra.mxu0 %v871
    %891 = vmatmul.f32.gmra.mxu0 %v867
    %v892 = vpop.f32.mrf.mxu0
    %v893 = vadd.f32 0.0, %v892
    %894 = vmatmul.f32.gmra.mxu0 %v869
    %v895 = vpop.f32.mrf.mxu0
    %v896 = vadd.f32 0.0, %v895
    %897 = vdwg.mxu0
    %v898 = vsel %vm165, %v854, -inf
    %899 = vmax.xlane.f32.xlu0 %v898
    %v900 = vpop.xlane.xlu0 %899
    %v901 = vsel %vm165, %v857, -inf
    %902 = vmax.xlane.f32.xlu0 %v901
    %v903 = vpop.xlane.xlu0 %902
    %v904 = vsel %vm165, %v893, -inf
    %905 = vmax.xlane.f32.xlu0 %v904
    %v906 = vpop.xlane.xlu0 %905
    %v907 = vsel %vm165, %v896, -inf
    %908 = vmax.xlane.f32.xlu0 %v907
    %v909 = vpop.xlane.xlu0 %908
    %v910 = vsub.f32 %v854, %v900
    %v911 = vsub.f32 %v857, %v903
    %v912 = vsub.f32 %v893, %v906
    %v913 = vsub.f32 %v896, %v909
    %v914 = vmul.f32 %v910, 1.442695
    %v915 = vpow.pop %v914
    %v916 = vmul.f32 %v911, 1.442695
    %v917 = vpow.pop %v916
    %v918 = vmul.f32 %v912, 1.442695
    %v919 = vpow.pop %v918
    %v920 = vmul.f32 %v913, 1.442695
    %v921 = vpow.pop %v920
    %v922 = vsel %vm165, %v915, 0.0
    %923 = vadd.xlane.f32.xlu0 %v922
    %v924 = vpop.xlane.xlu0 %923
    %v925 = vsel %vm165, %v917, 0.0
    %926 = vadd.xlane.f32.xlu0 %v925
    %v927 = vpop.xlane.xlu0 %926
    %v928 = vsel %vm165, %v919, 0.0
    %929 = vadd.xlane.f32.xlu0 %v928
    %v930 = vpop.xlane.xlu0 %929
    %v931 = vsel %vm165, %v921, 0.0
    %932 = vadd.xlane.f32.xlu0 %v931
    %v933 = vpop.xlane.xlu0 %932
    %v934 = vrcp.pop %v924
    %v935 = vmul.f32 %v924, %v934
    %v936 = vsub.f32 1.0, %v935
    %v937 = vmul.f32 %v934, %v936
    %v938 = vadd.f32 %v934, %v937
    %vm939 = vweird.f32 %v924
    %vm940 = vweird.f32 %v934
    %vm941 = vmor %vm939, %vm940
    %v942 = vsel %vm941, %v934, %v938
    %v943 = vand.u32 2147483647, %v924
    %vm944 = vcmp.eq.f32.partialorder %v943, 8.507059e+37
    %v945 = vand.u32 %v924, 2147483648
    %v946 = vor.u32 1.1754944e-38, %v945
    %v947 = vsel %vm944, %v946, %v942
    %v948 = vmul.f32 %v915, %v947
    %v949 = vrcp.pop %v927
    %v950 = vmul.f32 %v927, %v949
    %v951 = vsub.f32 1.0, %v950
    %v952 = vmul.f32 %v949, %v951
    %v953 = vadd.f32 %v949, %v952
    %vm954 = vweird.f32 %v927
    %vm955 = vweird.f32 %v949
    %vm956 = vmor %vm954, %vm955
    %v957 = vsel %vm956, %v949, %v953
    %v958 = vand.u32 2147483647, %v927
    %vm959 = vcmp.eq.f32.partialorder %v958, 8.507059e+37
    %v960 = vand.u32 %v927, 2147483648
    %v961 = vor.u32 1.1754944e-38, %v960
    %v962 = vsel %vm959, %v961, %v957
    %v963 = vmul.f32 %v917, %v962
    %v964 = vrcp.pop %v930
    %v965 = vmul.f32 %v930, %v964
    %v966 = vsub.f32 1.0, %v965
    %v967 = vmul.f32 %v964, %v966
    %v968 = vadd.f32 %v964, %v967
    %vm969 = vweird.f32 %v930
    %vm970 = vweird.f32 %v964
    %vm971 = vmor %vm969, %vm970
    %v972 = vsel %vm971, %v964, %v968
    %v973 = vand.u32 2147483647, %v930
    %vm974 = vcmp.eq.f32.partialorder %v973, 8.507059e+37
    %v975 = vand.u32 %v930, 2147483648
    %v976 = vor.u32 1.1754944e-38, %v975
    %v977 = vsel %vm974, %v976, %v972
    %v978 = vmul.f32 %v919, %v977
    %v979 = vrcp.pop %v933
    %v980 = vmul.f32 %v933, %v979
    %v981 = vsub.f32 1.0, %v980
    %v982 = vmul.f32 %v979, %v981
    %v983 = vadd.f32 %v979, %v982
    %vm984 = vweird.f32 %v933
    %vm985 = vweird.f32 %v979
    %vm986 = vmor %vm984, %vm985
    %v987 = vsel %vm986, %v979, %v983
    %v988 = vand.u32 2147483647, %v933
    %vm989 = vcmp.eq.f32.partialorder %v988, 8.507059e+37
    %v990 = vand.u32 %v933, 2147483648
    %v991 = vor.u32 1.1754944e-38, %v990
    %v992 = vsel %vm989, %v991, %v987
    %v993 = vmul.f32 %v921, %v992
    %994 = vrot.lane.b32.xlu0 %v71, 40
    %v995 = vpop.permute.xlu0 %994
    %996 = vrot.lane.b32.xlu0 %v74, 40
    %v997 = vpop.permute.xlu0 %996
    %v1001 = vsel %vm165, %v948, 0
    %v1004 = vsel %vm165, %v963, 0
    %1006 = vmatpush.msra.mxu0 0.0
    %1007 = vmatpush.msra.mxu0 0.0
    %1008 = vmatpush.msra.mxu0 0.0
    %1009 = vmatpush.msra.mxu0 0.0
    %1010 = vmatpush.msra.mxu0 0.0
    %1011 = vmatpush.msra.mxu0 0.0
    %1012 = vmatpush.msra.mxu0 0.0
    %1013 = vmatpush.msra.mxu0 0.0
    %1014 = vmatpush.msra.mxu0 0.0
    %1015 = vmatpush.msra.mxu0 0.0
    %1016 = vmatpush.msra.mxu0 0.0
    %1017 = vmatpush.msra.mxu0 0.0
    %1018 = vmatpush.msra.mxu0 0.0
    %1019 = vmatpush.msra.mxu0 0.0
    %1020 = vmatpush.msra.mxu0 %v997
    %1021 = vmatpush.msra.mxu0 %v995
    %1022 = vmatmul.f32.gmra.mxu0 %v1001
    %v1023 = vpop.f32.mrf.mxu0
    %v1024 = vadd.f32 0.0, %v1023
    %1025 = vmatmul.f32.gmra.mxu0 %v1004
    %v1026 = vpop.f32.mrf.mxu0
    %v1027 = vadd.f32 0.0, %v1026
    %1028 = vdwg.mxu0
    %1029 = vrot.lane.b32.xlu0 %v77, 40
    %v1030 = vpop.permute.xlu0 %1029
    %1031 = vrot.lane.b32.xlu0 %v80, 40
    %v1032 = vpop.permute.xlu0 %1031
    %v1036 = vsel %vm165, %v978, 0
    %v1039 = vsel %vm165, %v993, 0
    %1041 = vmatpush.msra.mxu0 0.0
    %1042 = vmatpush.msra.mxu0 0.0
    %1043 = vmatpush.msra.mxu0 0.0
    %1044 = vmatpush.msra.mxu0 0.0
    %1045 = vmatpush.msra.mxu0 0.0
    %1046 = vmatpush.msra.mxu0 0.0
    %1047 = vmatpush.msra.mxu0 0.0
    %1048 = vmatpush.msra.mxu0 0.0
    %1049 = vmatpush.msra.mxu0 0.0
    %1050 = vmatpush.msra.mxu0 0.0
    %1051 = vmatpush.msra.mxu0 0.0
    %1052 = vmatpush.msra.mxu0 0.0
    %1053 = vmatpush.msra.mxu0 0.0
    %1054 = vmatpush.msra.mxu0 0.0
    %1055 = vmatpush.msra.mxu0 %v1032
    %1056 = vmatpush.msra.mxu0 %v1030
    %1057 = vmatmul.f32.gmra.mxu0 %v1036
    %v1058 = vpop.f32.mrf.mxu0
    %v1059 = vadd.f32 0.0, %v1058
    %1060 = vmatmul.f32.gmra.mxu0 %v1039
    %v1061 = vpop.f32.mrf.mxu0
    %v1062 = vadd.f32 0.0, %v1061
    %1063 = vdwg.mxu0
    %1068 = vrot.lane.b32.xlu0 %v536, 8
    %v1069 = vpop.permute.xlu0 %1068
    %1070 = vrot.lane.b32.xlu0 %v539, 8
    %v1071 = vpop.permute.xlu0 %1070
    %1072 = vrot.lane.b32.xlu0 %v571, 8
    %v1073 = vpop.permute.xlu0 %1072
    %1074 = vrot.lane.b32.xlu0 %v574, 8
    %v1075 = vpop.permute.xlu0 %1074
    %1084 = vrot.lane.b32.xlu0 %v780, 16
    %v1085 = vpop.permute.xlu0 %1084
    %1086 = vrot.lane.b32.xlu0 %v783, 16
    %v1087 = vpop.permute.xlu0 %1086
    %1088 = vrot.lane.b32.xlu0 %v815, 16
    %v1089 = vpop.permute.xlu0 %1088
    %1090 = vrot.lane.b32.xlu0 %v818, 16
    %v1091 = vpop.permute.xlu0 %1090
    %1100 = vrot.lane.b32.xlu0 %v1024, 24
    %v1101 = vpop.permute.xlu0 %1100
    %1102 = vrot.lane.b32.xlu0 %v1027, 24
    %v1103 = vpop.permute.xlu0 %1102
    %1104 = vrot.lane.b32.xlu0 %v1059, 24
    %v1105 = vpop.permute.xlu0 %1104
    %1106 = vrot.lane.b32.xlu0 %v1062, 24
    %v1107 = vpop.permute.xlu0 %1106
    %v1112 = vsel %vm92, %v292, %v1069
    %v1113 = vsel %vm92, %v295, %v1071
    %v1114 = vsel %vm92, %v327, %v1073
    %v1115 = vsel %vm92, %v330, %v1075
    %v1116 = vsel %vm165, %v1112, %v1085
    %v1117 = vsel %vm165, %v1113, %v1087
    %v1118 = vsel %vm165, %v1114, %v1089
    %v1119 = vsel %vm165, %v1115, %v1091
    %vm1120 = vcmask 195584
    %v1121 = vsel %vm1120, %v1116, %v1101
    %v1122 = vsel %vm1120, %v1117, %v1103
    %v1123 = vsel %vm1120, %v1118, %v1105
    %v1124 = vsel %vm1120, %v1119, %v1107
    %v1125 = vld [vmem:[%s2] sm:$0xff]
    %v1126 = vld [vmem:[%s2 + $0x8] sm:$0xff]
    %v1127 = vld [vmem:[%s2 + $0x10] sm:$0xff]
    %v1128 = vld [vmem:[%s2 + $0x18] sm:$0xff]
    %vm1129 = vcmask 261120
    %v1131 = vsel %vm1129, %v1121, 0
    %v1134 = vsel %vm1129, %v1122, 0
    %v1137 = vsel %vm1129, %v1123, 0
    %v1140 = vsel %vm1129, %v1124, 0
    %1142 = vmatpush.msra.mxu0 0.0
    %1143 = vmatpush.msra.mxu0 0.0
    %1144 = vmatpush.msra.mxu0 0.0
    %1145 = vmatpush.msra.mxu0 0.0
    %1146 = vmatpush.msra.mxu0 0.0
    %1147 = vmatpush.msra.mxu0 0.0
    %1148 = vmatpush.msra.mxu0 0.0
    %1149 = vmatpush.msra.mxu0 0.0
    %1150 = vmatpush.msra.mxu0 0.0
    %1151 = vmatpush.msra.mxu0 0.0
    %1152 = vmatpush.msra.mxu0 0.0
    %1153 = vmatpush.msra.mxu0 0.0
    %1154 = vmatpush.msra.mxu0 %v1128
    %1155 = vmatpush.msra.mxu0 %v1127
    %1156 = vmatpush.msra.mxu0 %v1126
    %1157 = vmatpush.msra.mxu0 %v1125
    %1158 = vmatmul.f32.gmra.mxu0 %v1131
    %v1159 = vpop.f32.mrf.mxu0
    %v1160 = vadd.f32 %v29, %v1159
    %1161 = vmatmul.f32.gmra.mxu0 %v1134
    %v1162 = vpop.f32.mrf.mxu0
    %v1163 = vadd.f32 %v30, %v1162
    %1164 = vmatmul.f32.gmra.mxu0 %v1137
    %v1165 = vpop.f32.mrf.mxu0
    %v1166 = vadd.f32 %v31, %v1165
    %1167 = vmatmul.f32.gmra.mxu0 %v1140
    %v1168 = vpop.f32.mrf.mxu0
    %v1169 = vadd.f32 %v32, %v1168
    %1170 = vdwg.mxu0
    %v1171 = vsel %vm36, %v1160, 0.0
    %1172 = vadd.xlane.f32.xlu0 %v1171
    %v1173 = vpop.xlane.xlu0 %1172
    %v1174 = vsel %vm36, %v1163, 0.0
    %1175 = vadd.xlane.f32.xlu0 %v1174
    %v1176 = vpop.xlane.xlu0 %1175
    %v1177 = vsel %vm36, %v1166, 0.0
    %1178 = vadd.xlane.f32.xlu0 %v1177
    %v1179 = vpop.xlane.xlu0 %1178
    %v1180 = vsel %vm36, %v1169, 0.0
    %1181 = vadd.xlane.f32.xlu0 %v1180
    %v1182 = vpop.xlane.xlu0 %1181
    %v1183 = vrcp.pop 20.0
    %v1184 = vmul.f32 20.0, %v1183
    %v1185 = vsub.f32 1.0, %v1184
    %v1186 = vmul.f32 %v1183, %v1185
    %v1187 = vadd.f32 %v1183, %v1186
    %vm1188 = vweird.f32 %v1183
    %v1189 = vsel %vm1188, %v1183, %v1187
    %v1190 = vmul.f32 %v1173, %v1189
    %v1191 = vmul.f32 %v1176, %v1189
    %v1192 = vmul.f32 %v1179, %v1189
    %v1193 = vmul.f32 %v1182, %v1189
    %v1194 = vsub.f32 %v1160, %v1190
    %v1195 = vsub.f32 %v1163, %v1191
    %v1196 = vsub.f32 %v1166, %v1192
    %v1197 = vsub.f32 %v1169, %v1193
    %v1198 = vmul.f32 %v1194, %v1194
    %v1199 = vmul.f32 %v1195, %v1195
    %v1200 = vmul.f32 %v1196, %v1196
    %v1201 = vmul.f32 %v1197, %v1197
    %v1202 = vsel %vm36, %v1198, 0.0
    %1203 = vadd.xlane.f32.xlu0 %v1202
    %v1204 = vpop.xlane.xlu0 %1203
    %v1205 = vsel %vm36, %v1199, 0.0
    %1206 = vadd.xlane.f32.xlu0 %v1205
    %v1207 = vpop.xlane.xlu0 %1206
    %v1208 = vsel %vm36, %v1200, 0.0
    %1209 = vadd.xlane.f32.xlu0 %v1208
    %v1210 = vpop.xlane.xlu0 %1209
    %v1211 = vsel %vm36, %v1201, 0.0
    %1212 = vadd.xlane.f32.xlu0 %v1211
    %v1213 = vpop.xlane.xlu0 %1212
    %v1214 = vmul.f32 %v1204, %v1189
    %v1215 = vmul.f32 %v1207, %v1189
    %v1216 = vmul.f32 %v1210, %v1189
    %v1217 = vmul.f32 %v1213, %v1189
    %v1218 = vadd.f32 %v1214, 1e-06
    %v1219 = vadd.f32 %v1215, 1e-06
    %v1220 = vadd.f32 %v1216, 1e-06
    %v1221 = vadd.f32 %v1217, 1e-06
    %v1222 = vrsqrt.pop %v1218
    %v1223 = vmul.f32 %v1222, %v1218
    %v1224 = vmul.f32 %v1223, %v1222
    %v1225 = vmul.f32 0.5, %v1224
    %v1226 = vsub.f32 1.5, %v1225
    %v1227 = vmul.f32 %v1222, %v1226
    %vm1228 = vweird.f32 %v1218
    %vm1229 = vweird.f32 %v1222
    %vm1230 = vmor %vm1228, %vm1229
    %v1231 = vsel %vm1230, %v1222, %v1227
    %v1232 = vrsqrt.pop %v1219
    %v1233 = vmul.f32 %v1232, %v1219
    %v1234 = vmul.f32 %v1233, %v1232
    %v1235 = vmul.f32 0.5, %v1234
    %v1236 = vsub.f32 1.5, %v1235
    %v1237 = vmul.f32 %v1232, %v1236
    %vm1238 = vweird.f32 %v1219
    %vm1239 = vweird.f32 %v1232
    %vm1240 = vmor %vm1238, %vm1239
    %v1241 = vsel %vm1240, %v1232, %v1237
    %v1242 = vrsqrt.pop %v1220
    %v1243 = vmul.f32 %v1242, %v1220
    %v1244 = vmul.f32 %v1243, %v1242
    %v1245 = vmul.f32 0.5, %v1244
    %v1246 = vsub.f32 1.5, %v1245
    %v1247 = vmul.f32 %v1242, %v1246
    %vm1248 = vweird.f32 %v1220
    %vm1249 = vweird.f32 %v1242
    %vm1250 = vmor %vm1248, %vm1249
    %v1251 = vsel %vm1250, %v1242, %v1247
    %v1252 = vrsqrt.pop %v1221
    %v1253 = vmul.f32 %v1252, %v1221
    %v1254 = vmul.f32 %v1253, %v1252
    %v1255 = vmul.f32 0.5, %v1254
    %v1256 = vsub.f32 1.5, %v1255
    %v1257 = vmul.f32 %v1252, %v1256
    %vm1258 = vweird.f32 %v1221
    %vm1259 = vweird.f32 %v1252
    %vm1260 = vmor %vm1258, %vm1259
    %v1261 = vsel %vm1260, %v1252, %v1257
    %v1262 = vmul.f32 %v1194, %v1231
    %v1263 = vmul.f32 %v1195, %v1241
    %v1264 = vmul.f32 %v1196, %v1251
    %v1265 = vmul.f32 %v1197, %v1261
    %v1266 = vld [vmem:[%s3] sm:$0x1]
    %v1267 = vperm.slane %v1266, 0
    %v1268 = vmul.f32 %v1262, %v1267
    %v1269 = vmul.f32 %v1263, %v1267
    %v1270 = vmul.f32 %v1264, %v1267
    %v1271 = vmul.f32 %v1265, %v1267
    %v1272 = vld [vmem:[%s3 + $0x1] sm:$0x1]
    %v1273 = vperm.slane %v1272, 0
    %v1274 = vadd.f32 %v1268, %v1273
    %v1275 = vadd.f32 %v1269, %v1273
    %v1276 = vadd.f32 %v1270, %v1273
    %v1277 = vadd.f32 %v1271, %v1273
    %1278 = vst.msk [vmem:[%s7] sm:$0xff] %vm36, %v1274
    %1279 = vst.msk [vmem:[%s7 + $0x8] sm:$0xff] %vm36, %v1275
    %1280 = vst.msk [vmem:[%s7 + $0x10] sm:$0xff] %vm36, %v1276
    %1281 = vst.msk [vmem:[%s7 + $0x18] sm:$0xff] %vm36, %v1277
    %v1282 = vld [vmem:[%s6] sm:$0x1]
    %v1284 = vperm.slane %v1282, 0
    %v1286 = vadd.f32 %v1284, 0.0
    %v1287 = vld [vmem:[%s7] sm:$0x1]
    %v1288 = vld [vmem:[%s7 + $0x10] sm:$0x1]
    %v1289 = vld [vmem:[%s4] sm:$0xff]
    %v1290 = vld [vmem:[%s4 + $0x8] sm:$0xff]
    %v1291 = vld [vmem:[%s4 + $0x10] sm:$0xf]
    %v1294 = vrot.slane %v1288, 7
    %vm1295 = vcmask 1041409
    %v1296 = vsel %vm1295, %v1294, %v1287
    %v1297 = vsel %vm36, %v1296, 0
    %v1300 = vsel %vm49, %v1291, 0
    %1302 = vmatpush.msra.mxu0 0.0
    %1303 = vmatpush.msra.mxu0 0.0
    %1304 = vmatpush.msra.mxu0 0.0
    %1305 = vmatpush.msra.mxu0 0.0
    %1306 = vmatpush.msra.mxu0 0.0
    %1307 = vmatpush.msra.mxu0 0.0
    %1308 = vmatpush.msra.mxu0 0.0
    %1309 = vmatpush.msra.mxu0 0.0
    %1310 = vmatpush.msra.mxu0 0.0
    %1311 = vmatpush.msra.mxu0 0.0
    %1312 = vmatpush.msra.mxu0 0.0
    %1313 = vmatpush.msra.mxu0 0.0
    %1314 = vmatpush.msra.mxu0 0.0
    %1315 = vmatpush.msra.mxu0 %v1300
    %1316 = vmatpush.msra.mxu0 %v1290
    %1317 = vmatpush.msra.mxu0 %v1289
    %1318 = vmatmul.f32.gmra.mxu0 %v1297
    %v1319 = vpop.f32.mrf.mxu0
    %v1320 = vadd.f32 0.0, %v1319
    %1321 = vdwg.mxu0
    %v1322 = vadd.f32 %v1286, %v1320
    %v1323 = vld [vmem:[%s7 + $0x1] sm:$0x1]
    %v1324 = vld [vmem:[%s7 + $0x11] sm:$0x1]
    %s1325 = scalar_lea.vmem %s4, 24
    %v1326 = vld [vmem:[%s1325] sm:$0xff]
    %v1327 = vld [vmem:[%s1325 + $0x8] sm:$0xff]
    %v1328 = vld [vmem:[%s1325 + $0x10] sm:$0xf]
    %v1331 = vrot.slane %v1324, 7
    %v1332 = vsel %vm1295, %v1331, %v1323
    %v1333 = vsel %vm36, %v1332, 0
    %v1336 = vsel %vm49, %v1328, 0
    %1338 = vmatpush.msra.mxu0 0.0
    %1339 = vmatpush.msra.mxu0 0.0
    %1340 = vmatpush.msra.mxu0 0.0
    %1341 = vmatpush.msra.mxu0 0.0
    %1342 = vmatpush.msra.mxu0 0.0
    %1343 = vmatpush.msra.mxu0 0.0
    %1344 = vmatpush.msra.mxu0 0.0
    %1345 = vmatpush.msra.mxu0 0.0
    %1346 = vmatpush.msra.mxu0 0.0
    %1347 = vmatpush.msra.mxu0 0.0
    %1348 = vmatpush.msra.mxu0 0.0
    %1349 = vmatpush.msra.mxu0 0.0
    %1350 = vmatpush.msra.mxu0 0.0
    %1351 = vmatpush.msra.mxu0 %v1336
    %1352 = vmatpush.msra.mxu0 %v1327
    %1353 = vmatpush.msra.mxu0 %v1326
    %1354 = vmatmul.f32.gmra.mxu0 %v1333
    %v1355 = vpop.f32.mrf.mxu0
    %v1356 = vadd.f32 0.0, %v1355
    %1357 = vdwg.mxu0
    %v1358 = vadd.f32 %v1322, %v1356
    %v1359 = vld [vmem:[%s7 + $0x2] sm:$0x1]
    %v1360 = vld [vmem:[%s7 + $0x12] sm:$0x1]
    %s1361 = scalar_lea.vmem %s4, 48
    %v1362 = vld [vmem:[%s1361] sm:$0xff]
    %v1363 = vld [vmem:[%s1361 + $0x8] sm:$0xff]
    %v1364 = vld [vmem:[%s1361 + $0x10] sm:$0xf]
    %v1367 = vrot.slane %v1360, 7
    %v1368 = vsel %vm1295, %v1367, %v1359
    %v1369 = vsel %vm36, %v1368, 0
    %v1372 = vsel %vm49, %v1364, 0
    %1374 = vmatpush.msra.mxu0 0.0
    %1375 = vmatpush.msra.mxu0 0.0
    %1376 = vmatpush.msra.mxu0 0.0
    %1377 = vmatpush.msra.mxu0 0.0
    %1378 = vmatpush.msra.mxu0 0.0
    %1379 = vmatpush.msra.mxu0 0.0
    %1380 = vmatpush.msra.mxu0 0.0
    %1381 = vmatpush.msra.mxu0 0.0
    %1382 = vmatpush.msra.mxu0 0.0
    %1383 = vmatpush.msra.mxu0 0.0
    %1384 = vmatpush.msra.mxu0 0.0
    %1385 = vmatpush.msra.mxu0 0.0
    %1386 = vmatpush.msra.mxu0 0.0
    %1387 = vmatpush.msra.mxu0 %v1372
    %1388 = vmatpush.msra.mxu0 %v1363
    %1389 = vmatpush.msra.mxu0 %v1362
    %1390 = vmatmul.f32.gmra.mxu0 %v1369
    %v1391 = vpop.f32.mrf.mxu0
    %v1392 = vadd.f32 0.0, %v1391
    %1393 = vdwg.mxu0
    %v1394 = vadd.f32 %v1358, %v1392
    %v1395 = vld [vmem:[%s7 + $0x3] sm:$0x1]
    %v1396 = vld [vmem:[%s7 + $0x13] sm:$0x1]
    %s1397 = scalar_lea.vmem %s4, 72
    %v1398 = vld [vmem:[%s1397] sm:$0xff]
    %v1399 = vld [vmem:[%s1397 + $0x8] sm:$0xff]
    %v1400 = vld [vmem:[%s1397 + $0x10] sm:$0xf]
    %v1403 = vrot.slane %v1396, 7
    %v1404 = vsel %vm1295, %v1403, %v1395
    %v1405 = vsel %vm36, %v1404, 0
    %v1408 = vsel %vm49, %v1400, 0
    %1410 = vmatpush.msra.mxu0 0.0
    %1411 = vmatpush.msra.mxu0 0.0
    %1412 = vmatpush.msra.mxu0 0.0
    %1413 = vmatpush.msra.mxu0 0.0
    %1414 = vmatpush.msra.mxu0 0.0
    %1415 = vmatpush.msra.mxu0 0.0
    %1416 = vmatpush.msra.mxu0 0.0
    %1417 = vmatpush.msra.mxu0 0.0
    %1418 = vmatpush.msra.mxu0 0.0
    %1419 = vmatpush.msra.mxu0 0.0
    %1420 = vmatpush.msra.mxu0 0.0
    %1421 = vmatpush.msra.mxu0 0.0
    %1422 = vmatpush.msra.mxu0 0.0
    %1423 = vmatpush.msra.mxu0 %v1408
    %1424 = vmatpush.msra.mxu0 %v1399
    %1425 = vmatpush.msra.mxu0 %v1398
    %1426 = vmatmul.f32.gmra.mxu0 %v1405
    %v1427 = vpop.f32.mrf.mxu0
    %v1428 = vadd.f32 0.0, %v1427
    %1429 = vdwg.mxu0
    %v1430 = vadd.f32 %v1394, %v1428
    %v1431 = vld [vmem:[%s7 + $0x4] sm:$0x1]
    %v1432 = vld [vmem:[%s7 + $0x14] sm:$0x1]
    %s1433 = scalar_lea.vmem %s4, 96
    %v1434 = vld [vmem:[%s1433] sm:$0xff]
    %v1435 = vld [vmem:[%s1433 + $0x8] sm:$0xff]
    %v1436 = vld [vmem:[%s1433 + $0x10] sm:$0xf]
    %v1439 = vrot.slane %v1432, 7
    %v1440 = vsel %vm1295, %v1439, %v1431
    %v1441 = vsel %vm36, %v1440, 0
    %v1444 = vsel %vm49, %v1436, 0
    %1446 = vmatpush.msra.mxu0 0.0
    %1447 = vmatpush.msra.mxu0 0.0
    %1448 = vmatpush.msra.mxu0 0.0
    %1449 = vmatpush.msra.mxu0 0.0
    %1450 = vmatpush.msra.mxu0 0.0
    %1451 = vmatpush.msra.mxu0 0.0
    %1452 = vmatpush.msra.mxu0 0.0
    %1453 = vmatpush.msra.mxu0 0.0
    %1454 = vmatpush.msra.mxu0 0.0
    %1455 = vmatpush.msra.mxu0 0.0
    %1456 = vmatpush.msra.mxu0 0.0
    %1457 = vmatpush.msra.mxu0 0.0
    %1458 = vmatpush.msra.mxu0 0.0
    %1459 = vmatpush.msra.mxu0 %v1444
    %1460 = vmatpush.msra.mxu0 %v1435
    %1461 = vmatpush.msra.mxu0 %v1434
    %1462 = vmatmul.f32.gmra.mxu0 %v1441
    %v1463 = vpop.f32.mrf.mxu0
    %v1464 = vadd.f32 0.0, %v1463
    %1465 = vdwg.mxu0
    %v1466 = vadd.f32 %v1430, %v1464
    %v1467 = vld [vmem:[%s7 + $0x5] sm:$0x1]
    %v1468 = vld [vmem:[%s7 + $0x15] sm:$0x1]
    %s1469 = scalar_lea.vmem %s4, 120
    %v1470 = vld [vmem:[%s1469] sm:$0xff]
    %v1471 = vld [vmem:[%s1469 + $0x8] sm:$0xff]
    %v1472 = vld [vmem:[%s1469 + $0x10] sm:$0xf]
    %v1475 = vrot.slane %v1468, 7
    %v1476 = vsel %vm1295, %v1475, %v1467
    %v1477 = vsel %vm36, %v1476, 0
    %v1480 = vsel %vm49, %v1472, 0
    %1482 = vmatpush.msra.mxu0 0.0
    %1483 = vmatpush.msra.mxu0 0.0
    %1484 = vmatpush.msra.mxu0 0.0
    %1485 = vmatpush.msra.mxu0 0.0
    %1486 = vmatpush.msra.mxu0 0.0
    %1487 = vmatpush.msra.mxu0 0.0
    %1488 = vmatpush.msra.mxu0 0.0
    %1489 = vmatpush.msra.mxu0 0.0
    %1490 = vmatpush.msra.mxu0 0.0
    %1491 = vmatpush.msra.mxu0 0.0
    %1492 = vmatpush.msra.mxu0 0.0
    %1493 = vmatpush.msra.mxu0 0.0
    %1494 = vmatpush.msra.mxu0 0.0
    %1495 = vmatpush.msra.mxu0 %v1480
    %1496 = vmatpush.msra.mxu0 %v1471
    %1497 = vmatpush.msra.mxu0 %v1470
    %1498 = vmatmul.f32.gmra.mxu0 %v1477
    %v1499 = vpop.f32.mrf.mxu0
    %v1500 = vadd.f32 0.0, %v1499
    %1501 = vdwg.mxu0
    %v1502 = vadd.f32 %v1466, %v1500
    %v1503 = vld [vmem:[%s7 + $0x6] sm:$0x1]
    %v1504 = vld [vmem:[%s7 + $0x16] sm:$0x1]
    %s1505 = scalar_lea.vmem %s4, 144
    %v1506 = vld [vmem:[%s1505] sm:$0xff]
    %v1507 = vld [vmem:[%s1505 + $0x8] sm:$0xff]
    %v1508 = vld [vmem:[%s1505 + $0x10] sm:$0xf]
    %v1511 = vrot.slane %v1504, 7
    %v1512 = vsel %vm1295, %v1511, %v1503
    %v1513 = vsel %vm36, %v1512, 0
    %v1516 = vsel %vm49, %v1508, 0
    %1518 = vmatpush.msra.mxu0 0.0
    %1519 = vmatpush.msra.mxu0 0.0
    %1520 = vmatpush.msra.mxu0 0.0
    %1521 = vmatpush.msra.mxu0 0.0
    %1522 = vmatpush.msra.mxu0 0.0
    %1523 = vmatpush.msra.mxu0 0.0
    %1524 = vmatpush.msra.mxu0 0.0
    %1525 = vmatpush.msra.mxu0 0.0
    %1526 = vmatpush.msra.mxu0 0.0
    %1527 = vmatpush.msra.mxu0 0.0
    %1528 = vmatpush.msra.mxu0 0.0
    %1529 = vmatpush.msra.mxu0 0.0
    %1530 = vmatpush.msra.mxu0 0.0
    %1531 = vmatpush.msra.mxu0 %v1516
    %1532 = vmatpush.msra.mxu0 %v1507
    %1533 = vmatpush.msra.mxu0 %v1506
    %1534 = vmatmul.f32.gmra.mxu0 %v1513
    %v1535 = vpop.f32.mrf.mxu0
    %v1536 = vadd.f32 0.0, %v1535
    %1537 = vdwg.mxu0
    %v1538 = vadd.f32 %v1502, %v1536
    %v1539 = vld [vmem:[%s7 + $0x7] sm:$0x1]
    %v1540 = vld [vmem:[%s7 + $0x17] sm:$0x1]
    %s1541 = scalar_lea.vmem %s4, 168
    %v1542 = vld [vmem:[%s1541] sm:$0xff]
    %v1543 = vld [vmem:[%s1541 + $0x8] sm:$0xff]
    %v1544 = vld [vmem:[%s1541 + $0x10] sm:$0xf]
    %v1547 = vrot.slane %v1540, 7
    %v1548 = vsel %vm1295, %v1547, %v1539
    %v1549 = vsel %vm36, %v1548, 0
    %v1552 = vsel %vm49, %v1544, 0
    %1554 = vmatpush.msra.mxu0 0.0
    %1555 = vmatpush.msra.mxu0 0.0
    %1556 = vmatpush.msra.mxu0 0.0
    %1557 = vmatpush.msra.mxu0 0.0
    %1558 = vmatpush.msra.mxu0 0.0
    %1559 = vmatpush.msra.mxu0 0.0
    %1560 = vmatpush.msra.mxu0 0.0
    %1561 = vmatpush.msra.mxu0 0.0
    %1562 = vmatpush.msra.mxu0 0.0
    %1563 = vmatpush.msra.mxu0 0.0
    %1564 = vmatpush.msra.mxu0 0.0
    %1565 = vmatpush.msra.mxu0 0.0
    %1566 = vmatpush.msra.mxu0 0.0
    %1567 = vmatpush.msra.mxu0 %v1552
    %1568 = vmatpush.msra.mxu0 %v1543
    %1569 = vmatpush.msra.mxu0 %v1542
    %1570 = vmatmul.f32.gmra.mxu0 %v1549
    %v1571 = vpop.f32.mrf.mxu0
    %v1572 = vadd.f32 0.0, %v1571
    %1573 = vdwg.mxu0
    %v1574 = vadd.f32 %v1538, %v1572
    %v1575 = vld [vmem:[%s7 + $0x8] sm:$0x1]
    %v1576 = vld [vmem:[%s7 + $0x18] sm:$0x1]
    %s1577 = scalar_lea.vmem %s4, 192
    %v1578 = vld [vmem:[%s1577] sm:$0xff]
    %v1579 = vld [vmem:[%s1577 + $0x8] sm:$0xff]
    %v1580 = vld [vmem:[%s1577 + $0x10] sm:$0xf]
    %v1583 = vrot.slane %v1576, 7
    %v1584 = vsel %vm1295, %v1583, %v1575
    %v1585 = vsel %vm36, %v1584, 0
    %v1588 = vsel %vm49, %v1580, 0
    %1590 = vmatpush.msra.mxu0 0.0
    %1591 = vmatpush.msra.mxu0 0.0
    %1592 = vmatpush.msra.mxu0 0.0
    %1593 = vmatpush.msra.mxu0 0.0
    %1594 = vmatpush.msra.mxu0 0.0
    %1595 = vmatpush.msra.mxu0 0.0
    %1596 = vmatpush.msra.mxu0 0.0
    %1597 = vmatpush.msra.mxu0 0.0
    %1598 = vmatpush.msra.mxu0 0.0
    %1599 = vmatpush.msra.mxu0 0.0
    %1600 = vmatpush.msra.mxu0 0.0
    %1601 = vmatpush.msra.mxu0 0.0
    %1602 = vmatpush.msra.mxu0 0.0
    %1603 = vmatpush.msra.mxu0 %v1588
    %1604 = vmatpush.msra.mxu0 %v1579
    %1605 = vmatpush.msra.mxu0 %v1578
    %1606 = vmatmul.f32.gmra.mxu0 %v1585
    %v1607 = vpop.f32.mrf.mxu0
    %v1608 = vadd.f32 0.0, %v1607
    %1609 = vdwg.mxu0
    %v1610 = vadd.f32 %v1574, %v1608
    %v1611 = vld [vmem:[%s7 + $0x9] sm:$0x1]
    %v1612 = vld [vmem:[%s7 + $0x19] sm:$0x1]
    %s1613 = scalar_lea.vmem %s4, 216
    %v1614 = vld [vmem:[%s1613] sm:$0xff]
    %v1615 = vld [vmem:[%s1613 + $0x8] sm:$0xff]
    %v1616 = vld [vmem:[%s1613 + $0x10] sm:$0xf]
    %v1619 = vrot.slane %v1612, 7
    %v1620 = vsel %vm1295, %v1619, %v1611
    %v1621 = vsel %vm36, %v1620, 0
    %v1624 = vsel %vm49, %v1616, 0
    %1626 = vmatpush.msra.mxu0 0.0
    %1627 = vmatpush.msra.mxu0 0.0
    %1628 = vmatpush.msra.mxu0 0.0
    %1629 = vmatpush.msra.mxu0 0.0
    %1630 = vmatpush.msra.mxu0 0.0
    %1631 = vmatpush.msra.mxu0 0.0
    %1632 = vmatpush.msra.mxu0 0.0
    %1633 = vmatpush.msra.mxu0 0.0
    %1634 = vmatpush.msra.mxu0 0.0
    %1635 = vmatpush.msra.mxu0 0.0
    %1636 = vmatpush.msra.mxu0 0.0
    %1637 = vmatpush.msra.mxu0 0.0
    %1638 = vmatpush.msra.mxu0 0.0
    %1639 = vmatpush.msra.mxu0 %v1624
    %1640 = vmatpush.msra.mxu0 %v1615
    %1641 = vmatpush.msra.mxu0 %v1614
    %1642 = vmatmul.f32.gmra.mxu0 %v1621
    %v1643 = vpop.f32.mrf.mxu0
    %v1644 = vadd.f32 0.0, %v1643
    %1645 = vdwg.mxu0
    %v1646 = vadd.f32 %v1610, %v1644
    %v1647 = vld [vmem:[%s7 + $0xa] sm:$0x1]
    %v1648 = vld [vmem:[%s7 + $0x1a] sm:$0x1]
    %s1649 = scalar_lea.vmem %s4, 240
    %v1650 = vld [vmem:[%s1649] sm:$0xff]
    %v1651 = vld [vmem:[%s1649 + $0x8] sm:$0xff]
    %v1652 = vld [vmem:[%s1649 + $0x10] sm:$0xf]
    %v1655 = vrot.slane %v1648, 7
    %v1656 = vsel %vm1295, %v1655, %v1647
    %v1657 = vsel %vm36, %v1656, 0
    %v1660 = vsel %vm49, %v1652, 0
    %1662 = vmatpush.msra.mxu0 0.0
    %1663 = vmatpush.msra.mxu0 0.0
    %1664 = vmatpush.msra.mxu0 0.0
    %1665 = vmatpush.msra.mxu0 0.0
    %1666 = vmatpush.msra.mxu0 0.0
    %1667 = vmatpush.msra.mxu0 0.0
    %1668 = vmatpush.msra.mxu0 0.0
    %1669 = vmatpush.msra.mxu0 0.0
    %1670 = vmatpush.msra.mxu0 0.0
    %1671 = vmatpush.msra.mxu0 0.0
    %1672 = vmatpush.msra.mxu0 0.0
    %1673 = vmatpush.msra.mxu0 0.0
    %1674 = vmatpush.msra.mxu0 0.0
    %1675 = vmatpush.msra.mxu0 %v1660
    %1676 = vmatpush.msra.mxu0 %v1651
    %1677 = vmatpush.msra.mxu0 %v1650
    %1678 = vmatmul.f32.gmra.mxu0 %v1657
    %v1679 = vpop.f32.mrf.mxu0
    %v1680 = vadd.f32 0.0, %v1679
    %1681 = vdwg.mxu0
    %v1682 = vadd.f32 %v1646, %v1680
    %v1683 = vld [vmem:[%s7 + $0xb] sm:$0x1]
    %v1684 = vld [vmem:[%s7 + $0x1b] sm:$0x1]
    %s1685 = scalar_lea.vmem %s4, 264
    %v1686 = vld [vmem:[%s1685] sm:$0xff]
    %v1687 = vld [vmem:[%s1685 + $0x8] sm:$0xff]
    %v1688 = vld [vmem:[%s1685 + $0x10] sm:$0xf]
    %v1691 = vrot.slane %v1684, 7
    %v1692 = vsel %vm1295, %v1691, %v1683
    %v1693 = vsel %vm36, %v1692, 0
    %v1696 = vsel %vm49, %v1688, 0
    %1698 = vmatpush.msra.mxu0 0.0
    %1699 = vmatpush.msra.mxu0 0.0
    %1700 = vmatpush.msra.mxu0 0.0
    %1701 = vmatpush.msra.mxu0 0.0
    %1702 = vmatpush.msra.mxu0 0.0
    %1703 = vmatpush.msra.mxu0 0.0
    %1704 = vmatpush.msra.mxu0 0.0
    %1705 = vmatpush.msra.mxu0 0.0
    %1706 = vmatpush.msra.mxu0 0.0
    %1707 = vmatpush.msra.mxu0 0.0
    %1708 = vmatpush.msra.mxu0 0.0
    %1709 = vmatpush.msra.mxu0 0.0
    %1710 = vmatpush.msra.mxu0 0.0
    %1711 = vmatpush.msra.mxu0 %v1696
    %1712 = vmatpush.msra.mxu0 %v1687
    %1713 = vmatpush.msra.mxu0 %v1686
    %1714 = vmatmul.f32.gmra.mxu0 %v1693
    %v1715 = vpop.f32.mrf.mxu0
    %v1716 = vadd.f32 0.0, %v1715
    %1717 = vdwg.mxu0
    %v1718 = vadd.f32 %v1682, %v1716
    %v1719 = vld [vmem:[%s7 + $0xc] sm:$0x1]
    %v1720 = vld [vmem:[%s7 + $0x1c] sm:$0x1]
    %s1721 = scalar_lea.vmem %s4, 288
    %v1722 = vld [vmem:[%s1721] sm:$0xff]
    %v1723 = vld [vmem:[%s1721 + $0x8] sm:$0xff]
    %v1724 = vld [vmem:[%s1721 + $0x10] sm:$0xf]
    %v1727 = vrot.slane %v1720, 7
    %v1728 = vsel %vm1295, %v1727, %v1719
    %v1729 = vsel %vm36, %v1728, 0
    %v1732 = vsel %vm49, %v1724, 0
    %1734 = vmatpush.msra.mxu0 0.0
    %1735 = vmatpush.msra.mxu0 0.0
    %1736 = vmatpush.msra.mxu0 0.0
    %1737 = vmatpush.msra.mxu0 0.0
    %1738 = vmatpush.msra.mxu0 0.0
    %1739 = vmatpush.msra.mxu0 0.0
    %1740 = vmatpush.msra.mxu0 0.0
    %1741 = vmatpush.msra.mxu0 0.0
    %1742 = vmatpush.msra.mxu0 0.0
    %1743 = vmatpush.msra.mxu0 0.0
    %1744 = vmatpush.msra.mxu0 0.0
    %1745 = vmatpush.msra.mxu0 0.0
    %1746 = vmatpush.msra.mxu0 0.0
    %1747 = vmatpush.msra.mxu0 %v1732
    %1748 = vmatpush.msra.mxu0 %v1723
    %1749 = vmatpush.msra.mxu0 %v1722
    %1750 = vmatmul.f32.gmra.mxu0 %v1729
    %v1751 = vpop.f32.mrf.mxu0
    %v1752 = vadd.f32 0.0, %v1751
    %1753 = vdwg.mxu0
    %v1754 = vadd.f32 %v1718, %v1752
    %v1755 = vld [vmem:[%s7 + $0xd] sm:$0x1]
    %v1756 = vld [vmem:[%s7 + $0x1d] sm:$0x1]
    %s1757 = scalar_lea.vmem %s4, 312
    %v1758 = vld [vmem:[%s1757] sm:$0xff]
    %v1759 = vld [vmem:[%s1757 + $0x8] sm:$0xff]
    %v1760 = vld [vmem:[%s1757 + $0x10] sm:$0xf]
    %v1763 = vrot.slane %v1756, 7
    %v1764 = vsel %vm1295, %v1763, %v1755
    %v1765 = vsel %vm36, %v1764, 0
    %v1768 = vsel %vm49, %v1760, 0
    %1770 = vmatpush.msra.mxu0 0.0
    %1771 = vmatpush.msra.mxu0 0.0
    %1772 = vmatpush.msra.mxu0 0.0
    %1773 = vmatpush.msra.mxu0 0.0
    %1774 = vmatpush.msra.mxu0 0.0
    %1775 = vmatpush.msra.mxu0 0.0
    %1776 = vmatpush.msra.mxu0 0.0
    %1777 = vmatpush.msra.mxu0 0.0
    %1778 = vmatpush.msra.mxu0 0.0
    %1779 = vmatpush.msra.mxu0 0.0
    %1780 = vmatpush.msra.mxu0 0.0
    %1781 = vmatpush.msra.mxu0 0.0
    %1782 = vmatpush.msra.mxu0 0.0
    %1783 = vmatpush.msra.mxu0 %v1768
    %1784 = vmatpush.msra.mxu0 %v1759
    %1785 = vmatpush.msra.mxu0 %v1758
    %1786 = vmatmul.f32.gmra.mxu0 %v1765
    %v1787 = vpop.f32.mrf.mxu0
    %v1788 = vadd.f32 0.0, %v1787
    %1789 = vdwg.mxu0
    %v1790 = vadd.f32 %v1754, %v1788
    %v1791 = vld [vmem:[%s7 + $0xe] sm:$0x1]
    %v1792 = vld [vmem:[%s7 + $0x1e] sm:$0x1]
    %s1793 = scalar_lea.vmem %s4, 336
    %v1794 = vld [vmem:[%s1793] sm:$0xff]
    %v1795 = vld [vmem:[%s1793 + $0x8] sm:$0xff]
    %v1796 = vld [vmem:[%s1793 + $0x10] sm:$0xf]
    %v1799 = vrot.slane %v1792, 7
    %v1800 = vsel %vm1295, %v1799, %v1791
    %v1801 = vsel %vm36, %v1800, 0
    %v1804 = vsel %vm49, %v1796, 0
    %1806 = vmatpush.msra.mxu0 0.0
    %1807 = vmatpush.msra.mxu0 0.0
    %1808 = vmatpush.msra.mxu0 0.0
    %1809 = vmatpush.msra.mxu0 0.0
    %1810 = vmatpush.msra.mxu0 0.0
    %1811 = vmatpush.msra.mxu0 0.0
    %1812 = vmatpush.msra.mxu0 0.0
    %1813 = vmatpush.msra.mxu0 0.0
    %1814 = vmatpush.msra.mxu0 0.0
    %1815 = vmatpush.msra.mxu0 0.0
    %1816 = vmatpush.msra.mxu0 0.0
    %1817 = vmatpush.msra.mxu0 0.0
    %1818 = vmatpush.msra.mxu0 0.0
    %1819 = vmatpush.msra.mxu0 %v1804
    %1820 = vmatpush.msra.mxu0 %v1795
    %1821 = vmatpush.msra.mxu0 %v1794
    %1822 = vmatmul.f32.gmra.mxu0 %v1801
    %v1823 = vpop.f32.mrf.mxu0
    %v1824 = vadd.f32 0.0, %v1823
    %1825 = vdwg.mxu0
    %v1826 = vadd.f32 %v1790, %v1824
    %v1827 = vld [vmem:[%s7 + $0xf] sm:$0x1]
    %v1828 = vld [vmem:[%s7 + $0x1f] sm:$0x1]
    %s1829 = scalar_lea.vmem %s4, 360
    %v1830 = vld [vmem:[%s1829] sm:$0xff]
    %v1831 = vld [vmem:[%s1829 + $0x8] sm:$0xff]
    %v1832 = vld [vmem:[%s1829 + $0x10] sm:$0xf]
    %v1835 = vrot.slane %v1828, 7
    %v1836 = vsel %vm1295, %v1835, %v1827
    %v1837 = vsel %vm36, %v1836, 0
    %v1840 = vsel %vm49, %v1832, 0
    %1842 = vmatpush.msra.mxu0 0.0
    %1843 = vmatpush.msra.mxu0 0.0
    %1844 = vmatpush.msra.mxu0 0.0
    %1845 = vmatpush.msra.mxu0 0.0
    %1846 = vmatpush.msra.mxu0 0.0
    %1847 = vmatpush.msra.mxu0 0.0
    %1848 = vmatpush.msra.mxu0 0.0
    %1849 = vmatpush.msra.mxu0 0.0
    %1850 = vmatpush.msra.mxu0 0.0
    %1851 = vmatpush.msra.mxu0 0.0
    %1852 = vmatpush.msra.mxu0 0.0
    %1853 = vmatpush.msra.mxu0 0.0
    %1854 = vmatpush.msra.mxu0 0.0
    %1855 = vmatpush.msra.mxu0 %v1840
    %1856 = vmatpush.msra.mxu0 %v1831
    %1857 = vmatpush.msra.mxu0 %v1830
    %1858 = vmatmul.f32.gmra.mxu0 %v1837
    %v1859 = vpop.f32.mrf.mxu0
    %v1860 = vadd.f32 0.0, %v1859
    %1861 = vdwg.mxu0
    %v1862 = vadd.f32 %v1826, %v1860
    %v1863 = vld [vmem:[%s5] sm:$0xff]
    %v1864 = vld [vmem:[%s5 + $0x8] sm:$0xff]
    %v1865 = vld [vmem:[%s5 + $0x10] sm:$0xff]
    %v1866 = vld [vmem:[%s5 + $0x18] sm:$0xff]
    %v1867 = vld [vmem:[%s5 + $0x20] sm:$0xff]
    %v1868 = vld [vmem:[%s5 + $0x28] sm:$0xff]
    %v1869 = vld [vmem:[%s5 + $0x30] sm:$0x3]
    %1870 = vrot.lane.b32.xlu0 %v1284, 78
    %v1871 = vpop.permute.xlu0 %1870
    %vm1873 = vcmask 408576
    %v1875 = vsel %vm1873, %v1862, 0
    %vm1877 = vcmask 1041408
    %v1879 = vsel %vm1877, %v1869, 0
    %1881 = vmatpush.msra.mxu0 0.0
    %1882 = vmatpush.msra.mxu0 0.0
    %1883 = vmatpush.msra.mxu0 0.0
    %1884 = vmatpush.msra.mxu0 0.0
    %1885 = vmatpush.msra.mxu0 0.0
    %1886 = vmatpush.msra.mxu0 0.0
    %1887 = vmatpush.msra.mxu0 0.0
    %1888 = vmatpush.msra.mxu0 0.0
    %1889 = vmatpush.msra.mxu0 0.0
    %1890 = vmatpush.msra.mxu0 %v1879
    %1891 = vmatpush.msra.mxu0 %v1868
    %1892 = vmatpush.msra.mxu0 %v1867
    %1893 = vmatpush.msra.mxu0 %v1866
    %1894 = vmatpush.msra.mxu0 %v1865
    %1895 = vmatpush.msra.mxu0 %v1864
    %1896 = vmatpush.msra.mxu0 %v1863
    %1897 = vmatmul.f32.gmra.mxu0 %v1875
    %v1898 = vpop.f32.mrf.mxu0
    %v1899 = vadd.f32 %v1871, %v1898
    %1900 = vdwg.mxu0
    %vm1901 = vcmask 74752
    %v1902 = vsel %vm1901, %v1899, -inf
    %1903 = vmax.xlane.f32.xlu0 %v1902
    %v1904 = vpop.xlane.xlu0 %1903
    %v1905 = vsub.f32 %v1899, %v1904
    %v1906 = vmul.f32 %v1905, 1.442695
    %v1907 = vpow.pop %v1906
    %v1908 = vsel %vm1901, %v1907, 0.0
    %1909 = vadd.xlane.f32.xlu0 %v1908
    %v1910 = vpop.xlane.xlu0 %1909
    %v1911 = vlog2.pop %v1910
    %v1912 = vmul.f32 %v1911, 0.6931472
    %v1913 = vsub.f32 %v1905, %v1912
    %1914 = vst.msk [vmem:[#allocation2] sm:$0x3] %vm1901, %v1913
    // Predicated region
    $region30: #{forward.3} parent=1 // pred_check
      _
    $region31: #{forward.3} parent=1 // pred_check_branch
      %1916 = sbr.rel (0) target = $region33
    $region32: #{forward.3} parent=1 // pred_region
      _
    $region33: #{forward.3} parent=1 // pred_fallthru
      _
    // Predicated region
    $region34: #{forward.3} parent=1 // pred_check
      _
    $region35: #{forward.3} parent=1 // pred_check_branch
      %1918 = sbr.rel (0) target = $region37
    $region36: #{forward.3} parent=1 // pred_region
      %1920 = vsyncadd [#allocation3], 0
      %s1922 = sshll.u32 [#allocation2], 4
      %s1923 = int_to_ptr.vmem [resolvable:$true] %s1922
      %s1924 = sshll.u32 %s8, 4
      %s1925 = int_to_ptr.hbm [resolvable:$true] %s1924
      %1927 = dma.vmem_to_hbm [thread:$0]  %s1923, 32, %s1925, [#allocation3]
    $region37: #{forward.3} parent=1 // pred_fallthru
      _
    // Predicated region
    $region38: #{forward.3} parent=1 // pred_check
      _
    $region39: #{forward.3} parent=1 // pred_check_branch
      %1929 = sbr.rel (0) target = $region41
    $region40: #{forward.3} parent=1 // pred_region
      _
    $region41: #{forward.3} parent=1 // pred_fallthru
      _
    // Predicated region
    $region42: #{forward.3} parent=1 // pred_check
      _
    $region43: #{forward.3} parent=1 // pred_check_branch
      %1931 = sbr.rel (0) target = $region45
    $region44: #{forward.3} parent=1 // pred_region
      %1933 = dma.done [#allocation3], 32
    $region45: #{forward.3} parent=1 // pred_fallthru
      _
    %1934 = vsyncpa [#allocation3], 1

// kernel: forward.2
$region0: #{forward.2}
  #allocation0 [shape = 'u32[]', space=smem, size = 0x4, offset = 0x4, fixed_abs, tag = 'smem constant byte address 0x4 - core index']
  #allocation1 [shape = 'u32[72,128]{1,0:T(1,128)}', space=vmem, size = 0x9000, scoped, tag = 'internal scratch']
  #allocation2 [shape = 'f32[2,12,24,10]{3,2,1,0:T(8,128)}', space=vmem, size = 0x48000, scoped, tag = 'scratch operand']
  #allocation3 [shape = 'f32[2,4,8,20]{3,2,1,0:T(8,128)}', space=vmem, size = 0x8000, scoped, tag = 'scratch operand']
  %s0 = inlined_call_operand.vmem [shape: bf16[1152,25], index: 0, kind: input, shape index: {}]
  %s1 = inlined_call_operand.vmem [shape: bf16[25,10], index: 1, kind: input, shape index: {}]
  %s2 = inlined_call_operand.vmem [shape: f32[1,10], index: 2, kind: input, shape index: {}]
  %s3 = inlined_call_operand.vmem [shape: bf16[25,10,20], index: 3, kind: input, shape index: {}]
  %s4 = inlined_call_operand.vmem [shape: f32[1,20], index: 4, kind: input, shape index: {}]
  %s5 = inlined_call_operand.vmem [shape: f32[2,4,4,20], index: 5, kind: output, shape index: {}]
  %s6 = sld [smem:[#allocation0]]
  $region30: #{forward.2} parent=0
    _
  %s8 = ssub.s32 1, %s6
  %s9 = scalar_select 0, %s8, %s6
  // Predicated region
  $region2: #{forward.2} parent=0 // pred_check
    _
  $region3: #{forward.2} parent=0 // pred_check_branch
    %11 = sbr.rel (0) target = $region5
  $region4: #{forward.2} parent=0 // pred_region
    _
  $region5: #{forward.2} parent=0 // pred_fallthru
    _
  // Predicated region
  $region6: #{forward.2} parent=0 // pred_check
    _
  $region7: #{forward.2} parent=0 // pred_check_branch
    %13 = sbr.rel (0) target = $region9
  $region8: #{forward.2} parent=0 // pred_region
    _
  $region9: #{forward.2} parent=0 // pred_fallthru
    _
  // Predicated region
  $region10: #{forward.2} parent=0 // pred_check
    _
  $region11: #{forward.2} parent=0 // pred_check_branch
    %15 = sbr.rel (0) target = $region13
  $region12: #{forward.2} parent=0 // pred_region
    _
  $region13: #{forward.2} parent=0 // pred_fallthru
    _
  // Predicated region
  $region14: #{forward.2} parent=0 // pred_check
    _
  $region15: #{forward.2} parent=0 // pred_check_branch
    %17 = sbr.rel (0) target = $region17
  $region16: #{forward.2} parent=0 // pred_region
    _
  $region17: #{forward.2} parent=0 // pred_fallthru
    _
  // Predicated region
  $region18: #{forward.2} parent=0 // pred_check
    _
  $region19: #{forward.2} parent=0 // pred_check_branch
    %19 = sbr.rel (0) target = $region21
  $region20: #{forward.2} parent=0 // pred_region
    _
  $region21: #{forward.2} parent=0 // pred_fallthru
    _
  %v21 = vld [vmem:[%s0] sm:$0xf]
  %v22 = vld [vmem:[%s0 + $0x4] sm:$0xf]
  %v23 = vld [vmem:[%s0 + $0x8] sm:$0xf]
  %v24 = vld [vmem:[%s0 + $0xc] sm:$0xf]
  %v25 = vld [vmem:[%s0 + $0x10] sm:$0xf]
  %v26 = vld [vmem:[%s0 + $0x14] sm:$0xf]
  %v27 = vld [vmem:[%s0 + $0x18] sm:$0xf]
  %v28 = vld [vmem:[%s0 + $0x1c] sm:$0xf]
  %v29 = vld [vmem:[%s0 + $0x20] sm:$0xf]
  %v30 = vld [vmem:[%s0 + $0x24] sm:$0xf]
  %v31 = vld [vmem:[%s0 + $0x28] sm:$0xf]
  %v32 = vld [vmem:[%s0 + $0x2c] sm:$0xf]
  %v33 = vld [vmem:[%s0 + $0x30] sm:$0xf]
  %v34 = vld [vmem:[%s0 + $0x34] sm:$0xf]
  %v35 = vld [vmem:[%s0 + $0x38] sm:$0xf]
  %v36 = vld [vmem:[%s0 + $0x3c] sm:$0xf]
  %v37 = vld [vmem:[%s0 + $0x40] sm:$0xf]
  %v38 = vld [vmem:[%s0 + $0x44] sm:$0xf]
  %v39 = vld [vmem:[%s0 + $0x48] sm:$0xf]
  %v40 = vld [vmem:[%s0 + $0x4c] sm:$0xf]
  %v41 = vld [vmem:[%s0 + $0x50] sm:$0xf]
  %v42 = vld [vmem:[%s0 + $0x54] sm:$0xf]
  %v43 = vld [vmem:[%s0 + $0x58] sm:$0xf]
  %v44 = vld [vmem:[%s0 + $0x5c] sm:$0xf]
  %v45 = vld [vmem:[%s0 + $0x60] sm:$0xf]
  %v46 = vld [vmem:[%s0 + $0x64] sm:$0xf]
  %v47 = vld [vmem:[%s0 + $0x68] sm:$0xf]
  %v48 = vld [vmem:[%s0 + $0x6c] sm:$0xf]
  %v49 = vld [vmem:[%s0 + $0x70] sm:$0xf]
  %v50 = vld [vmem:[%s0 + $0x74] sm:$0xf]
  %v51 = vld [vmem:[%s0 + $0x78] sm:$0xf]
  %v52 = vld [vmem:[%s0 + $0x7c] sm:$0xf]
  %v53 = vld [vmem:[%s0 + $0x80] sm:$0xf]
  %v54 = vld [vmem:[%s0 + $0x84] sm:$0xf]
  %v55 = vld [vmem:[%s0 + $0x88] sm:$0xf]
  %v56 = vld [vmem:[%s0 + $0x8c] sm:$0xf]
  %v57 = vld [vmem:[%s0 + $0x90] sm:$0xf]
  %v58 = vld [vmem:[%s0 + $0x94] sm:$0xf]
  %v59 = vld [vmem:[%s0 + $0x98] sm:$0xf]
  %v60 = vld [vmem:[%s0 + $0x9c] sm:$0xf]
  %v61 = vld [vmem:[%s0 + $0xa0] sm:$0xf]
  %v62 = vld [vmem:[%s0 + $0xa4] sm:$0xf]
  %v63 = vld [vmem:[%s0 + $0xa8] sm:$0xf]
  %v64 = vld [vmem:[%s0 + $0xac] sm:$0xf]
  %v65 = vld [vmem:[%s0 + $0xb0] sm:$0xf]
  %v66 = vld [vmem:[%s0 + $0xb4] sm:$0xf]
  %v67 = vld [vmem:[%s0 + $0xb8] sm:$0xf]
  %v68 = vld [vmem:[%s0 + $0xbc] sm:$0xf]
  %v69 = vld [vmem:[%s0 + $0xc0] sm:$0xf]
  %v70 = vld [vmem:[%s0 + $0xc4] sm:$0xf]
  %v71 = vld [vmem:[%s0 + $0xc8] sm:$0xf]
  %v72 = vld [vmem:[%s0 + $0xcc] sm:$0xf]
  %v73 = vld [vmem:[%s0 + $0xd0] sm:$0xf]
  %v74 = vld [vmem:[%s0 + $0xd4] sm:$0xf]
  %v75 = vld [vmem:[%s0 + $0xd8] sm:$0xf]
  %v76 = vld [vmem:[%s0 + $0xdc] sm:$0xf]
  %v77 = vld [vmem:[%s0 + $0xe0] sm:$0xf]
  %v78 = vld [vmem:[%s0 + $0xe4] sm:$0xf]
  %v79 = vld [vmem:[%s0 + $0xe8] sm:$0xf]
  %v80 = vld [vmem:[%s0 + $0xec] sm:$0xf]
  %v81 = vld [vmem:[%s0 + $0xf0] sm:$0xf]
  %v82 = vld [vmem:[%s0 + $0xf4] sm:$0xf]
  %v83 = vld [vmem:[%s0 + $0xf8] sm:$0xf]
  %v84 = vld [vmem:[%s0 + $0xfc] sm:$0xf]
  %v85 = vld [vmem:[%s0 + $0x100] sm:$0xf]
  %v86 = vld [vmem:[%s0 + $0x104] sm:$0xf]
  %v87 = vld [vmem:[%s0 + $0x108] sm:$0xf]
  %v88 = vld [vmem:[%s0 + $0x10c] sm:$0xf]
  %v89 = vld [vmem:[%s0 + $0x110] sm:$0xf]
  %v90 = vld [vmem:[%s0 + $0x114] sm:$0xf]
  %v91 = vld [vmem:[%s0 + $0x118] sm:$0xf]
  %v92 = vld [vmem:[%s0 + $0x11c] sm:$0xf]
  %v93 = vld [vmem:[%s0 + $0x120] sm:$0xf]
  %v94 = vld [vmem:[%s0 + $0x124] sm:$0xf]
  %v95 = vld [vmem:[%s0 + $0x128] sm:$0xf]
  %v96 = vld [vmem:[%s0 + $0x12c] sm:$0xf]
  %v97 = vld [vmem:[%s0 + $0x130] sm:$0xf]
  %v98 = vld [vmem:[%s0 + $0x134] sm:$0xf]
  %v99 = vld [vmem:[%s0 + $0x138] sm:$0xf]
  %v100 = vld [vmem:[%s0 + $0x13c] sm:$0xf]
  %v101 = vld [vmem:[%s0 + $0x140] sm:$0xf]
  %v102 = vld [vmem:[%s0 + $0x144] sm:$0xf]
  %v103 = vld [vmem:[%s0 + $0x148] sm:$0xf]
  %v104 = vld [vmem:[%s0 + $0x14c] sm:$0xf]
  %v105 = vld [vmem:[%s0 + $0x150] sm:$0xf]
  %v106 = vld [vmem:[%s0 + $0x154] sm:$0xf]
  %v107 = vld [vmem:[%s0 + $0x158] sm:$0xf]
  %v108 = vld [vmem:[%s0 + $0x15c] sm:$0xf]
  %v109 = vld [vmem:[%s0 + $0x160] sm:$0xf]
  %v110 = vld [vmem:[%s0 + $0x164] sm:$0xf]
  %v111 = vld [vmem:[%s0 + $0x168] sm:$0xf]
  %v112 = vld [vmem:[%s0 + $0x16c] sm:$0xf]
  %v113 = vld [vmem:[%s0 + $0x170] sm:$0xf]
  %v114 = vld [vmem:[%s0 + $0x174] sm:$0xf]
  %v115 = vld [vmem:[%s0 + $0x178] sm:$0xf]
  %v116 = vld [vmem:[%s0 + $0x17c] sm:$0xf]
  %v117 = vld [vmem:[%s0 + $0x180] sm:$0xf]
  %v118 = vld [vmem:[%s0 + $0x184] sm:$0xf]
  %v119 = vld [vmem:[%s0 + $0x188] sm:$0xf]
  %v120 = vld [vmem:[%s0 + $0x18c] sm:$0xf]
  %v121 = vld [vmem:[%s0 + $0x190] sm:$0xf]
  %v122 = vld [vmem:[%s0 + $0x194] sm:$0xf]
  %v123 = vld [vmem:[%s0 + $0x198] sm:$0xf]
  %v124 = vld [vmem:[%s0 + $0x19c] sm:$0xf]
  %v125 = vld [vmem:[%s0 + $0x1a0] sm:$0xf]
  %v126 = vld [vmem:[%s0 + $0x1a4] sm:$0xf]
  %v127 = vld [vmem:[%s0 + $0x1a8] sm:$0xf]
  %v128 = vld [vmem:[%s0 + $0x1ac] sm:$0xf]
  %v129 = vld [vmem:[%s0 + $0x1b0] sm:$0xf]
  %v130 = vld [vmem:[%s0 + $0x1b4] sm:$0xf]
  %v131 = vld [vmem:[%s0 + $0x1b8] sm:$0xf]
  %v132 = vld [vmem:[%s0 + $0x1bc] sm:$0xf]
  %v133 = vld [vmem:[%s0 + $0x1c0] sm:$0xf]
  %v134 = vld [vmem:[%s0 + $0x1c4] sm:$0xf]
  %v135 = vld [vmem:[%s0 + $0x1c8] sm:$0xf]
  %v136 = vld [vmem:[%s0 + $0x1cc] sm:$0xf]
  %v137 = vld [vmem:[%s0 + $0x1d0] sm:$0xf]
  %v138 = vld [vmem:[%s0 + $0x1d4] sm:$0xf]
  %v139 = vld [vmem:[%s0 + $0x1d8] sm:$0xf]
  %v140 = vld [vmem:[%s0 + $0x1dc] sm:$0xf]
  %v141 = vld [vmem:[%s0 + $0x1e0] sm:$0xf]
  %v142 = vld [vmem:[%s0 + $0x1e4] sm:$0xf]
  %v143 = vld [vmem:[%s0 + $0x1e8] sm:$0xf]
  %v144 = vld [vmem:[%s0 + $0x1ec] sm:$0xf]
  %v145 = vld [vmem:[%s0 + $0x1f0] sm:$0xf]
  %v146 = vld [vmem:[%s0 + $0x1f4] sm:$0xf]
  %v147 = vld [vmem:[%s0 + $0x1f8] sm:$0xf]
  %v148 = vld [vmem:[%s0 + $0x1fc] sm:$0xf]
  %v149 = vld [vmem:[%s0 + $0x200] sm:$0xf]
  %v150 = vld [vmem:[%s0 + $0x204] sm:$0xf]
  %v151 = vld [vmem:[%s0 + $0x208] sm:$0xf]
  %v152 = vld [vmem:[%s0 + $0x20c] sm:$0xf]
  %v153 = vld [vmem:[%s0 + $0x210] sm:$0xf]
  %v154 = vld [vmem:[%s0 + $0x214] sm:$0xf]
  %v155 = vld [vmem:[%s0 + $0x218] sm:$0xf]
  %v156 = vld [vmem:[%s0 + $0x21c] sm:$0xf]
  %v157 = vld [vmem:[%s0 + $0x220] sm:$0xf]
  %v158 = vld [vmem:[%s0 + $0x224] sm:$0xf]
  %v159 = vld [vmem:[%s0 + $0x228] sm:$0xf]
  %v160 = vld [vmem:[%s0 + $0x22c] sm:$0xf]
  %v161 = vld [vmem:[%s0 + $0x230] sm:$0xf]
  %v162 = vld [vmem:[%s0 + $0x234] sm:$0xf]
  %v163 = vld [vmem:[%s0 + $0x238] sm:$0xf]
  %v164 = vld [vmem:[%s0 + $0x23c] sm:$0xf]
  %v165 = vld [vmem:[%s1] sm:$0xf]
  %v166 = vld [vmem:[%s1 + $0x4] sm:$0xf]
  %v167 = vld [vmem:[%s1 + $0x8] sm:$0xf]
  %v168 = vld [vmem:[%s1 + $0xc] sm:$0x1]
  %v169 = vld [vmem:[%s2] sm:$0x1]
  %v171 = vperm.slane %v169, 0
  %v317 = vunpack.c.l.b16 %v21
  %v318 = vunpack.c.l.b16 %v22
  %v319 = vunpack.c.l.b16 %v23
  %v320 = vunpack.c.l.b16 %v24
  %v321 = vunpack.c.l.b16 %v25
  %v322 = vunpack.c.l.b16 %v26
  %v323 = vunpack.c.l.b16 %v27
  %v324 = vunpack.c.l.b16 %v28
  %v325 = vunpack.c.l.b16 %v29
  %v326 = vunpack.c.l.b16 %v30
  %v327 = vunpack.c.l.b16 %v31
  %v328 = vunpack.c.l.b16 %v32
  %v329 = vunpack.c.l.b16 %v33
  %v330 = vunpack.c.l.b16 %v34
  %v331 = vunpack.c.l.b16 %v35
  %v332 = vunpack.c.l.b16 %v36
  %v333 = vunpack.c.l.b16 %v37
  %v334 = vunpack.c.l.b16 %v38
  %v335 = vunpack.c.l.b16 %v39
  %v336 = vunpack.c.l.b16 %v40
  %v337 = vunpack.c.l.b16 %v41
  %v338 = vunpack.c.l.b16 %v42
  %v339 = vunpack.c.l.b16 %v43
  %v340 = vunpack.c.l.b16 %v44
  %v341 = vunpack.c.l.b16 %v45
  %v342 = vunpack.c.l.b16 %v46
  %v343 = vunpack.c.l.b16 %v47
  %v344 = vunpack.c.l.b16 %v48
  %v345 = vunpack.c.l.b16 %v49
  %v346 = vunpack.c.l.b16 %v50
  %v347 = vunpack.c.l.b16 %v51
  %v348 = vunpack.c.l.b16 %v52
  %v349 = vunpack.c.l.b16 %v53
  %v350 = vunpack.c.l.b16 %v54
  %v351 = vunpack.c.l.b16 %v55
  %v352 = vunpack.c.l.b16 %v56
  %v353 = vunpack.c.l.b16 %v57
  %v354 = vunpack.c.l.b16 %v58
  %v355 = vunpack.c.l.b16 %v59
  %v356 = vunpack.c.l.b16 %v60
  %v357 = vunpack.c.l.b16 %v61
  %v358 = vunpack.c.l.b16 %v62
  %v359 = vunpack.c.l.b16 %v63
  %v360 = vunpack.c.l.b16 %v64
  %v361 = vunpack.c.l.b16 %v65
  %v362 = vunpack.c.l.b16 %v66
  %v363 = vunpack.c.l.b16 %v67
  %v364 = vunpack.c.l.b16 %v68
  %v365 = vunpack.c.l.b16 %v69
  %v366 = vunpack.c.l.b16 %v70
  %v367 = vunpack.c.l.b16 %v71
  %v368 = vunpack.c.l.b16 %v72
  %v369 = vunpack.c.l.b16 %v73
  %v370 = vunpack.c.l.b16 %v74
  %v371 = vunpack.c.l.b16 %v75
  %v372 = vunpack.c.l.b16 %v76
  %v373 = vunpack.c.l.b16 %v77
  %v374 = vunpack.c.l.b16 %v78
  %v375 = vunpack.c.l.b16 %v79
  %v376 = vunpack.c.l.b16 %v80
  %v377 = vunpack.c.l.b16 %v81
  %v378 = vunpack.c.l.b16 %v82
  %v379 = vunpack.c.l.b16 %v83
  %v380 = vunpack.c.l.b16 %v84
  %v381 = vunpack.c.l.b16 %v85
  %v382 = vunpack.c.l.b16 %v86
  %v383 = vunpack.c.l.b16 %v87
  %v384 = vunpack.c.l.b16 %v88
  %v385 = vunpack.c.l.b16 %v89
  %v386 = vunpack.c.l.b16 %v90
  %v387 = vunpack.c.l.b16 %v91
  %v388 = vunpack.c.l.b16 %v92
  %v389 = vunpack.c.l.b16 %v93
  %v390 = vunpack.c.l.b16 %v94
  %v391 = vunpack.c.l.b16 %v95
  %v392 = vunpack.c.l.b16 %v96
  %v393 = vunpack.c.l.b16 %v97
  %v394 = vunpack.c.l.b16 %v98
  %v395 = vunpack.c.l.b16 %v99
  %v396 = vunpack.c.l.b16 %v100
  %v397 = vunpack.c.l.b16 %v101
  %v398 = vunpack.c.l.b16 %v102
  %v399 = vunpack.c.l.b16 %v103
  %v400 = vunpack.c.l.b16 %v104
  %v401 = vunpack.c.l.b16 %v105
  %v402 = vunpack.c.l.b16 %v106
  %v403 = vunpack.c.l.b16 %v107
  %v404 = vunpack.c.l.b16 %v108
  %v405 = vunpack.c.l.b16 %v109
  %v406 = vunpack.c.l.b16 %v110
  %v407 = vunpack.c.l.b16 %v111
  %v408 = vunpack.c.l.b16 %v112
  %v409 = vunpack.c.l.b16 %v113
  %v410 = vunpack.c.l.b16 %v114
  %v411 = vunpack.c.l.b16 %v115
  %v412 = vunpack.c.l.b16 %v116
  %v413 = vunpack.c.l.b16 %v117
  %v414 = vunpack.c.l.b16 %v118
  %v415 = vunpack.c.l.b16 %v119
  %v416 = vunpack.c.l.b16 %v120
  %v417 = vunpack.c.l.b16 %v121
  %v418 = vunpack.c.l.b16 %v122
  %v419 = vunpack.c.l.b16 %v123
  %v420 = vunpack.c.l.b16 %v124
  %v421 = vunpack.c.l.b16 %v125
  %v422 = vunpack.c.l.b16 %v126
  %v423 = vunpack.c.l.b16 %v127
  %v424 = vunpack.c.l.b16 %v128
  %v425 = vunpack.c.l.b16 %v129
  %v426 = vunpack.c.l.b16 %v130
  %v427 = vunpack.c.l.b16 %v131
  %v428 = vunpack.c.l.b16 %v132
  %v429 = vunpack.c.l.b16 %v133
  %v430 = vunpack.c.l.b16 %v134
  %v431 = vunpack.c.l.b16 %v135
  %v432 = vunpack.c.l.b16 %v136
  %v433 = vunpack.c.l.b16 %v137
  %v434 = vunpack.c.l.b16 %v138
  %v435 = vunpack.c.l.b16 %v139
  %v436 = vunpack.c.l.b16 %v140
  %v437 = vunpack.c.l.b16 %v141
  %v438 = vunpack.c.l.b16 %v142
  %v439 = vunpack.c.l.b16 %v143
  %v440 = vunpack.c.l.b16 %v144
  %v441 = vunpack.c.l.b16 %v145
  %v442 = vunpack.c.l.b16 %v146
  %v443 = vunpack.c.l.b16 %v147
  %v444 = vunpack.c.l.b16 %v148
  %v445 = vunpack.c.l.b16 %v149
  %v446 = vunpack.c.l.b16 %v150
  %v447 = vunpack.c.l.b16 %v151
  %v448 = vunpack.c.l.b16 %v152
  %v449 = vunpack.c.l.b16 %v153
  %v450 = vunpack.c.l.b16 %v154
  %v451 = vunpack.c.l.b16 %v155
  %v452 = vunpack.c.l.b16 %v156
  %v453 = vunpack.c.l.b16 %v157
  %v454 = vunpack.c.l.b16 %v158
  %v455 = vunpack.c.l.b16 %v159
  %v456 = vunpack.c.l.b16 %v160
  %v457 = vunpack.c.l.b16 %v161
  %v458 = vunpack.c.l.b16 %v162
  %v459 = vunpack.c.l.b16 %v163
  %v460 = vunpack.c.l.b16 %v164
  %v461 = vpack.c.b16 %v318, %v317
  %v462 = vpack.c.b16 %v320, %v319
  %v463 = vpack.c.b16 %v322, %v321
  %v464 = vpack.c.b16 %v324, %v323
  %v465 = vpack.c.b16 %v326, %v325
  %v466 = vpack.c.b16 %v328, %v327
  %v467 = vpack.c.b16 %v330, %v329
  %v468 = vpack.c.b16 %v332, %v331
  %v469 = vpack.c.b16 %v334, %v333
  %v470 = vpack.c.b16 %v336, %v335
  %v471 = vpack.c.b16 %v338, %v337
  %v472 = vpack.c.b16 %v340, %v339
  %v473 = vpack.c.b16 %v342, %v341
  %v474 = vpack.c.b16 %v344, %v343
  %v475 = vpack.c.b16 %v346, %v345
  %v476 = vpack.c.b16 %v348, %v347
  %v477 = vpack.c.b16 %v350, %v349
  %v478 = vpack.c.b16 %v352, %v351
  %v479 = vpack.c.b16 %v354, %v353
  %v480 = vpack.c.b16 %v356, %v355
  %v481 = vpack.c.b16 %v358, %v357
  %v482 = vpack.c.b16 %v360, %v359
  %v483 = vpack.c.b16 %v362, %v361
  %v484 = vpack.c.b16 %v364, %v363
  %v485 = vpack.c.b16 %v366, %v365
  %v486 = vpack.c.b16 %v368, %v367
  %v487 = vpack.c.b16 %v370, %v369
  %v488 = vpack.c.b16 %v372, %v371
  %v489 = vpack.c.b16 %v374, %v373
  %v490 = vpack.c.b16 %v376, %v375
  %v491 = vpack.c.b16 %v378, %v377
  %v492 = vpack.c.b16 %v380, %v379
  %v493 = vpack.c.b16 %v382, %v381
  %v494 = vpack.c.b16 %v384, %v383
  %v495 = vpack.c.b16 %v386, %v385
  %v496 = vpack.c.b16 %v388, %v387
  %v497 = vpack.c.b16 %v390, %v389
  %v498 = vpack.c.b16 %v392, %v391
  %v499 = vpack.c.b16 %v394, %v393
  %v500 = vpack.c.b16 %v396, %v395
  %v501 = vpack.c.b16 %v398, %v397
  %v502 = vpack.c.b16 %v400, %v399
  %v503 = vpack.c.b16 %v402, %v401
  %v504 = vpack.c.b16 %v404, %v403
  %v505 = vpack.c.b16 %v406, %v405
  %v506 = vpack.c.b16 %v408, %v407
  %v507 = vpack.c.b16 %v410, %v409
  %v508 = vpack.c.b16 %v412, %v411
  %v509 = vpack.c.b16 %v414, %v413
  %v510 = vpack.c.b16 %v416, %v415
  %v511 = vpack.c.b16 %v418, %v417
  %v512 = vpack.c.b16 %v420, %v419
  %v513 = vpack.c.b16 %v422, %v421
  %v514 = vpack.c.b16 %v424, %v423
  %v515 = vpack.c.b16 %v426, %v425
  %v516 = vpack.c.b16 %v428, %v427
  %v517 = vpack.c.b16 %v430, %v429
  %v518 = vpack.c.b16 %v432, %v431
  %v519 = vpack.c.b16 %v434, %v433
  %v520 = vpack.c.b16 %v436, %v435
  %v521 = vpack.c.b16 %v438, %v437
  %v522 = vpack.c.b16 %v440, %v439
  %v523 = vpack.c.b16 %v442, %v441
  %v524 = vpack.c.b16 %v444, %v443
  %v525 = vpack.c.b16 %v446, %v445
  %v526 = vpack.c.b16 %v448, %v447
  %v527 = vpack.c.b16 %v450, %v449
  %v528 = vpack.c.b16 %v452, %v451
  %v529 = vpack.c.b16 %v454, %v453
  %v530 = vpack.c.b16 %v456, %v455
  %v531 = vpack.c.b16 %v458, %v457
  %v532 = vpack.c.b16 %v460, %v459
  %v537 = vunpack.c.l.b16 %v165
  %v538 = vunpack.c.l.b16 %v166
  %v539 = vunpack.c.l.b16 %v167
  %v540 = vunpack.c.l.b16 %v168
  %v541 = vpack.c.b16 %v538, %v537
  %v542 = vpack.c.b16 %v540, %v539
  %vm544 = vcmask 203776
  %v546 = vsel %vm544, %v461, 0
  %v549 = vsel %vm544, %v462, 0
  %v552 = vsel %vm544, %v463, 0
  %v555 = vsel %vm544, %v464, 0
  %v558 = vsel %vm544, %v465, 0
  %v561 = vsel %vm544, %v466, 0
  %v564 = vsel %vm544, %v467, 0
  %v567 = vsel %vm544, %v468, 0
  %v570 = vsel %vm544, %v469, 0
  %v573 = vsel %vm544, %v470, 0
  %v576 = vsel %vm544, %v471, 0
  %v579 = vsel %vm544, %v472, 0
  %v582 = vsel %vm544, %v473, 0
  %v585 = vsel %vm544, %v474, 0
  %v588 = vsel %vm544, %v475, 0
  %v591 = vsel %vm544, %v476, 0
  %v594 = vsel %vm544, %v477, 0
  %v597 = vsel %vm544, %v478, 0
  %v600 = vsel %vm544, %v479, 0
  %v603 = vsel %vm544, %v480, 0
  %v606 = vsel %vm544, %v481, 0
  %v609 = vsel %vm544, %v482, 0
  %v612 = vsel %vm544, %v483, 0
  %v615 = vsel %vm544, %v484, 0
  %v618 = vsel %vm544, %v485, 0
  %v621 = vsel %vm544, %v486, 0
  %v624 = vsel %vm544, %v487, 0
  %v627 = vsel %vm544, %v488, 0
  %v630 = vsel %vm544, %v489, 0
  %v633 = vsel %vm544, %v490, 0
  %v636 = vsel %vm544, %v491, 0
  %v639 = vsel %vm544, %v492, 0
  %v642 = vsel %vm544, %v493, 0
  %v645 = vsel %vm544, %v494, 0
  %v648 = vsel %vm544, %v495, 0
  %v651 = vsel %vm544, %v496, 0
  %v654 = vsel %vm544, %v497, 0
  %v657 = vsel %vm544, %v498, 0
  %v660 = vsel %vm544, %v499, 0
  %v663 = vsel %vm544, %v500, 0
  %v666 = vsel %vm544, %v501, 0
  %v669 = vsel %vm544, %v502, 0
  %v672 = vsel %vm544, %v503, 0
  %v675 = vsel %vm544, %v504, 0
  %v678 = vsel %vm544, %v505, 0
  %v681 = vsel %vm544, %v506, 0
  %v684 = vsel %vm544, %v507, 0
  %v687 = vsel %vm544, %v508, 0
  %v690 = vsel %vm544, %v509, 0
  %v693 = vsel %vm544, %v510, 0
  %v696 = vsel %vm544, %v511, 0
  %v699 = vsel %vm544, %v512, 0
  %v702 = vsel %vm544, %v513, 0
  %v705 = vsel %vm544, %v514, 0
  %v708 = vsel %vm544, %v515, 0
  %v711 = vsel %vm544, %v516, 0
  %v714 = vsel %vm544, %v517, 0
  %v717 = vsel %vm544, %v518, 0
  %v720 = vsel %vm544, %v519, 0
  %v723 = vsel %vm544, %v520, 0
  %v726 = vsel %vm544, %v521, 0
  %v729 = vsel %vm544, %v522, 0
  %v732 = vsel %vm544, %v523, 0
  %v735 = vsel %vm544, %v524, 0
  %v738 = vsel %vm544, %v525, 0
  %v741 = vsel %vm544, %v526, 0
  %v744 = vsel %vm544, %v527, 0
  %v747 = vsel %vm544, %v528, 0
  %v750 = vsel %vm544, %v529, 0
  %v753 = vsel %vm544, %v530, 0
  %v756 = vsel %vm544, %v531, 0
  %v759 = vsel %vm544, %v532, 0
  %vm761 = vcmask 1043456
  %vm762 = vcmask 1044480
  %v763 = vsel %vm761, 4294967295, 65535
  %v764 = vsel %vm762, %v763, 0
  %v766 = vand.u32 %v542, %v764
  %768 = vmatpush.bf16.msra.mxu0 0
  %769 = vmatpush.bf16.msra.mxu0 0
  %770 = vmatpush.bf16.msra.mxu0 0
  %771 = vmatpush.bf16.msra.mxu0 0
  %772 = vmatpush.bf16.msra.mxu0 0
  %773 = vmatpush.bf16.msra.mxu0 0
  %774 = vmatpush.bf16.msra.mxu0 %v766
  %775 = vmatpush.bf16.msra.mxu0 %v541
  %776 = vmatmul.bf16.gmra.mxu0 %v546
  %v777 = vpop.f32.mrf.mxu0
  %v778 = vadd.f32 %v171, %v777
  %v779 = vpop.f32.mrf.mxu0
  %v780 = vadd.f32 %v171, %v779
  %781 = vmatmul.bf16.gmra.mxu0 %v549
  %v782 = vpop.f32.mrf.mxu0
  %v783 = vadd.f32 %v171, %v782
  %v784 = vpop.f32.mrf.mxu0
  %v785 = vadd.f32 %v171, %v784
  %786 = vmatmul.bf16.gmra.mxu0 %v552
  %v787 = vpop.f32.mrf.mxu0
  %v788 = vadd.f32 %v171, %v787
  %v789 = vpop.f32.mrf.mxu0
  %v790 = vadd.f32 %v171, %v789
  %791 = vmatmul.bf16.gmra.mxu0 %v555
  %v792 = vpop.f32.mrf.mxu0
  %v793 = vadd.f32 %v171, %v792
  %v794 = vpop.f32.mrf.mxu0
  %v795 = vadd.f32 %v171, %v794
  %796 = vmatmul.bf16.gmra.mxu0 %v558
  %v797 = vpop.f32.mrf.mxu0
  %v798 = vadd.f32 %v171, %v797
  %v799 = vpop.f32.mrf.mxu0
  %v800 = vadd.f32 %v171, %v799
  %801 = vmatmul.bf16.gmra.mxu0 %v561
  %v802 = vpop.f32.mrf.mxu0
  %v803 = vadd.f32 %v171, %v802
  %v804 = vpop.f32.mrf.mxu0
  %v805 = vadd.f32 %v171, %v804
  %806 = vmatmul.bf16.gmra.mxu0 %v564
  %v807 = vpop.f32.mrf.mxu0
  %v808 = vadd.f32 %v171, %v807
  %v809 = vpop.f32.mrf.mxu0
  %v810 = vadd.f32 %v171, %v809
  %811 = vmatmul.bf16.gmra.mxu0 %v567
  %v812 = vpop.f32.mrf.mxu0
  %v813 = vadd.f32 %v171, %v812
  %v814 = vpop.f32.mrf.mxu0
  %v815 = vadd.f32 %v171, %v814
  %816 = vmatmul.bf16.gmra.mxu0 %v570
  %v817 = vpop.f32.mrf.mxu0
  %v818 = vadd.f32 %v171, %v817
  %v819 = vpop.f32.mrf.mxu0
  %v820 = vadd.f32 %v171, %v819
  %821 = vmatmul.bf16.gmra.mxu0 %v573
  %v822 = vpop.f32.mrf.mxu0
  %v823 = vadd.f32 %v171, %v822
  %v824 = vpop.f32.mrf.mxu0
  %v825 = vadd.f32 %v171, %v824
  %826 = vmatmul.bf16.gmra.mxu0 %v576
  %v827 = vpop.f32.mrf.mxu0
  %v828 = vadd.f32 %v171, %v827
  %v829 = vpop.f32.mrf.mxu0
  %v830 = vadd.f32 %v171, %v829
  %831 = vmatmul.bf16.gmra.mxu0 %v579
  %v832 = vpop.f32.mrf.mxu0
  %v833 = vadd.f32 %v171, %v832
  %v834 = vpop.f32.mrf.mxu0
  %v835 = vadd.f32 %v171, %v834
  %836 = vmatmul.bf16.gmra.mxu0 %v582
  %v837 = vpop.f32.mrf.mxu0
  %v838 = vadd.f32 %v171, %v837
  %v839 = vpop.f32.mrf.mxu0
  %v840 = vadd.f32 %v171, %v839
  %841 = vmatmul.bf16.gmra.mxu0 %v585
  %v842 = vpop.f32.mrf.mxu0
  %v843 = vadd.f32 %v171, %v842
  %v844 = vpop.f32.mrf.mxu0
  %v845 = vadd.f32 %v171, %v844
  %846 = vmatmul.bf16.gmra.mxu0 %v588
  %v847 = vpop.f32.mrf.mxu0
  %v848 = vadd.f32 %v171, %v847
  %v849 = vpop.f32.mrf.mxu0
  %v850 = vadd.f32 %v171, %v849
  %851 = vmatmul.bf16.gmra.mxu0 %v591
  %v852 = vpop.f32.mrf.mxu0
  %v853 = vadd.f32 %v171, %v852
  %v854 = vpop.f32.mrf.mxu0
  %v855 = vadd.f32 %v171, %v854
  %856 = vmatmul.bf16.gmra.mxu0 %v594
  %v857 = vpop.f32.mrf.mxu0
  %v858 = vadd.f32 %v171, %v857
  %v859 = vpop.f32.mrf.mxu0
  %v860 = vadd.f32 %v171, %v859
  %861 = vmatmul.bf16.gmra.mxu0 %v597
  %v862 = vpop.f32.mrf.mxu0
  %v863 = vadd.f32 %v171, %v862
  %v864 = vpop.f32.mrf.mxu0
  %v865 = vadd.f32 %v171, %v864
  %866 = vmatmul.bf16.gmra.mxu0 %v600
  %v867 = vpop.f32.mrf.mxu0
  %v868 = vadd.f32 %v171, %v867
  %v869 = vpop.f32.mrf.mxu0
  %v870 = vadd.f32 %v171, %v869
  %871 = vmatmul.bf16.gmra.mxu0 %v603
  %v872 = vpop.f32.mrf.mxu0
  %v873 = vadd.f32 %v171, %v872
  %v874 = vpop.f32.mrf.mxu0
  %v875 = vadd.f32 %v171, %v874
  %876 = vmatmul.bf16.gmra.mxu0 %v606
  %v877 = vpop.f32.mrf.mxu0
  %v878 = vadd.f32 %v171, %v877
  %v879 = vpop.f32.mrf.mxu0
  %v880 = vadd.f32 %v171, %v879
  %881 = vmatmul.bf16.gmra.mxu0 %v609
  %v882 = vpop.f32.mrf.mxu0
  %v883 = vadd.f32 %v171, %v882
  %v884 = vpop.f32.mrf.mxu0
  %v885 = vadd.f32 %v171, %v884
  %886 = vmatmul.bf16.gmra.mxu0 %v612
  %v887 = vpop.f32.mrf.mxu0
  %v888 = vadd.f32 %v171, %v887
  %v889 = vpop.f32.mrf.mxu0
  %v890 = vadd.f32 %v171, %v889
  %891 = vmatmul.bf16.gmra.mxu0 %v615
  %v892 = vpop.f32.mrf.mxu0
  %v893 = vadd.f32 %v171, %v892
  %v894 = vpop.f32.mrf.mxu0
  %v895 = vadd.f32 %v171, %v894
  %896 = vmatmul.bf16.gmra.mxu0 %v618
  %v897 = vpop.f32.mrf.mxu0
  %v898 = vadd.f32 %v171, %v897
  %v899 = vpop.f32.mrf.mxu0
  %v900 = vadd.f32 %v171, %v899
  %901 = vmatmul.bf16.gmra.mxu0 %v621
  %v902 = vpop.f32.mrf.mxu0
  %v903 = vadd.f32 %v171, %v902
  %v904 = vpop.f32.mrf.mxu0
  %v905 = vadd.f32 %v171, %v904
  %906 = vmatmul.bf16.gmra.mxu0 %v624
  %v907 = vpop.f32.mrf.mxu0
  %v908 = vadd.f32 %v171, %v907
  %v909 = vpop.f32.mrf.mxu0
  %v910 = vadd.f32 %v171, %v909
  %911 = vmatmul.bf16.gmra.mxu0 %v627
  %v912 = vpop.f32.mrf.mxu0
  %v913 = vadd.f32 %v171, %v912
  %v914 = vpop.f32.mrf.mxu0
  %v915 = vadd.f32 %v171, %v914
  %916 = vmatmul.bf16.gmra.mxu0 %v630
  %v917 = vpop.f32.mrf.mxu0
  %v918 = vadd.f32 %v171, %v917
  %v919 = vpop.f32.mrf.mxu0
  %v920 = vadd.f32 %v171, %v919
  %921 = vmatmul.bf16.gmra.mxu0 %v633
  %v922 = vpop.f32.mrf.mxu0
  %v923 = vadd.f32 %v171, %v922
  %v924 = vpop.f32.mrf.mxu0
  %v925 = vadd.f32 %v171, %v924
  %926 = vmatmul.bf16.gmra.mxu0 %v636
  %v927 = vpop.f32.mrf.mxu0
  %v928 = vadd.f32 %v171, %v927
  %v929 = vpop.f32.mrf.mxu0
  %v930 = vadd.f32 %v171, %v929
  %931 = vmatmul.bf16.gmra.mxu0 %v639
  %v932 = vpop.f32.mrf.mxu0
  %v933 = vadd.f32 %v171, %v932
  %v934 = vpop.f32.mrf.mxu0
  %v935 = vadd.f32 %v171, %v934
  %936 = vmatmul.bf16.gmra.mxu0 %v642
  %v937 = vpop.f32.mrf.mxu0
  %v938 = vadd.f32 %v171, %v937
  %v939 = vpop.f32.mrf.mxu0
  %v940 = vadd.f32 %v171, %v939
  %941 = vmatmul.bf16.gmra.mxu0 %v645
  %v942 = vpop.f32.mrf.mxu0
  %v943 = vadd.f32 %v171, %v942
  %v944 = vpop.f32.mrf.mxu0
  %v945 = vadd.f32 %v171, %v944
  %946 = vmatmul.bf16.gmra.mxu0 %v648
  %v947 = vpop.f32.mrf.mxu0
  %v948 = vadd.f32 %v171, %v947
  %v949 = vpop.f32.mrf.mxu0
  %v950 = vadd.f32 %v171, %v949
  %951 = vmatmul.bf16.gmra.mxu0 %v651
  %v952 = vpop.f32.mrf.mxu0
  %v953 = vadd.f32 %v171, %v952
  %v954 = vpop.f32.mrf.mxu0
  %v955 = vadd.f32 %v171, %v954
  %956 = vmatmul.bf16.gmra.mxu0 %v654
  %v957 = vpop.f32.mrf.mxu0
  %v958 = vadd.f32 %v171, %v957
  %v959 = vpop.f32.mrf.mxu0
  %v960 = vadd.f32 %v171, %v959
  %961 = vmatmul.bf16.gmra.mxu0 %v657
  %v962 = vpop.f32.mrf.mxu0
  %v963 = vadd.f32 %v171, %v962
  %v964 = vpop.f32.mrf.mxu0
  %v965 = vadd.f32 %v171, %v964
  %966 = vmatmul.bf16.gmra.mxu0 %v660
  %v967 = vpop.f32.mrf.mxu0
  %v968 = vadd.f32 %v171, %v967
  %v969 = vpop.f32.mrf.mxu0
  %v970 = vadd.f32 %v171, %v969
  %971 = vmatmul.bf16.gmra.mxu0 %v663
  %v972 = vpop.f32.mrf.mxu0
  %v973 = vadd.f32 %v171, %v972
  %v974 = vpop.f32.mrf.mxu0
  %v975 = vadd.f32 %v171, %v974
  %976 = vmatmul.bf16.gmra.mxu0 %v666
  %v977 = vpop.f32.mrf.mxu0
  %v978 = vadd.f32 %v171, %v977
  %v979 = vpop.f32.mrf.mxu0
  %v980 = vadd.f32 %v171, %v979
  %981 = vmatmul.bf16.gmra.mxu0 %v669
  %v982 = vpop.f32.mrf.mxu0
  %v983 = vadd.f32 %v171, %v982
  %v984 = vpop.f32.mrf.mxu0
  %v985 = vadd.f32 %v171, %v984
  %986 = vmatmul.bf16.gmra.mxu0 %v672
  %v987 = vpop.f32.mrf.mxu0
  %v988 = vadd.f32 %v171, %v987
  %v989 = vpop.f32.mrf.mxu0
  %v990 = vadd.f32 %v171, %v989
  %991 = vmatmul.bf16.gmra.mxu0 %v675
  %v992 = vpop.f32.mrf.mxu0
  %v993 = vadd.f32 %v171, %v992
  %v994 = vpop.f32.mrf.mxu0
  %v995 = vadd.f32 %v171, %v994
  %996 = vmatmul.bf16.gmra.mxu0 %v678
  %v997 = vpop.f32.mrf.mxu0
  %v998 = vadd.f32 %v171, %v997
  %v999 = vpop.f32.mrf.mxu0
  %v1000 = vadd.f32 %v171, %v999
  %1001 = vmatmul.bf16.gmra.mxu0 %v681
  %v1002 = vpop.f32.mrf.mxu0
  %v1003 = vadd.f32 %v171, %v1002
  %v1004 = vpop.f32.mrf.mxu0
  %v1005 = vadd.f32 %v171, %v1004
  %1006 = vmatmul.bf16.gmra.mxu0 %v684
  %v1007 = vpop.f32.mrf.mxu0
  %v1008 = vadd.f32 %v171, %v1007
  %v1009 = vpop.f32.mrf.mxu0
  %v1010 = vadd.f32 %v171, %v1009
  %1011 = vmatmul.bf16.gmra.mxu0 %v687
  %v1012 = vpop.f32.mrf.mxu0
  %v1013 = vadd.f32 %v171, %v1012
  %v1014 = vpop.f32.mrf.mxu0
  %v1015 = vadd.f32 %v171, %v1014
  %1016 = vmatmul.bf16.gmra.mxu0 %v690
  %v1017 = vpop.f32.mrf.mxu0
  %v1018 = vadd.f32 %v171, %v1017
  %v1019 = vpop.f32.mrf.mxu0
  %v1020 = vadd.f32 %v171, %v1019
  %1021 = vmatmul.bf16.gmra.mxu0 %v693
  %v1022 = vpop.f32.mrf.mxu0
  %v1023 = vadd.f32 %v171, %v1022
  %v1024 = vpop.f32.mrf.mxu0
  %v1025 = vadd.f32 %v171, %v1024
  %1026 = vmatmul.bf16.gmra.mxu0 %v696
  %v1027 = vpop.f32.mrf.mxu0
  %v1028 = vadd.f32 %v171, %v1027
  %v1029 = vpop.f32.mrf.mxu0
  %v1030 = vadd.f32 %v171, %v1029
  %1031 = vmatmul.bf16.gmra.mxu0 %v699
  %v1032 = vpop.f32.mrf.mxu0
  %v1033 = vadd.f32 %v171, %v1032
  %v1034 = vpop.f32.mrf.mxu0
  %v1035 = vadd.f32 %v171, %v1034
  %1036 = vmatmul.bf16.gmra.mxu0 %v702
  %v1037 = vpop.f32.mrf.mxu0
  %v1038 = vadd.f32 %v171, %v1037
  %v1039 = vpop.f32.mrf.mxu0
  %v1040 = vadd.f32 %v171, %v1039
  %1041 = vmatmul.bf16.gmra.mxu0 %v705
  %v1042 = vpop.f32.mrf.mxu0
  %v1043 = vadd.f32 %v171, %v1042
  %v1044 = vpop.f32.mrf.mxu0
  %v1045 = vadd.f32 %v171, %v1044
  %1046 = vmatmul.bf16.gmra.mxu0 %v708
  %v1047 = vpop.f32.mrf.mxu0
  %v1048 = vadd.f32 %v171, %v1047
  %v1049 = vpop.f32.mrf.mxu0
  %v1050 = vadd.f32 %v171, %v1049
  %1051 = vmatmul.bf16.gmra.mxu0 %v711
  %v1052 = vpop.f32.mrf.mxu0
  %v1053 = vadd.f32 %v171, %v1052
  %v1054 = vpop.f32.mrf.mxu0
  %v1055 = vadd.f32 %v171, %v1054
  %1056 = vmatmul.bf16.gmra.mxu0 %v714
  %v1057 = vpop.f32.mrf.mxu0
  %v1058 = vadd.f32 %v171, %v1057
  %v1059 = vpop.f32.mrf.mxu0
  %v1060 = vadd.f32 %v171, %v1059
  %1061 = vmatmul.bf16.gmra.mxu0 %v717
  %v1062 = vpop.f32.mrf.mxu0
  %v1063 = vadd.f32 %v171, %v1062
  %v1064 = vpop.f32.mrf.mxu0
  %v1065 = vadd.f32 %v171, %v1064
  %1066 = vmatmul.bf16.gmra.mxu0 %v720
  %v1067 = vpop.f32.mrf.mxu0
  %v1068 = vadd.f32 %v171, %v1067
  %v1069 = vpop.f32.mrf.mxu0
  %v1070 = vadd.f32 %v171, %v1069
  %1071 = vmatmul.bf16.gmra.mxu0 %v723
  %v1072 = vpop.f32.mrf.mxu0
  %v1073 = vadd.f32 %v171, %v1072
  %v1074 = vpop.f32.mrf.mxu0
  %v1075 = vadd.f32 %v171, %v1074
  %1076 = vmatmul.bf16.gmra.mxu0 %v726
  %v1077 = vpop.f32.mrf.mxu0
  %v1078 = vadd.f32 %v171, %v1077
  %v1079 = vpop.f32.mrf.mxu0
  %v1080 = vadd.f32 %v171, %v1079
  %1081 = vmatmul.bf16.gmra.mxu0 %v729
  %v1082 = vpop.f32.mrf.mxu0
  %v1083 = vadd.f32 %v171, %v1082
  %v1084 = vpop.f32.mrf.mxu0
  %v1085 = vadd.f32 %v171, %v1084
  %1086 = vmatmul.bf16.gmra.mxu0 %v732
  %v1087 = vpop.f32.mrf.mxu0
  %v1088 = vadd.f32 %v171, %v1087
  %v1089 = vpop.f32.mrf.mxu0
  %v1090 = vadd.f32 %v171, %v1089
  %1091 = vmatmul.bf16.gmra.mxu0 %v735
  %v1092 = vpop.f32.mrf.mxu0
  %v1093 = vadd.f32 %v171, %v1092
  %v1094 = vpop.f32.mrf.mxu0
  %v1095 = vadd.f32 %v171, %v1094
  %1096 = vmatmul.bf16.gmra.mxu0 %v738
  %v1097 = vpop.f32.mrf.mxu0
  %v1098 = vadd.f32 %v171, %v1097
  %v1099 = vpop.f32.mrf.mxu0
  %v1100 = vadd.f32 %v171, %v1099
  %1101 = vmatmul.bf16.gmra.mxu0 %v741
  %v1102 = vpop.f32.mrf.mxu0
  %v1103 = vadd.f32 %v171, %v1102
  %v1104 = vpop.f32.mrf.mxu0
  %v1105 = vadd.f32 %v171, %v1104
  %1106 = vmatmul.bf16.gmra.mxu0 %v744
  %v1107 = vpop.f32.mrf.mxu0
  %v1108 = vadd.f32 %v171, %v1107
  %v1109 = vpop.f32.mrf.mxu0
  %v1110 = vadd.f32 %v171, %v1109
  %1111 = vmatmul.bf16.gmra.mxu0 %v747
  %v1112 = vpop.f32.mrf.mxu0
  %v1113 = vadd.f32 %v171, %v1112
  %v1114 = vpop.f32.mrf.mxu0
  %v1115 = vadd.f32 %v171, %v1114
  %1116 = vmatmul.bf16.gmra.mxu0 %v750
  %v1117 = vpop.f32.mrf.mxu0
  %v1118 = vadd.f32 %v171, %v1117
  %v1119 = vpop.f32.mrf.mxu0
  %v1120 = vadd.f32 %v171, %v1119
  %1121 = vmatmul.bf16.gmra.mxu0 %v753
  %v1122 = vpop.f32.mrf.mxu0
  %v1123 = vadd.f32 %v171, %v1122
  %v1124 = vpop.f32.mrf.mxu0
  %v1125 = vadd.f32 %v171, %v1124
  %1126 = vmatmul.bf16.gmra.mxu0 %v756
  %v1127 = vpop.f32.mrf.mxu0
  %v1128 = vadd.f32 %v171, %v1127
  %v1129 = vpop.f32.mrf.mxu0
  %v1130 = vadd.f32 %v171, %v1129
  %1131 = vmatmul.bf16.gmra.mxu0 %v759
  %v1132 = vpop.f32.mrf.mxu0
  %v1133 = vadd.f32 %v171, %v1132
  %v1134 = vpop.f32.mrf.mxu0
  %v1135 = vadd.f32 %v171, %v1134
  %1136 = vdwg.mxu0
  %v1137 = vmax.f32 %v778, 0.0
  %v1138 = vmax.f32 %v780, 0.0
  %v1139 = vmax.f32 %v783, 0.0
  %v1140 = vmax.f32 %v785, 0.0
  %v1141 = vmax.f32 %v788, 0.0
  %v1142 = vmax.f32 %v790, 0.0
  %v1143 = vmax.f32 %v793, 0.0
  %v1144 = vmax.f32 %v795, 0.0
  %v1145 = vmax.f32 %v798, 0.0
  %v1146 = vmax.f32 %v800, 0.0
  %v1147 = vmax.f32 %v803, 0.0
  %v1148 = vmax.f32 %v805, 0.0
  %v1149 = vmax.f32 %v808, 0.0
  %v1150 = vmax.f32 %v810, 0.0
  %v1151 = vmax.f32 %v813, 0.0
  %v1152 = vmax.f32 %v815, 0.0
  %v1153 = vmax.f32 %v818, 0.0
  %v1154 = vmax.f32 %v820, 0.0
  %v1155 = vmax.f32 %v823, 0.0
  %v1156 = vmax.f32 %v825, 0.0
  %v1157 = vmax.f32 %v828, 0.0
  %v1158 = vmax.f32 %v830, 0.0
  %v1159 = vmax.f32 %v833, 0.0
  %v1160 = vmax.f32 %v835, 0.0
  %v1161 = vmax.f32 %v838, 0.0
  %v1162 = vmax.f32 %v840, 0.0
  %v1163 = vmax.f32 %v843, 0.0
  %v1164 = vmax.f32 %v845, 0.0
  %v1165 = vmax.f32 %v848, 0.0
  %v1166 = vmax.f32 %v850, 0.0
  %v1167 = vmax.f32 %v853, 0.0
  %v1168 = vmax.f32 %v855, 0.0
  %v1169 = vmax.f32 %v858, 0.0
  %v1170 = vmax.f32 %v860, 0.0
  %v1171 = vmax.f32 %v863, 0.0
  %v1172 = vmax.f32 %v865, 0.0
  %v1173 = vmax.f32 %v868, 0.0
  %v1174 = vmax.f32 %v870, 0.0
  %v1175 = vmax.f32 %v873, 0.0
  %v1176 = vmax.f32 %v875, 0.0
  %v1177 = vmax.f32 %v878, 0.0
  %v1178 = vmax.f32 %v880, 0.0
  %v1179 = vmax.f32 %v883, 0.0
  %v1180 = vmax.f32 %v885, 0.0
  %v1181 = vmax.f32 %v888, 0.0
  %v1182 = vmax.f32 %v890, 0.0
  %v1183 = vmax.f32 %v893, 0.0
  %v1184 = vmax.f32 %v895, 0.0
  %v1185 = vmax.f32 %v898, 0.0
  %v1186 = vmax.f32 %v900, 0.0
  %v1187 = vmax.f32 %v903, 0.0
  %v1188 = vmax.f32 %v905, 0.0
  %v1189 = vmax.f32 %v908, 0.0
  %v1190 = vmax.f32 %v910, 0.0
  %v1191 = vmax.f32 %v913, 0.0
  %v1192 = vmax.f32 %v915, 0.0
  %v1193 = vmax.f32 %v918, 0.0
  %v1194 = vmax.f32 %v920, 0.0
  %v1195 = vmax.f32 %v923, 0.0
  %v1196 = vmax.f32 %v925, 0.0
  %v1197 = vmax.f32 %v928, 0.0
  %v1198 = vmax.f32 %v930, 0.0
  %v1199 = vmax.f32 %v933, 0.0
  %v1200 = vmax.f32 %v935, 0.0
  %v1201 = vmax.f32 %v938, 0.0
  %v1202 = vmax.f32 %v940, 0.0
  %v1203 = vmax.f32 %v943, 0.0
  %v1204 = vmax.f32 %v945, 0.0
  %v1205 = vmax.f32 %v948, 0.0
  %v1206 = vmax.f32 %v950, 0.0
  %v1207 = vmax.f32 %v953, 0.0
  %v1208 = vmax.f32 %v955, 0.0
  %v1209 = vmax.f32 %v958, 0.0
  %v1210 = vmax.f32 %v960, 0.0
  %v1211 = vmax.f32 %v963, 0.0
  %v1212 = vmax.f32 %v965, 0.0
  %v1213 = vmax.f32 %v968, 0.0
  %v1214 = vmax.f32 %v970, 0.0
  %v1215 = vmax.f32 %v973, 0.0
  %v1216 = vmax.f32 %v975, 0.0
  %v1217 = vmax.f32 %v978, 0.0
  %v1218 = vmax.f32 %v980, 0.0
  %v1219 = vmax.f32 %v983, 0.0
  %v1220 = vmax.f32 %v985, 0.0
  %v1221 = vmax.f32 %v988, 0.0
  %v1222 = vmax.f32 %v990, 0.0
  %v1223 = vmax.f32 %v993, 0.0
  %v1224 = vmax.f32 %v995, 0.0
  %v1225 = vmax.f32 %v998, 0.0
  %v1226 = vmax.f32 %v1000, 0.0
  %v1227 = vmax.f32 %v1003, 0.0
  %v1228 = vmax.f32 %v1005, 0.0
  %v1229 = vmax.f32 %v1008, 0.0
  %v1230 = vmax.f32 %v1010, 0.0
  %v1231 = vmax.f32 %v1013, 0.0
  %v1232 = vmax.f32 %v1015, 0.0
  %v1233 = vmax.f32 %v1018, 0.0
  %v1234 = vmax.f32 %v1020, 0.0
  %v1235 = vmax.f32 %v1023, 0.0
  %v1236 = vmax.f32 %v1025, 0.0
  %v1237 = vmax.f32 %v1028, 0.0
  %v1238 = vmax.f32 %v1030, 0.0
  %v1239 = vmax.f32 %v1033, 0.0
  %v1240 = vmax.f32 %v1035, 0.0
  %v1241 = vmax.f32 %v1038, 0.0
  %v1242 = vmax.f32 %v1040, 0.0
  %v1243 = vmax.f32 %v1043, 0.0
  %v1244 = vmax.f32 %v1045, 0.0
  %v1245 = vmax.f32 %v1048, 0.0
  %v1246 = vmax.f32 %v1050, 0.0
  %v1247 = vmax.f32 %v1053, 0.0
  %v1248 = vmax.f32 %v1055, 0.0
  %v1249 = vmax.f32 %v1058, 0.0
  %v1250 = vmax.f32 %v1060, 0.0
  %v1251 = vmax.f32 %v1063, 0.0
  %v1252 = vmax.f32 %v1065, 0.0
  %v1253 = vmax.f32 %v1068, 0.0
  %v1254 = vmax.f32 %v1070, 0.0
  %v1255 = vmax.f32 %v1073, 0.0
  %v1256 = vmax.f32 %v1075, 0.0
  %v1257 = vmax.f32 %v1078, 0.0
  %v1258 = vmax.f32 %v1080, 0.0
  %v1259 = vmax.f32 %v1083, 0.0
  %v1260 = vmax.f32 %v1085, 0.0
  %v1261 = vmax.f32 %v1088, 0.0
  %v1262 = vmax.f32 %v1090, 0.0
  %v1263 = vmax.f32 %v1093, 0.0
  %v1264 = vmax.f32 %v1095, 0.0
  %v1265 = vmax.f32 %v1098, 0.0
  %v1266 = vmax.f32 %v1100, 0.0
  %v1267 = vmax.f32 %v1103, 0.0
  %v1268 = vmax.f32 %v1105, 0.0
  %v1269 = vmax.f32 %v1108, 0.0
  %v1270 = vmax.f32 %v1110, 0.0
  %v1271 = vmax.f32 %v1113, 0.0
  %v1272 = vmax.f32 %v1115, 0.0
  %v1273 = vmax.f32 %v1118, 0.0
  %v1274 = vmax.f32 %v1120, 0.0
  %v1275 = vmax.f32 %v1123, 0.0
  %v1276 = vmax.f32 %v1125, 0.0
  %v1277 = vmax.f32 %v1128, 0.0
  %v1278 = vmax.f32 %v1130, 0.0
  %v1279 = vmax.f32 %v1133, 0.0
  %v1280 = vmax.f32 %v1135, 0.0
  %v1281 = vmax.f32 %v1137, %v1140
  %v1282 = vmax.f32 %v1138, %v1141
  %v1283 = vmax.f32 %v1139, %v1142
  %v1284 = vmax.f32 %v1143, %v1146
  %v1285 = vmax.f32 %v1144, %v1147
  %v1286 = vmax.f32 %v1145, %v1148
  %v1287 = vmax.f32 %v1149, %v1152
  %v1288 = vmax.f32 %v1150, %v1153
  %v1289 = vmax.f32 %v1151, %v1154
  %v1290 = vmax.f32 %v1155, %v1158
  %v1291 = vmax.f32 %v1156, %v1159
  %v1292 = vmax.f32 %v1157, %v1160
  %v1293 = vmax.f32 %v1161, %v1164
  %v1294 = vmax.f32 %v1162, %v1165
  %v1295 = vmax.f32 %v1163, %v1166
  %v1296 = vmax.f32 %v1167, %v1170
  %v1297 = vmax.f32 %v1168, %v1171
  %v1298 = vmax.f32 %v1169, %v1172
  %v1299 = vmax.f32 %v1173, %v1176
  %v1300 = vmax.f32 %v1174, %v1177
  %v1301 = vmax.f32 %v1175, %v1178
  %v1302 = vmax.f32 %v1179, %v1182
  %v1303 = vmax.f32 %v1180, %v1183
  %v1304 = vmax.f32 %v1181, %v1184
  %v1305 = vmax.f32 %v1185, %v1188
  %v1306 = vmax.f32 %v1186, %v1189
  %v1307 = vmax.f32 %v1187, %v1190
  %v1308 = vmax.f32 %v1191, %v1194
  %v1309 = vmax.f32 %v1192, %v1195
  %v1310 = vmax.f32 %v1193, %v1196
  %v1311 = vmax.f32 %v1197, %v1200
  %v1312 = vmax.f32 %v1198, %v1201
  %v1313 = vmax.f32 %v1199, %v1202
  %v1314 = vmax.f32 %v1203, %v1206
  %v1315 = vmax.f32 %v1204, %v1207
  %v1316 = vmax.f32 %v1205, %v1208
  %v1317 = vmax.f32 %v1209, %v1212
  %v1318 = vmax.f32 %v1210, %v1213
  %v1319 = vmax.f32 %v1211, %v1214
  %v1320 = vmax.f32 %v1215, %v1218
  %v1321 = vmax.f32 %v1216, %v1219
  %v1322 = vmax.f32 %v1217, %v1220
  %v1323 = vmax.f32 %v1221, %v1224
  %v1324 = vmax.f32 %v1222, %v1225
  %v1325 = vmax.f32 %v1223, %v1226
  %v1326 = vmax.f32 %v1227, %v1230
  %v1327 = vmax.f32 %v1228, %v1231
  %v1328 = vmax.f32 %v1229, %v1232
  %v1329 = vmax.f32 %v1233, %v1236
  %v1330 = vmax.f32 %v1234, %v1237
  %v1331 = vmax.f32 %v1235, %v1238
  %v1332 = vmax.f32 %v1239, %v1242
  %v1333 = vmax.f32 %v1240, %v1243
  %v1334 = vmax.f32 %v1241, %v1244
  %v1335 = vmax.f32 %v1245, %v1248
  %v1336 = vmax.f32 %v1246, %v1249
  %v1337 = vmax.f32 %v1247, %v1250
  %v1338 = vmax.f32 %v1251, %v1254
  %v1339 = vmax.f32 %v1252, %v1255
  %v1340 = vmax.f32 %v1253, %v1256
  %v1341 = vmax.f32 %v1257, %v1260
  %v1342 = vmax.f32 %v1258, %v1261
  %v1343 = vmax.f32 %v1259, %v1262
  %v1344 = vmax.f32 %v1263, %v1266
  %v1345 = vmax.f32 %v1264, %v1267
  %v1346 = vmax.f32 %v1265, %v1268
  %v1347 = vmax.f32 %v1269, %v1272
  %v1348 = vmax.f32 %v1270, %v1273
  %v1349 = vmax.f32 %v1271, %v1274
  %v1350 = vmax.f32 %v1275, %v1278
  %v1351 = vmax.f32 %v1276, %v1279
  %v1352 = vmax.f32 %v1277, %v1280
  %vm1353 = vcmask 80896
  %1354 = vst.msk [vmem:[#allocation2] sm:$0xff] %vm1353, %v1281
  %1355 = vst.msk [vmem:[#allocation2 + $0x8] sm:$0xff] %vm1353, %v1282
  %1356 = vst.msk [vmem:[#allocation2 + $0x10] sm:$0xff] %vm1353, %v1283
  %1357 = vst.msk [vmem:[#allocation2 + $0x18] sm:$0xff] %vm1353, %v1284
  %1358 = vst.msk [vmem:[#allocation2 + $0x20] sm:$0xff] %vm1353, %v1285
  %1359 = vst.msk [vmem:[#allocation2 + $0x28] sm:$0xff] %vm1353, %v1286
  %1360 = vst.msk [vmem:[#allocation2 + $0x30] sm:$0xff] %vm1353, %v1287
  %1361 = vst.msk [vmem:[#allocation2 + $0x38] sm:$0xff] %vm1353, %v1288
  %1362 = vst.msk [vmem:[#allocation2 + $0x40] sm:$0xff] %vm1353, %v1289
  %1363 = vst.msk [vmem:[#allocation2 + $0x48] sm:$0xff] %vm1353, %v1290
  %1364 = vst.msk [vmem:[#allocation2 + $0x50] sm:$0xff] %vm1353, %v1291
  %1365 = vst.msk [vmem:[#allocation2 + $0x58] sm:$0xff] %vm1353, %v1292
  %1366 = vst.msk [vmem:[#allocation2 + $0x60] sm:$0xff] %vm1353, %v1293
  %1367 = vst.msk [vmem:[#allocation2 + $0x68] sm:$0xff] %vm1353, %v1294
  %1368 = vst.msk [vmem:[#allocation2 + $0x70] sm:$0xff] %vm1353, %v1295
  %1369 = vst.msk [vmem:[#allocation2 + $0x78] sm:$0xff] %vm1353, %v1296
  %1370 = vst.msk [vmem:[#allocation2 + $0x80] sm:$0xff] %vm1353, %v1297
  %1371 = vst.msk [vmem:[#allocation2 + $0x88] sm:$0xff] %vm1353, %v1298
  %1372 = vst.msk [vmem:[#allocation2 + $0x90] sm:$0xff] %vm1353, %v1299
  %1373 = vst.msk [vmem:[#allocation2 + $0x98] sm:$0xff] %vm1353, %v1300
  %1374 = vst.msk [vmem:[#allocation2 + $0xa0] sm:$0xff] %vm1353, %v1301
  %1375 = vst.msk [vmem:[#allocation2 + $0xa8] sm:$0xff] %vm1353, %v1302
  %1376 = vst.msk [vmem:[#allocation2 + $0xb0] sm:$0xff] %vm1353, %v1303
  %1377 = vst.msk [vmem:[#allocation2 + $0xb8] sm:$0xff] %vm1353, %v1304
  %1378 = vst.msk [vmem:[#allocation2 + $0xc0] sm:$0xff] %vm1353, %v1305
  %1379 = vst.msk [vmem:[#allocation2 + $0xc8] sm:$0xff] %vm1353, %v1306
  %1380 = vst.msk [vmem:[#allocation2 + $0xd0] sm:$0xff] %vm1353, %v1307
  %1381 = vst.msk [vmem:[#allocation2 + $0xd8] sm:$0xff] %vm1353, %v1308
  %1382 = vst.msk [vmem:[#allocation2 + $0xe0] sm:$0xff] %vm1353, %v1309
  %1383 = vst.msk [vmem:[#allocation2 + $0xe8] sm:$0xff] %vm1353, %v1310
  %1384 = vst.msk [vmem:[#allocation2 + $0xf0] sm:$0xff] %vm1353, %v1311
  %1385 = vst.msk [vmem:[#allocation2 + $0xf8] sm:$0xff] %vm1353, %v1312
  %1386 = vst.msk [vmem:[#allocation2 + $0x100] sm:$0xff] %vm1353, %v1313
  %1387 = vst.msk [vmem:[#allocation2 + $0x108] sm:$0xff] %vm1353, %v1314
  %1388 = vst.msk [vmem:[#allocation2 + $0x110] sm:$0xff] %vm1353, %v1315
  %1389 = vst.msk [vmem:[#allocation2 + $0x118] sm:$0xff] %vm1353, %v1316
  %1390 = vst.msk [vmem:[#allocation2 + $0x120] sm:$0xff] %vm1353, %v1317
  %1391 = vst.msk [vmem:[#allocation2 + $0x128] sm:$0xff] %vm1353, %v1318
  %1392 = vst.msk [vmem:[#allocation2 + $0x130] sm:$0xff] %vm1353, %v1319
  %1393 = vst.msk [vmem:[#allocation2 + $0x138] sm:$0xff] %vm1353, %v1320
  %1394 = vst.msk [vmem:[#allocation2 + $0x140] sm:$0xff] %vm1353, %v1321
  %1395 = vst.msk [vmem:[#allocation2 + $0x148] sm:$0xff] %vm1353, %v1322
  %1396 = vst.msk [vmem:[#allocation2 + $0x150] sm:$0xff] %vm1353, %v1323
  %1397 = vst.msk [vmem:[#allocation2 + $0x158] sm:$0xff] %vm1353, %v1324
  %1398 = vst.msk [vmem:[#allocation2 + $0x160] sm:$0xff] %vm1353, %v1325
  %1399 = vst.msk [vmem:[#allocation2 + $0x168] sm:$0xff] %vm1353, %v1326
  %1400 = vst.msk [vmem:[#allocation2 + $0x170] sm:$0xff] %vm1353, %v1327
  %1401 = vst.msk [vmem:[#allocation2 + $0x178] sm:$0xff] %vm1353, %v1328
  %1402 = vst.msk [vmem:[#allocation2 + $0x180] sm:$0xff] %vm1353, %v1329
  %1403 = vst.msk [vmem:[#allocation2 + $0x188] sm:$0xff] %vm1353, %v1330
  %1404 = vst.msk [vmem:[#allocation2 + $0x190] sm:$0xff] %vm1353, %v1331
  %1405 = vst.msk [vmem:[#allocation2 + $0x198] sm:$0xff] %vm1353, %v1332
  %1406 = vst.msk [vmem:[#allocation2 + $0x1a0] sm:$0xff] %vm1353, %v1333
  %1407 = vst.msk [vmem:[#allocation2 + $0x1a8] sm:$0xff] %vm1353, %v1334
  %1408 = vst.msk [vmem:[#allocation2 + $0x1b0] sm:$0xff] %vm1353, %v1335
  %1409 = vst.msk [vmem:[#allocation2 + $0x1b8] sm:$0xff] %vm1353, %v1336
  %1410 = vst.msk [vmem:[#allocation2 + $0x1c0] sm:$0xff] %vm1353, %v1337
  %1411 = vst.msk [vmem:[#allocation2 + $0x1c8] sm:$0xff] %vm1353, %v1338
  %1412 = vst.msk [vmem:[#allocation2 + $0x1d0] sm:$0xff] %vm1353, %v1339
  %1413 = vst.msk [vmem:[#allocation2 + $0x1d8] sm:$0xff] %vm1353, %v1340
  %1414 = vst.msk [vmem:[#allocation2 + $0x1e0] sm:$0xff] %vm1353, %v1341
  %1415 = vst.msk [vmem:[#allocation2 + $0x1e8] sm:$0xff] %vm1353, %v1342
  %1416 = vst.msk [vmem:[#allocation2 + $0x1f0] sm:$0xff] %vm1353, %v1343
  %1417 = vst.msk [vmem:[#allocation2 + $0x1f8] sm:$0xff] %vm1353, %v1344
  %1418 = vst.msk [vmem:[#allocation2 + $0x200] sm:$0xff] %vm1353, %v1345
  %1419 = vst.msk [vmem:[#allocation2 + $0x208] sm:$0xff] %vm1353, %v1346
  %1420 = vst.msk [vmem:[#allocation2 + $0x210] sm:$0xff] %vm1353, %v1347
  %1421 = vst.msk [vmem:[#allocation2 + $0x218] sm:$0xff] %vm1353, %v1348
  %1422 = vst.msk [vmem:[#allocation2 + $0x220] sm:$0xff] %vm1353, %v1349
  %1423 = vst.msk [vmem:[#allocation2 + $0x228] sm:$0xff] %vm1353, %v1350
  %1424 = vst.msk [vmem:[#allocation2 + $0x230] sm:$0xff] %vm1353, %v1351
  %1425 = vst.msk [vmem:[#allocation2 + $0x238] sm:$0xff] %vm1353, %v1352
  %v1426 = vld [vmem:[#allocation2] ss:$2 sm:$0xff]
  %s1427 = scalar_lea.vmem [#allocation2], 16
  %v1428 = vld [vmem:[%s1427] ss:$2 sm:$0xf]
  %s1429 = scalar_lea.vmem [#allocation2], 24
  %v1430 = vld [vmem:[%s1429] ss:$2 sm:$0xff]
  %s1431 = scalar_lea.vmem [#allocation2], 40
  %v1432 = vld [vmem:[%s1431] ss:$2 sm:$0xf]
  %s1433 = scalar_lea.vmem [#allocation2], 48
  %v1434 = vld [vmem:[%s1433] ss:$2 sm:$0xff]
  %s1435 = scalar_lea.vmem [#allocation2], 64
  %v1436 = vld [vmem:[%s1435] ss:$2 sm:$0xf]
  %s1437 = scalar_lea.vmem [#allocation2], 72
  %v1438 = vld [vmem:[%s1437] ss:$2 sm:$0xff]
  %s1439 = scalar_lea.vmem [#allocation2], 88
  %v1440 = vld [vmem:[%s1439] ss:$2 sm:$0xf]
  %s1441 = scalar_lea.vmem [#allocation2], 96
  %v1442 = vld [vmem:[%s1441] ss:$2 sm:$0xff]
  %s1443 = scalar_lea.vmem [#allocation2], 112
  %v1444 = vld [vmem:[%s1443] ss:$2 sm:$0xf]
  %s1445 = scalar_lea.vmem [#allocation2], 120
  %v1446 = vld [vmem:[%s1445] ss:$2 sm:$0xff]
  %s1447 = scalar_lea.vmem [#allocation2], 136
  %v1448 = vld [vmem:[%s1447] ss:$2 sm:$0xf]
  %s1449 = scalar_lea.vmem [#allocation2], 144
  %v1450 = vld [vmem:[%s1449] ss:$2 sm:$0xff]
  %s1451 = scalar_lea.vmem [#allocation2], 160
  %v1452 = vld [vmem:[%s1451] ss:$2 sm:$0xf]
  %s1453 = scalar_lea.vmem [#allocation2], 168
  %v1454 = vld [vmem:[%s1453] ss:$2 sm:$0xff]
  %s1455 = scalar_lea.vmem [#allocation2], 184
  %v1456 = vld [vmem:[%s1455] ss:$2 sm:$0xf]
  %s1457 = scalar_lea.vmem [#allocation2], 192
  %v1458 = vld [vmem:[%s1457] ss:$2 sm:$0xff]
  %s1459 = scalar_lea.vmem [#allocation2], 208
  %v1460 = vld [vmem:[%s1459] ss:$2 sm:$0xf]
  %s1461 = scalar_lea.vmem [#allocation2], 216
  %v1462 = vld [vmem:[%s1461] ss:$2 sm:$0xff]
  %s1463 = scalar_lea.vmem [#allocation2], 232
  %v1464 = vld [vmem:[%s1463] ss:$2 sm:$0xf]
  %s1465 = scalar_lea.vmem [#allocation2], 240
  %v1466 = vld [vmem:[%s1465] ss:$2 sm:$0xff]
  %s1467 = scalar_lea.vmem [#allocation2], 256
  %v1468 = vld [vmem:[%s1467] ss:$2 sm:$0xf]
  %s1469 = scalar_lea.vmem [#allocation2], 264
  %v1470 = vld [vmem:[%s1469] ss:$2 sm:$0xff]
  %s1471 = scalar_lea.vmem [#allocation2], 280
  %v1472 = vld [vmem:[%s1471] ss:$2 sm:$0xf]
  %s1473 = scalar_lea.vmem [#allocation2], 288
  %v1474 = vld [vmem:[%s1473] ss:$2 sm:$0xff]
  %s1475 = scalar_lea.vmem [#allocation2], 304
  %v1476 = vld [vmem:[%s1475] ss:$2 sm:$0xf]
  %s1477 = scalar_lea.vmem [#allocation2], 312
  %v1478 = vld [vmem:[%s1477] ss:$2 sm:$0xff]
  %s1479 = scalar_lea.vmem [#allocation2], 328
  %v1480 = vld [vmem:[%s1479] ss:$2 sm:$0xf]
  %s1481 = scalar_lea.vmem [#allocation2], 336
  %v1482 = vld [vmem:[%s1481] ss:$2 sm:$0xff]
  %s1483 = scalar_lea.vmem [#allocation2], 352
  %v1484 = vld [vmem:[%s1483] ss:$2 sm:$0xf]
  %s1485 = scalar_lea.vmem [#allocation2], 360
  %v1486 = vld [vmem:[%s1485] ss:$2 sm:$0xff]
  %s1487 = scalar_lea.vmem [#allocation2], 376
  %v1488 = vld [vmem:[%s1487] ss:$2 sm:$0xf]
  %s1489 = scalar_lea.vmem [#allocation2], 384
  %v1490 = vld [vmem:[%s1489] ss:$2 sm:$0xff]
  %s1491 = scalar_lea.vmem [#allocation2], 400
  %v1492 = vld [vmem:[%s1491] ss:$2 sm:$0xf]
  %s1493 = scalar_lea.vmem [#allocation2], 408
  %v1494 = vld [vmem:[%s1493] ss:$2 sm:$0xff]
  %s1495 = scalar_lea.vmem [#allocation2], 424
  %v1496 = vld [vmem:[%s1495] ss:$2 sm:$0xf]
  %s1497 = scalar_lea.vmem [#allocation2], 432
  %v1498 = vld [vmem:[%s1497] ss:$2 sm:$0xff]
  %s1499 = scalar_lea.vmem [#allocation2], 448
  %v1500 = vld [vmem:[%s1499] ss:$2 sm:$0xf]
  %s1501 = scalar_lea.vmem [#allocation2], 456
  %v1502 = vld [vmem:[%s1501] ss:$2 sm:$0xff]
  %s1503 = scalar_lea.vmem [#allocation2], 472
  %v1504 = vld [vmem:[%s1503] ss:$2 sm:$0xf]
  %s1505 = scalar_lea.vmem [#allocation2], 480
  %v1506 = vld [vmem:[%s1505] ss:$2 sm:$0xff]
  %s1507 = scalar_lea.vmem [#allocation2], 496
  %v1508 = vld [vmem:[%s1507] ss:$2 sm:$0xf]
  %s1509 = scalar_lea.vmem [#allocation2], 504
  %v1510 = vld [vmem:[%s1509] ss:$2 sm:$0xff]
  %s1511 = scalar_lea.vmem [#allocation2], 520
  %v1512 = vld [vmem:[%s1511] ss:$2 sm:$0xf]
  %s1513 = scalar_lea.vmem [#allocation2], 528
  %v1514 = vld [vmem:[%s1513] ss:$2 sm:$0xff]
  %s1515 = scalar_lea.vmem [#allocation2], 544
  %v1516 = vld [vmem:[%s1515] ss:$2 sm:$0xf]
  %s1517 = scalar_lea.vmem [#allocation2], 552
  %v1518 = vld [vmem:[%s1517] ss:$2 sm:$0xff]
  %s1519 = scalar_lea.vmem [#allocation2], 568
  %v1520 = vld [vmem:[%s1519] ss:$2 sm:$0xf]
  %s1521 = scalar_lea.vmem [#allocation2], 1
  %v1522 = vld [vmem:[%s1521] ss:$2 sm:$0xff]
  %s1523 = scalar_lea.vmem [#allocation2], 17
  %v1524 = vld [vmem:[%s1523] ss:$2 sm:$0xf]
  %s1525 = scalar_lea.vmem [#allocation2], 25
  %v1526 = vld [vmem:[%s1525] ss:$2 sm:$0xff]
  %s1527 = scalar_lea.vmem [#allocation2], 41
  %v1528 = vld [vmem:[%s1527] ss:$2 sm:$0xf]
  %s1529 = scalar_lea.vmem [#allocation2], 49
  %v1530 = vld [vmem:[%s1529] ss:$2 sm:$0xff]
  %s1531 = scalar_lea.vmem [#allocation2], 65
  %v1532 = vld [vmem:[%s1531] ss:$2 sm:$0xf]
  %s1533 = scalar_lea.vmem [#allocation2], 73
  %v1534 = vld [vmem:[%s1533] ss:$2 sm:$0xff]
  %s1535 = scalar_lea.vmem [#allocation2], 89
  %v1536 = vld [vmem:[%s1535] ss:$2 sm:$0xf]
  %s1537 = scalar_lea.vmem [#allocation2], 97
  %v1538 = vld [vmem:[%s1537] ss:$2 sm:$0xff]
  %s1539 = scalar_lea.vmem [#allocation2], 113
  %v1540 = vld [vmem:[%s1539] ss:$2 sm:$0xf]
  %s1541 = scalar_lea.vmem [#allocation2], 121
  %v1542 = vld [vmem:[%s1541] ss:$2 sm:$0xff]
  %s1543 = scalar_lea.vmem [#allocation2], 137
  %v1544 = vld [vmem:[%s1543] ss:$2 sm:$0xf]
  %s1545 = scalar_lea.vmem [#allocation2], 145
  %v1546 = vld [vmem:[%s1545] ss:$2 sm:$0xff]
  %s1547 = scalar_lea.vmem [#allocation2], 161
  %v1548 = vld [vmem:[%s1547] ss:$2 sm:$0xf]
  %s1549 = scalar_lea.vmem [#allocation2], 169
  %v1550 = vld [vmem:[%s1549] ss:$2 sm:$0xff]
  %s1551 = scalar_lea.vmem [#allocation2], 185
  %v1552 = vld [vmem:[%s1551] ss:$2 sm:$0xf]
  %s1553 = scalar_lea.vmem [#allocation2], 193
  %v1554 = vld [vmem:[%s1553] ss:$2 sm:$0xff]
  %s1555 = scalar_lea.vmem [#allocation2], 209
  %v1556 = vld [vmem:[%s1555] ss:$2 sm:$0xf]
  %s1557 = scalar_lea.vmem [#allocation2], 217
  %v1558 = vld [vmem:[%s1557] ss:$2 sm:$0xff]
  %s1559 = scalar_lea.vmem [#allocation2], 233
  %v1560 = vld [vmem:[%s1559] ss:$2 sm:$0xf]
  %s1561 = scalar_lea.vmem [#allocation2], 241
  %v1562 = vld [vmem:[%s1561] ss:$2 sm:$0xff]
  %s1563 = scalar_lea.vmem [#allocation2], 257
  %v1564 = vld [vmem:[%s1563] ss:$2 sm:$0xf]
  %s1565 = scalar_lea.vmem [#allocation2], 265
  %v1566 = vld [vmem:[%s1565] ss:$2 sm:$0xff]
  %s1567 = scalar_lea.vmem [#allocation2], 281
  %v1568 = vld [vmem:[%s1567] ss:$2 sm:$0xf]
  %s1569 = scalar_lea.vmem [#allocation2], 289
  %v1570 = vld [vmem:[%s1569] ss:$2 sm:$0xff]
  %s1571 = scalar_lea.vmem [#allocation2], 305
  %v1572 = vld [vmem:[%s1571] ss:$2 sm:$0xf]
  %s1573 = scalar_lea.vmem [#allocation2], 313
  %v1574 = vld [vmem:[%s1573] ss:$2 sm:$0xff]
  %s1575 = scalar_lea.vmem [#allocation2], 329
  %v1576 = vld [vmem:[%s1575] ss:$2 sm:$0xf]
  %s1577 = scalar_lea.vmem [#allocation2], 337
  %v1578 = vld [vmem:[%s1577] ss:$2 sm:$0xff]
  %s1579 = scalar_lea.vmem [#allocation2], 353
  %v1580 = vld [vmem:[%s1579] ss:$2 sm:$0xf]
  %s1581 = scalar_lea.vmem [#allocation2], 361
  %v1582 = vld [vmem:[%s1581] ss:$2 sm:$0xff]
  %s1583 = scalar_lea.vmem [#allocation2], 377
  %v1584 = vld [vmem:[%s1583] ss:$2 sm:$0xf]
  %s1585 = scalar_lea.vmem [#allocation2], 385
  %v1586 = vld [vmem:[%s1585] ss:$2 sm:$0xff]
  %s1587 = scalar_lea.vmem [#allocation2], 401
  %v1588 = vld [vmem:[%s1587] ss:$2 sm:$0xf]
  %s1589 = scalar_lea.vmem [#allocation2], 409
  %v1590 = vld [vmem:[%s1589] ss:$2 sm:$0xff]
  %s1591 = scalar_lea.vmem [#allocation2], 425
  %v1592 = vld [vmem:[%s1591] ss:$2 sm:$0xf]
  %s1593 = scalar_lea.vmem [#allocation2], 433
  %v1594 = vld [vmem:[%s1593] ss:$2 sm:$0xff]
  %s1595 = scalar_lea.vmem [#allocation2], 449
  %v1596 = vld [vmem:[%s1595] ss:$2 sm:$0xf]
  %s1597 = scalar_lea.vmem [#allocation2], 457
  %v1598 = vld [vmem:[%s1597] ss:$2 sm:$0xff]
  %s1599 = scalar_lea.vmem [#allocation2], 473
  %v1600 = vld [vmem:[%s1599] ss:$2 sm:$0xf]
  %s1601 = scalar_lea.vmem [#allocation2], 481
  %v1602 = vld [vmem:[%s1601] ss:$2 sm:$0xff]
  %s1603 = scalar_lea.vmem [#allocation2], 497
  %v1604 = vld [vmem:[%s1603] ss:$2 sm:$0xf]
  %s1605 = scalar_lea.vmem [#allocation2], 505
  %v1606 = vld [vmem:[%s1605] ss:$2 sm:$0xff]
  %s1607 = scalar_lea.vmem [#allocation2], 521
  %v1608 = vld [vmem:[%s1607] ss:$2 sm:$0xf]
  %s1609 = scalar_lea.vmem [#allocation2], 529
  %v1610 = vld [vmem:[%s1609] ss:$2 sm:$0xff]
  %s1611 = scalar_lea.vmem [#allocation2], 545
  %v1612 = vld [vmem:[%s1611] ss:$2 sm:$0xf]
  %s1613 = scalar_lea.vmem [#allocation2], 553
  %v1614 = vld [vmem:[%s1613] ss:$2 sm:$0xff]
  %s1615 = scalar_lea.vmem [#allocation2], 569
  %v1616 = vld [vmem:[%s1615] ss:$2 sm:$0xf]
  %v1617 = vmax.f32 %v1426, %v1522
  %v1618 = vmax.f32 %v1428, %v1524
  %v1619 = vmax.f32 %v1430, %v1526
  %v1620 = vmax.f32 %v1432, %v1528
  %v1621 = vmax.f32 %v1434, %v1530
  %v1622 = vmax.f32 %v1436, %v1532
  %v1623 = vmax.f32 %v1438, %v1534
  %v1624 = vmax.f32 %v1440, %v1536
  %v1625 = vmax.f32 %v1442, %v1538
  %v1626 = vmax.f32 %v1444, %v1540
  %v1627 = vmax.f32 %v1446, %v1542
  %v1628 = vmax.f32 %v1448, %v1544
  %v1629 = vmax.f32 %v1450, %v1546
  %v1630 = vmax.f32 %v1452, %v1548
  %v1631 = vmax.f32 %v1454, %v1550
  %v1632 = vmax.f32 %v1456, %v1552
  %v1633 = vmax.f32 %v1458, %v1554
  %v1634 = vmax.f32 %v1460, %v1556
  %v1635 = vmax.f32 %v1462, %v1558
  %v1636 = vmax.f32 %v1464, %v1560
  %v1637 = vmax.f32 %v1466, %v1562
  %v1638 = vmax.f32 %v1468, %v1564
  %v1639 = vmax.f32 %v1470, %v1566
  %v1640 = vmax.f32 %v1472, %v1568
  %v1641 = vmax.f32 %v1474, %v1570
  %v1642 = vmax.f32 %v1476, %v1572
  %v1643 = vmax.f32 %v1478, %v1574
  %v1644 = vmax.f32 %v1480, %v1576
  %v1645 = vmax.f32 %v1482, %v1578
  %v1646 = vmax.f32 %v1484, %v1580
  %v1647 = vmax.f32 %v1486, %v1582
  %v1648 = vmax.f32 %v1488, %v1584
  %v1649 = vmax.f32 %v1490, %v1586
  %v1650 = vmax.f32 %v1492, %v1588
  %v1651 = vmax.f32 %v1494, %v1590
  %v1652 = vmax.f32 %v1496, %v1592
  %v1653 = vmax.f32 %v1498, %v1594
  %v1654 = vmax.f32 %v1500, %v1596
  %v1655 = vmax.f32 %v1502, %v1598
  %v1656 = vmax.f32 %v1504, %v1600
  %v1657 = vmax.f32 %v1506, %v1602
  %v1658 = vmax.f32 %v1508, %v1604
  %v1659 = vmax.f32 %v1510, %v1606
  %v1660 = vmax.f32 %v1512, %v1608
  %v1661 = vmax.f32 %v1514, %v1610
  %v1662 = vmax.f32 %v1516, %v1612
  %v1663 = vmax.f32 %v1518, %v1614
  %v1664 = vmax.f32 %v1520, %v1616
  %v1665 = vpack.c.bf16 %v1619, %v1617
  %v1666 = vpack.c.bf16 %v1623, %v1621
  %v1667 = vpack.c.bf16 %v1627, %v1625
  %v1668 = vpack.c.bf16 %v1631, %v1629
  %v1669 = vpack.c.bf16 %v1643, %v1641
  %v1670 = vpack.c.bf16 %v1647, %v1645
  %v1671 = vpack.c.bf16 %v1651, %v1649
  %v1672 = vpack.c.bf16 %v1655, %v1653
  %v1673 = vld [vmem:[%s3] sm:$0xf]
  %v1674 = vld [vmem:[%s3 + $0x4] sm:$0x1]
  %vm1707 = vcmask 1046528
  %v1708 = vrot.slane %v1617, 1
  %v1709 = vrot.slane %v1618, 1
  %v1710 = vsel %vm1707, %v1708, %v1709
  %v1711 = vrot.slane %v1619, 1
  %v1712 = vrot.slane %v1620, 1
  %v1713 = vsel %vm1707, %v1711, %v1712
  %v1714 = vrot.slane %v1621, 1
  %v1715 = vrot.slane %v1622, 1
  %v1716 = vsel %vm1707, %v1714, %v1715
  %v1717 = vrot.slane %v1623, 1
  %v1718 = vrot.slane %v1624, 1
  %v1719 = vsel %vm1707, %v1717, %v1718
  %v1720 = vrot.slane %v1625, 1
  %v1721 = vrot.slane %v1626, 1
  %v1722 = vsel %vm1707, %v1720, %v1721
  %v1723 = vrot.slane %v1627, 1
  %v1724 = vrot.slane %v1628, 1
  %v1725 = vsel %vm1707, %v1723, %v1724
  %v1726 = vrot.slane %v1629, 1
  %v1727 = vrot.slane %v1630, 1
  %v1728 = vsel %vm1707, %v1726, %v1727
  %v1729 = vrot.slane %v1631, 1
  %v1730 = vrot.slane %v1632, 1
  %v1731 = vsel %vm1707, %v1729, %v1730
  %v1732 = vrot.slane %v1641, 1
  %v1733 = vrot.slane %v1642, 1
  %v1734 = vsel %vm1707, %v1732, %v1733
  %v1735 = vrot.slane %v1643, 1
  %v1736 = vrot.slane %v1644, 1
  %v1737 = vsel %vm1707, %v1735, %v1736
  %v1738 = vrot.slane %v1645, 1
  %v1739 = vrot.slane %v1646, 1
  %v1740 = vsel %vm1707, %v1738, %v1739
  %v1741 = vrot.slane %v1647, 1
  %v1742 = vrot.slane %v1648, 1
  %v1743 = vsel %vm1707, %v1741, %v1742
  %v1744 = vrot.slane %v1649, 1
  %v1745 = vrot.slane %v1650, 1
  %v1746 = vsel %vm1707, %v1744, %v1745
  %v1747 = vrot.slane %v1651, 1
  %v1748 = vrot.slane %v1652, 1
  %v1749 = vsel %vm1707, %v1747, %v1748
  %v1750 = vrot.slane %v1653, 1
  %v1751 = vrot.slane %v1654, 1
  %v1752 = vsel %vm1707, %v1750, %v1751
  %v1753 = vrot.slane %v1655, 1
  %v1754 = vrot.slane %v1656, 1
  %v1755 = vsel %vm1707, %v1753, %v1754
  %v1772 = vpack.c.bf16 %v1713, %v1710
  %v1773 = vpack.c.bf16 %v1719, %v1716
  %v1774 = vpack.c.bf16 %v1725, %v1722
  %v1775 = vpack.c.bf16 %v1731, %v1728
  %v1776 = vpack.c.bf16 %v1737, %v1734
  %v1777 = vpack.c.bf16 %v1743, %v1740
  %v1778 = vpack.c.bf16 %v1749, %v1746
  %v1779 = vpack.c.bf16 %v1755, %v1752
  %s1780 = scalar_lea.vmem %s3, 8
  %v1781 = vld [vmem:[%s1780] sm:$0xf]
  %v1782 = vld [vmem:[%s1780 + $0x4] sm:$0x1]
  %v1785 = vunpack.c.l.b16 %v1781
  %v1786 = vunpack.c.l.b16 %v1782
  %v1787 = vpack.c.b16 %v1786, %v1785
  %v1789 = vsel %vm1353, %v1772, 0
  %v1792 = vsel %vm1353, %v1773, 0
  %v1795 = vsel %vm1353, %v1774, 0
  %v1798 = vsel %vm1353, %v1775, 0
  %v1801 = vsel %vm1353, %v1776, 0
  %v1804 = vsel %vm1353, %v1777, 0
  %v1807 = vsel %vm1353, %v1778, 0
  %v1810 = vsel %vm1353, %v1779, 0
  %v1813 = vsel %vm762, %v1787, 0
  %1815 = vmatpush.bf16.msra.mxu0 0
  %1816 = vmatpush.bf16.msra.mxu0 0
  %1817 = vmatpush.bf16.msra.mxu0 0
  %1818 = vmatpush.bf16.msra.mxu0 0
  %1819 = vmatpush.bf16.msra.mxu0 0
  %1820 = vmatpush.bf16.msra.mxu0 0
  %1821 = vmatpush.bf16.msra.mxu0 0
  %1822 = vmatpush.bf16.msra.mxu0 %v1813
  %1823 = vmatmul.bf16.gmra.mxu0 %v1789
  %v1824 = vpop.f32.mrf.mxu0
  %v1825 = vadd.f32 0.0, %v1824
  %v1826 = vpop.f32.mrf.mxu0
  %v1827 = vadd.f32 0.0, %v1826
  %1828 = vmatmul.bf16.gmra.mxu0 %v1792
  %v1829 = vpop.f32.mrf.mxu0
  %v1830 = vadd.f32 0.0, %v1829
  %v1831 = vpop.f32.mrf.mxu0
  %v1832 = vadd.f32 0.0, %v1831
  %1833 = vmatmul.bf16.gmra.mxu0 %v1795
  %v1834 = vpop.f32.mrf.mxu0
  %v1835 = vadd.f32 0.0, %v1834
  %v1836 = vpop.f32.mrf.mxu0
  %v1837 = vadd.f32 0.0, %v1836
  %1838 = vmatmul.bf16.gmra.mxu0 %v1798
  %v1839 = vpop.f32.mrf.mxu0
  %v1840 = vadd.f32 0.0, %v1839
  %v1841 = vpop.f32.mrf.mxu0
  %v1842 = vadd.f32 0.0, %v1841
  %1843 = vmatmul.bf16.gmra.mxu0 %v1801
  %v1844 = vpop.f32.mrf.mxu0
  %v1845 = vadd.f32 0.0, %v1844
  %v1846 = vpop.f32.mrf.mxu0
  %v1847 = vadd.f32 0.0, %v1846
  %1848 = vmatmul.bf16.gmra.mxu0 %v1804
  %v1849 = vpop.f32.mrf.mxu0
  %v1850 = vadd.f32 0.0, %v1849
  %v1851 = vpop.f32.mrf.mxu0
  %v1852 = vadd.f32 0.0, %v1851
  %1853 = vmatmul.bf16.gmra.mxu0 %v1807
  %v1854 = vpop.f32.mrf.mxu0
  %v1855 = vadd.f32 0.0, %v1854
  %v1856 = vpop.f32.mrf.mxu0
  %v1857 = vadd.f32 0.0, %v1856
  %1858 = vmatmul.bf16.gmra.mxu0 %v1810
  %v1859 = vpop.f32.mrf.mxu0
  %v1860 = vadd.f32 0.0, %v1859
  %v1861 = vpop.f32.mrf.mxu0
  %v1862 = vadd.f32 0.0, %v1861
  %1863 = vdwg.mxu0
  %v1866 = vunpack.c.l.b16 %v1673
  %v1867 = vunpack.c.l.b16 %v1674
  %v1868 = vpack.c.b16 %v1867, %v1866
  %v1870 = vsel %vm1353, %v1665, 0
  %v1873 = vsel %vm1353, %v1666, 0
  %v1876 = vsel %vm1353, %v1667, 0
  %v1879 = vsel %vm1353, %v1668, 0
  %v1882 = vsel %vm1353, %v1669, 0
  %v1885 = vsel %vm1353, %v1670, 0
  %v1888 = vsel %vm1353, %v1671, 0
  %v1891 = vsel %vm1353, %v1672, 0
  %v1894 = vsel %vm762, %v1868, 0
  %1896 = vmatpush.bf16.msra.mxu0 0
  %1897 = vmatpush.bf16.msra.mxu0 0
  %1898 = vmatpush.bf16.msra.mxu0 0
  %1899 = vmatpush.bf16.msra.mxu0 0
  %1900 = vmatpush.bf16.msra.mxu0 0
  %1901 = vmatpush.bf16.msra.mxu0 0
  %1902 = vmatpush.bf16.msra.mxu0 0
  %1903 = vmatpush.bf16.msra.mxu0 %v1894
  %1904 = vmatmul.bf16.gmra.mxu0 %v1870
  %v1905 = vpop.f32.mrf.mxu0
  %v1906 = vadd.f32 %v1825, %v1905
  %v1907 = vpop.f32.mrf.mxu0
  %v1908 = vadd.f32 %v1827, %v1907
  %1909 = vmatmul.bf16.gmra.mxu0 %v1873
  %v1910 = vpop.f32.mrf.mxu0
  %v1911 = vadd.f32 %v1830, %v1910
  %v1912 = vpop.f32.mrf.mxu0
  %v1913 = vadd.f32 %v1832, %v1912
  %1914 = vmatmul.bf16.gmra.mxu0 %v1876
  %v1915 = vpop.f32.mrf.mxu0
  %v1916 = vadd.f32 %v1835, %v1915
  %v1917 = vpop.f32.mrf.mxu0
  %v1918 = vadd.f32 %v1837, %v1917
  %1919 = vmatmul.bf16.gmra.mxu0 %v1879
  %v1920 = vpop.f32.mrf.mxu0
  %v1921 = vadd.f32 %v1840, %v1920
  %v1922 = vpop.f32.mrf.mxu0
  %v1923 = vadd.f32 %v1842, %v1922
  %1924 = vmatmul.bf16.gmra.mxu0 %v1882
  %v1925 = vpop.f32.mrf.mxu0
  %v1926 = vadd.f32 %v1845, %v1925
  %v1927 = vpop.f32.mrf.mxu0
  %v1928 = vadd.f32 %v1847, %v1927
  %1929 = vmatmul.bf16.gmra.mxu0 %v1885
  %v1930 = vpop.f32.mrf.mxu0
  %v1931 = vadd.f32 %v1850, %v1930
  %v1932 = vpop.f32.mrf.mxu0
  %v1933 = vadd.f32 %v1852, %v1932
  %1934 = vmatmul.bf16.gmra.mxu0 %v1888
  %v1935 = vpop.f32.mrf.mxu0
  %v1936 = vadd.f32 %v1855, %v1935
  %v1937 = vpop.f32.mrf.mxu0
  %v1938 = vadd.f32 %v1857, %v1937
  %1939 = vmatmul.bf16.gmra.mxu0 %v1891
  %v1940 = vpop.f32.mrf.mxu0
  %v1941 = vadd.f32 %v1860, %v1940
  %v1942 = vpop.f32.mrf.mxu0
  %v1943 = vadd.f32 %v1862, %v1942
  %1944 = vdwg.mxu0
  %vm1945 = vcmask 1045504
  %v1946 = vrot.slane %v1617, 2
  %v1947 = vrot.slane %v1618, 2
  %v1948 = vsel %vm1945, %v1946, %v1947
  %v1949 = vrot.slane %v1619, 2
  %v1950 = vrot.slane %v1620, 2
  %v1951 = vsel %vm1945, %v1949, %v1950
  %v1952 = vrot.slane %v1621, 2
  %v1953 = vrot.slane %v1622, 2
  %v1954 = vsel %vm1945, %v1952, %v1953
  %v1955 = vrot.slane %v1623, 2
  %v1956 = vrot.slane %v1624, 2
  %v1957 = vsel %vm1945, %v1955, %v1956
  %v1958 = vrot.slane %v1625, 2
  %v1959 = vrot.slane %v1626, 2
  %v1960 = vsel %vm1945, %v1958, %v1959
  %v1961 = vrot.slane %v1627, 2
  %v1962 = vrot.slane %v1628, 2
  %v1963 = vsel %vm1945, %v1961, %v1962
  %v1964 = vrot.slane %v1629, 2
  %v1965 = vrot.slane %v1630, 2
  %v1966 = vsel %vm1945, %v1964, %v1965
  %v1967 = vrot.slane %v1631, 2
  %v1968 = vrot.slane %v1632, 2
  %v1969 = vsel %vm1945, %v1967, %v1968
  %v1970 = vrot.slane %v1641, 2
  %v1971 = vrot.slane %v1642, 2
  %v1972 = vsel %vm1945, %v1970, %v1971
  %v1973 = vrot.slane %v1643, 2
  %v1974 = vrot.slane %v1644, 2
  %v1975 = vsel %vm1945, %v1973, %v1974
  %v1976 = vrot.slane %v1645, 2
  %v1977 = vrot.slane %v1646, 2
  %v1978 = vsel %vm1945, %v1976, %v1977
  %v1979 = vrot.slane %v1647, 2
  %v1980 = vrot.slane %v1648, 2
  %v1981 = vsel %vm1945, %v1979, %v1980
  %v1982 = vrot.slane %v1649, 2
  %v1983 = vrot.slane %v1650, 2
  %v1984 = vsel %vm1945, %v1982, %v1983
  %v1985 = vrot.slane %v1651, 2
  %v1986 = vrot.slane %v1652, 2
  %v1987 = vsel %vm1945, %v1985, %v1986
  %v1988 = vrot.slane %v1653, 2
  %v1989 = vrot.slane %v1654, 2
  %v1990 = vsel %vm1945, %v1988, %v1989
  %v1991 = vrot.slane %v1655, 2
  %v1992 = vrot.slane %v1656, 2
  %v1993 = vsel %vm1945, %v1991, %v1992
  %v2010 = vpack.c.bf16 %v1951, %v1948
  %v2011 = vpack.c.bf16 %v1957, %v1954
  %v2012 = vpack.c.bf16 %v1963, %v1960
  %v2013 = vpack.c.bf16 %v1969, %v1966
  %v2014 = vpack.c.bf16 %v1975, %v1972
  %v2015 = vpack.c.bf16 %v1981, %v1978
  %v2016 = vpack.c.bf16 %v1987, %v1984
  %v2017 = vpack.c.bf16 %v1993, %v1990
  %s2018 = scalar_lea.vmem %s3, 16
  %v2019 = vld [vmem:[%s2018] sm:$0xf]
  %v2020 = vld [vmem:[%s2018 + $0x4] sm:$0x1]
  %v2023 = vunpack.c.l.b16 %v2019
  %v2024 = vunpack.c.l.b16 %v2020
  %v2025 = vpack.c.b16 %v2024, %v2023
  %v2027 = vsel %vm1353, %v2010, 0
  %v2030 = vsel %vm1353, %v2011, 0
  %v2033 = vsel %vm1353, %v2012, 0
  %v2036 = vsel %vm1353, %v2013, 0
  %v2039 = vsel %vm1353, %v2014, 0
  %v2042 = vsel %vm1353, %v2015, 0
  %v2045 = vsel %vm1353, %v2016, 0
  %v2048 = vsel %vm1353, %v2017, 0
  %v2051 = vsel %vm762, %v2025, 0
  %2053 = vmatpush.bf16.msra.mxu0 0
  %2054 = vmatpush.bf16.msra.mxu0 0
  %2055 = vmatpush.bf16.msra.mxu0 0
  %2056 = vmatpush.bf16.msra.mxu0 0
  %2057 = vmatpush.bf16.msra.mxu0 0
  %2058 = vmatpush.bf16.msra.mxu0 0
  %2059 = vmatpush.bf16.msra.mxu0 0
  %2060 = vmatpush.bf16.msra.mxu0 %v2051
  %2061 = vmatmul.bf16.gmra.mxu0 %v2027
  %v2062 = vpop.f32.mrf.mxu0
  %v2063 = vadd.f32 0.0, %v2062
  %v2064 = vpop.f32.mrf.mxu0
  %v2065 = vadd.f32 0.0, %v2064
  %2066 = vmatmul.bf16.gmra.mxu0 %v2030
  %v2067 = vpop.f32.mrf.mxu0
  %v2068 = vadd.f32 0.0, %v2067
  %v2069 = vpop.f32.mrf.mxu0
  %v2070 = vadd.f32 0.0, %v2069
  %2071 = vmatmul.bf16.gmra.mxu0 %v2033
  %v2072 = vpop.f32.mrf.mxu0
  %v2073 = vadd.f32 0.0, %v2072
  %v2074 = vpop.f32.mrf.mxu0
  %v2075 = vadd.f32 0.0, %v2074
  %2076 = vmatmul.bf16.gmra.mxu0 %v2036
  %v2077 = vpop.f32.mrf.mxu0
  %v2078 = vadd.f32 0.0, %v2077
  %v2079 = vpop.f32.mrf.mxu0
  %v2080 = vadd.f32 0.0, %v2079
  %2081 = vmatmul.bf16.gmra.mxu0 %v2039
  %v2082 = vpop.f32.mrf.mxu0
  %v2083 = vadd.f32 0.0, %v2082
  %v2084 = vpop.f32.mrf.mxu0
  %v2085 = vadd.f32 0.0, %v2084
  %2086 = vmatmul.bf16.gmra.mxu0 %v2042
  %v2087 = vpop.f32.mrf.mxu0
  %v2088 = vadd.f32 0.0, %v2087
  %v2089 = vpop.f32.mrf.mxu0
  %v2090 = vadd.f32 0.0, %v2089
  %2091 = vmatmul.bf16.gmra.mxu0 %v2045
  %v2092 = vpop.f32.mrf.mxu0
  %v2093 = vadd.f32 0.0, %v2092
  %v2094 = vpop.f32.mrf.mxu0
  %v2095 = vadd.f32 0.0, %v2094
  %2096 = vmatmul.bf16.gmra.mxu0 %v2048
  %v2097 = vpop.f32.mrf.mxu0
  %v2098 = vadd.f32 0.0, %v2097
  %v2099 = vpop.f32.mrf.mxu0
  %v2100 = vadd.f32 0.0, %v2099
  %2101 = vdwg.mxu0
  %v2102 = vadd.f32 %v1906, %v2063
  %v2103 = vadd.f32 %v1908, %v2065
  %v2104 = vadd.f32 %v1911, %v2068
  %v2105 = vadd.f32 %v1913, %v2070
  %v2106 = vadd.f32 %v1916, %v2073
  %v2107 = vadd.f32 %v1918, %v2075
  %v2108 = vadd.f32 %v1921, %v2078
  %v2109 = vadd.f32 %v1923, %v2080
  %v2110 = vadd.f32 %v1926, %v2083
  %v2111 = vadd.f32 %v1928, %v2085
  %v2112 = vadd.f32 %v1931, %v2088
  %v2113 = vadd.f32 %v1933, %v2090
  %v2114 = vadd.f32 %v1936, %v2093
  %v2115 = vadd.f32 %v1938, %v2095
  %v2116 = vadd.f32 %v1941, %v2098
  %v2117 = vadd.f32 %v1943, %v2100
  %v2118 = vrot.slane %v1617, 3
  %v2119 = vrot.slane %v1618, 3
  %v2120 = vsel %vm762, %v2118, %v2119
  %v2121 = vrot.slane %v1619, 3
  %v2122 = vrot.slane %v1620, 3
  %v2123 = vsel %vm762, %v2121, %v2122
  %v2124 = vrot.slane %v1621, 3
  %v2125 = vrot.slane %v1622, 3
  %v2126 = vsel %vm762, %v2124, %v2125
  %v2127 = vrot.slane %v1623, 3
  %v2128 = vrot.slane %v1624, 3
  %v2129 = vsel %vm762, %v2127, %v2128
  %v2130 = vrot.slane %v1625, 3
  %v2131 = vrot.slane %v1626, 3
  %v2132 = vsel %vm762, %v2130, %v2131
  %v2133 = vrot.slane %v1627, 3
  %v2134 = vrot.slane %v1628, 3
  %v2135 = vsel %vm762, %v2133, %v2134
  %v2136 = vrot.slane %v1629, 3
  %v2137 = vrot.slane %v1630, 3
  %v2138 = vsel %vm762, %v2136, %v2137
  %v2139 = vrot.slane %v1631, 3
  %v2140 = vrot.slane %v1632, 3
  %v2141 = vsel %vm762, %v2139, %v2140
  %v2142 = vrot.slane %v1641, 3
  %v2143 = vrot.slane %v1642, 3
  %v2144 = vsel %vm762, %v2142, %v2143
  %v2145 = vrot.slane %v1643, 3
  %v2146 = vrot.slane %v1644, 3
  %v2147 = vsel %vm762, %v2145, %v2146
  %v2148 = vrot.slane %v1645, 3
  %v2149 = vrot.slane %v1646, 3
  %v2150 = vsel %vm762, %v2148, %v2149
  %v2151 = vrot.slane %v1647, 3
  %v2152 = vrot.slane %v1648, 3
  %v2153 = vsel %vm762, %v2151, %v2152
  %v2154 = vrot.slane %v1649, 3
  %v2155 = vrot.slane %v1650, 3
  %v2156 = vsel %vm762, %v2154, %v2155
  %v2157 = vrot.slane %v1651, 3
  %v2158 = vrot.slane %v1652, 3
  %v2159 = vsel %vm762, %v2157, %v2158
  %v2160 = vrot.slane %v1653, 3
  %v2161 = vrot.slane %v1654, 3
  %v2162 = vsel %vm762, %v2160, %v2161
  %v2163 = vrot.slane %v1655, 3
  %v2164 = vrot.slane %v1656, 3
  %v2165 = vsel %vm762, %v2163, %v2164
  %v2182 = vpack.c.bf16 %v2123, %v2120
  %v2183 = vpack.c.bf16 %v2129, %v2126
  %v2184 = vpack.c.bf16 %v2135, %v2132
  %v2185 = vpack.c.bf16 %v2141, %v2138
  %v2186 = vpack.c.bf16 %v2147, %v2144
  %v2187 = vpack.c.bf16 %v2153, %v2150
  %v2188 = vpack.c.bf16 %v2159, %v2156
  %v2189 = vpack.c.bf16 %v2165, %v2162
  %s2190 = scalar_lea.vmem %s3, 24
  %v2191 = vld [vmem:[%s2190] sm:$0xf]
  %v2192 = vld [vmem:[%s2190 + $0x4] sm:$0x1]
  %v2195 = vunpack.c.l.b16 %v2191
  %v2196 = vunpack.c.l.b16 %v2192
  %v2197 = vpack.c.b16 %v2196, %v2195
  %v2199 = vsel %vm1353, %v2182, 0
  %v2202 = vsel %vm1353, %v2183, 0
  %v2205 = vsel %vm1353, %v2184, 0
  %v2208 = vsel %vm1353, %v2185, 0
  %v2211 = vsel %vm1353, %v2186, 0
  %v2214 = vsel %vm1353, %v2187, 0
  %v2217 = vsel %vm1353, %v2188, 0
  %v2220 = vsel %vm1353, %v2189, 0
  %v2223 = vsel %vm762, %v2197, 0
  %2225 = vmatpush.bf16.msra.mxu0 0
  %2226 = vmatpush.bf16.msra.mxu0 0
  %2227 = vmatpush.bf16.msra.mxu0 0
  %2228 = vmatpush.bf16.msra.mxu0 0
  %2229 = vmatpush.bf16.msra.mxu0 0
  %2230 = vmatpush.bf16.msra.mxu0 0
  %2231 = vmatpush.bf16.msra.mxu0 0
  %2232 = vmatpush.bf16.msra.mxu0 %v2223
  %2233 = vmatmul.bf16.gmra.mxu0 %v2199
  %v2234 = vpop.f32.mrf.mxu0
  %v2235 = vadd.f32 0.0, %v2234
  %v2236 = vpop.f32.mrf.mxu0
  %v2237 = vadd.f32 0.0, %v2236
  %2238 = vmatmul.bf16.gmra.mxu0 %v2202
  %v2239 = vpop.f32.mrf.mxu0
  %v2240 = vadd.f32 0.0, %v2239
  %v2241 = vpop.f32.mrf.mxu0
  %v2242 = vadd.f32 0.0, %v2241
  %2243 = vmatmul.bf16.gmra.mxu0 %v2205
  %v2244 = vpop.f32.mrf.mxu0
  %v2245 = vadd.f32 0.0, %v2244
  %v2246 = vpop.f32.mrf.mxu0
  %v2247 = vadd.f32 0.0, %v2246
  %2248 = vmatmul.bf16.gmra.mxu0 %v2208
  %v2249 = vpop.f32.mrf.mxu0
  %v2250 = vadd.f32 0.0, %v2249
  %v2251 = vpop.f32.mrf.mxu0
  %v2252 = vadd.f32 0.0, %v2251
  %2253 = vmatmul.bf16.gmra.mxu0 %v2211
  %v2254 = vpop.f32.mrf.mxu0
  %v2255 = vadd.f32 0.0, %v2254
  %v2256 = vpop.f32.mrf.mxu0
  %v2257 = vadd.f32 0.0, %v2256
  %2258 = vmatmul.bf16.gmra.mxu0 %v2214
  %v2259 = vpop.f32.mrf.mxu0
  %v2260 = vadd.f32 0.0, %v2259
  %v2261 = vpop.f32.mrf.mxu0
  %v2262 = vadd.f32 0.0, %v2261
  %2263 = vmatmul.bf16.gmra.mxu0 %v2217
  %v2264 = vpop.f32.mrf.mxu0
  %v2265 = vadd.f32 0.0, %v2264
  %v2266 = vpop.f32.mrf.mxu0
  %v2267 = vadd.f32 0.0, %v2266
  %2268 = vmatmul.bf16.gmra.mxu0 %v2220
  %v2269 = vpop.f32.mrf.mxu0
  %v2270 = vadd.f32 0.0, %v2269
  %v2271 = vpop.f32.mrf.mxu0
  %v2272 = vadd.f32 0.0, %v2271
  %2273 = vdwg.mxu0
  %v2274 = vadd.f32 %v2102, %v2235
  %v2275 = vadd.f32 %v2103, %v2237
  %v2276 = vadd.f32 %v2104, %v2240
  %v2277 = vadd.f32 %v2105, %v2242
  %v2278 = vadd.f32 %v2106, %v2245
  %v2279 = vadd.f32 %v2107, %v2247
  %v2280 = vadd.f32 %v2108, %v2250
  %v2281 = vadd.f32 %v2109, %v2252
  %v2282 = vadd.f32 %v2110, %v2255
  %v2283 = vadd.f32 %v2111, %v2257
  %v2284 = vadd.f32 %v2112, %v2260
  %v2285 = vadd.f32 %v2113, %v2262
  %v2286 = vadd.f32 %v2114, %v2265
  %v2287 = vadd.f32 %v2115, %v2267
  %v2288 = vadd.f32 %v2116, %v2270
  %v2289 = vadd.f32 %v2117, %v2272
  %v2290 = vrot.slane %v1617, 4
  %v2291 = vrot.slane %v1618, 4
  %v2292 = vsel %vm761, %v2290, %v2291
  %v2293 = vrot.slane %v1619, 4
  %v2294 = vrot.slane %v1620, 4
  %v2295 = vsel %vm761, %v2293, %v2294
  %v2296 = vrot.slane %v1621, 4
  %v2297 = vrot.slane %v1622, 4
  %v2298 = vsel %vm761, %v2296, %v2297
  %v2299 = vrot.slane %v1623, 4
  %v2300 = vrot.slane %v1624, 4
  %v2301 = vsel %vm761, %v2299, %v2300
  %v2302 = vrot.slane %v1625, 4
  %v2303 = vrot.slane %v1626, 4
  %v2304 = vsel %vm761, %v2302, %v2303
  %v2305 = vrot.slane %v1627, 4
  %v2306 = vrot.slane %v1628, 4
  %v2307 = vsel %vm761, %v2305, %v2306
  %v2308 = vrot.slane %v1629, 4
  %v2309 = vrot.slane %v1630, 4
  %v2310 = vsel %vm761, %v2308, %v2309
  %v2311 = vrot.slane %v1631, 4
  %v2312 = vrot.slane %v1632, 4
  %v2313 = vsel %vm761, %v2311, %v2312
  %v2314 = vrot.slane %v1641, 4
  %v2315 = vrot.slane %v1642, 4
  %v2316 = vsel %vm761, %v2314, %v2315
  %v2317 = vrot.slane %v1643, 4
  %v2318 = vrot.slane %v1644, 4
  %v2319 = vsel %vm761, %v2317, %v2318
  %v2320 = vrot.slane %v1645, 4
  %v2321 = vrot.slane %v1646, 4
  %v2322 = vsel %vm761, %v2320, %v2321
  %v2323 = vrot.slane %v1647, 4
  %v2324 = vrot.slane %v1648, 4
  %v2325 = vsel %vm761, %v2323, %v2324
  %v2326 = vrot.slane %v1649, 4
  %v2327 = vrot.slane %v1650, 4
  %v2328 = vsel %vm761, %v2326, %v2327
  %v2329 = vrot.slane %v1651, 4
  %v2330 = vrot.slane %v1652, 4
  %v2331 = vsel %vm761, %v2329, %v2330
  %v2332 = vrot.slane %v1653, 4
  %v2333 = vrot.slane %v1654, 4
  %v2334 = vsel %vm761, %v2332, %v2333
  %v2335 = vrot.slane %v1655, 4
  %v2336 = vrot.slane %v1656, 4
  %v2337 = vsel %vm761, %v2335, %v2336
  %v2354 = vpack.c.bf16 %v2295, %v2292
  %v2355 = vpack.c.bf16 %v2301, %v2298
  %v2356 = vpack.c.bf16 %v2307, %v2304
  %v2357 = vpack.c.bf16 %v2313, %v2310
  %v2358 = vpack.c.bf16 %v2319, %v2316
  %v2359 = vpack.c.bf16 %v2325, %v2322
  %v2360 = vpack.c.bf16 %v2331, %v2328
  %v2361 = vpack.c.bf16 %v2337, %v2334
  %s2362 = scalar_lea.vmem %s3, 32
  %v2363 = vld [vmem:[%s2362] sm:$0xf]
  %v2364 = vld [vmem:[%s2362 + $0x4] sm:$0x1]
  %v2367 = vunpack.c.l.b16 %v2363
  %v2368 = vunpack.c.l.b16 %v2364
  %v2369 = vpack.c.b16 %v2368, %v2367
  %v2371 = vsel %vm1353, %v2354, 0
  %v2374 = vsel %vm1353, %v2355, 0
  %v2377 = vsel %vm1353, %v2356, 0
  %v2380 = vsel %vm1353, %v2357, 0
  %v2383 = vsel %vm1353, %v2358, 0
  %v2386 = vsel %vm1353, %v2359, 0
  %v2389 = vsel %vm1353, %v2360, 0
  %v2392 = vsel %vm1353, %v2361, 0
  %v2395 = vsel %vm762, %v2369, 0
  %2397 = vmatpush.bf16.msra.mxu0 0
  %2398 = vmatpush.bf16.msra.mxu0 0
  %2399 = vmatpush.bf16.msra.mxu0 0
  %2400 = vmatpush.bf16.msra.mxu0 0
  %2401 = vmatpush.bf16.msra.mxu0 0
  %2402 = vmatpush.bf16.msra.mxu0 0
  %2403 = vmatpush.bf16.msra.mxu0 0
  %2404 = vmatpush.bf16.msra.mxu0 %v2395
  %2405 = vmatmul.bf16.gmra.mxu0 %v2371
  %v2406 = vpop.f32.mrf.mxu0
  %v2407 = vadd.f32 0.0, %v2406
  %v2408 = vpop.f32.mrf.mxu0
  %v2409 = vadd.f32 0.0, %v2408
  %2410 = vmatmul.bf16.gmra.mxu0 %v2374
  %v2411 = vpop.f32.mrf.mxu0
  %v2412 = vadd.f32 0.0, %v2411
  %v2413 = vpop.f32.mrf.mxu0
  %v2414 = vadd.f32 0.0, %v2413
  %2415 = vmatmul.bf16.gmra.mxu0 %v2377
  %v2416 = vpop.f32.mrf.mxu0
  %v2417 = vadd.f32 0.0, %v2416
  %v2418 = vpop.f32.mrf.mxu0
  %v2419 = vadd.f32 0.0, %v2418
  %2420 = vmatmul.bf16.gmra.mxu0 %v2380
  %v2421 = vpop.f32.mrf.mxu0
  %v2422 = vadd.f32 0.0, %v2421
  %v2423 = vpop.f32.mrf.mxu0
  %v2424 = vadd.f32 0.0, %v2423
  %2425 = vmatmul.bf16.gmra.mxu0 %v2383
  %v2426 = vpop.f32.mrf.mxu0
  %v2427 = vadd.f32 0.0, %v2426
  %v2428 = vpop.f32.mrf.mxu0
  %v2429 = vadd.f32 0.0, %v2428
  %2430 = vmatmul.bf16.gmra.mxu0 %v2386
  %v2431 = vpop.f32.mrf.mxu0
  %v2432 = vadd.f32 0.0, %v2431
  %v2433 = vpop.f32.mrf.mxu0
  %v2434 = vadd.f32 0.0, %v2433
  %2435 = vmatmul.bf16.gmra.mxu0 %v2389
  %v2436 = vpop.f32.mrf.mxu0
  %v2437 = vadd.f32 0.0, %v2436
  %v2438 = vpop.f32.mrf.mxu0
  %v2439 = vadd.f32 0.0, %v2438
  %2440 = vmatmul.bf16.gmra.mxu0 %v2392
  %v2441 = vpop.f32.mrf.mxu0
  %v2442 = vadd.f32 0.0, %v2441
  %v2443 = vpop.f32.mrf.mxu0
  %v2444 = vadd.f32 0.0, %v2443
  %2445 = vdwg.mxu0
  %v2446 = vadd.f32 %v2274, %v2407
  %v2447 = vadd.f32 %v2275, %v2409
  %v2448 = vadd.f32 %v2276, %v2412
  %v2449 = vadd.f32 %v2277, %v2414
  %v2450 = vadd.f32 %v2278, %v2417
  %v2451 = vadd.f32 %v2279, %v2419
  %v2452 = vadd.f32 %v2280, %v2422
  %v2453 = vadd.f32 %v2281, %v2424
  %v2454 = vadd.f32 %v2282, %v2427
  %v2455 = vadd.f32 %v2283, %v2429
  %v2456 = vadd.f32 %v2284, %v2432
  %v2457 = vadd.f32 %v2285, %v2434
  %v2458 = vadd.f32 %v2286, %v2437
  %v2459 = vadd.f32 %v2287, %v2439
  %v2460 = vadd.f32 %v2288, %v2442
  %v2461 = vadd.f32 %v2289, %v2444
  %v2462 = vpack.c.bf16 %v1621, %v1619
  %v2463 = vpack.c.bf16 %v1625, %v1623
  %v2464 = vpack.c.bf16 %v1629, %v1627
  %v2465 = vpack.c.bf16 %v1633, %v1631
  %v2466 = vpack.c.bf16 %v1645, %v1643
  %v2467 = vpack.c.bf16 %v1649, %v1647
  %v2468 = vpack.c.bf16 %v1653, %v1651
  %v2469 = vpack.c.bf16 %v1657, %v1655
  %s2470 = scalar_lea.vmem %s3, 40
  %v2471 = vld [vmem:[%s2470] sm:$0xf]
  %v2472 = vld [vmem:[%s2470 + $0x4] sm:$0x1]
  %v2475 = vunpack.c.l.b16 %v2471
  %v2476 = vunpack.c.l.b16 %v2472
  %v2477 = vpack.c.b16 %v2476, %v2475
  %v2479 = vsel %vm1353, %v2462, 0
  %v2482 = vsel %vm1353, %v2463, 0
  %v2485 = vsel %vm1353, %v2464, 0
  %v2488 = vsel %vm1353, %v2465, 0
  %v2491 = vsel %vm1353, %v2466, 0
  %v2494 = vsel %vm1353, %v2467, 0
  %v2497 = vsel %vm1353, %v2468, 0
  %v2500 = vsel %vm1353, %v2469, 0
  %v2503 = vsel %vm762, %v2477, 0
  %2505 = vmatpush.bf16.msra.mxu0 0
  %2506 = vmatpush.bf16.msra.mxu0 0
  %2507 = vmatpush.bf16.msra.mxu0 0
  %2508 = vmatpush.bf16.msra.mxu0 0
  %2509 = vmatpush.bf16.msra.mxu0 0
  %2510 = vmatpush.bf16.msra.mxu0 0
  %2511 = vmatpush.bf16.msra.mxu0 0
  %2512 = vmatpush.bf16.msra.mxu0 %v2503
  %2513 = vmatmul.bf16.gmra.mxu0 %v2479
  %v2514 = vpop.f32.mrf.mxu0
  %v2515 = vadd.f32 0.0, %v2514
  %v2516 = vpop.f32.mrf.mxu0
  %v2517 = vadd.f32 0.0, %v2516
  %2518 = vmatmul.bf16.gmra.mxu0 %v2482
  %v2519 = vpop.f32.mrf.mxu0
  %v2520 = vadd.f32 0.0, %v2519
  %v2521 = vpop.f32.mrf.mxu0
  %v2522 = vadd.f32 0.0, %v2521
  %2523 = vmatmul.bf16.gmra.mxu0 %v2485
  %v2524 = vpop.f32.mrf.mxu0
  %v2525 = vadd.f32 0.0, %v2524
  %v2526 = vpop.f32.mrf.mxu0
  %v2527 = vadd.f32 0.0, %v2526
  %2528 = vmatmul.bf16.gmra.mxu0 %v2488
  %v2529 = vpop.f32.mrf.mxu0
  %v2530 = vadd.f32 0.0, %v2529
  %v2531 = vpop.f32.mrf.mxu0
  %v2532 = vadd.f32 0.0, %v2531
  %2533 = vmatmul.bf16.gmra.mxu0 %v2491
  %v2534 = vpop.f32.mrf.mxu0
  %v2535 = vadd.f32 0.0, %v2534
  %v2536 = vpop.f32.mrf.mxu0
  %v2537 = vadd.f32 0.0, %v2536
  %2538 = vmatmul.bf16.gmra.mxu0 %v2494
  %v2539 = vpop.f32.mrf.mxu0
  %v2540 = vadd.f32 0.0, %v2539
  %v2541 = vpop.f32.mrf.mxu0
  %v2542 = vadd.f32 0.0, %v2541
  %2543 = vmatmul.bf16.gmra.mxu0 %v2497
  %v2544 = vpop.f32.mrf.mxu0
  %v2545 = vadd.f32 0.0, %v2544
  %v2546 = vpop.f32.mrf.mxu0
  %v2547 = vadd.f32 0.0, %v2546
  %2548 = vmatmul.bf16.gmra.mxu0 %v2500
  %v2549 = vpop.f32.mrf.mxu0
  %v2550 = vadd.f32 0.0, %v2549
  %v2551 = vpop.f32.mrf.mxu0
  %v2552 = vadd.f32 0.0, %v2551
  %2553 = vdwg.mxu0
  %v2554 = vadd.f32 %v2446, %v2515
  %v2555 = vadd.f32 %v2447, %v2517
  %v2556 = vadd.f32 %v2448, %v2520
  %v2557 = vadd.f32 %v2449, %v2522
  %v2558 = vadd.f32 %v2450, %v2525
  %v2559 = vadd.f32 %v2451, %v2527
  %v2560 = vadd.f32 %v2452, %v2530
  %v2561 = vadd.f32 %v2453, %v2532
  %v2562 = vadd.f32 %v2454, %v2535
  %v2563 = vadd.f32 %v2455, %v2537
  %v2564 = vadd.f32 %v2456, %v2540
  %v2565 = vadd.f32 %v2457, %v2542
  %v2566 = vadd.f32 %v2458, %v2545
  %v2567 = vadd.f32 %v2459, %v2547
  %v2568 = vadd.f32 %v2460, %v2550
  %v2569 = vadd.f32 %v2461, %v2552
  %v2574 = vrot.slane %v1633, 1
  %v2575 = vrot.slane %v1634, 1
  %v2576 = vsel %vm1707, %v2574, %v2575
  %v2577 = vrot.slane %v1657, 1
  %v2578 = vrot.slane %v1658, 1
  %v2579 = vsel %vm1707, %v2577, %v2578
  %v2582 = vpack.c.bf16 %v1716, %v1713
  %v2583 = vpack.c.bf16 %v1722, %v1719
  %v2584 = vpack.c.bf16 %v1728, %v1725
  %v2585 = vpack.c.bf16 %v2576, %v1731
  %v2586 = vpack.c.bf16 %v1740, %v1737
  %v2587 = vpack.c.bf16 %v1746, %v1743
  %v2588 = vpack.c.bf16 %v1752, %v1749
  %v2589 = vpack.c.bf16 %v2579, %v1755
  %s2590 = scalar_lea.vmem %s3, 48
  %v2591 = vld [vmem:[%s2590] sm:$0xf]
  %v2592 = vld [vmem:[%s2590 + $0x4] sm:$0x1]
  %v2595 = vunpack.c.l.b16 %v2591
  %v2596 = vunpack.c.l.b16 %v2592
  %v2597 = vpack.c.b16 %v2596, %v2595
  %v2599 = vsel %vm1353, %v2582, 0
  %v2602 = vsel %vm1353, %v2583, 0
  %v2605 = vsel %vm1353, %v2584, 0
  %v2608 = vsel %vm1353, %v2585, 0
  %v2611 = vsel %vm1353, %v2586, 0
  %v2614 = vsel %vm1353, %v2587, 0
  %v2617 = vsel %vm1353, %v2588, 0
  %v2620 = vsel %vm1353, %v2589, 0
  %v2623 = vsel %vm762, %v2597, 0
  %2625 = vmatpush.bf16.msra.mxu0 0
  %2626 = vmatpush.bf16.msra.mxu0 0
  %2627 = vmatpush.bf16.msra.mxu0 0
  %2628 = vmatpush.bf16.msra.mxu0 0
  %2629 = vmatpush.bf16.msra.mxu0 0
  %2630 = vmatpush.bf16.msra.mxu0 0
  %2631 = vmatpush.bf16.msra.mxu0 0
  %2632 = vmatpush.bf16.msra.mxu0 %v2623
  %2633 = vmatmul.bf16.gmra.mxu0 %v2599
  %v2634 = vpop.f32.mrf.mxu0
  %v2635 = vadd.f32 0.0, %v2634
  %v2636 = vpop.f32.mrf.mxu0
  %v2637 = vadd.f32 0.0, %v2636
  %2638 = vmatmul.bf16.gmra.mxu0 %v2602
  %v2639 = vpop.f32.mrf.mxu0
  %v2640 = vadd.f32 0.0, %v2639
  %v2641 = vpop.f32.mrf.mxu0
  %v2642 = vadd.f32 0.0, %v2641
  %2643 = vmatmul.bf16.gmra.mxu0 %v2605
  %v2644 = vpop.f32.mrf.mxu0
  %v2645 = vadd.f32 0.0, %v2644
  %v2646 = vpop.f32.mrf.mxu0
  %v2647 = vadd.f32 0.0, %v2646
  %2648 = vmatmul.bf16.gmra.mxu0 %v2608
  %v2649 = vpop.f32.mrf.mxu0
  %v2650 = vadd.f32 0.0, %v2649
  %v2651 = vpop.f32.mrf.mxu0
  %v2652 = vadd.f32 0.0, %v2651
  %2653 = vmatmul.bf16.gmra.mxu0 %v2611
  %v2654 = vpop.f32.mrf.mxu0
  %v2655 = vadd.f32 0.0, %v2654
  %v2656 = vpop.f32.mrf.mxu0
  %v2657 = vadd.f32 0.0, %v2656
  %2658 = vmatmul.bf16.gmra.mxu0 %v2614
  %v2659 = vpop.f32.mrf.mxu0
  %v2660 = vadd.f32 0.0, %v2659
  %v2661 = vpop.f32.mrf.mxu0
  %v2662 = vadd.f32 0.0, %v2661
  %2663 = vmatmul.bf16.gmra.mxu0 %v2617
  %v2664 = vpop.f32.mrf.mxu0
  %v2665 = vadd.f32 0.0, %v2664
  %v2666 = vpop.f32.mrf.mxu0
  %v2667 = vadd.f32 0.0, %v2666
  %2668 = vmatmul.bf16.gmra.mxu0 %v2620
  %v2669 = vpop.f32.mrf.mxu0
  %v2670 = vadd.f32 0.0, %v2669
  %v2671 = vpop.f32.mrf.mxu0
  %v2672 = vadd.f32 0.0, %v2671
  %2673 = vdwg.mxu0
  %v2674 = vadd.f32 %v2554, %v2635
  %v2675 = vadd.f32 %v2555, %v2637
  %v2676 = vadd.f32 %v2556, %v2640
  %v2677 = vadd.f32 %v2557, %v2642
  %v2678 = vadd.f32 %v2558, %v2645
  %v2679 = vadd.f32 %v2559, %v2647
  %v2680 = vadd.f32 %v2560, %v2650
  %v2681 = vadd.f32 %v2561, %v2652
  %v2682 = vadd.f32 %v2562, %v2655
  %v2683 = vadd.f32 %v2563, %v2657
  %v2684 = vadd.f32 %v2564, %v2660
  %v2685 = vadd.f32 %v2565, %v2662
  %v2686 = vadd.f32 %v2566, %v2665
  %v2687 = vadd.f32 %v2567, %v2667
  %v2688 = vadd.f32 %v2568, %v2670
  %v2689 = vadd.f32 %v2569, %v2672
  %v2690 = vrot.slane %v1633, 2
  %v2691 = vrot.slane %v1634, 2
  %v2692 = vsel %vm1945, %v2690, %v2691
  %v2693 = vrot.slane %v1657, 2
  %v2694 = vrot.slane %v1658, 2
  %v2695 = vsel %vm1945, %v2693, %v2694
  %v2698 = vpack.c.bf16 %v1954, %v1951
  %v2699 = vpack.c.bf16 %v1960, %v1957
  %v2700 = vpack.c.bf16 %v1966, %v1963
  %v2701 = vpack.c.bf16 %v2692, %v1969
  %v2702 = vpack.c.bf16 %v1978, %v1975
  %v2703 = vpack.c.bf16 %v1984, %v1981
  %v2704 = vpack.c.bf16 %v1990, %v1987
  %v2705 = vpack.c.bf16 %v2695, %v1993
  %s2706 = scalar_lea.vmem %s3, 56
  %v2707 = vld [vmem:[%s2706] sm:$0xf]
  %v2708 = vld [vmem:[%s2706 + $0x4] sm:$0x1]
  %v2711 = vunpack.c.l.b16 %v2707
  %v2712 = vunpack.c.l.b16 %v2708
  %v2713 = vpack.c.b16 %v2712, %v2711
  %v2715 = vsel %vm1353, %v2698, 0
  %v2718 = vsel %vm1353, %v2699, 0
  %v2721 = vsel %vm1353, %v2700, 0
  %v2724 = vsel %vm1353, %v2701, 0
  %v2727 = vsel %vm1353, %v2702, 0
  %v2730 = vsel %vm1353, %v2703, 0
  %v2733 = vsel %vm1353, %v2704, 0
  %v2736 = vsel %vm1353, %v2705, 0
  %v2739 = vsel %vm762, %v2713, 0
  %2741 = vmatpush.bf16.msra.mxu0 0
  %2742 = vmatpush.bf16.msra.mxu0 0
  %2743 = vmatpush.bf16.msra.mxu0 0
  %2744 = vmatpush.bf16.msra.mxu0 0
  %2745 = vmatpush.bf16.msra.mxu0 0
  %2746 = vmatpush.bf16.msra.mxu0 0
  %2747 = vmatpush.bf16.msra.mxu0 0
  %2748 = vmatpush.bf16.msra.mxu0 %v2739
  %2749 = vmatmul.bf16.gmra.mxu0 %v2715
  %v2750 = vpop.f32.mrf.mxu0
  %v2751 = vadd.f32 0.0, %v2750
  %v2752 = vpop.f32.mrf.mxu0
  %v2753 = vadd.f32 0.0, %v2752
  %2754 = vmatmul.bf16.gmra.mxu0 %v2718
  %v2755 = vpop.f32.mrf.mxu0
  %v2756 = vadd.f32 0.0, %v2755
  %v2757 = vpop.f32.mrf.mxu0
  %v2758 = vadd.f32 0.0, %v2757
  %2759 = vmatmul.bf16.gmra.mxu0 %v2721
  %v2760 = vpop.f32.mrf.mxu0
  %v2761 = vadd.f32 0.0, %v2760
  %v2762 = vpop.f32.mrf.mxu0
  %v2763 = vadd.f32 0.0, %v2762
  %2764 = vmatmul.bf16.gmra.mxu0 %v2724
  %v2765 = vpop.f32.mrf.mxu0
  %v2766 = vadd.f32 0.0, %v2765
  %v2767 = vpop.f32.mrf.mxu0
  %v2768 = vadd.f32 0.0, %v2767
  %2769 = vmatmul.bf16.gmra.mxu0 %v2727
  %v2770 = vpop.f32.mrf.mxu0
  %v2771 = vadd.f32 0.0, %v2770
  %v2772 = vpop.f32.mrf.mxu0
  %v2773 = vadd.f32 0.0, %v2772
  %2774 = vmatmul.bf16.gmra.mxu0 %v2730
  %v2775 = vpop.f32.mrf.mxu0
  %v2776 = vadd.f32 0.0, %v2775
  %v2777 = vpop.f32.mrf.mxu0
  %v2778 = vadd.f32 0.0, %v2777
  %2779 = vmatmul.bf16.gmra.mxu0 %v2733
  %v2780 = vpop.f32.mrf.mxu0
  %v2781 = vadd.f32 0.0, %v2780
  %v2782 = vpop.f32.mrf.mxu0
  %v2783 = vadd.f32 0.0, %v2782
  %2784 = vmatmul.bf16.gmra.mxu0 %v2736
  %v2785 = vpop.f32.mrf.mxu0
  %v2786 = vadd.f32 0.0, %v2785
  %v2787 = vpop.f32.mrf.mxu0
  %v2788 = vadd.f32 0.0, %v2787
  %2789 = vdwg.mxu0
  %v2790 = vadd.f32 %v2674, %v2751
  %v2791 = vadd.f32 %v2675, %v2753
  %v2792 = vadd.f32 %v2676, %v2756
  %v2793 = vadd.f32 %v2677, %v2758
  %v2794 = vadd.f32 %v2678, %v2761
  %v2795 = vadd.f32 %v2679, %v2763
  %v2796 = vadd.f32 %v2680, %v2766
  %v2797 = vadd.f32 %v2681, %v2768
  %v2798 = vadd.f32 %v2682, %v2771
  %v2799 = vadd.f32 %v2683, %v2773
  %v2800 = vadd.f32 %v2684, %v2776
  %v2801 = vadd.f32 %v2685, %v2778
  %v2802 = vadd.f32 %v2686, %v2781
  %v2803 = vadd.f32 %v2687, %v2783
  %v2804 = vadd.f32 %v2688, %v2786
  %v2805 = vadd.f32 %v2689, %v2788
  %v2806 = vrot.slane %v1633, 3
  %v2807 = vrot.slane %v1634, 3
  %v2808 = vsel %vm762, %v2806, %v2807
  %v2809 = vrot.slane %v1657, 3
  %v2810 = vrot.slane %v1658, 3
  %v2811 = vsel %vm762, %v2809, %v2810
  %v2814 = vpack.c.bf16 %v2126, %v2123
  %v2815 = vpack.c.bf16 %v2132, %v2129
  %v2816 = vpack.c.bf16 %v2138, %v2135
  %v2817 = vpack.c.bf16 %v2808, %v2141
  %v2818 = vpack.c.bf16 %v2150, %v2147
  %v2819 = vpack.c.bf16 %v2156, %v2153
  %v2820 = vpack.c.bf16 %v2162, %v2159
  %v2821 = vpack.c.bf16 %v2811, %v2165
  %s2822 = scalar_lea.vmem %s3, 64
  %v2823 = vld [vmem:[%s2822] sm:$0xf]
  %v2824 = vld [vmem:[%s2822 + $0x4] sm:$0x1]
  %v2827 = vunpack.c.l.b16 %v2823
  %v2828 = vunpack.c.l.b16 %v2824
  %v2829 = vpack.c.b16 %v2828, %v2827
  %v2831 = vsel %vm1353, %v2814, 0
  %v2834 = vsel %vm1353, %v2815, 0
  %v2837 = vsel %vm1353, %v2816, 0
  %v2840 = vsel %vm1353, %v2817, 0
  %v2843 = vsel %vm1353, %v2818, 0
  %v2846 = vsel %vm1353, %v2819, 0
  %v2849 = vsel %vm1353, %v2820, 0
  %v2852 = vsel %vm1353, %v2821, 0
  %v2855 = vsel %vm762, %v2829, 0
  %2857 = vmatpush.bf16.msra.mxu0 0
  %2858 = vmatpush.bf16.msra.mxu0 0
  %2859 = vmatpush.bf16.msra.mxu0 0
  %2860 = vmatpush.bf16.msra.mxu0 0
  %2861 = vmatpush.bf16.msra.mxu0 0
  %2862 = vmatpush.bf16.msra.mxu0 0
  %2863 = vmatpush.bf16.msra.mxu0 0
  %2864 = vmatpush.bf16.msra.mxu0 %v2855
  %2865 = vmatmul.bf16.gmra.mxu0 %v2831
  %v2866 = vpop.f32.mrf.mxu0
  %v2867 = vadd.f32 0.0, %v2866
  %v2868 = vpop.f32.mrf.mxu0
  %v2869 = vadd.f32 0.0, %v2868
  %2870 = vmatmul.bf16.gmra.mxu0 %v2834
  %v2871 = vpop.f32.mrf.mxu0
  %v2872 = vadd.f32 0.0, %v2871
  %v2873 = vpop.f32.mrf.mxu0
  %v2874 = vadd.f32 0.0, %v2873
  %2875 = vmatmul.bf16.gmra.mxu0 %v2837
  %v2876 = vpop.f32.mrf.mxu0
  %v2877 = vadd.f32 0.0, %v2876
  %v2878 = vpop.f32.mrf.mxu0
  %v2879 = vadd.f32 0.0, %v2878
  %2880 = vmatmul.bf16.gmra.mxu0 %v2840
  %v2881 = vpop.f32.mrf.mxu0
  %v2882 = vadd.f32 0.0, %v2881
  %v2883 = vpop.f32.mrf.mxu0
  %v2884 = vadd.f32 0.0, %v2883
  %2885 = vmatmul.bf16.gmra.mxu0 %v2843
  %v2886 = vpop.f32.mrf.mxu0
  %v2887 = vadd.f32 0.0, %v2886
  %v2888 = vpop.f32.mrf.mxu0
  %v2889 = vadd.f32 0.0, %v2888
  %2890 = vmatmul.bf16.gmra.mxu0 %v2846
  %v2891 = vpop.f32.mrf.mxu0
  %v2892 = vadd.f32 0.0, %v2891
  %v2893 = vpop.f32.mrf.mxu0
  %v2894 = vadd.f32 0.0, %v2893
  %2895 = vmatmul.bf16.gmra.mxu0 %v2849
  %v2896 = vpop.f32.mrf.mxu0
  %v2897 = vadd.f32 0.0, %v2896
  %v2898 = vpop.f32.mrf.mxu0
  %v2899 = vadd.f32 0.0, %v2898
  %2900 = vmatmul.bf16.gmra.mxu0 %v2852
  %v2901 = vpop.f32.mrf.mxu0
  %v2902 = vadd.f32 0.0, %v2901
  %v2903 = vpop.f32.mrf.mxu0
  %v2904 = vadd.f32 0.0, %v2903
  %2905 = vdwg.mxu0
  %v2906 = vadd.f32 %v2790, %v2867
  %v2907 = vadd.f32 %v2791, %v2869
  %v2908 = vadd.f32 %v2792, %v2872
  %v2909 = vadd.f32 %v2793, %v2874
  %v2910 = vadd.f32 %v2794, %v2877
  %v2911 = vadd.f32 %v2795, %v2879
  %v2912 = vadd.f32 %v2796, %v2882
  %v2913 = vadd.f32 %v2797, %v2884
  %v2914 = vadd.f32 %v2798, %v2887
  %v2915 = vadd.f32 %v2799, %v2889
  %v2916 = vadd.f32 %v2800, %v2892
  %v2917 = vadd.f32 %v2801, %v2894
  %v2918 = vadd.f32 %v2802, %v2897
  %v2919 = vadd.f32 %v2803, %v2899
  %v2920 = vadd.f32 %v2804, %v2902
  %v2921 = vadd.f32 %v2805, %v2904
  %v2922 = vrot.slane %v1633, 4
  %v2923 = vrot.slane %v1634, 4
  %v2924 = vsel %vm761, %v2922, %v2923
  %v2925 = vrot.slane %v1657, 4
  %v2926 = vrot.slane %v1658, 4
  %v2927 = vsel %vm761, %v2925, %v2926
  %v2930 = vpack.c.bf16 %v2298, %v2295
  %v2931 = vpack.c.bf16 %v2304, %v2301
  %v2932 = vpack.c.bf16 %v2310, %v2307
  %v2933 = vpack.c.bf16 %v2924, %v2313
  %v2934 = vpack.c.bf16 %v2322, %v2319
  %v2935 = vpack.c.bf16 %v2328, %v2325
  %v2936 = vpack.c.bf16 %v2334, %v2331
  %v2937 = vpack.c.bf16 %v2927, %v2337
  %s2938 = scalar_lea.vmem %s3, 72
  %v2939 = vld [vmem:[%s2938] sm:$0xf]
  %v2940 = vld [vmem:[%s2938 + $0x4] sm:$0x1]
  %v2943 = vunpack.c.l.b16 %v2939
  %v2944 = vunpack.c.l.b16 %v2940
  %v2945 = vpack.c.b16 %v2944, %v2943
  %v2947 = vsel %vm1353, %v2930, 0
  %v2950 = vsel %vm1353, %v2931, 0
  %v2953 = vsel %vm1353, %v2932, 0
  %v2956 = vsel %vm1353, %v2933, 0
  %v2959 = vsel %vm1353, %v2934, 0
  %v2962 = vsel %vm1353, %v2935, 0
  %v2965 = vsel %vm1353, %v2936, 0
  %v2968 = vsel %vm1353, %v2937, 0
  %v2971 = vsel %vm762, %v2945, 0
  %2973 = vmatpush.bf16.msra.mxu0 0
  %2974 = vmatpush.bf16.msra.mxu0 0
  %2975 = vmatpush.bf16.msra.mxu0 0
  %2976 = vmatpush.bf16.msra.mxu0 0
  %2977 = vmatpush.bf16.msra.mxu0 0
  %2978 = vmatpush.bf16.msra.mxu0 0
  %2979 = vmatpush.bf16.msra.mxu0 0
  %2980 = vmatpush.bf16.msra.mxu0 %v2971
  %2981 = vmatmul.bf16.gmra.mxu0 %v2947
  %v2982 = vpop.f32.mrf.mxu0
  %v2983 = vadd.f32 0.0, %v2982
  %v2984 = vpop.f32.mrf.mxu0
  %v2985 = vadd.f32 0.0, %v2984
  %2986 = vmatmul.bf16.gmra.mxu0 %v2950
  %v2987 = vpop.f32.mrf.mxu0
  %v2988 = vadd.f32 0.0, %v2987
  %v2989 = vpop.f32.mrf.mxu0
  %v2990 = vadd.f32 0.0, %v2989
  %2991 = vmatmul.bf16.gmra.mxu0 %v2953
  %v2992 = vpop.f32.mrf.mxu0
  %v2993 = vadd.f32 0.0, %v2992
  %v2994 = vpop.f32.mrf.mxu0
  %v2995 = vadd.f32 0.0, %v2994
  %2996 = vmatmul.bf16.gmra.mxu0 %v2956
  %v2997 = vpop.f32.mrf.mxu0
  %v2998 = vadd.f32 0.0, %v2997
  %v2999 = vpop.f32.mrf.mxu0
  %v3000 = vadd.f32 0.0, %v2999
  %3001 = vmatmul.bf16.gmra.mxu0 %v2959
  %v3002 = vpop.f32.mrf.mxu0
  %v3003 = vadd.f32 0.0, %v3002
  %v3004 = vpop.f32.mrf.mxu0
  %v3005 = vadd.f32 0.0, %v3004
  %3006 = vmatmul.bf16.gmra.mxu0 %v2962
  %v3007 = vpop.f32.mrf.mxu0
  %v3008 = vadd.f32 0.0, %v3007
  %v3009 = vpop.f32.mrf.mxu0
  %v3010 = vadd.f32 0.0, %v3009
  %3011 = vmatmul.bf16.gmra.mxu0 %v2965
  %v3012 = vpop.f32.mrf.mxu0
  %v3013 = vadd.f32 0.0, %v3012
  %v3014 = vpop.f32.mrf.mxu0
  %v3015 = vadd.f32 0.0, %v3014
  %3016 = vmatmul.bf16.gmra.mxu0 %v2968
  %v3017 = vpop.f32.mrf.mxu0
  %v3018 = vadd.f32 0.0, %v3017
  %v3019 = vpop.f32.mrf.mxu0
  %v3020 = vadd.f32 0.0, %v3019
  %3021 = vdwg.mxu0
  %v3022 = vadd.f32 %v2906, %v2983
  %v3023 = vadd.f32 %v2907, %v2985
  %v3024 = vadd.f32 %v2908, %v2988
  %v3025 = vadd.f32 %v2909, %v2990
  %v3026 = vadd.f32 %v2910, %v2993
  %v3027 = vadd.f32 %v2911, %v2995
  %v3028 = vadd.f32 %v2912, %v2998
  %v3029 = vadd.f32 %v2913, %v3000
  %v3030 = vadd.f32 %v2914, %v3003
  %v3031 = vadd.f32 %v2915, %v3005
  %v3032 = vadd.f32 %v2916, %v3008
  %v3033 = vadd.f32 %v2917, %v3010
  %v3034 = vadd.f32 %v2918, %v3013
  %v3035 = vadd.f32 %v2919, %v3015
  %v3036 = vadd.f32 %v2920, %v3018
  %v3037 = vadd.f32 %v2921, %v3020
  %v3038 = vpack.c.bf16 %v1635, %v1633
  %v3039 = vpack.c.bf16 %v1659, %v1657
  %s3040 = scalar_lea.vmem %s3, 80
  %v3041 = vld [vmem:[%s3040] sm:$0xf]
  %v3042 = vld [vmem:[%s3040 + $0x4] sm:$0x1]
  %v3045 = vunpack.c.l.b16 %v3041
  %v3046 = vunpack.c.l.b16 %v3042
  %v3047 = vpack.c.b16 %v3046, %v3045
  %v3049 = vsel %vm1353, %v3038, 0
  %v3052 = vsel %vm1353, %v3039, 0
  %v3055 = vsel %vm762, %v3047, 0
  %3057 = vmatpush.bf16.msra.mxu0 0
  %3058 = vmatpush.bf16.msra.mxu0 0
  %3059 = vmatpush.bf16.msra.mxu0 0
  %3060 = vmatpush.bf16.msra.mxu0 0
  %3061 = vmatpush.bf16.msra.mxu0 0
  %3062 = vmatpush.bf16.msra.mxu0 0
  %3063 = vmatpush.bf16.msra.mxu0 0
  %3064 = vmatpush.bf16.msra.mxu0 %v3055
  %3065 = vmatmul.bf16.gmra.mxu0 %v1873
  %v3066 = vpop.f32.mrf.mxu0
  %v3067 = vadd.f32 0.0, %v3066
  %v3068 = vpop.f32.mrf.mxu0
  %v3069 = vadd.f32 0.0, %v3068
  %3070 = vmatmul.bf16.gmra.mxu0 %v1876
  %v3071 = vpop.f32.mrf.mxu0
  %v3072 = vadd.f32 0.0, %v3071
  %v3073 = vpop.f32.mrf.mxu0
  %v3074 = vadd.f32 0.0, %v3073
  %3075 = vmatmul.bf16.gmra.mxu0 %v1879
  %v3076 = vpop.f32.mrf.mxu0
  %v3077 = vadd.f32 0.0, %v3076
  %v3078 = vpop.f32.mrf.mxu0
  %v3079 = vadd.f32 0.0, %v3078
  %3080 = vmatmul.bf16.gmra.mxu0 %v3049
  %v3081 = vpop.f32.mrf.mxu0
  %v3082 = vadd.f32 0.0, %v3081
  %v3083 = vpop.f32.mrf.mxu0
  %v3084 = vadd.f32 0.0, %v3083
  %3085 = vmatmul.bf16.gmra.mxu0 %v1885
  %v3086 = vpop.f32.mrf.mxu0
  %v3087 = vadd.f32 0.0, %v3086
  %v3088 = vpop.f32.mrf.mxu0
  %v3089 = vadd.f32 0.0, %v3088
  %3090 = vmatmul.bf16.gmra.mxu0 %v1888
  %v3091 = vpop.f32.mrf.mxu0
  %v3092 = vadd.f32 0.0, %v3091
  %v3093 = vpop.f32.mrf.mxu0
  %v3094 = vadd.f32 0.0, %v3093
  %3095 = vmatmul.bf16.gmra.mxu0 %v1891
  %v3096 = vpop.f32.mrf.mxu0
  %v3097 = vadd.f32 0.0, %v3096
  %v3098 = vpop.f32.mrf.mxu0
  %v3099 = vadd.f32 0.0, %v3098
  %3100 = vmatmul.bf16.gmra.mxu0 %v3052
  %v3101 = vpop.f32.mrf.mxu0
  %v3102 = vadd.f32 0.0, %v3101
  %v3103 = vpop.f32.mrf.mxu0
  %v3104 = vadd.f32 0.0, %v3103
  %3105 = vdwg.mxu0
  %v3106 = vadd.f32 %v3022, %v3067
  %v3107 = vadd.f32 %v3023, %v3069
  %v3108 = vadd.f32 %v3024, %v3072
  %v3109 = vadd.f32 %v3025, %v3074
  %v3110 = vadd.f32 %v3026, %v3077
  %v3111 = vadd.f32 %v3027, %v3079
  %v3112 = vadd.f32 %v3028, %v3082
  %v3113 = vadd.f32 %v3029, %v3084
  %v3114 = vadd.f32 %v3030, %v3087
  %v3115 = vadd.f32 %v3031, %v3089
  %v3116 = vadd.f32 %v3032, %v3092
  %v3117 = vadd.f32 %v3033, %v3094
  %v3118 = vadd.f32 %v3034, %v3097
  %v3119 = vadd.f32 %v3035, %v3099
  %v3120 = vadd.f32 %v3036, %v3102
  %v3121 = vadd.f32 %v3037, %v3104
  %v3126 = vrot.slane %v1635, 1
  %v3127 = vrot.slane %v1636, 1
  %v3128 = vsel %vm1707, %v3126, %v3127
  %v3129 = vrot.slane %v1659, 1
  %v3130 = vrot.slane %v1660, 1
  %v3131 = vsel %vm1707, %v3129, %v3130
  %v3134 = vpack.c.bf16 %v3128, %v2576
  %v3135 = vpack.c.bf16 %v3131, %v2579
  %s3136 = scalar_lea.vmem %s3, 88
  %v3137 = vld [vmem:[%s3136] sm:$0xf]
  %v3138 = vld [vmem:[%s3136 + $0x4] sm:$0x1]
  %v3141 = vunpack.c.l.b16 %v3137
  %v3142 = vunpack.c.l.b16 %v3138
  %v3143 = vpack.c.b16 %v3142, %v3141
  %v3145 = vsel %vm1353, %v3134, 0
  %v3148 = vsel %vm1353, %v3135, 0
  %v3151 = vsel %vm762, %v3143, 0
  %3153 = vmatpush.bf16.msra.mxu0 0
  %3154 = vmatpush.bf16.msra.mxu0 0
  %3155 = vmatpush.bf16.msra.mxu0 0
  %3156 = vmatpush.bf16.msra.mxu0 0
  %3157 = vmatpush.bf16.msra.mxu0 0
  %3158 = vmatpush.bf16.msra.mxu0 0
  %3159 = vmatpush.bf16.msra.mxu0 0
  %3160 = vmatpush.bf16.msra.mxu0 %v3151
  %3161 = vmatmul.bf16.gmra.mxu0 %v1792
  %v3162 = vpop.f32.mrf.mxu0
  %v3163 = vadd.f32 0.0, %v3162
  %v3164 = vpop.f32.mrf.mxu0
  %v3165 = vadd.f32 0.0, %v3164
  %3166 = vmatmul.bf16.gmra.mxu0 %v1795
  %v3167 = vpop.f32.mrf.mxu0
  %v3168 = vadd.f32 0.0, %v3167
  %v3169 = vpop.f32.mrf.mxu0
  %v3170 = vadd.f32 0.0, %v3169
  %3171 = vmatmul.bf16.gmra.mxu0 %v1798
  %v3172 = vpop.f32.mrf.mxu0
  %v3173 = vadd.f32 0.0, %v3172
  %v3174 = vpop.f32.mrf.mxu0
  %v3175 = vadd.f32 0.0, %v3174
  %3176 = vmatmul.bf16.gmra.mxu0 %v3145
  %v3177 = vpop.f32.mrf.mxu0
  %v3178 = vadd.f32 0.0, %v3177
  %v3179 = vpop.f32.mrf.mxu0
  %v3180 = vadd.f32 0.0, %v3179
  %3181 = vmatmul.bf16.gmra.mxu0 %v1804
  %v3182 = vpop.f32.mrf.mxu0
  %v3183 = vadd.f32 0.0, %v3182
  %v3184 = vpop.f32.mrf.mxu0
  %v3185 = vadd.f32 0.0, %v3184
  %3186 = vmatmul.bf16.gmra.mxu0 %v1807
  %v3187 = vpop.f32.mrf.mxu0
  %v3188 = vadd.f32 0.0, %v3187
  %v3189 = vpop.f32.mrf.mxu0
  %v3190 = vadd.f32 0.0, %v3189
  %3191 = vmatmul.bf16.gmra.mxu0 %v1810
  %v3192 = vpop.f32.mrf.mxu0
  %v3193 = vadd.f32 0.0, %v3192
  %v3194 = vpop.f32.mrf.mxu0
  %v3195 = vadd.f32 0.0, %v3194
  %3196 = vmatmul.bf16.gmra.mxu0 %v3148
  %v3197 = vpop.f32.mrf.mxu0
  %v3198 = vadd.f32 0.0, %v3197
  %v3199 = vpop.f32.mrf.mxu0
  %v3200 = vadd.f32 0.0, %v3199
  %3201 = vdwg.mxu0
  %v3202 = vadd.f32 %v3106, %v3163
  %v3203 = vadd.f32 %v3107, %v3165
  %v3204 = vadd.f32 %v3108, %v3168
  %v3205 = vadd.f32 %v3109, %v3170
  %v3206 = vadd.f32 %v3110, %v3173
  %v3207 = vadd.f32 %v3111, %v3175
  %v3208 = vadd.f32 %v3112, %v3178
  %v3209 = vadd.f32 %v3113, %v3180
  %v3210 = vadd.f32 %v3114, %v3183
  %v3211 = vadd.f32 %v3115, %v3185
  %v3212 = vadd.f32 %v3116, %v3188
  %v3213 = vadd.f32 %v3117, %v3190
  %v3214 = vadd.f32 %v3118, %v3193
  %v3215 = vadd.f32 %v3119, %v3195
  %v3216 = vadd.f32 %v3120, %v3198
  %v3217 = vadd.f32 %v3121, %v3200
  %v3218 = vrot.slane %v1635, 2
  %v3219 = vrot.slane %v1636, 2
  %v3220 = vsel %vm1945, %v3218, %v3219
  %v3221 = vrot.slane %v1659, 2
  %v3222 = vrot.slane %v1660, 2
  %v3223 = vsel %vm1945, %v3221, %v3222
  %v3226 = vpack.c.bf16 %v3220, %v2692
  %v3227 = vpack.c.bf16 %v3223, %v2695
  %s3228 = scalar_lea.vmem %s3, 96
  %v3229 = vld [vmem:[%s3228] sm:$0xf]
  %v3230 = vld [vmem:[%s3228 + $0x4] sm:$0x1]
  %v3233 = vunpack.c.l.b16 %v3229
  %v3234 = vunpack.c.l.b16 %v3230
  %v3235 = vpack.c.b16 %v3234, %v3233
  %v3237 = vsel %vm1353, %v3226, 0
  %v3240 = vsel %vm1353, %v3227, 0
  %v3243 = vsel %vm762, %v3235, 0
  %3245 = vmatpush.bf16.msra.mxu0 0
  %3246 = vmatpush.bf16.msra.mxu0 0
  %3247 = vmatpush.bf16.msra.mxu0 0
  %3248 = vmatpush.bf16.msra.mxu0 0
  %3249 = vmatpush.bf16.msra.mxu0 0
  %3250 = vmatpush.bf16.msra.mxu0 0
  %3251 = vmatpush.bf16.msra.mxu0 0
  %3252 = vmatpush.bf16.msra.mxu0 %v3243
  %3253 = vmatmul.bf16.gmra.mxu0 %v2030
  %v3254 = vpop.f32.mrf.mxu0
  %v3255 = vadd.f32 0.0, %v3254
  %v3256 = vpop.f32.mrf.mxu0
  %v3257 = vadd.f32 0.0, %v3256
  %3258 = vmatmul.bf16.gmra.mxu0 %v2033
  %v3259 = vpop.f32.mrf.mxu0
  %v3260 = vadd.f32 0.0, %v3259
  %v3261 = vpop.f32.mrf.mxu0
  %v3262 = vadd.f32 0.0, %v3261
  %3263 = vmatmul.bf16.gmra.mxu0 %v2036
  %v3264 = vpop.f32.mrf.mxu0
  %v3265 = vadd.f32 0.0, %v3264
  %v3266 = vpop.f32.mrf.mxu0
  %v3267 = vadd.f32 0.0, %v3266
  %3268 = vmatmul.bf16.gmra.mxu0 %v3237
  %v3269 = vpop.f32.mrf.mxu0
  %v3270 = vadd.f32 0.0, %v3269
  %v3271 = vpop.f32.mrf.mxu0
  %v3272 = vadd.f32 0.0, %v3271
  %3273 = vmatmul.bf16.gmra.mxu0 %v2042
  %v3274 = vpop.f32.mrf.mxu0
  %v3275 = vadd.f32 0.0, %v3274
  %v3276 = vpop.f32.mrf.mxu0
  %v3277 = vadd.f32 0.0, %v3276
  %3278 = vmatmul.bf16.gmra.mxu0 %v2045
  %v3279 = vpop.f32.mrf.mxu0
  %v3280 = vadd.f32 0.0, %v3279
  %v3281 = vpop.f32.mrf.mxu0
  %v3282 = vadd.f32 0.0, %v3281
  %3283 = vmatmul.bf16.gmra.mxu0 %v2048
  %v3284 = vpop.f32.mrf.mxu0
  %v3285 = vadd.f32 0.0, %v3284
  %v3286 = vpop.f32.mrf.mxu0
  %v3287 = vadd.f32 0.0, %v3286
  %3288 = vmatmul.bf16.gmra.mxu0 %v3240
  %v3289 = vpop.f32.mrf.mxu0
  %v3290 = vadd.f32 0.0, %v3289
  %v3291 = vpop.f32.mrf.mxu0
  %v3292 = vadd.f32 0.0, %v3291
  %3293 = vdwg.mxu0
  %v3294 = vadd.f32 %v3202, %v3255
  %v3295 = vadd.f32 %v3203, %v3257
  %v3296 = vadd.f32 %v3204, %v3260
  %v3297 = vadd.f32 %v3205, %v3262
  %v3298 = vadd.f32 %v3206, %v3265
  %v3299 = vadd.f32 %v3207, %v3267
  %v3300 = vadd.f32 %v3208, %v3270
  %v3301 = vadd.f32 %v3209, %v3272
  %v3302 = vadd.f32 %v3210, %v3275
  %v3303 = vadd.f32 %v3211, %v3277
  %v3304 = vadd.f32 %v3212, %v3280
  %v3305 = vadd.f32 %v3213, %v3282
  %v3306 = vadd.f32 %v3214, %v3285
  %v3307 = vadd.f32 %v3215, %v3287
  %v3308 = vadd.f32 %v3216, %v3290
  %v3309 = vadd.f32 %v3217, %v3292
  %v3310 = vrot.slane %v1635, 3
  %v3311 = vrot.slane %v1636, 3
  %v3312 = vsel %vm762, %v3310, %v3311
  %v3313 = vrot.slane %v1659, 3
  %v3314 = vrot.slane %v1660, 3
  %v3315 = vsel %vm762, %v3313, %v3314
  %v3318 = vpack.c.bf16 %v3312, %v2808
  %v3319 = vpack.c.bf16 %v3315, %v2811
  %s3320 = scalar_lea.vmem %s3, 104
  %v3321 = vld [vmem:[%s3320] sm:$0xf]
  %v3322 = vld [vmem:[%s3320 + $0x4] sm:$0x1]
  %v3325 = vunpack.c.l.b16 %v3321
  %v3326 = vunpack.c.l.b16 %v3322
  %v3327 = vpack.c.b16 %v3326, %v3325
  %v3329 = vsel %vm1353, %v3318, 0
  %v3332 = vsel %vm1353, %v3319, 0
  %v3335 = vsel %vm762, %v3327, 0
  %3337 = vmatpush.bf16.msra.mxu0 0
  %3338 = vmatpush.bf16.msra.mxu0 0
  %3339 = vmatpush.bf16.msra.mxu0 0
  %3340 = vmatpush.bf16.msra.mxu0 0
  %3341 = vmatpush.bf16.msra.mxu0 0
  %3342 = vmatpush.bf16.msra.mxu0 0
  %3343 = vmatpush.bf16.msra.mxu0 0
  %3344 = vmatpush.bf16.msra.mxu0 %v3335
  %3345 = vmatmul.bf16.gmra.mxu0 %v2202
  %v3346 = vpop.f32.mrf.mxu0
  %v3347 = vadd.f32 0.0, %v3346
  %v3348 = vpop.f32.mrf.mxu0
  %v3349 = vadd.f32 0.0, %v3348
  %3350 = vmatmul.bf16.gmra.mxu0 %v2205
  %v3351 = vpop.f32.mrf.mxu0
  %v3352 = vadd.f32 0.0, %v3351
  %v3353 = vpop.f32.mrf.mxu0
  %v3354 = vadd.f32 0.0, %v3353
  %3355 = vmatmul.bf16.gmra.mxu0 %v2208
  %v3356 = vpop.f32.mrf.mxu0
  %v3357 = vadd.f32 0.0, %v3356
  %v3358 = vpop.f32.mrf.mxu0
  %v3359 = vadd.f32 0.0, %v3358
  %3360 = vmatmul.bf16.gmra.mxu0 %v3329
  %v3361 = vpop.f32.mrf.mxu0
  %v3362 = vadd.f32 0.0, %v3361
  %v3363 = vpop.f32.mrf.mxu0
  %v3364 = vadd.f32 0.0, %v3363
  %3365 = vmatmul.bf16.gmra.mxu0 %v2214
  %v3366 = vpop.f32.mrf.mxu0
  %v3367 = vadd.f32 0.0, %v3366
  %v3368 = vpop.f32.mrf.mxu0
  %v3369 = vadd.f32 0.0, %v3368
  %3370 = vmatmul.bf16.gmra.mxu0 %v2217
  %v3371 = vpop.f32.mrf.mxu0
  %v3372 = vadd.f32 0.0, %v3371
  %v3373 = vpop.f32.mrf.mxu0
  %v3374 = vadd.f32 0.0, %v3373
  %3375 = vmatmul.bf16.gmra.mxu0 %v2220
  %v3376 = vpop.f32.mrf.mxu0
  %v3377 = vadd.f32 0.0, %v3376
  %v3378 = vpop.f32.mrf.mxu0
  %v3379 = vadd.f32 0.0, %v3378
  %3380 = vmatmul.bf16.gmra.mxu0 %v3332
  %v3381 = vpop.f32.mrf.mxu0
  %v3382 = vadd.f32 0.0, %v3381
  %v3383 = vpop.f32.mrf.mxu0
  %v3384 = vadd.f32 0.0, %v3383
  %3385 = vdwg.mxu0
  %v3386 = vadd.f32 %v3294, %v3347
  %v3387 = vadd.f32 %v3295, %v3349
  %v3388 = vadd.f32 %v3296, %v3352
  %v3389 = vadd.f32 %v3297, %v3354
  %v3390 = vadd.f32 %v3298, %v3357
  %v3391 = vadd.f32 %v3299, %v3359
  %v3392 = vadd.f32 %v3300, %v3362
  %v3393 = vadd.f32 %v3301, %v3364
  %v3394 = vadd.f32 %v3302, %v3367
  %v3395 = vadd.f32 %v3303, %v3369
  %v3396 = vadd.f32 %v3304, %v3372
  %v3397 = vadd.f32 %v3305, %v3374
  %v3398 = vadd.f32 %v3306, %v3377
  %v3399 = vadd.f32 %v3307, %v3379
  %v3400 = vadd.f32 %v3308, %v3382
  %v3401 = vadd.f32 %v3309, %v3384
  %v3402 = vrot.slane %v1635, 4
  %v3403 = vrot.slane %v1636, 4
  %v3404 = vsel %vm761, %v3402, %v3403
  %v3405 = vrot.slane %v1659, 4
  %v3406 = vrot.slane %v1660, 4
  %v3407 = vsel %vm761, %v3405, %v3406
  %v3410 = vpack.c.bf16 %v3404, %v2924
  %v3411 = vpack.c.bf16 %v3407, %v2927
  %s3412 = scalar_lea.vmem %s3, 112
  %v3413 = vld [vmem:[%s3412] sm:$0xf]
  %v3414 = vld [vmem:[%s3412 + $0x4] sm:$0x1]
  %v3417 = vunpack.c.l.b16 %v3413
  %v3418 = vunpack.c.l.b16 %v3414
  %v3419 = vpack.c.b16 %v3418, %v3417
  %v3421 = vsel %vm1353, %v3410, 0
  %v3424 = vsel %vm1353, %v3411, 0
  %v3427 = vsel %vm762, %v3419, 0
  %3429 = vmatpush.bf16.msra.mxu0 0
  %3430 = vmatpush.bf16.msra.mxu0 0
  %3431 = vmatpush.bf16.msra.mxu0 0
  %3432 = vmatpush.bf16.msra.mxu0 0
  %3433 = vmatpush.bf16.msra.mxu0 0
  %3434 = vmatpush.bf16.msra.mxu0 0
  %3435 = vmatpush.bf16.msra.mxu0 0
  %3436 = vmatpush.bf16.msra.mxu0 %v3427
  %3437 = vmatmul.bf16.gmra.mxu0 %v2374
  %v3438 = vpop.f32.mrf.mxu0
  %v3439 = vadd.f32 0.0, %v3438
  %v3440 = vpop.f32.mrf.mxu0
  %v3441 = vadd.f32 0.0, %v3440
  %3442 = vmatmul.bf16.gmra.mxu0 %v2377
  %v3443 = vpop.f32.mrf.mxu0
  %v3444 = vadd.f32 0.0, %v3443
  %v3445 = vpop.f32.mrf.mxu0
  %v3446 = vadd.f32 0.0, %v3445
  %3447 = vmatmul.bf16.gmra.mxu0 %v2380
  %v3448 = vpop.f32.mrf.mxu0
  %v3449 = vadd.f32 0.0, %v3448
  %v3450 = vpop.f32.mrf.mxu0
  %v3451 = vadd.f32 0.0, %v3450
  %3452 = vmatmul.bf16.gmra.mxu0 %v3421
  %v3453 = vpop.f32.mrf.mxu0
  %v3454 = vadd.f32 0.0, %v3453
  %v3455 = vpop.f32.mrf.mxu0
  %v3456 = vadd.f32 0.0, %v3455
  %3457 = vmatmul.bf16.gmra.mxu0 %v2386
  %v3458 = vpop.f32.mrf.mxu0
  %v3459 = vadd.f32 0.0, %v3458
  %v3460 = vpop.f32.mrf.mxu0
  %v3461 = vadd.f32 0.0, %v3460
  %3462 = vmatmul.bf16.gmra.mxu0 %v2389
  %v3463 = vpop.f32.mrf.mxu0
  %v3464 = vadd.f32 0.0, %v3463
  %v3465 = vpop.f32.mrf.mxu0
  %v3466 = vadd.f32 0.0, %v3465
  %3467 = vmatmul.bf16.gmra.mxu0 %v2392
  %v3468 = vpop.f32.mrf.mxu0
  %v3469 = vadd.f32 0.0, %v3468
  %v3470 = vpop.f32.mrf.mxu0
  %v3471 = vadd.f32 0.0, %v3470
  %3472 = vmatmul.bf16.gmra.mxu0 %v3424
  %v3473 = vpop.f32.mrf.mxu0
  %v3474 = vadd.f32 0.0, %v3473
  %v3475 = vpop.f32.mrf.mxu0
  %v3476 = vadd.f32 0.0, %v3475
  %3477 = vdwg.mxu0
  %v3478 = vadd.f32 %v3386, %v3439
  %v3479 = vadd.f32 %v3387, %v3441
  %v3480 = vadd.f32 %v3388, %v3444
  %v3481 = vadd.f32 %v3389, %v3446
  %v3482 = vadd.f32 %v3390, %v3449
  %v3483 = vadd.f32 %v3391, %v3451
  %v3484 = vadd.f32 %v3392, %v3454
  %v3485 = vadd.f32 %v3393, %v3456
  %v3486 = vadd.f32 %v3394, %v3459
  %v3487 = vadd.f32 %v3395, %v3461
  %v3488 = vadd.f32 %v3396, %v3464
  %v3489 = vadd.f32 %v3397, %v3466
  %v3490 = vadd.f32 %v3398, %v3469
  %v3491 = vadd.f32 %v3399, %v3471
  %v3492 = vadd.f32 %v3400, %v3474
  %v3493 = vadd.f32 %v3401, %v3476
  %v3494 = vpack.c.bf16 %v1637, %v1635
  %v3495 = vpack.c.bf16 %v1661, %v1659
  %s3496 = scalar_lea.vmem %s3, 120
  %v3497 = vld [vmem:[%s3496] sm:$0xf]
  %v3498 = vld [vmem:[%s3496 + $0x4] sm:$0x1]
  %v3501 = vunpack.c.l.b16 %v3497
  %v3502 = vunpack.c.l.b16 %v3498
  %v3503 = vpack.c.b16 %v3502, %v3501
  %v3505 = vsel %vm1353, %v3494, 0
  %v3508 = vsel %vm1353, %v3495, 0
  %v3511 = vsel %vm762, %v3503, 0
  %3513 = vmatpush.bf16.msra.mxu0 0
  %3514 = vmatpush.bf16.msra.mxu0 0
  %3515 = vmatpush.bf16.msra.mxu0 0
  %3516 = vmatpush.bf16.msra.mxu0 0
  %3517 = vmatpush.bf16.msra.mxu0 0
  %3518 = vmatpush.bf16.msra.mxu0 0
  %3519 = vmatpush.bf16.msra.mxu0 0
  %3520 = vmatpush.bf16.msra.mxu0 %v3511
  %3521 = vmatmul.bf16.gmra.mxu0 %v2482
  %v3522 = vpop.f32.mrf.mxu0
  %v3523 = vadd.f32 0.0, %v3522
  %v3524 = vpop.f32.mrf.mxu0
  %v3525 = vadd.f32 0.0, %v3524
  %3526 = vmatmul.bf16.gmra.mxu0 %v2485
  %v3527 = vpop.f32.mrf.mxu0
  %v3528 = vadd.f32 0.0, %v3527
  %v3529 = vpop.f32.mrf.mxu0
  %v3530 = vadd.f32 0.0, %v3529
  %3531 = vmatmul.bf16.gmra.mxu0 %v2488
  %v3532 = vpop.f32.mrf.mxu0
  %v3533 = vadd.f32 0.0, %v3532
  %v3534 = vpop.f32.mrf.mxu0
  %v3535 = vadd.f32 0.0, %v3534
  %3536 = vmatmul.bf16.gmra.mxu0 %v3505
  %v3537 = vpop.f32.mrf.mxu0
  %v3538 = vadd.f32 0.0, %v3537
  %v3539 = vpop.f32.mrf.mxu0
  %v3540 = vadd.f32 0.0, %v3539
  %3541 = vmatmul.bf16.gmra.mxu0 %v2494
  %v3542 = vpop.f32.mrf.mxu0
  %v3543 = vadd.f32 0.0, %v3542
  %v3544 = vpop.f32.mrf.mxu0
  %v3545 = vadd.f32 0.0, %v3544
  %3546 = vmatmul.bf16.gmra.mxu0 %v2497
  %v3547 = vpop.f32.mrf.mxu0
  %v3548 = vadd.f32 0.0, %v3547
  %v3549 = vpop.f32.mrf.mxu0
  %v3550 = vadd.f32 0.0, %v3549
  %3551 = vmatmul.bf16.gmra.mxu0 %v2500
  %v3552 = vpop.f32.mrf.mxu0
  %v3553 = vadd.f32 0.0, %v3552
  %v3554 = vpop.f32.mrf.mxu0
  %v3555 = vadd.f32 0.0, %v3554
  %3556 = vmatmul.bf16.gmra.mxu0 %v3508
  %v3557 = vpop.f32.mrf.mxu0
  %v3558 = vadd.f32 0.0, %v3557
  %v3559 = vpop.f32.mrf.mxu0
  %v3560 = vadd.f32 0.0, %v3559
  %3561 = vdwg.mxu0
  %v3562 = vadd.f32 %v3478, %v3523
  %v3563 = vadd.f32 %v3479, %v3525
  %v3564 = vadd.f32 %v3480, %v3528
  %v3565 = vadd.f32 %v3481, %v3530
  %v3566 = vadd.f32 %v3482, %v3533
  %v3567 = vadd.f32 %v3483, %v3535
  %v3568 = vadd.f32 %v3484, %v3538
  %v3569 = vadd.f32 %v3485, %v3540
  %v3570 = vadd.f32 %v3486, %v3543
  %v3571 = vadd.f32 %v3487, %v3545
  %v3572 = vadd.f32 %v3488, %v3548
  %v3573 = vadd.f32 %v3489, %v3550
  %v3574 = vadd.f32 %v3490, %v3553
  %v3575 = vadd.f32 %v3491, %v3555
  %v3576 = vadd.f32 %v3492, %v3558
  %v3577 = vadd.f32 %v3493, %v3560
  %v3582 = vrot.slane %v1637, 1
  %v3583 = vrot.slane %v1638, 1
  %v3584 = vsel %vm1707, %v3582, %v3583
  %v3585 = vrot.slane %v1661, 1
  %v3586 = vrot.slane %v1662, 1
  %v3587 = vsel %vm1707, %v3585, %v3586
  %v3590 = vpack.c.bf16 %v3584, %v3128
  %v3591 = vpack.c.bf16 %v3587, %v3131
  %s3592 = scalar_lea.vmem %s3, 128
  %v3593 = vld [vmem:[%s3592] sm:$0xf]
  %v3594 = vld [vmem:[%s3592 + $0x4] sm:$0x1]
  %v3597 = vunpack.c.l.b16 %v3593
  %v3598 = vunpack.c.l.b16 %v3594
  %v3599 = vpack.c.b16 %v3598, %v3597
  %v3601 = vsel %vm1353, %v3590, 0
  %v3604 = vsel %vm1353, %v3591, 0
  %v3607 = vsel %vm762, %v3599, 0
  %3609 = vmatpush.bf16.msra.mxu0 0
  %3610 = vmatpush.bf16.msra.mxu0 0
  %3611 = vmatpush.bf16.msra.mxu0 0
  %3612 = vmatpush.bf16.msra.mxu0 0
  %3613 = vmatpush.bf16.msra.mxu0 0
  %3614 = vmatpush.bf16.msra.mxu0 0
  %3615 = vmatpush.bf16.msra.mxu0 0
  %3616 = vmatpush.bf16.msra.mxu0 %v3607
  %3617 = vmatmul.bf16.gmra.mxu0 %v2602
  %v3618 = vpop.f32.mrf.mxu0
  %v3619 = vadd.f32 0.0, %v3618
  %v3620 = vpop.f32.mrf.mxu0
  %v3621 = vadd.f32 0.0, %v3620
  %3622 = vmatmul.bf16.gmra.mxu0 %v2605
  %v3623 = vpop.f32.mrf.mxu0
  %v3624 = vadd.f32 0.0, %v3623
  %v3625 = vpop.f32.mrf.mxu0
  %v3626 = vadd.f32 0.0, %v3625
  %3627 = vmatmul.bf16.gmra.mxu0 %v2608
  %v3628 = vpop.f32.mrf.mxu0
  %v3629 = vadd.f32 0.0, %v3628
  %v3630 = vpop.f32.mrf.mxu0
  %v3631 = vadd.f32 0.0, %v3630
  %3632 = vmatmul.bf16.gmra.mxu0 %v3601
  %v3633 = vpop.f32.mrf.mxu0
  %v3634 = vadd.f32 0.0, %v3633
  %v3635 = vpop.f32.mrf.mxu0
  %v3636 = vadd.f32 0.0, %v3635
  %3637 = vmatmul.bf16.gmra.mxu0 %v2614
  %v3638 = vpop.f32.mrf.mxu0
  %v3639 = vadd.f32 0.0, %v3638
  %v3640 = vpop.f32.mrf.mxu0
  %v3641 = vadd.f32 0.0, %v3640
  %3642 = vmatmul.bf16.gmra.mxu0 %v2617
  %v3643 = vpop.f32.mrf.mxu0
  %v3644 = vadd.f32 0.0, %v3643
  %v3645 = vpop.f32.mrf.mxu0
  %v3646 = vadd.f32 0.0, %v3645
  %3647 = vmatmul.bf16.gmra.mxu0 %v2620
  %v3648 = vpop.f32.mrf.mxu0
  %v3649 = vadd.f32 0.0, %v3648
  %v3650 = vpop.f32.mrf.mxu0
  %v3651 = vadd.f32 0.0, %v3650
  %3652 = vmatmul.bf16.gmra.mxu0 %v3604
  %v3653 = vpop.f32.mrf.mxu0
  %v3654 = vadd.f32 0.0, %v3653
  %v3655 = vpop.f32.mrf.mxu0
  %v3656 = vadd.f32 0.0, %v3655
  %3657 = vdwg.mxu0
  %v3658 = vadd.f32 %v3562, %v3619
  %v3659 = vadd.f32 %v3563, %v3621
  %v3660 = vadd.f32 %v3564, %v3624
  %v3661 = vadd.f32 %v3565, %v3626
  %v3662 = vadd.f32 %v3566, %v3629
  %v3663 = vadd.f32 %v3567, %v3631
  %v3664 = vadd.f32 %v3568, %v3634
  %v3665 = vadd.f32 %v3569, %v3636
  %v3666 = vadd.f32 %v3570, %v3639
  %v3667 = vadd.f32 %v3571, %v3641
  %v3668 = vadd.f32 %v3572, %v3644
  %v3669 = vadd.f32 %v3573, %v3646
  %v3670 = vadd.f32 %v3574, %v3649
  %v3671 = vadd.f32 %v3575, %v3651
  %v3672 = vadd.f32 %v3576, %v3654
  %v3673 = vadd.f32 %v3577, %v3656
  %v3674 = vrot.slane %v1637, 2
  %v3675 = vrot.slane %v1638, 2
  %v3676 = vsel %vm1945, %v3674, %v3675
  %v3677 = vrot.slane %v1661, 2
  %v3678 = vrot.slane %v1662, 2
  %v3679 = vsel %vm1945, %v3677, %v3678
  %v3682 = vpack.c.bf16 %v3676, %v3220
  %v3683 = vpack.c.bf16 %v3679, %v3223
  %s3684 = scalar_lea.vmem %s3, 136
  %v3685 = vld [vmem:[%s3684] sm:$0xf]
  %v3686 = vld [vmem:[%s3684 + $0x4] sm:$0x1]
  %v3689 = vunpack.c.l.b16 %v3685
  %v3690 = vunpack.c.l.b16 %v3686
  %v3691 = vpack.c.b16 %v3690, %v3689
  %v3693 = vsel %vm1353, %v3682, 0
  %v3696 = vsel %vm1353, %v3683, 0
  %v3699 = vsel %vm762, %v3691, 0
  %3701 = vmatpush.bf16.msra.mxu0 0
  %3702 = vmatpush.bf16.msra.mxu0 0
  %3703 = vmatpush.bf16.msra.mxu0 0
  %3704 = vmatpush.bf16.msra.mxu0 0
  %3705 = vmatpush.bf16.msra.mxu0 0
  %3706 = vmatpush.bf16.msra.mxu0 0
  %3707 = vmatpush.bf16.msra.mxu0 0
  %3708 = vmatpush.bf16.msra.mxu0 %v3699
  %3709 = vmatmul.bf16.gmra.mxu0 %v2718
  %v3710 = vpop.f32.mrf.mxu0
  %v3711 = vadd.f32 0.0, %v3710
  %v3712 = vpop.f32.mrf.mxu0
  %v3713 = vadd.f32 0.0, %v3712
  %3714 = vmatmul.bf16.gmra.mxu0 %v2721
  %v3715 = vpop.f32.mrf.mxu0
  %v3716 = vadd.f32 0.0, %v3715
  %v3717 = vpop.f32.mrf.mxu0
  %v3718 = vadd.f32 0.0, %v3717
  %3719 = vmatmul.bf16.gmra.mxu0 %v2724
  %v3720 = vpop.f32.mrf.mxu0
  %v3721 = vadd.f32 0.0, %v3720
  %v3722 = vpop.f32.mrf.mxu0
  %v3723 = vadd.f32 0.0, %v3722
  %3724 = vmatmul.bf16.gmra.mxu0 %v3693
  %v3725 = vpop.f32.mrf.mxu0
  %v3726 = vadd.f32 0.0, %v3725
  %v3727 = vpop.f32.mrf.mxu0
  %v3728 = vadd.f32 0.0, %v3727
  %3729 = vmatmul.bf16.gmra.mxu0 %v2730
  %v3730 = vpop.f32.mrf.mxu0
  %v3731 = vadd.f32 0.0, %v3730
  %v3732 = vpop.f32.mrf.mxu0
  %v3733 = vadd.f32 0.0, %v3732
  %3734 = vmatmul.bf16.gmra.mxu0 %v2733
  %v3735 = vpop.f32.mrf.mxu0
  %v3736 = vadd.f32 0.0, %v3735
  %v3737 = vpop.f32.mrf.mxu0
  %v3738 = vadd.f32 0.0, %v3737
  %3739 = vmatmul.bf16.gmra.mxu0 %v2736
  %v3740 = vpop.f32.mrf.mxu0
  %v3741 = vadd.f32 0.0, %v3740
  %v3742 = vpop.f32.mrf.mxu0
  %v3743 = vadd.f32 0.0, %v3742
  %3744 = vmatmul.bf16.gmra.mxu0 %v3696
  %v3745 = vpop.f32.mrf.mxu0
  %v3746 = vadd.f32 0.0, %v3745
  %v3747 = vpop.f32.mrf.mxu0
  %v3748 = vadd.f32 0.0, %v3747
  %3749 = vdwg.mxu0
  %v3750 = vadd.f32 %v3658, %v3711
  %v3751 = vadd.f32 %v3659, %v3713
  %v3752 = vadd.f32 %v3660, %v3716
  %v3753 = vadd.f32 %v3661, %v3718
  %v3754 = vadd.f32 %v3662, %v3721
  %v3755 = vadd.f32 %v3663, %v3723
  %v3756 = vadd.f32 %v3664, %v3726
  %v3757 = vadd.f32 %v3665, %v3728
  %v3758 = vadd.f32 %v3666, %v3731
  %v3759 = vadd.f32 %v3667, %v3733
  %v3760 = vadd.f32 %v3668, %v3736
  %v3761 = vadd.f32 %v3669, %v3738
  %v3762 = vadd.f32 %v3670, %v3741
  %v3763 = vadd.f32 %v3671, %v3743
  %v3764 = vadd.f32 %v3672, %v3746
  %v3765 = vadd.f32 %v3673, %v3748
  %v3766 = vrot.slane %v1637, 3
  %v3767 = vrot.slane %v1638, 3
  %v3768 = vsel %vm762, %v3766, %v3767
  %v3769 = vrot.slane %v1661, 3
  %v3770 = vrot.slane %v1662, 3
  %v3771 = vsel %vm762, %v3769, %v3770
  %v3774 = vpack.c.bf16 %v3768, %v3312
  %v3775 = vpack.c.bf16 %v3771, %v3315
  %s3776 = scalar_lea.vmem %s3, 144
  %v3777 = vld [vmem:[%s3776] sm:$0xf]
  %v3778 = vld [vmem:[%s3776 + $0x4] sm:$0x1]
  %v3781 = vunpack.c.l.b16 %v3777
  %v3782 = vunpack.c.l.b16 %v3778
  %v3783 = vpack.c.b16 %v3782, %v3781
  %v3785 = vsel %vm1353, %v3774, 0
  %v3788 = vsel %vm1353, %v3775, 0
  %v3791 = vsel %vm762, %v3783, 0
  %3793 = vmatpush.bf16.msra.mxu0 0
  %3794 = vmatpush.bf16.msra.mxu0 0
  %3795 = vmatpush.bf16.msra.mxu0 0
  %3796 = vmatpush.bf16.msra.mxu0 0
  %3797 = vmatpush.bf16.msra.mxu0 0
  %3798 = vmatpush.bf16.msra.mxu0 0
  %3799 = vmatpush.bf16.msra.mxu0 0
  %3800 = vmatpush.bf16.msra.mxu0 %v3791
  %3801 = vmatmul.bf16.gmra.mxu0 %v2834
  %v3802 = vpop.f32.mrf.mxu0
  %v3803 = vadd.f32 0.0, %v3802
  %v3804 = vpop.f32.mrf.mxu0
  %v3805 = vadd.f32 0.0, %v3804
  %3806 = vmatmul.bf16.gmra.mxu0 %v2837
  %v3807 = vpop.f32.mrf.mxu0
  %v3808 = vadd.f32 0.0, %v3807
  %v3809 = vpop.f32.mrf.mxu0
  %v3810 = vadd.f32 0.0, %v3809
  %3811 = vmatmul.bf16.gmra.mxu0 %v2840
  %v3812 = vpop.f32.mrf.mxu0
  %v3813 = vadd.f32 0.0, %v3812
  %v3814 = vpop.f32.mrf.mxu0
  %v3815 = vadd.f32 0.0, %v3814
  %3816 = vmatmul.bf16.gmra.mxu0 %v3785
  %v3817 = vpop.f32.mrf.mxu0
  %v3818 = vadd.f32 0.0, %v3817
  %v3819 = vpop.f32.mrf.mxu0
  %v3820 = vadd.f32 0.0, %v3819
  %3821 = vmatmul.bf16.gmra.mxu0 %v2846
  %v3822 = vpop.f32.mrf.mxu0
  %v3823 = vadd.f32 0.0, %v3822
  %v3824 = vpop.f32.mrf.mxu0
  %v3825 = vadd.f32 0.0, %v3824
  %3826 = vmatmul.bf16.gmra.mxu0 %v2849
  %v3827 = vpop.f32.mrf.mxu0
  %v3828 = vadd.f32 0.0, %v3827
  %v3829 = vpop.f32.mrf.mxu0
  %v3830 = vadd.f32 0.0, %v3829
  %3831 = vmatmul.bf16.gmra.mxu0 %v2852
  %v3832 = vpop.f32.mrf.mxu0
  %v3833 = vadd.f32 0.0, %v3832
  %v3834 = vpop.f32.mrf.mxu0
  %v3835 = vadd.f32 0.0, %v3834
  %3836 = vmatmul.bf16.gmra.mxu0 %v3788
  %v3837 = vpop.f32.mrf.mxu0
  %v3838 = vadd.f32 0.0, %v3837
  %v3839 = vpop.f32.mrf.mxu0
  %v3840 = vadd.f32 0.0, %v3839
  %3841 = vdwg.mxu0
  %v3842 = vadd.f32 %v3750, %v3803
  %v3843 = vadd.f32 %v3751, %v3805
  %v3844 = vadd.f32 %v3752, %v3808
  %v3845 = vadd.f32 %v3753, %v3810
  %v3846 = vadd.f32 %v3754, %v3813
  %v3847 = vadd.f32 %v3755, %v3815
  %v3848 = vadd.f32 %v3756, %v3818
  %v3849 = vadd.f32 %v3757, %v3820
  %v3850 = vadd.f32 %v3758, %v3823
  %v3851 = vadd.f32 %v3759, %v3825
  %v3852 = vadd.f32 %v3760, %v3828
  %v3853 = vadd.f32 %v3761, %v3830
  %v3854 = vadd.f32 %v3762, %v3833
  %v3855 = vadd.f32 %v3763, %v3835
  %v3856 = vadd.f32 %v3764, %v3838
  %v3857 = vadd.f32 %v3765, %v3840
  %v3858 = vrot.slane %v1637, 4
  %v3859 = vrot.slane %v1638, 4
  %v3860 = vsel %vm761, %v3858, %v3859
  %v3861 = vrot.slane %v1661, 4
  %v3862 = vrot.slane %v1662, 4
  %v3863 = vsel %vm761, %v3861, %v3862
  %v3866 = vpack.c.bf16 %v3860, %v3404
  %v3867 = vpack.c.bf16 %v3863, %v3407
  %s3868 = scalar_lea.vmem %s3, 152
  %v3869 = vld [vmem:[%s3868] sm:$0xf]
  %v3870 = vld [vmem:[%s3868 + $0x4] sm:$0x1]
  %v3873 = vunpack.c.l.b16 %v3869
  %v3874 = vunpack.c.l.b16 %v3870
  %v3875 = vpack.c.b16 %v3874, %v3873
  %v3877 = vsel %vm1353, %v3866, 0
  %v3880 = vsel %vm1353, %v3867, 0
  %v3883 = vsel %vm762, %v3875, 0
  %3885 = vmatpush.bf16.msra.mxu0 0
  %3886 = vmatpush.bf16.msra.mxu0 0
  %3887 = vmatpush.bf16.msra.mxu0 0
  %3888 = vmatpush.bf16.msra.mxu0 0
  %3889 = vmatpush.bf16.msra.mxu0 0
  %3890 = vmatpush.bf16.msra.mxu0 0
  %3891 = vmatpush.bf16.msra.mxu0 0
  %3892 = vmatpush.bf16.msra.mxu0 %v3883
  %3893 = vmatmul.bf16.gmra.mxu0 %v2950
  %v3894 = vpop.f32.mrf.mxu0
  %v3895 = vadd.f32 0.0, %v3894
  %v3896 = vpop.f32.mrf.mxu0
  %v3897 = vadd.f32 0.0, %v3896
  %3898 = vmatmul.bf16.gmra.mxu0 %v2953
  %v3899 = vpop.f32.mrf.mxu0
  %v3900 = vadd.f32 0.0, %v3899
  %v3901 = vpop.f32.mrf.mxu0
  %v3902 = vadd.f32 0.0, %v3901
  %3903 = vmatmul.bf16.gmra.mxu0 %v2956
  %v3904 = vpop.f32.mrf.mxu0
  %v3905 = vadd.f32 0.0, %v3904
  %v3906 = vpop.f32.mrf.mxu0
  %v3907 = vadd.f32 0.0, %v3906
  %3908 = vmatmul.bf16.gmra.mxu0 %v3877
  %v3909 = vpop.f32.mrf.mxu0
  %v3910 = vadd.f32 0.0, %v3909
  %v3911 = vpop.f32.mrf.mxu0
  %v3912 = vadd.f32 0.0, %v3911
  %3913 = vmatmul.bf16.gmra.mxu0 %v2962
  %v3914 = vpop.f32.mrf.mxu0
  %v3915 = vadd.f32 0.0, %v3914
  %v3916 = vpop.f32.mrf.mxu0
  %v3917 = vadd.f32 0.0, %v3916
  %3918 = vmatmul.bf16.gmra.mxu0 %v2965
  %v3919 = vpop.f32.mrf.mxu0
  %v3920 = vadd.f32 0.0, %v3919
  %v3921 = vpop.f32.mrf.mxu0
  %v3922 = vadd.f32 0.0, %v3921
  %3923 = vmatmul.bf16.gmra.mxu0 %v2968
  %v3924 = vpop.f32.mrf.mxu0
  %v3925 = vadd.f32 0.0, %v3924
  %v3926 = vpop.f32.mrf.mxu0
  %v3927 = vadd.f32 0.0, %v3926
  %3928 = vmatmul.bf16.gmra.mxu0 %v3880
  %v3929 = vpop.f32.mrf.mxu0
  %v3930 = vadd.f32 0.0, %v3929
  %v3931 = vpop.f32.mrf.mxu0
  %v3932 = vadd.f32 0.0, %v3931
  %3933 = vdwg.mxu0
  %v3934 = vadd.f32 %v3842, %v3895
  %v3935 = vadd.f32 %v3843, %v3897
  %v3936 = vadd.f32 %v3844, %v3900
  %v3937 = vadd.f32 %v3845, %v3902
  %v3938 = vadd.f32 %v3846, %v3905
  %v3939 = vadd.f32 %v3847, %v3907
  %v3940 = vadd.f32 %v3848, %v3910
  %v3941 = vadd.f32 %v3849, %v3912
  %v3942 = vadd.f32 %v3850, %v3915
  %v3943 = vadd.f32 %v3851, %v3917
  %v3944 = vadd.f32 %v3852, %v3920
  %v3945 = vadd.f32 %v3853, %v3922
  %v3946 = vadd.f32 %v3854, %v3925
  %v3947 = vadd.f32 %v3855, %v3927
  %v3948 = vadd.f32 %v3856, %v3930
  %v3949 = vadd.f32 %v3857, %v3932
  %v3950 = vpack.c.bf16 %v1639, %v1637
  %v3951 = vpack.c.bf16 %v1663, %v1661
  %s3952 = scalar_lea.vmem %s3, 160
  %v3953 = vld [vmem:[%s3952] sm:$0xf]
  %v3954 = vld [vmem:[%s3952 + $0x4] sm:$0x1]
  %v3957 = vunpack.c.l.b16 %v3953
  %v3958 = vunpack.c.l.b16 %v3954
  %v3959 = vpack.c.b16 %v3958, %v3957
  %v3961 = vsel %vm1353, %v3950, 0
  %v3964 = vsel %vm1353, %v3951, 0
  %v3967 = vsel %vm762, %v3959, 0
  %3969 = vmatpush.bf16.msra.mxu0 0
  %3970 = vmatpush.bf16.msra.mxu0 0
  %3971 = vmatpush.bf16.msra.mxu0 0
  %3972 = vmatpush.bf16.msra.mxu0 0
  %3973 = vmatpush.bf16.msra.mxu0 0
  %3974 = vmatpush.bf16.msra.mxu0 0
  %3975 = vmatpush.bf16.msra.mxu0 0
  %3976 = vmatpush.bf16.msra.mxu0 %v3967
  %3977 = vmatmul.bf16.gmra.mxu0 %v1876
  %v3978 = vpop.f32.mrf.mxu0
  %v3979 = vadd.f32 0.0, %v3978
  %v3980 = vpop.f32.mrf.mxu0
  %v3981 = vadd.f32 0.0, %v3980
  %3982 = vmatmul.bf16.gmra.mxu0 %v1879
  %v3983 = vpop.f32.mrf.mxu0
  %v3984 = vadd.f32 0.0, %v3983
  %v3985 = vpop.f32.mrf.mxu0
  %v3986 = vadd.f32 0.0, %v3985
  %3987 = vmatmul.bf16.gmra.mxu0 %v3049
  %v3988 = vpop.f32.mrf.mxu0
  %v3989 = vadd.f32 0.0, %v3988
  %v3990 = vpop.f32.mrf.mxu0
  %v3991 = vadd.f32 0.0, %v3990
  %3992 = vmatmul.bf16.gmra.mxu0 %v3961
  %v3993 = vpop.f32.mrf.mxu0
  %v3994 = vadd.f32 0.0, %v3993
  %v3995 = vpop.f32.mrf.mxu0
  %v3996 = vadd.f32 0.0, %v3995
  %3997 = vmatmul.bf16.gmra.mxu0 %v1888
  %v3998 = vpop.f32.mrf.mxu0
  %v3999 = vadd.f32 0.0, %v3998
  %v4000 = vpop.f32.mrf.mxu0
  %v4001 = vadd.f32 0.0, %v4000
  %4002 = vmatmul.bf16.gmra.mxu0 %v1891
  %v4003 = vpop.f32.mrf.mxu0
  %v4004 = vadd.f32 0.0, %v4003
  %v4005 = vpop.f32.mrf.mxu0
  %v4006 = vadd.f32 0.0, %v4005
  %4007 = vmatmul.bf16.gmra.mxu0 %v3052
  %v4008 = vpop.f32.mrf.mxu0
  %v4009 = vadd.f32 0.0, %v4008
  %v4010 = vpop.f32.mrf.mxu0
  %v4011 = vadd.f32 0.0, %v4010
  %4012 = vmatmul.bf16.gmra.mxu0 %v3964
  %v4013 = vpop.f32.mrf.mxu0
  %v4014 = vadd.f32 0.0, %v4013
  %v4015 = vpop.f32.mrf.mxu0
  %v4016 = vadd.f32 0.0, %v4015
  %4017 = vdwg.mxu0
  %v4018 = vadd.f32 %v3934, %v3979
  %v4019 = vadd.f32 %v3935, %v3981
  %v4020 = vadd.f32 %v3936, %v3984
  %v4021 = vadd.f32 %v3937, %v3986
  %v4022 = vadd.f32 %v3938, %v3989
  %v4023 = vadd.f32 %v3939, %v3991
  %v4024 = vadd.f32 %v3940, %v3994
  %v4025 = vadd.f32 %v3941, %v3996
  %v4026 = vadd.f32 %v3942, %v3999
  %v4027 = vadd.f32 %v3943, %v4001
  %v4028 = vadd.f32 %v3944, %v4004
  %v4029 = vadd.f32 %v3945, %v4006
  %v4030 = vadd.f32 %v3946, %v4009
  %v4031 = vadd.f32 %v3947, %v4011
  %v4032 = vadd.f32 %v3948, %v4014
  %v4033 = vadd.f32 %v3949, %v4016
  %v4038 = vrot.slane %v1639, 1
  %v4039 = vrot.slane %v1640, 1
  %v4040 = vsel %vm1707, %v4038, %v4039
  %v4041 = vrot.slane %v1663, 1
  %v4042 = vrot.slane %v1664, 1
  %v4043 = vsel %vm1707, %v4041, %v4042
  %v4046 = vpack.c.bf16 %v4040, %v3584
  %v4047 = vpack.c.bf16 %v4043, %v3587
  %s4048 = scalar_lea.vmem %s3, 168
  %v4049 = vld [vmem:[%s4048] sm:$0xf]
  %v4050 = vld [vmem:[%s4048 + $0x4] sm:$0x1]
  %v4053 = vunpack.c.l.b16 %v4049
  %v4054 = vunpack.c.l.b16 %v4050
  %v4055 = vpack.c.b16 %v4054, %v4053
  %v4057 = vsel %vm1353, %v4046, 0
  %v4060 = vsel %vm1353, %v4047, 0
  %v4063 = vsel %vm762, %v4055, 0
  %4065 = vmatpush.bf16.msra.mxu0 0
  %4066 = vmatpush.bf16.msra.mxu0 0
  %4067 = vmatpush.bf16.msra.mxu0 0
  %4068 = vmatpush.bf16.msra.mxu0 0
  %4069 = vmatpush.bf16.msra.mxu0 0
  %4070 = vmatpush.bf16.msra.mxu0 0
  %4071 = vmatpush.bf16.msra.mxu0 0
  %4072 = vmatpush.bf16.msra.mxu0 %v4063
  %4073 = vmatmul.bf16.gmra.mxu0 %v1795
  %v4074 = vpop.f32.mrf.mxu0
  %v4075 = vadd.f32 0.0, %v4074
  %v4076 = vpop.f32.mrf.mxu0
  %v4077 = vadd.f32 0.0, %v4076
  %4078 = vmatmul.bf16.gmra.mxu0 %v1798
  %v4079 = vpop.f32.mrf.mxu0
  %v4080 = vadd.f32 0.0, %v4079
  %v4081 = vpop.f32.mrf.mxu0
  %v4082 = vadd.f32 0.0, %v4081
  %4083 = vmatmul.bf16.gmra.mxu0 %v3145
  %v4084 = vpop.f32.mrf.mxu0
  %v4085 = vadd.f32 0.0, %v4084
  %v4086 = vpop.f32.mrf.mxu0
  %v4087 = vadd.f32 0.0, %v4086
  %4088 = vmatmul.bf16.gmra.mxu0 %v4057
  %v4089 = vpop.f32.mrf.mxu0
  %v4090 = vadd.f32 0.0, %v4089
  %v4091 = vpop.f32.mrf.mxu0
  %v4092 = vadd.f32 0.0, %v4091
  %4093 = vmatmul.bf16.gmra.mxu0 %v1807
  %v4094 = vpop.f32.mrf.mxu0
  %v4095 = vadd.f32 0.0, %v4094
  %v4096 = vpop.f32.mrf.mxu0
  %v4097 = vadd.f32 0.0, %v4096
  %4098 = vmatmul.bf16.gmra.mxu0 %v1810
  %v4099 = vpop.f32.mrf.mxu0
  %v4100 = vadd.f32 0.0, %v4099
  %v4101 = vpop.f32.mrf.mxu0
  %v4102 = vadd.f32 0.0, %v4101
  %4103 = vmatmul.bf16.gmra.mxu0 %v3148
  %v4104 = vpop.f32.mrf.mxu0
  %v4105 = vadd.f32 0.0, %v4104
  %v4106 = vpop.f32.mrf.mxu0
  %v4107 = vadd.f32 0.0, %v4106
  %4108 = vmatmul.bf16.gmra.mxu0 %v4060
  %v4109 = vpop.f32.mrf.mxu0
  %v4110 = vadd.f32 0.0, %v4109
  %v4111 = vpop.f32.mrf.mxu0
  %v4112 = vadd.f32 0.0, %v4111
  %4113 = vdwg.mxu0
  %v4114 = vadd.f32 %v4018, %v4075
  %v4115 = vadd.f32 %v4019, %v4077
  %v4116 = vadd.f32 %v4020, %v4080
  %v4117 = vadd.f32 %v4021, %v4082
  %v4118 = vadd.f32 %v4022, %v4085
  %v4119 = vadd.f32 %v4023, %v4087
  %v4120 = vadd.f32 %v4024, %v4090
  %v4121 = vadd.f32 %v4025, %v4092
  %v4122 = vadd.f32 %v4026, %v4095
  %v4123 = vadd.f32 %v4027, %v4097
  %v4124 = vadd.f32 %v4028, %v4100
  %v4125 = vadd.f32 %v4029, %v4102
  %v4126 = vadd.f32 %v4030, %v4105
  %v4127 = vadd.f32 %v4031, %v4107
  %v4128 = vadd.f32 %v4032, %v4110
  %v4129 = vadd.f32 %v4033, %v4112
  %v4130 = vrot.slane %v1639, 2
  %v4131 = vrot.slane %v1640, 2
  %v4132 = vsel %vm1945, %v4130, %v4131
  %v4133 = vrot.slane %v1663, 2
  %v4134 = vrot.slane %v1664, 2
  %v4135 = vsel %vm1945, %v4133, %v4134
  %v4138 = vpack.c.bf16 %v4132, %v3676
  %v4139 = vpack.c.bf16 %v4135, %v3679
  %s4140 = scalar_lea.vmem %s3, 176
  %v4141 = vld [vmem:[%s4140] sm:$0xf]
  %v4142 = vld [vmem:[%s4140 + $0x4] sm:$0x1]
  %v4145 = vunpack.c.l.b16 %v4141
  %v4146 = vunpack.c.l.b16 %v4142
  %v4147 = vpack.c.b16 %v4146, %v4145
  %v4149 = vsel %vm1353, %v4138, 0
  %v4152 = vsel %vm1353, %v4139, 0
  %v4155 = vsel %vm762, %v4147, 0
  %4157 = vmatpush.bf16.msra.mxu0 0
  %4158 = vmatpush.bf16.msra.mxu0 0
  %4159 = vmatpush.bf16.msra.mxu0 0
  %4160 = vmatpush.bf16.msra.mxu0 0
  %4161 = vmatpush.bf16.msra.mxu0 0
  %4162 = vmatpush.bf16.msra.mxu0 0
  %4163 = vmatpush.bf16.msra.mxu0 0
  %4164 = vmatpush.bf16.msra.mxu0 %v4155
  %4165 = vmatmul.bf16.gmra.mxu0 %v2033
  %v4166 = vpop.f32.mrf.mxu0
  %v4167 = vadd.f32 0.0, %v4166
  %v4168 = vpop.f32.mrf.mxu0
  %v4169 = vadd.f32 0.0, %v4168
  %4170 = vmatmul.bf16.gmra.mxu0 %v2036
  %v4171 = vpop.f32.mrf.mxu0
  %v4172 = vadd.f32 0.0, %v4171
  %v4173 = vpop.f32.mrf.mxu0
  %v4174 = vadd.f32 0.0, %v4173
  %4175 = vmatmul.bf16.gmra.mxu0 %v3237
  %v4176 = vpop.f32.mrf.mxu0
  %v4177 = vadd.f32 0.0, %v4176
  %v4178 = vpop.f32.mrf.mxu0
  %v4179 = vadd.f32 0.0, %v4178
  %4180 = vmatmul.bf16.gmra.mxu0 %v4149
  %v4181 = vpop.f32.mrf.mxu0
  %v4182 = vadd.f32 0.0, %v4181
  %v4183 = vpop.f32.mrf.mxu0
  %v4184 = vadd.f32 0.0, %v4183
  %4185 = vmatmul.bf16.gmra.mxu0 %v2045
  %v4186 = vpop.f32.mrf.mxu0
  %v4187 = vadd.f32 0.0, %v4186
  %v4188 = vpop.f32.mrf.mxu0
  %v4189 = vadd.f32 0.0, %v4188
  %4190 = vmatmul.bf16.gmra.mxu0 %v2048
  %v4191 = vpop.f32.mrf.mxu0
  %v4192 = vadd.f32 0.0, %v4191
  %v4193 = vpop.f32.mrf.mxu0
  %v4194 = vadd.f32 0.0, %v4193
  %4195 = vmatmul.bf16.gmra.mxu0 %v3240
  %v4196 = vpop.f32.mrf.mxu0
  %v4197 = vadd.f32 0.0, %v4196
  %v4198 = vpop.f32.mrf.mxu0
  %v4199 = vadd.f32 0.0, %v4198
  %4200 = vmatmul.bf16.gmra.mxu0 %v4152
  %v4201 = vpop.f32.mrf.mxu0
  %v4202 = vadd.f32 0.0, %v4201
  %v4203 = vpop.f32.mrf.mxu0
  %v4204 = vadd.f32 0.0, %v4203
  %4205 = vdwg.mxu0
  %v4206 = vadd.f32 %v4114, %v4167
  %v4207 = vadd.f32 %v4115, %v4169
  %v4208 = vadd.f32 %v4116, %v4172
  %v4209 = vadd.f32 %v4117, %v4174
  %v4210 = vadd.f32 %v4118, %v4177
  %v4211 = vadd.f32 %v4119, %v4179
  %v4212 = vadd.f32 %v4120, %v4182
  %v4213 = vadd.f32 %v4121, %v4184
  %v4214 = vadd.f32 %v4122, %v4187
  %v4215 = vadd.f32 %v4123, %v4189
  %v4216 = vadd.f32 %v4124, %v4192
  %v4217 = vadd.f32 %v4125, %v4194
  %v4218 = vadd.f32 %v4126, %v4197
  %v4219 = vadd.f32 %v4127, %v4199
  %v4220 = vadd.f32 %v4128, %v4202
  %v4221 = vadd.f32 %v4129, %v4204
  %v4222 = vrot.slane %v1639, 3
  %v4223 = vrot.slane %v1640, 3
  %v4224 = vsel %vm762, %v4222, %v4223
  %v4225 = vrot.slane %v1663, 3
  %v4226 = vrot.slane %v1664, 3
  %v4227 = vsel %vm762, %v4225, %v4226
  %v4230 = vpack.c.bf16 %v4224, %v3768
  %v4231 = vpack.c.bf16 %v4227, %v3771
  %s4232 = scalar_lea.vmem %s3, 184
  %v4233 = vld [vmem:[%s4232] sm:$0xf]
  %v4234 = vld [vmem:[%s4232 + $0x4] sm:$0x1]
  %v4237 = vunpack.c.l.b16 %v4233
  %v4238 = vunpack.c.l.b16 %v4234
  %v4239 = vpack.c.b16 %v4238, %v4237
  %v4241 = vsel %vm1353, %v4230, 0
  %v4244 = vsel %vm1353, %v4231, 0
  %v4247 = vsel %vm762, %v4239, 0
  %4249 = vmatpush.bf16.msra.mxu0 0
  %4250 = vmatpush.bf16.msra.mxu0 0
  %4251 = vmatpush.bf16.msra.mxu0 0
  %4252 = vmatpush.bf16.msra.mxu0 0
  %4253 = vmatpush.bf16.msra.mxu0 0
  %4254 = vmatpush.bf16.msra.mxu0 0
  %4255 = vmatpush.bf16.msra.mxu0 0
  %4256 = vmatpush.bf16.msra.mxu0 %v4247
  %4257 = vmatmul.bf16.gmra.mxu0 %v2205
  %v4258 = vpop.f32.mrf.mxu0
  %v4259 = vadd.f32 0.0, %v4258
  %v4260 = vpop.f32.mrf.mxu0
  %v4261 = vadd.f32 0.0, %v4260
  %4262 = vmatmul.bf16.gmra.mxu0 %v2208
  %v4263 = vpop.f32.mrf.mxu0
  %v4264 = vadd.f32 0.0, %v4263
  %v4265 = vpop.f32.mrf.mxu0
  %v4266 = vadd.f32 0.0, %v4265
  %4267 = vmatmul.bf16.gmra.mxu0 %v3329
  %v4268 = vpop.f32.mrf.mxu0
  %v4269 = vadd.f32 0.0, %v4268
  %v4270 = vpop.f32.mrf.mxu0
  %v4271 = vadd.f32 0.0, %v4270
  %4272 = vmatmul.bf16.gmra.mxu0 %v4241
  %v4273 = vpop.f32.mrf.mxu0
  %v4274 = vadd.f32 0.0, %v4273
  %v4275 = vpop.f32.mrf.mxu0
  %v4276 = vadd.f32 0.0, %v4275
  %4277 = vmatmul.bf16.gmra.mxu0 %v2217
  %v4278 = vpop.f32.mrf.mxu0
  %v4279 = vadd.f32 0.0, %v4278
  %v4280 = vpop.f32.mrf.mxu0
  %v4281 = vadd.f32 0.0, %v4280
  %4282 = vmatmul.bf16.gmra.mxu0 %v2220
  %v4283 = vpop.f32.mrf.mxu0
  %v4284 = vadd.f32 0.0, %v4283
  %v4285 = vpop.f32.mrf.mxu0
  %v4286 = vadd.f32 0.0, %v4285
  %4287 = vmatmul.bf16.gmra.mxu0 %v3332
  %v4288 = vpop.f32.mrf.mxu0
  %v4289 = vadd.f32 0.0, %v4288
  %v4290 = vpop.f32.mrf.mxu0
  %v4291 = vadd.f32 0.0, %v4290
  %4292 = vmatmul.bf16.gmra.mxu0 %v4244
  %v4293 = vpop.f32.mrf.mxu0
  %v4294 = vadd.f32 0.0, %v4293
  %v4295 = vpop.f32.mrf.mxu0
  %v4296 = vadd.f32 0.0, %v4295
  %4297 = vdwg.mxu0
  %v4298 = vadd.f32 %v4206, %v4259
  %v4299 = vadd.f32 %v4207, %v4261
  %v4300 = vadd.f32 %v4208, %v4264
  %v4301 = vadd.f32 %v4209, %v4266
  %v4302 = vadd.f32 %v4210, %v4269
  %v4303 = vadd.f32 %v4211, %v4271
  %v4304 = vadd.f32 %v4212, %v4274
  %v4305 = vadd.f32 %v4213, %v4276
  %v4306 = vadd.f32 %v4214, %v4279
  %v4307 = vadd.f32 %v4215, %v4281
  %v4308 = vadd.f32 %v4216, %v4284
  %v4309 = vadd.f32 %v4217, %v4286
  %v4310 = vadd.f32 %v4218, %v4289
  %v4311 = vadd.f32 %v4219, %v4291
  %v4312 = vadd.f32 %v4220, %v4294
  %v4313 = vadd.f32 %v4221, %v4296
  %v4314 = vrot.slane %v1639, 4
  %v4315 = vrot.slane %v1640, 4
  %v4316 = vsel %vm761, %v4314, %v4315
  %v4317 = vrot.slane %v1663, 4
  %v4318 = vrot.slane %v1664, 4
  %v4319 = vsel %vm761, %v4317, %v4318
  %v4322 = vpack.c.bf16 %v4316, %v3860
  %v4323 = vpack.c.bf16 %v4319, %v3863
  %s4324 = scalar_lea.vmem %s3, 192
  %v4325 = vld [vmem:[%s4324] sm:$0xf]
  %v4326 = vld [vmem:[%s4324 + $0x4] sm:$0x1]
  %v4329 = vunpack.c.l.b16 %v4325
  %v4330 = vunpack.c.l.b16 %v4326
  %v4331 = vpack.c.b16 %v4330, %v4329
  %v4333 = vsel %vm1353, %v4322, 0
  %v4336 = vsel %vm1353, %v4323, 0
  %v4339 = vsel %vm762, %v4331, 0
  %4341 = vmatpush.bf16.msra.mxu0 0
  %4342 = vmatpush.bf16.msra.mxu0 0
  %4343 = vmatpush.bf16.msra.mxu0 0
  %4344 = vmatpush.bf16.msra.mxu0 0
  %4345 = vmatpush.bf16.msra.mxu0 0
  %4346 = vmatpush.bf16.msra.mxu0 0
  %4347 = vmatpush.bf16.msra.mxu0 0
  %4348 = vmatpush.bf16.msra.mxu0 %v4339
  %4349 = vmatmul.bf16.gmra.mxu0 %v2377
  %v4350 = vpop.f32.mrf.mxu0
  %v4351 = vadd.f32 0.0, %v4350
  %v4352 = vpop.f32.mrf.mxu0
  %v4353 = vadd.f32 0.0, %v4352
  %4354 = vmatmul.bf16.gmra.mxu0 %v2380
  %v4355 = vpop.f32.mrf.mxu0
  %v4356 = vadd.f32 0.0, %v4355
  %v4357 = vpop.f32.mrf.mxu0
  %v4358 = vadd.f32 0.0, %v4357
  %4359 = vmatmul.bf16.gmra.mxu0 %v3421
  %v4360 = vpop.f32.mrf.mxu0
  %v4361 = vadd.f32 0.0, %v4360
  %v4362 = vpop.f32.mrf.mxu0
  %v4363 = vadd.f32 0.0, %v4362
  %4364 = vmatmul.bf16.gmra.mxu0 %v4333
  %v4365 = vpop.f32.mrf.mxu0
  %v4366 = vadd.f32 0.0, %v4365
  %v4367 = vpop.f32.mrf.mxu0
  %v4368 = vadd.f32 0.0, %v4367
  %4369 = vmatmul.bf16.gmra.mxu0 %v2389
  %v4370 = vpop.f32.mrf.mxu0
  %v4371 = vadd.f32 0.0, %v4370
  %v4372 = vpop.f32.mrf.mxu0
  %v4373 = vadd.f32 0.0, %v4372
  %4374 = vmatmul.bf16.gmra.mxu0 %v2392
  %v4375 = vpop.f32.mrf.mxu0
  %v4376 = vadd.f32 0.0, %v4375
  %v4377 = vpop.f32.mrf.mxu0
  %v4378 = vadd.f32 0.0, %v4377
  %4379 = vmatmul.bf16.gmra.mxu0 %v3424
  %v4380 = vpop.f32.mrf.mxu0
  %v4381 = vadd.f32 0.0, %v4380
  %v4382 = vpop.f32.mrf.mxu0
  %v4383 = vadd.f32 0.0, %v4382
  %4384 = vmatmul.bf16.gmra.mxu0 %v4336
  %v4385 = vpop.f32.mrf.mxu0
  %v4386 = vadd.f32 0.0, %v4385
  %v4387 = vpop.f32.mrf.mxu0
  %v4388 = vadd.f32 0.0, %v4387
  %4389 = vdwg.mxu0
  %v4390 = vadd.f32 %v4298, %v4351
  %v4391 = vadd.f32 %v4299, %v4353
  %v4392 = vadd.f32 %v4300, %v4356
  %v4393 = vadd.f32 %v4301, %v4358
  %v4394 = vadd.f32 %v4302, %v4361
  %v4395 = vadd.f32 %v4303, %v4363
  %v4396 = vadd.f32 %v4304, %v4366
  %v4397 = vadd.f32 %v4305, %v4368
  %v4398 = vadd.f32 %v4306, %v4371
  %v4399 = vadd.f32 %v4307, %v4373
  %v4400 = vadd.f32 %v4308, %v4376
  %v4401 = vadd.f32 %v4309, %v4378
  %v4402 = vadd.f32 %v4310, %v4381
  %v4403 = vadd.f32 %v4311, %v4383
  %v4404 = vadd.f32 %v4312, %v4386
  %v4405 = vadd.f32 %v4313, %v4388
  %v4406 = vld [vmem:[%s4] sm:$0x1]
  %v4408 = vperm.slane %v4406, 0
  %v4410 = vadd.f32 %v4390, %v4408
  %v4411 = vadd.f32 %v4391, %v4408
  %v4412 = vadd.f32 %v4392, %v4408
  %v4413 = vadd.f32 %v4393, %v4408
  %v4414 = vadd.f32 %v4394, %v4408
  %v4415 = vadd.f32 %v4395, %v4408
  %v4416 = vadd.f32 %v4396, %v4408
  %v4417 = vadd.f32 %v4397, %v4408
  %v4418 = vadd.f32 %v4398, %v4408
  %v4419 = vadd.f32 %v4399, %v4408
  %v4420 = vadd.f32 %v4400, %v4408
  %v4421 = vadd.f32 %v4401, %v4408
  %v4422 = vadd.f32 %v4402, %v4408
  %v4423 = vadd.f32 %v4403, %v4408
  %v4424 = vadd.f32 %v4404, %v4408
  %v4425 = vadd.f32 %v4405, %v4408
  %v4426 = vmax.f32 %v4410, 0.0
  %v4427 = vmax.f32 %v4411, 0.0
  %v4428 = vmax.f32 %v4412, 0.0
  %v4429 = vmax.f32 %v4413, 0.0
  %v4430 = vmax.f32 %v4414, 0.0
  %v4431 = vmax.f32 %v4415, 0.0
  %v4432 = vmax.f32 %v4416, 0.0
  %v4433 = vmax.f32 %v4417, 0.0
  %v4434 = vmax.f32 %v4418, 0.0
  %v4435 = vmax.f32 %v4419, 0.0
  %v4436 = vmax.f32 %v4420, 0.0
  %v4437 = vmax.f32 %v4421, 0.0
  %v4438 = vmax.f32 %v4422, 0.0
  %v4439 = vmax.f32 %v4423, 0.0
  %v4440 = vmax.f32 %v4424, 0.0
  %v4441 = vmax.f32 %v4425, 0.0
  %v4442 = vmax.f32 %v4426, %v4427
  %v4443 = vmax.f32 %v4428, %v4429
  %v4444 = vmax.f32 %v4430, %v4431
  %v4445 = vmax.f32 %v4432, %v4433
  %v4446 = vmax.f32 %v4434, %v4435
  %v4447 = vmax.f32 %v4436, %v4437
  %v4448 = vmax.f32 %v4438, %v4439
  %v4449 = vmax.f32 %v4440, %v4441
  %vm4450 = vcmask 162816
  %4451 = vst.msk [vmem:[#allocation3] sm:$0xff] %vm4450, %v4442
  %4452 = vst.msk [vmem:[#allocation3 + $0x8] sm:$0xff] %vm4450, %v4443
  %4453 = vst.msk [vmem:[#allocation3 + $0x10] sm:$0xff] %vm4450, %v4444
  %4454 = vst.msk [vmem:[#allocation3 + $0x18] sm:$0xff] %vm4450, %v4445
  %4455 = vst.msk [vmem:[#allocation3 + $0x20] sm:$0xff] %vm4450, %v4446
  %4456 = vst.msk [vmem:[#allocation3 + $0x28] sm:$0xff] %vm4450, %v4447
  %4457 = vst.msk [vmem:[#allocation3 + $0x30] sm:$0xff] %vm4450, %v4448
  %4458 = vst.msk [vmem:[#allocation3 + $0x38] sm:$0xff] %vm4450, %v4449
  %v4459 = vld [vmem:[#allocation3] ss:$2 sm:$0xf]
  %s4460 = scalar_lea.vmem [#allocation3], 8
  %v4461 = vld [vmem:[%s4460] ss:$2 sm:$0xf]
  %s4462 = scalar_lea.vmem [#allocation3], 16
  %v4463 = vld [vmem:[%s4462] ss:$2 sm:$0xf]
  %s4464 = scalar_lea.vmem [#allocation3], 24
  %v4465 = vld [vmem:[%s4464] ss:$2 sm:$0xf]
  %s4466 = scalar_lea.vmem [#allocation3], 32
  %v4467 = vld [vmem:[%s4466] ss:$2 sm:$0xf]
  %s4468 = scalar_lea.vmem [#allocation3], 40
  %v4469 = vld [vmem:[%s4468] ss:$2 sm:$0xf]
  %s4470 = scalar_lea.vmem [#allocation3], 48
  %v4471 = vld [vmem:[%s4470] ss:$2 sm:$0xf]
  %s4472 = scalar_lea.vmem [#allocation3], 56
  %v4473 = vld [vmem:[%s4472] ss:$2 sm:$0xf]
  %s4474 = scalar_lea.vmem [#allocation3], 1
  %v4475 = vld [vmem:[%s4474] ss:$2 sm:$0xf]
  %s4476 = scalar_lea.vmem [#allocation3], 9
  %v4477 = vld [vmem:[%s4476] ss:$2 sm:$0xf]
  %s4478 = scalar_lea.vmem [#allocation3], 17
  %v4479 = vld [vmem:[%s4478] ss:$2 sm:$0xf]
  %s4480 = scalar_lea.vmem [#allocation3], 25
  %v4481 = vld [vmem:[%s4480] ss:$2 sm:$0xf]
  %s4482 = scalar_lea.vmem [#allocation3], 33
  %v4483 = vld [vmem:[%s4482] ss:$2 sm:$0xf]
  %s4484 = scalar_lea.vmem [#allocation3], 41
  %v4485 = vld [vmem:[%s4484] ss:$2 sm:$0xf]
  %s4486 = scalar_lea.vmem [#allocation3], 49
  %v4487 = vld [vmem:[%s4486] ss:$2 sm:$0xf]
  %s4488 = scalar_lea.vmem [#allocation3], 57
  %v4489 = vld [vmem:[%s4488] ss:$2 sm:$0xf]
  %v4490 = vmax.f32 %v4459, %v4475
  %v4491 = vmax.f32 %v4461, %v4477
  %v4492 = vmax.f32 %v4463, %v4479
  %v4493 = vmax.f32 %v4465, %v4481
  %v4494 = vmax.f32 %v4467, %v4483
  %v4495 = vmax.f32 %v4469, %v4485
  %v4496 = vmax.f32 %v4471, %v4487
  %v4497 = vmax.f32 %v4473, %v4489
  %vm4498 = vcmask 158720
  %4499 = vst.msk [vmem:[%s5] sm:$0xf] %vm4498, %v4490
  %4500 = vst.msk [vmem:[%s5 + $0x4] sm:$0xf] %vm4498, %v4491
  %4501 = vst.msk [vmem:[%s5 + $0x8] sm:$0xf] %vm4498, %v4492
  %4502 = vst.msk [vmem:[%s5 + $0xc] sm:$0xf] %vm4498, %v4493
  %4503 = vst.msk [vmem:[%s5 + $0x10] sm:$0xf] %vm4498, %v4494
  %4504 = vst.msk [vmem:[%s5 + $0x14] sm:$0xf] %vm4498, %v4495
  %4505 = vst.msk [vmem:[%s5 + $0x18] sm:$0xf] %vm4498, %v4496
  %4506 = vst.msk [vmem:[%s5 + $0x1c] sm:$0xf] %vm4498, %v4497
  // Predicated region
  $region22: #{forward.2} parent=0 // pred_check
    _
  $region23: #{forward.2} parent=0 // pred_check_branch
    %4508 = sbr.rel (0) target = $region25
  $region24: #{forward.2} parent=0 // pred_region
    _
  $region25: #{forward.2} parent=0 // pred_fallthru
    _
  // Predicated region
  $region26: #{forward.2} parent=0 // pred_check
    _
  $region27: #{forward.2} parent=0 // pred_check_branch
    %4510 = sbr.rel (0) target = $region29
  $region28: #{forward.2} parent=0 // pred_region
    _
  $region29: #{forward.2} parent=0 // pred_fallthru
    _

</llo_original>
